<compile_context>
chip_gen: v7x
topology: tpu7x:2x2x1
jax: 0.10.0
libtpu: 0.0.40
codegen_flags: <defaults>
</compile_context>

<pallas_src>
import numpy as np

import jax
import jax.numpy as jnp
from jax.experimental import pallas as pl
from jax.experimental.pallas import tpu as pltpu


TB = 8  # images per grid step; == f32 sublane tile so batch-folding is a layout no-op


# ------------------------------ fused kernel ------------------------------- #

def _cifarcnn_kernel(x_ref, m1_ref, b1_ref, prow_ref, pcol_ref, m2_ref, b2_ref,
                     f1w_ref, f1b_ref, f2w_ref, f2b_ref, f3w_ref, f3b_ref,
                     out_ref):
    f32 = jnp.float32

    # x_ref block: [32*TB, 96], folded row = h*TB + b, lane = w*3 + c.
    # ---- conv1 (3->6, k=5) + bias + relu: 5 banded matmuls over kh ----
    # Band for tap kh is the contiguous, sublane-aligned row range [8*kh, 8*kh+224).
    c1 = jnp.zeros((28 * TB, 28 * 6), f32)                            # [224, 168]
    for kh in range(5):
        c1 = c1 + jnp.dot(x_ref[TB * kh:TB * kh + 28 * TB, :], m1_ref[kh],
                          preferred_element_type=f32)
    c1 = jnp.maximum(c1 + b1_ref[...], 0.0)                           # [224, 168]

    # ---- 2x2 max-pool, entirely on-chip (selection matmuls + max) ----
    # prow_ref[dr][t*TB+b, (2t+dr)*TB+b] = 1 picks row pairs across the folded batch.
    r = jnp.maximum(jnp.dot(prow_ref[0], c1, preferred_element_type=f32),
                    jnp.dot(prow_ref[1], c1, preferred_element_type=f32))   # [112, 168]
    p = jnp.maximum(jnp.dot(r, pcol_ref[0], preferred_element_type=f32),
                    jnp.dot(r, pcol_ref[1], preferred_element_type=f32))    # [112, 84]

    # ---- conv2 (6->16, k=5) + bias + relu ----
    c2 = jnp.zeros((10 * TB, 160), f32)                               # row = i2*TB + b
    for kh in range(5):
        c2 = c2 + jnp.dot(p[TB * kh:TB * kh + 10 * TB, :], m2_ref[kh],
                          preferred_element_type=f32)
    c2 = jnp.maximum(c2 + b2_ref[...], 0.0)                           # [80, 160]

    # ---- NCHW view(-1,400) + fc1, fused via per-conv2-row weights ----
    # h1 row = image b within the block, lane = view_row*128 + unit.
    h1 = jnp.zeros((TB, 4 * 128), f32)                                # [8, 512]
    for i2 in range(10):
        h1 = h1 + jnp.dot(c2[TB * i2:TB * i2 + TB, :], f1w_ref[i2],
                          preferred_element_type=f32)
    h1 = jnp.maximum(h1 + f1b_ref[...], 0.0)

    # ---- fc2 + relu, fc3 (block-diagonal over the 4 view rows) ----
    h2 = jnp.maximum(jnp.dot(h1, f2w_ref[...], preferred_element_type=f32)
                     + f2b_ref[...], 0.0)                             # [8, 256]
    out_ref[...] = (jnp.dot(h2, f3w_ref[...], preferred_element_type=f32)
                    + f3b_ref[...])                                   # [8, 40]


# ------------------------------- JAX wrapper -------------------------------- #

def _resident(shape):
    """Full-array block, same block for every grid step (stays in VMEM)."""
    nd = len(shape)
    return pl.BlockSpec(tuple(int(s) for s in shape),
                        lambda i, _nd=nd: (0,) * _nd)


def cifarcnn_forward(x_nchw, packed):
    n = x_nchw.shape[0]
    assert x_nchw.shape[1:] == (3, 32, 32)
    n_blk = -(-n // TB)
    n_pad = n_blk * TB

    # NCHW -> NHWC rows [N, 32, 96] (lane = w*3 + c), pad batch to a multiple
    # of TB, then fold the batch under each image row:
    #   global folded row = blk*32*TB + h*TB + b.
    x_rows = jnp.transpose(x_nchw, (0, 2, 3, 1)).reshape(n, 32, 96)
    if n_pad != n:
        x_rows = jnp.pad(x_rows, ((0, n_pad - n), (0, 0), (0, 0)))
    x_folded = jnp.transpose(x_rows.reshape(n_blk, TB, 32, 96),
                             (0, 2, 1, 3)).reshape(n_blk * 32 * TB, 96)

    in_specs = [pl.BlockSpec((32 * TB, 96), lambda i: (i, 0))]
    in_specs += [_resident(w.shape) for w in packed]

    out = pl.pallas_call(
        _cifarcnn_kernel,
        out_shape=jax.ShapeDtypeStruct((n_pad, 40), jnp.float32),
        grid=(n_blk,),
        in_specs=in_specs,
        out_specs=pl.BlockSpec((TB, 40), lambda i: (i, 0)),
        compiler_params=pltpu.CompilerParams(
            dimension_semantics=("parallel",),
            vmem_limit_bytes=32 * 1024 * 1024),
    )(x_folded, *packed)

    # [N_pad, 4*10] -> drop padding -> [4N, 10]: exactly PyTorch's view(-1, 400) order.
    return out[:n].reshape(4 * n, 10)


# ------------------------ one-time weight repacking ------------------------- #

def pack_params(params):
    """Hoisted out of the forward: repack PyTorch-layout weights into the
    kernel's banded / selection / block-diagonal layouts."""
    (w1, b1, w2, b2, wf1, bf1, wf2, bf2, wf3, bf3) = [
        np.asarray(p, np.float32) for p in params]

    # conv1: M1[kh][(w_in*3 + c), (j*6 + o)] = w1[o, c, kh, w_in - j]
    m1 = np.zeros((5, 32 * 3, 28 * 6), np.float32)
    for kh in range(5):
        for kw in range(5):
            for j in range(28):
                m1[kh, (j + kw) * 3:(j + kw) * 3 + 3, j * 6:(j + 1) * 6] = \
                    w1[:, :, kh, kw].T
    b1row = np.tile(b1, 28)[None, :]                                  # [1, 168]

    # 2x2 max-pool selection matrices in the batch-folded layout.
    # Row pairs: prow[dr][t*TB + b, (2t+dr)*TB + b] = 1.
    prow = np.zeros((2, 14 * TB, 28 * TB), np.float32)
    for t in range(14):
        for b in range(TB):
            prow[0, t * TB + b, (2 * t) * TB + b] = 1.0
            prow[1, t * TB + b, (2 * t + 1) * TB + b] = 1.0
    # Width pairs per channel: pcol[dw][(2j+dw)*6 + o, j*6 + o] = 1.
    pcol = np.zeros((2, 28 * 6, 14 * 6), np.float32)
    for j in range(14):
        for o in range(6):
            pcol[0, (2 * j) * 6 + o, j * 6 + o] = 1.0
            pcol[1, (2 * j + 1) * 6 + o, j * 6 + o] = 1.0

    # conv2: M2[kh][(jp*6 + c), (j2*16 + o2)] = w2[o2, c, kh, jp - j2]
    m2 = np.zeros((5, 14 * 6, 10 * 16), np.float32)
    for kh in range(5):
        for kw in range(5):
            for j2 in range(10):
                m2[kh, (j2 + kw) * 6:(j2 + kw) * 6 + 6, j2 * 16:(j2 + 1) * 16] = \
                    w2[:, :, kh, kw].T
    b2row = np.tile(b2, 10)[None, :]                                  # [1, 160]

    # fc1 with the NCHW view(-1, 400) permutation folded in:
    #   view row R = o2 // 4, view col q = (o2 % 4)*100 + i2*10 + j2.
    bf1w = np.zeros((10, 160, 4 * 128), np.float32)
    for i2 in range(10):
        for j2 in range(10):
            for o2 in range(16):
                r, s = divmod(o2, 4)
                q = s * 100 + i2 * 10 + j2
                bf1w[i2, 16 * j2 + o2, 128 * r:128 * (r + 1)] = wf1[:, q]
    bf1row = np.tile(bf1, 4)[None, :]                                 # [1, 512]

    # fc2 / fc3 as block-diagonal matrices (the 4 view rows packed in lanes).
    w2bd = np.zeros((4 * 128, 4 * 64), np.float32)
    w3bd = np.zeros((4 * 64, 4 * 10), np.float32)
    for r in range(4):
        w2bd[128 * r:128 * (r + 1), 64 * r:64 * (r + 1)] = wf2.T
        w3bd[64 * r:64 * (r + 1), 10 * r:10 * (r + 1)] = wf3.T
    bf2row = np.tile(bf2, 4)[None, :]                                 # [1, 256]
    bf3row = np.tile(bf3, 4)[None, :]                                 # [1, 40]

    packed = (m1, b1row, prow, pcol, m2, b2row,
              bf1w, bf1row, w2bd, bf2row, w3bd, bf3row)
    return tuple(jnp.asarray(w) for w in packed)


# --------------------------- pure-JAX reference ----------------------------- #

def reference_forward(x_nchw, params):
    (w1, b1, w2, b2, wf1, bf1, wf2, bf2, wf3, bf3) = params
    dn = ('NCHW', 'OIHW', 'NCHW')
    y = jax.lax.conv_general_dilated(x_nchw, w1, (1, 1), 'VALID',
                                     dimension_numbers=dn)
    y = jnp.maximum(y + b1[None, :, None, None], 0.0)
    y = jax.lax.reduce_window(y, -jnp.inf, jax.lax.max,
                              (1, 1, 2, 2), (1, 1, 2, 2), 'VALID')
    z = jax.lax.conv_general_dilated(y, w2, (1, 1), 'VALID',
                                     dimension_numbers=dn)
    z = jnp.maximum(z + b2[None, :, None, None], 0.0)
    z = z.reshape(-1, 16 * 5 * 5)
    h = jnp.maximum(z @ wf1.T + bf1, 0.0)
    h = jnp.maximum(h @ wf2.T + bf2, 0.0)
    return h @ wf3.T + bf3


# ------------------------------- params init -------------------------------- #

def init_params(key):
    ks = jax.random.split(key, 10)

    def u(k, shape, fan_in):
        bound = 1.0 / jnp.sqrt(jnp.float32(fan_in))
        return jax.random.uniform(k, shape, jnp.float32, -bound, bound)

    w1 = u(ks[0], (6, 3, 5, 5), 3 * 25);   b1 = u(ks[1], (6,), 3 * 25)
    w2 = u(ks[2], (16, 6, 5, 5), 6 * 25);  b2 = u(ks[3], (16,), 6 * 25)
    wf1 = u(ks[4], (128, 400), 400);       bf1 = u(ks[5], (128,), 400)
    wf2 = u(ks[6], (64, 128), 128);        bf2 = u(ks[7], (64,), 128)
    wf3 = u(ks[8], (10, 64), 64);          bf3 = u(ks[9], (10,), 64)
    return (w1, b1, w2, b2, wf1, bf1, wf2, bf2, wf3, bf3)


if __name__ == "__main__":
    key = jax.random.PRNGKey(0)
    pkey, xkey = jax.random.split(key)
    params = init_params(pkey)
    packed = pack_params(params)          # one-time weight repack (hoisted)

    # CIFAR-shaped input (32x32 is required for view(-1, 400) to be valid).
    x = jax.random.normal(xkey, (2, 3, 32, 32), jnp.float32)

    fwd = jax.jit(cifarcnn_forward)
    out = jax.block_until_ready(fwd(x, packed))
    ref = jax.block_until_ready(reference_forward(x, params))

    assert out.shape == (8, 10), out.shape            # view(-1, 400) -> 4N rows
    max_err = float(jnp.max(jnp.abs(out - ref)))
    assert jnp.allclose(out, ref, rtol=2e-4, atol=2e-4), max_err
    print("KERNEL_OK")
</pallas_src>

<mosaic_0001>
module attributes {stable_mosaic.version = 11 : i64} {
  func.func @_cifarcnn_kernel(%arg0: i32, %arg1: memref<256x96xf32, #tpu.memory_space<vmem>>, %arg2: memref<5x96x168xf32, #tpu.memory_space<vmem>>, %arg3: memref<1x168xf32, #tpu.memory_space<vmem>>, %arg4: memref<2x112x224xf32, #tpu.memory_space<vmem>>, %arg5: memref<2x168x84xf32, #tpu.memory_space<vmem>>, %arg6: memref<5x84x160xf32, #tpu.memory_space<vmem>>, %arg7: memref<1x160xf32, #tpu.memory_space<vmem>>, %arg8: memref<10x160x512xf32, #tpu.memory_space<vmem>>, %arg9: memref<1x512xf32, #tpu.memory_space<vmem>>, %arg10: memref<512x256xf32, #tpu.memory_space<vmem>>, %arg11: memref<1x256xf32, #tpu.memory_space<vmem>>, %arg12: memref<256x40xf32, #tpu.memory_space<vmem>>, %arg13: memref<1x40xf32, #tpu.memory_space<vmem>>, %arg14: memref<8x40xf32, #tpu.memory_space<vmem>>) attributes {dimension_semantics = [#tpu.dimension_semantics<parallel>], iteration_bounds = array<i64: 1>, scalar_prefetch = 0 : i64, scratch_operands = 0 : i64, tpu.core_type = #tpu.core_type<tc>, window_params = [{transform_indices = @transform_0, window_bounds = array<i64: 256, 96>}, {pipeline_mode = #tpu.pipeline_mode<synchronous>, transform_indices = @transform_1, window_bounds = array<i64: 5, 96, 168>}, {pipeline_mode = #tpu.pipeline_mode<synchronous>, transform_indices = @transform_2, window_bounds = array<i64: 1, 168>}, {pipeline_mode = #tpu.pipeline_mode<synchronous>, transform_indices = @transform_3, window_bounds = array<i64: 2, 112, 224>}, {pipeline_mode = #tpu.pipeline_mode<synchronous>, transform_indices = @transform_4, window_bounds = array<i64: 2, 168, 84>}, {pipeline_mode = #tpu.pipeline_mode<synchronous>, transform_indices = @transform_5, window_bounds = array<i64: 5, 84, 160>}, {pipeline_mode = #tpu.pipeline_mode<synchronous>, transform_indices = @transform_6, window_bounds = array<i64: 1, 160>}, {pipeline_mode = #tpu.pipeline_mode<synchronous>, transform_indices = @transform_7, window_bounds = array<i64: 10, 160, 512>}, {pipeline_mode = #tpu.pipeline_mode<synchronous>, transform_indices = @transform_8, window_bounds = array<i64: 1, 512>}, {pipeline_mode = #tpu.pipeline_mode<synchronous>, transform_indices = @transform_9, window_bounds = array<i64: 512, 256>}, {pipeline_mode = #tpu.pipeline_mode<synchronous>, transform_indices = @transform_10, window_bounds = array<i64: 1, 256>}, {pipeline_mode = #tpu.pipeline_mode<synchronous>, transform_indices = @transform_11, window_bounds = array<i64: 256, 40>}, {pipeline_mode = #tpu.pipeline_mode<synchronous>, transform_indices = @transform_12, window_bounds = array<i64: 1, 40>}, {transform_indices = @transform_13, window_bounds = array<i64: 8, 40>}]} {
    %cst = arith.constant 0.000000e+00 : f32
    %0 = vector.broadcast %cst : f32 to vector<224x168xf32>
    %c0 = arith.constant 0 : index
    %c0_0 = arith.constant 0 : index
    %1 = vector.load %arg1[%c0, %c0_0] : memref<256x96xf32, #tpu.memory_space<vmem>>, vector<224x96xf32>
    %c0_1 = arith.constant 0 : index
    %c0_2 = arith.constant 0 : index
    %c0_3 = arith.constant 0 : index
    %2 = vector.load %arg2[%c0_1, %c0_2, %c0_3] : memref<5x96x168xf32, #tpu.memory_space<vmem>>, vector<1x96x168xf32>
    %3 = vector.shape_cast %2 : vector<1x96x168xf32> to vector<96x168xf32>
    %cst_4 = arith.constant dense<0.000000e+00> : vector<224x168xf32>
    %4 = tpu.matmul %1, %3, %cst_4 {dimension_numbers = #tpu.dot_dimension_numbers<[1], [0], [0], [1], [0, 0, 1, 1], [], []>} : vector<224x96xf32>, vector<96x168xf32>, vector<224x168xf32> -> vector<224x168xf32>
    %5 = arith.addf %0, %4 : vector<224x168xf32>
    %c8 = arith.constant 8 : index
    %c0_5 = arith.constant 0 : index
    %6 = vector.load %arg1[%c8, %c0_5] : memref<256x96xf32, #tpu.memory_space<vmem>>, vector<224x96xf32>
    %c1 = arith.constant 1 : index
    %c0_6 = arith.constant 0 : index
    %c0_7 = arith.constant 0 : index
    %7 = vector.load %arg2[%c1, %c0_6, %c0_7] : memref<5x96x168xf32, #tpu.memory_space<vmem>>, vector<1x96x168xf32>
    %8 = vector.shape_cast %7 : vector<1x96x168xf32> to vector<96x168xf32>
    %cst_8 = arith.constant dense<0.000000e+00> : vector<224x168xf32>
    %9 = tpu.matmul %6, %8, %cst_8 {dimension_numbers = #tpu.dot_dimension_numbers<[1], [0], [0], [1], [0, 0, 1, 1], [], []>} : vector<224x96xf32>, vector<96x168xf32>, vector<224x168xf32> -> vector<224x168xf32>
    %10 = arith.addf %5, %9 : vector<224x168xf32>
    %c16 = arith.constant 16 : index
    %c0_9 = arith.constant 0 : index
    %11 = vector.load %arg1[%c16, %c0_9] : memref<256x96xf32, #tpu.memory_space<vmem>>, vector<224x96xf32>
    %c2 = arith.constant 2 : index
    %c0_10 = arith.constant 0 : index
    %c0_11 = arith.constant 0 : index
    %12 = vector.load %arg2[%c2, %c0_10, %c0_11] : memref<5x96x168xf32, #tpu.memory_space<vmem>>, vector<1x96x168xf32>
    %13 = vector.shape_cast %12 : vector<1x96x168xf32> to vector<96x168xf32>
    %cst_12 = arith.constant dense<0.000000e+00> : vector<224x168xf32>
    %14 = tpu.matmul %11, %13, %cst_12 {dimension_numbers = #tpu.dot_dimension_numbers<[1], [0], [0], [1], [0, 0, 1, 1], [], []>} : vector<224x96xf32>, vector<96x168xf32>, vector<224x168xf32> -> vector<224x168xf32>
    %15 = arith.addf %10, %14 : vector<224x168xf32>
    %c24 = arith.constant 24 : index
    %c0_13 = arith.constant 0 : index
    %16 = vector.load %arg1[%c24, %c0_13] : memref<256x96xf32, #tpu.memory_space<vmem>>, vector<224x96xf32>
    %c3 = arith.constant 3 : index
    %c0_14 = arith.constant 0 : index
    %c0_15 = arith.constant 0 : index
    %17 = vector.load %arg2[%c3, %c0_14, %c0_15] : memref<5x96x168xf32, #tpu.memory_space<vmem>>, vector<1x96x168xf32>
    %18 = vector.shape_cast %17 : vector<1x96x168xf32> to vector<96x168xf32>
    %cst_16 = arith.constant dense<0.000000e+00> : vector<224x168xf32>
    %19 = tpu.matmul %16, %18, %cst_16 {dimension_numbers = #tpu.dot_dimension_numbers<[1], [0], [0], [1], [0, 0, 1, 1], [], []>} : vector<224x96xf32>, vector<96x168xf32>, vector<224x168xf32> -> vector<224x168xf32>
    %20 = arith.addf %15, %19 : vector<224x168xf32>
    %c32 = arith.constant 32 : index
    %c0_17 = arith.constant 0 : index
    %21 = vector.load %arg1[%c32, %c0_17] : memref<256x96xf32, #tpu.memory_space<vmem>>, vector<224x96xf32>
    %c4 = arith.constant 4 : index
    %c0_18 = arith.constant 0 : index
    %c0_19 = arith.constant 0 : index
    %22 = vector.load %arg2[%c4, %c0_18, %c0_19] : memref<5x96x168xf32, #tpu.memory_space<vmem>>, vector<1x96x168xf32>
    %23 = vector.shape_cast %22 : vector<1x96x168xf32> to vector<96x168xf32>
    %cst_20 = arith.constant dense<0.000000e+00> : vector<224x168xf32>
    %24 = tpu.matmul %21, %23, %cst_20 {dimension_numbers = #tpu.dot_dimension_numbers<[1], [0], [0], [1], [0, 0, 1, 1], [], []>} : vector<224x96xf32>, vector<96x168xf32>, vector<224x168xf32> -> vector<224x168xf32>
    %25 = arith.addf %20, %24 : vector<224x168xf32>
    %c0_21 = arith.constant 0 : index
    %c0_22 = arith.constant 0 : index
    %26 = vector.load %arg3[%c0_21, %c0_22] : memref<1x168xf32, #tpu.memory_space<vmem>>, vector<1x168xf32>
    %27 = vector.broadcast %26 : vector<1x168xf32> to vector<224x168xf32>
    %28 = arith.addf %25, %27 : vector<224x168xf32>
    %cst_23 = arith.constant 0.000000e+00 : f32
    %29 = vector.broadcast %cst_23 : f32 to vector<224x168xf32>
    %30 = arith.maximumf %28, %29 : vector<224x168xf32>
    %c0_24 = arith.constant 0 : index
    %c0_25 = arith.constant 0 : index
    %c0_26 = arith.constant 0 : index
    %31 = vector.load %arg4[%c0_24, %c0_25, %c0_26] : memref<2x112x224xf32, #tpu.memory_space<vmem>>, vector<1x112x224xf32>
    %32 = vector.shape_cast %31 : vector<1x112x224xf32> to vector<112x224xf32>
    %cst_27 = arith.constant dense<0.000000e+00> : vector<112x168xf32>
    %33 = tpu.matmul %32, %30, %cst_27 {dimension_numbers = #tpu.dot_dimension_numbers<[1], [0], [0], [1], [0, 0, 1, 1], [], []>} : vector<112x224xf32>, vector<224x168xf32>, vector<112x168xf32> -> vector<112x168xf32>
    %c1_28 = arith.constant 1 : index
    %c0_29 = arith.constant 0 : index
    %c0_30 = arith.constant 0 : index
    %34 = vector.load %arg4[%c1_28, %c0_29, %c0_30] : memref<2x112x224xf32, #tpu.memory_space<vmem>>, vector<1x112x224xf32>
    %35 = vector.shape_cast %34 : vector<1x112x224xf32> to vector<112x224xf32>
    %cst_31 = arith.constant dense<0.000000e+00> : vector<112x168xf32>
    %36 = tpu.matmul %35, %30, %cst_31 {dimension_numbers = #tpu.dot_dimension_numbers<[1], [0], [0], [1], [0, 0, 1, 1], [], []>} : vector<112x224xf32>, vector<224x168xf32>, vector<112x168xf32> -> vector<112x168xf32>
    %37 = arith.maximumf %33, %36 : vector<112x168xf32>
    %c0_32 = arith.constant 0 : index
    %c0_33 = arith.constant 0 : index
    %c0_34 = arith.constant 0 : index
    %38 = vector.load %arg5[%c0_32, %c0_33, %c0_34] : memref<2x168x84xf32, #tpu.memory_space<vmem>>, vector<1x168x84xf32>
    %39 = vector.shape_cast %38 : vector<1x168x84xf32> to vector<168x84xf32>
    %cst_35 = arith.constant dense<0.000000e+00> : vector<112x84xf32>
    %40 = tpu.matmul %37, %39, %cst_35 {dimension_numbers = #tpu.dot_dimension_numbers<[1], [0], [0], [1], [0, 0, 1, 1], [], []>} : vector<112x168xf32>, vector<168x84xf32>, vector<112x84xf32> -> vector<112x84xf32>
    %c1_36 = arith.constant 1 : index
    %c0_37 = arith.constant 0 : index
    %c0_38 = arith.constant 0 : index
    %41 = vector.load %arg5[%c1_36, %c0_37, %c0_38] : memref<2x168x84xf32, #tpu.memory_space<vmem>>, vector<1x168x84xf32>
    %42 = vector.shape_cast %41 : vector<1x168x84xf32> to vector<168x84xf32>
    %cst_39 = arith.constant dense<0.000000e+00> : vector<112x84xf32>
    %43 = tpu.matmul %37, %42, %cst_39 {dimension_numbers = #tpu.dot_dimension_numbers<[1], [0], [0], [1], [0, 0, 1, 1], [], []>} : vector<112x168xf32>, vector<168x84xf32>, vector<112x84xf32> -> vector<112x84xf32>
    %44 = arith.maximumf %40, %43 : vector<112x84xf32>
    %cst_40 = arith.constant 0.000000e+00 : f32
    %45 = vector.broadcast %cst_40 : f32 to vector<80x160xf32>
    %46 = vector.extract_strided_slice %44 {offsets = [0, 0], sizes = [80, 84], strides = [1, 1]} : vector<112x84xf32> to vector<80x84xf32>
    %c0_41 = arith.constant 0 : index
    %c0_42 = arith.constant 0 : index
    %c0_43 = arith.constant 0 : index
    %47 = vector.load %arg6[%c0_41, %c0_42, %c0_43] : memref<5x84x160xf32, #tpu.memory_space<vmem>>, vector<1x84x160xf32>
    %48 = vector.shape_cast %47 : vector<1x84x160xf32> to vector<84x160xf32>
    %cst_44 = arith.constant dense<0.000000e+00> : vector<80x160xf32>
    %49 = tpu.matmul %46, %48, %cst_44 {dimension_numbers = #tpu.dot_dimension_numbers<[1], [0], [0], [1], [0, 0, 1, 1], [], []>} : vector<80x84xf32>, vector<84x160xf32>, vector<80x160xf32> -> vector<80x160xf32>
    %50 = arith.addf %45, %49 : vector<80x160xf32>
    %51 = vector.extract_strided_slice %44 {offsets = [8, 0], sizes = [80, 84], strides = [1, 1]} : vector<112x84xf32> to vector<80x84xf32>
    %c1_45 = arith.constant 1 : index
    %c0_46 = arith.constant 0 : index
    %c0_47 = arith.constant 0 : index
    %52 = vector.load %arg6[%c1_45, %c0_46, %c0_47] : memref<5x84x160xf32, #tpu.memory_space<vmem>>, vector<1x84x160xf32>
    %53 = vector.shape_cast %52 : vector<1x84x160xf32> to vector<84x160xf32>
    %cst_48 = arith.constant dense<0.000000e+00> : vector<80x160xf32>
    %54 = tpu.matmul %51, %53, %cst_48 {dimension_numbers = #tpu.dot_dimension_numbers<[1], [0], [0], [1], [0, 0, 1, 1], [], []>} : vector<80x84xf32>, vector<84x160xf32>, vector<80x160xf32> -> vector<80x160xf32>
    %55 = arith.addf %50, %54 : vector<80x160xf32>
    %56 = vector.extract_strided_slice %44 {offsets = [16, 0], sizes = [80, 84], strides = [1, 1]} : vector<112x84xf32> to vector<80x84xf32>
    %c2_49 = arith.constant 2 : index
    %c0_50 = arith.constant 0 : index
    %c0_51 = arith.constant 0 : index
    %57 = vector.load %arg6[%c2_49, %c0_50, %c0_51] : memref<5x84x160xf32, #tpu.memory_space<vmem>>, vector<1x84x160xf32>
    %58 = vector.shape_cast %57 : vector<1x84x160xf32> to vector<84x160xf32>
    %cst_52 = arith.constant dense<0.000000e+00> : vector<80x160xf32>
    %59 = tpu.matmul %56, %58, %cst_52 {dimension_numbers = #tpu.dot_dimension_numbers<[1], [0], [0], [1], [0, 0, 1, 1], [], []>} : vector<80x84xf32>, vector<84x160xf32>, vector<80x160xf32> -> vector<80x160xf32>
    %60 = arith.addf %55, %59 : vector<80x160xf32>
    %61 = vector.extract_strided_slice %44 {offsets = [24, 0], sizes = [80, 84], strides = [1, 1]} : vector<112x84xf32> to vector<80x84xf32>
    %c3_53 = arith.constant 3 : index
    %c0_54 = arith.constant 0 : index
    %c0_55 = arith.constant 0 : index
    %62 = vector.load %arg6[%c3_53, %c0_54, %c0_55] : memref<5x84x160xf32, #tpu.memory_space<vmem>>, vector<1x84x160xf32>
    %63 = vector.shape_cast %62 : vector<1x84x160xf32> to vector<84x160xf32>
    %cst_56 = arith.constant dense<0.000000e+00> : vector<80x160xf32>
    %64 = tpu.matmul %61, %63, %cst_56 {dimension_numbers = #tpu.dot_dimension_numbers<[1], [0], [0], [1], [0, 0, 1, 1], [], []>} : vector<80x84xf32>, vector<84x160xf32>, vector<80x160xf32> -> vector<80x160xf32>
    %65 = arith.addf %60, %64 : vector<80x160xf32>
    %66 = vector.extract_strided_slice %44 {offsets = [32, 0], sizes = [80, 84], strides = [1, 1]} : vector<112x84xf32> to vector<80x84xf32>
    %c4_57 = arith.constant 4 : index
    %c0_58 = arith.constant 0 : index
    %c0_59 = arith.constant 0 : index
    %67 = vector.load %arg6[%c4_57, %c0_58, %c0_59] : memref<5x84x160xf32, #tpu.memory_space<vmem>>, vector<1x84x160xf32>
    %68 = vector.shape_cast %67 : vector<1x84x160xf32> to vector<84x160xf32>
    %cst_60 = arith.constant dense<0.000000e+00> : vector<80x160xf32>
    %69 = tpu.matmul %66, %68, %cst_60 {dimension_numbers = #tpu.dot_dimension_numbers<[1], [0], [0], [1], [0, 0, 1, 1], [], []>} : vector<80x84xf32>, vector<84x160xf32>, vector<80x160xf32> -> vector<80x160xf32>
    %70 = arith.addf %65, %69 : vector<80x160xf32>
    %c0_61 = arith.constant 0 : index
    %c0_62 = arith.constant 0 : index
    %71 = vector.load %arg7[%c0_61, %c0_62] : memref<1x160xf32, #tpu.memory_space<vmem>>, vector<1x160xf32>
    %72 = vector.broadcast %71 : vector<1x160xf32> to vector<80x160xf32>
    %73 = arith.addf %70, %72 : vector<80x160xf32>
    %cst_63 = arith.constant 0.000000e+00 : f32
    %74 = vector.broadcast %cst_63 : f32 to vector<80x160xf32>
    %75 = arith.maximumf %73, %74 : vector<80x160xf32>
    %cst_64 = arith.constant 0.000000e+00 : f32
    %76 = vector.broadcast %cst_64 : f32 to vector<8x512xf32>
    %77 = vector.extract_strided_slice %75 {offsets = [0, 0], sizes = [8, 160], strides = [1, 1]} : vector<80x160xf32> to vector<8x160xf32>
    %c0_65 = arith.constant 0 : index
    %c0_66 = arith.constant 0 : index
    %c0_67 = arith.constant 0 : index
    %78 = vector.load %arg8[%c0_65, %c0_66, %c0_67] : memref<10x160x512xf32, #tpu.memory_space<vmem>>, vector<1x160x512xf32>
    %79 = vector.shape_cast %78 : vector<1x160x512xf32> to vector<160x512xf32>
    %cst_68 = arith.constant dense<0.000000e+00> : vector<8x512xf32>
    %80 = tpu.matmul %77, %79, %cst_68 {dimension_numbers = #tpu.dot_dimension_numbers<[1], [0], [0], [1], [0, 0, 1, 1], [], []>} : vector<8x160xf32>, vector<160x512xf32>, vector<8x512xf32> -> vector<8x512xf32>
    %81 = arith.addf %76, %80 : vector<8x512xf32>
    %82 = vector.extract_strided_slice %75 {offsets = [8, 0], sizes = [8, 160], strides = [1, 1]} : vector<80x160xf32> to vector<8x160xf32>
    %c1_69 = arith.constant 1 : index
    %c0_70 = arith.constant 0 : index
    %c0_71 = arith.constant 0 : index
    %83 = vector.load %arg8[%c1_69, %c0_70, %c0_71] : memref<10x160x512xf32, #tpu.memory_space<vmem>>, vector<1x160x512xf32>
    %84 = vector.shape_cast %83 : vector<1x160x512xf32> to vector<160x512xf32>
    %cst_72 = arith.constant dense<0.000000e+00> : vector<8x512xf32>
    %85 = tpu.matmul %82, %84, %cst_72 {dimension_numbers = #tpu.dot_dimension_numbers<[1], [0], [0], [1], [0, 0, 1, 1], [], []>} : vector<8x160xf32>, vector<160x512xf32>, vector<8x512xf32> -> vector<8x512xf32>
    %86 = arith.addf %81, %85 : vector<8x512xf32>
    %87 = vector.extract_strided_slice %75 {offsets = [16, 0], sizes = [8, 160], strides = [1, 1]} : vector<80x160xf32> to vector<8x160xf32>
    %c2_73 = arith.constant 2 : index
    %c0_74 = arith.constant 0 : index
    %c0_75 = arith.constant 0 : index
    %88 = vector.load %arg8[%c2_73, %c0_74, %c0_75] : memref<10x160x512xf32, #tpu.memory_space<vmem>>, vector<1x160x512xf32>
    %89 = vector.shape_cast %88 : vector<1x160x512xf32> to vector<160x512xf32>
    %cst_76 = arith.constant dense<0.000000e+00> : vector<8x512xf32>
    %90 = tpu.matmul %87, %89, %cst_76 {dimension_numbers = #tpu.dot_dimension_numbers<[1], [0], [0], [1], [0, 0, 1, 1], [], []>} : vector<8x160xf32>, vector<160x512xf32>, vector<8x512xf32> -> vector<8x512xf32>
    %91 = arith.addf %86, %90 : vector<8x512xf32>
    %92 = vector.extract_strided_slice %75 {offsets = [24, 0], sizes = [8, 160], strides = [1, 1]} : vector<80x160xf32> to vector<8x160xf32>
    %c3_77 = arith.constant 3 : index
    %c0_78 = arith.constant 0 : index
    %c0_79 = arith.constant 0 : index
    %93 = vector.load %arg8[%c3_77, %c0_78, %c0_79] : memref<10x160x512xf32, #tpu.memory_space<vmem>>, vector<1x160x512xf32>
    %94 = vector.shape_cast %93 : vector<1x160x512xf32> to vector<160x512xf32>
    %cst_80 = arith.constant dense<0.000000e+00> : vector<8x512xf32>
    %95 = tpu.matmul %92, %94, %cst_80 {dimension_numbers = #tpu.dot_dimension_numbers<[1], [0], [0], [1], [0, 0, 1, 1], [], []>} : vector<8x160xf32>, vector<160x512xf32>, vector<8x512xf32> -> vector<8x512xf32>
    %96 = arith.addf %91, %95 : vector<8x512xf32>
    %97 = vector.extract_strided_slice %75 {offsets = [32, 0], sizes = [8, 160], strides = [1, 1]} : vector<80x160xf32> to vector<8x160xf32>
    %c4_81 = arith.constant 4 : index
    %c0_82 = arith.constant 0 : index
    %c0_83 = arith.constant 0 : index
    %98 = vector.load %arg8[%c4_81, %c0_82, %c0_83] : memref<10x160x512xf32, #tpu.memory_space<vmem>>, vector<1x160x512xf32>
    %99 = vector.shape_cast %98 : vector<1x160x512xf32> to vector<160x512xf32>
    %cst_84 = arith.constant dense<0.000000e+00> : vector<8x512xf32>
    %100 = tpu.matmul %97, %99, %cst_84 {dimension_numbers = #tpu.dot_dimension_numbers<[1], [0], [0], [1], [0, 0, 1, 1], [], []>} : vector<8x160xf32>, vector<160x512xf32>, vector<8x512xf32> -> vector<8x512xf32>
    %101 = arith.addf %96, %100 : vector<8x512xf32>
    %102 = vector.extract_strided_slice %75 {offsets = [40, 0], sizes = [8, 160], strides = [1, 1]} : vector<80x160xf32> to vector<8x160xf32>
    %c5 = arith.constant 5 : index
    %c0_85 = arith.constant 0 : index
    %c0_86 = arith.constant 0 : index
    %103 = vector.load %arg8[%c5, %c0_85, %c0_86] : memref<10x160x512xf32, #tpu.memory_space<vmem>>, vector<1x160x512xf32>
    %104 = vector.shape_cast %103 : vector<1x160x512xf32> to vector<160x512xf32>
    %cst_87 = arith.constant dense<0.000000e+00> : vector<8x512xf32>
    %105 = tpu.matmul %102, %104, %cst_87 {dimension_numbers = #tpu.dot_dimension_numbers<[1], [0], [0], [1], [0, 0, 1, 1], [], []>} : vector<8x160xf32>, vector<160x512xf32>, vector<8x512xf32> -> vector<8x512xf32>
    %106 = arith.addf %101, %105 : vector<8x512xf32>
    %107 = vector.extract_strided_slice %75 {offsets = [48, 0], sizes = [8, 160], strides = [1, 1]} : vector<80x160xf32> to vector<8x160xf32>
    %c6 = arith.constant 6 : index
    %c0_88 = arith.constant 0 : index
    %c0_89 = arith.constant 0 : index
    %108 = vector.load %arg8[%c6, %c0_88, %c0_89] : memref<10x160x512xf32, #tpu.memory_space<vmem>>, vector<1x160x512xf32>
    %109 = vector.shape_cast %108 : vector<1x160x512xf32> to vector<160x512xf32>
    %cst_90 = arith.constant dense<0.000000e+00> : vector<8x512xf32>
    %110 = tpu.matmul %107, %109, %cst_90 {dimension_numbers = #tpu.dot_dimension_numbers<[1], [0], [0], [1], [0, 0, 1, 1], [], []>} : vector<8x160xf32>, vector<160x512xf32>, vector<8x512xf32> -> vector<8x512xf32>
    %111 = arith.addf %106, %110 : vector<8x512xf32>
    %112 = vector.extract_strided_slice %75 {offsets = [56, 0], sizes = [8, 160], strides = [1, 1]} : vector<80x160xf32> to vector<8x160xf32>
    %c7 = arith.constant 7 : index
    %c0_91 = arith.constant 0 : index
    %c0_92 = arith.constant 0 : index
    %113 = vector.load %arg8[%c7, %c0_91, %c0_92] : memref<10x160x512xf32, #tpu.memory_space<vmem>>, vector<1x160x512xf32>
    %114 = vector.shape_cast %113 : vector<1x160x512xf32> to vector<160x512xf32>
    %cst_93 = arith.constant dense<0.000000e+00> : vector<8x512xf32>
    %115 = tpu.matmul %112, %114, %cst_93 {dimension_numbers = #tpu.dot_dimension_numbers<[1], [0], [0], [1], [0, 0, 1, 1], [], []>} : vector<8x160xf32>, vector<160x512xf32>, vector<8x512xf32> -> vector<8x512xf32>
    %116 = arith.addf %111, %115 : vector<8x512xf32>
    %117 = vector.extract_strided_slice %75 {offsets = [64, 0], sizes = [8, 160], strides = [1, 1]} : vector<80x160xf32> to vector<8x160xf32>
    %c8_94 = arith.constant 8 : index
    %c0_95 = arith.constant 0 : index
    %c0_96 = arith.constant 0 : index
    %118 = vector.load %arg8[%c8_94, %c0_95, %c0_96] : memref<10x160x512xf32, #tpu.memory_space<vmem>>, vector<1x160x512xf32>
    %119 = vector.shape_cast %118 : vector<1x160x512xf32> to vector<160x512xf32>
    %cst_97 = arith.constant dense<0.000000e+00> : vector<8x512xf32>
    %120 = tpu.matmul %117, %119, %cst_97 {dimension_numbers = #tpu.dot_dimension_numbers<[1], [0], [0], [1], [0, 0, 1, 1], [], []>} : vector<8x160xf32>, vector<160x512xf32>, vector<8x512xf32> -> vector<8x512xf32>
    %121 = arith.addf %116, %120 : vector<8x512xf32>
    %122 = vector.extract_strided_slice %75 {offsets = [72, 0], sizes = [8, 160], strides = [1, 1]} : vector<80x160xf32> to vector<8x160xf32>
    %c9 = arith.constant 9 : index
    %c0_98 = arith.constant 0 : index
    %c0_99 = arith.constant 0 : index
    %123 = vector.load %arg8[%c9, %c0_98, %c0_99] : memref<10x160x512xf32, #tpu.memory_space<vmem>>, vector<1x160x512xf32>
    %124 = vector.shape_cast %123 : vector<1x160x512xf32> to vector<160x512xf32>
    %cst_100 = arith.constant dense<0.000000e+00> : vector<8x512xf32>
    %125 = tpu.matmul %122, %124, %cst_100 {dimension_numbers = #tpu.dot_dimension_numbers<[1], [0], [0], [1], [0, 0, 1, 1], [], []>} : vector<8x160xf32>, vector<160x512xf32>, vector<8x512xf32> -> vector<8x512xf32>
    %126 = arith.addf %121, %125 : vector<8x512xf32>
    %c0_101 = arith.constant 0 : index
    %c0_102 = arith.constant 0 : index
    %127 = vector.load %arg9[%c0_101, %c0_102] : memref<1x512xf32, #tpu.memory_space<vmem>>, vector<1x512xf32>
    %128 = vector.broadcast %127 : vector<1x512xf32> to vector<8x512xf32>
    %129 = arith.addf %126, %128 : vector<8x512xf32>
    %cst_103 = arith.constant 0.000000e+00 : f32
    %130 = vector.broadcast %cst_103 : f32 to vector<8x512xf32>
    %131 = arith.maximumf %129, %130 : vector<8x512xf32>
    %c0_104 = arith.constant 0 : index
    %c0_105 = arith.constant 0 : index
    %132 = vector.load %arg10[%c0_104, %c0_105] : memref<512x256xf32, #tpu.memory_space<vmem>>, vector<512x256xf32>
    %cst_106 = arith.constant dense<0.000000e+00> : vector<8x256xf32>
    %133 = tpu.matmul %131, %132, %cst_106 {dimension_numbers = #tpu.dot_dimension_numbers<[1], [0], [0], [1], [0, 0, 1, 1], [], []>} : vector<8x512xf32>, vector<512x256xf32>, vector<8x256xf32> -> vector<8x256xf32>
    %c0_107 = arith.constant 0 : index
    %c0_108 = arith.constant 0 : index
    %134 = vector.load %arg11[%c0_107, %c0_108] : memref<1x256xf32, #tpu.memory_space<vmem>>, vector<1x256xf32>
    %135 = vector.broadcast %134 : vector<1x256xf32> to vector<8x256xf32>
    %136 = arith.addf %133, %135 : vector<8x256xf32>
    %cst_109 = arith.constant 0.000000e+00 : f32
    %137 = vector.broadcast %cst_109 : f32 to vector<8x256xf32>
    %138 = arith.maximumf %136, %137 : vector<8x256xf32>
    %c0_110 = arith.constant 0 : index
    %c0_111 = arith.constant 0 : index
    %139 = vector.load %arg12[%c0_110, %c0_111] : memref<256x40xf32, #tpu.memory_space<vmem>>, vector<256x40xf32>
    %cst_112 = arith.constant dense<0.000000e+00> : vector<8x40xf32>
    %140 = tpu.matmul %138, %139, %cst_112 {dimension_numbers = #tpu.dot_dimension_numbers<[1], [0], [0], [1], [0, 0, 1, 1], [], []>} : vector<8x256xf32>, vector<256x40xf32>, vector<8x40xf32> -> vector<8x40xf32>
    %c0_113 = arith.constant 0 : index
    %c0_114 = arith.constant 0 : index
    %141 = vector.load %arg13[%c0_113, %c0_114] : memref<1x40xf32, #tpu.memory_space<vmem>>, vector<1x40xf32>
    %142 = vector.broadcast %141 : vector<1x40xf32> to vector<8x40xf32>
    %143 = arith.addf %140, %142 : vector<8x40xf32>
    %c0_115 = arith.constant 0 : index
    %c0_116 = arith.constant 0 : index
    %144 = vector.load %arg14[%c0_115, %c0_116] : memref<8x40xf32, #tpu.memory_space<vmem>>, vector<8x40xf32>
    tpu.vector_store %arg14[%c0_115, %c0_116], %143 {strides = array<i32>} : memref<8x40xf32, #tpu.memory_space<vmem>>, vector<8x40xf32>,
    return
  }
  func.func @transform_0(%arg0: i32) -> (i32, i32) {
    %c0_i32 = arith.constant 0 : i32
    %c0_i32_0 = arith.constant 0 : i32
    return %arg0, %c0_i32 : i32, i32
  }
  func.func @transform_1(%arg0: i32) -> (i32, i32, i32) {
    %c0_i32 = arith.constant 0 : i32
    %c0_i32_0 = arith.constant 0 : i32
    %c0_i32_1 = arith.constant 0 : i32
    %c0_i32_2 = arith.constant 0 : i32
    return %c0_i32, %c0_i32_0, %c0_i32_1 : i32, i32, i32
  }
  func.func @transform_2(%arg0: i32) -> (i32, i32) {
    %c0_i32 = arith.constant 0 : i32
    %c0_i32_0 = arith.constant 0 : i32
    %c0_i32_1 = arith.constant 0 : i32
    return %c0_i32, %c0_i32_0 : i32, i32
  }
  func.func @transform_3(%arg0: i32) -> (i32, i32, i32) {
    %c0_i32 = arith.constant 0 : i32
    %c0_i32_0 = arith.constant 0 : i32
    %c0_i32_1 = arith.constant 0 : i32
    %c0_i32_2 = arith.constant 0 : i32
    return %c0_i32, %c0_i32_0, %c0_i32_1 : i32, i32, i32
  }
  func.func @transform_4(%arg0: i32) -> (i32, i32, i32) {
    %c0_i32 = arith.constant 0 : i32
    %c0_i32_0 = arith.constant 0 : i32
    %c0_i32_1 = arith.constant 0 : i32
    %c0_i32_2 = arith.constant 0 : i32
    return %c0_i32, %c0_i32_0, %c0_i32_1 : i32, i32, i32
  }
  func.func @transform_5(%arg0: i32) -> (i32, i32, i32) {
    %c0_i32 = arith.constant 0 : i32
    %c0_i32_0 = arith.constant 0 : i32
    %c0_i32_1 = arith.constant 0 : i32
    %c0_i32_2 = arith.constant 0 : i32
    return %c0_i32, %c0_i32_0, %c0_i32_1 : i32, i32, i32
  }
  func.func @transform_6(%arg0: i32) -> (i32, i32) {
    %c0_i32 = arith.constant 0 : i32
    %c0_i32_0 = arith.constant 0 : i32
    %c0_i32_1 = arith.constant 0 : i32
    return %c0_i32, %c0_i32_0 : i32, i32
  }
  func.func @transform_7(%arg0: i32) -> (i32, i32, i32) {
    %c0_i32 = arith.constant 0 : i32
    %c0_i32_0 = arith.constant 0 : i32
    %c0_i32_1 = arith.constant 0 : i32
    %c0_i32_2 = arith.constant 0 : i32
    return %c0_i32, %c0_i32_0, %c0_i32_1 : i32, i32, i32
  }
  func.func @transform_8(%arg0: i32) -> (i32, i32) {
    %c0_i32 = arith.constant 0 : i32
    %c0_i32_0 = arith.constant 0 : i32
    %c0_i32_1 = arith.constant 0 : i32
    return %c0_i32, %c0_i32_0 : i32, i32
  }
  func.func @transform_9(%arg0: i32) -> (i32, i32) {
    %c0_i32 = arith.constant 0 : i32
    %c0_i32_0 = arith.constant 0 : i32
    %c0_i32_1 = arith.constant 0 : i32
    return %c0_i32, %c0_i32_0 : i32, i32
  }
  func.func @transform_10(%arg0: i32) -> (i32, i32) {
    %c0_i32 = arith.constant 0 : i32
    %c0_i32_0 = arith.constant 0 : i32
    %c0_i32_1 = arith.constant 0 : i32
    return %c0_i32, %c0_i32_0 : i32, i32
  }
  func.func @transform_11(%arg0: i32) -> (i32, i32) {
    %c0_i32 = arith.constant 0 : i32
    %c0_i32_0 = arith.constant 0 : i32
    %c0_i32_1 = arith.constant 0 : i32
    return %c0_i32, %c0_i32_0 : i32, i32
  }
  func.func @transform_12(%arg0: i32) -> (i32, i32) {
    %c0_i32 = arith.constant 0 : i32
    %c0_i32_0 = arith.constant 0 : i32
    %c0_i32_1 = arith.constant 0 : i32
    return %c0_i32, %c0_i32_0 : i32, i32
  }
  func.func @transform_13(%arg0: i32) -> (i32, i32) {
    %c0_i32 = arith.constant 0 : i32
    %c0_i32_0 = arith.constant 0 : i32
    return %arg0, %c0_i32 : i32, i32
  }
}

</mosaic_0001>

<llo_original>
// kernel: cifarcnn_forward.1
$region0: #{cifarcnn_forward.1}
  #allocation0 [shape = 'u32[]', space=smem, size = 0x4, offset = 0x4, fixed_abs, tag = 'smem constant byte address 0x4 - core index']
  #allocation1 [shape = 'u32[144,128]{1,0:T(1,128)}', space=vmem, size = 0x12000, scoped, tag = 'internal scratch']
  %s0 = inlined_call_operand.vmem [shape: f32[256,96], index: 0, kind: input, shape index: {}]
  %s1 = inlined_call_operand.vmem [shape: f32[5,96,168], index: 1, kind: input, shape index: {}]
  %s2 = inlined_call_operand.hbm [shape: f32[1,168], index: 2, kind: input, shape index: {}]
  %s3 = inlined_call_operand.vmem [shape: f32[2,112,224], index: 3, kind: input, shape index: {}]
  %s4 = inlined_call_operand.vmem [shape: f32[2,168,84], index: 4, kind: input, shape index: {}]
  %s5 = inlined_call_operand.vmem [shape: f32[5,84,160], index: 5, kind: input, shape index: {}]
  %s6 = inlined_call_operand.hbm [shape: f32[1,160], index: 6, kind: input, shape index: {}]
  %s7 = inlined_call_operand.hbm [shape: f32[10,160,512], index: 7, kind: input, shape index: {}]
  %s8 = inlined_call_operand.hbm [shape: f32[1,512], index: 8, kind: input, shape index: {}]
  %s9 = inlined_call_operand.vmem [shape: f32[512,256], index: 9, kind: input, shape index: {}]
  %s10 = inlined_call_operand.hbm [shape: f32[1,256], index: 10, kind: input, shape index: {}]
  %s11 = inlined_call_operand.vmem [shape: f32[256,40], index: 11, kind: input, shape index: {}]
  %s12 = inlined_call_operand.hbm [shape: f32[1,40], index: 12, kind: input, shape index: {}]
  %s13 = inlined_call_operand.vmem [shape: f32[8,40], index: 13, kind: output, shape index: {}]
  %s14 = sld [smem:[#allocation0]]
  $region86: #{cifarcnn_forward.1} parent=0
    _
  %s16 = ssub.s32 1, %s14
  %s17 = scalar_select 0, %s16, %s14
  $region1: #{cifarcnn_forward.1} parent=0
    #allocation2 [shape = 'u8[1024]{0}', space=vmem, size = 0x400, scoped, tag = 'input window, operand 2, single buffered']
    #allocation3 [shape = 's32[1]{0}', space=sflag, size = 0x4, scoped, tag = 'scoped memory for cifarcnn_forward.1']
    #allocation4 [shape = 'u8[1024]{0}', space=vmem, size = 0x400, scoped, tag = 'input window, operand 6, single buffered']
    #allocation5 [shape = 's32[1]{0}', space=sflag, size = 0x4, scoped, tag = 'scoped memory for cifarcnn_forward.1']
    #allocation6 [shape = 'u8[3276800]{0}', space=vmem, size = 0x320000, scoped, tag = 'input window, operand 7, single buffered']
    #allocation7 [shape = 'u8[2048]{0}', space=vmem, size = 0x800, scoped, tag = 'input window, operand 8, single buffered']
    #allocation8 [shape = 's32[1]{0}', space=sflag, size = 0x4, scoped, tag = 'scoped memory for cifarcnn_forward.1']
    #allocation9 [shape = 'u8[1024]{0}', space=vmem, size = 0x400, scoped, tag = 'input window, operand 10, single buffered']
    #allocation10 [shape = 'u8[512]{0}', space=vmem, size = 0x400, scoped, tag = 'input window, operand 12, single buffered']
    #allocation11 [shape = 's32[1]{0}', space=sflag, size = 0x4, scoped, tag = 'scoped memory for cifarcnn_forward.1']
    %18 = vsyncpa [#allocation3], 0
    %19 = vsyncpa [#allocation5], 0
    %20 = vsyncpa [#allocation8], 0
    %21 = vsyncpa [#allocation11], 0
    // Predicated region
    $region2: #{cifarcnn_forward.1} parent=1 // pred_check
      _
    $region3: #{cifarcnn_forward.1} parent=1 // pred_check_branch
      %23 = sbr.rel (0) target = $region5
    $region4: #{cifarcnn_forward.1} parent=1 // pred_region
      _
    $region5: #{cifarcnn_forward.1} parent=1 // pred_fallthru
      _
    // Predicated region
    $region6: #{cifarcnn_forward.1} parent=1 // pred_check
      _
    $region7: #{cifarcnn_forward.1} parent=1 // pred_check_branch
      %25 = sbr.rel (0) target = $region9
    $region8: #{cifarcnn_forward.1} parent=1 // pred_region
      _
    $region9: #{cifarcnn_forward.1} parent=1 // pred_fallthru
      _
    // Predicated region
    $region10: #{cifarcnn_forward.1} parent=1 // pred_check
      _
    $region11: #{cifarcnn_forward.1} parent=1 // pred_check_branch
      %27 = sbr.rel (0) target = $region13
    $region12: #{cifarcnn_forward.1} parent=1 // pred_region
      %s29 = ssub.s32 32, 32
      %30 = vsyncadd [#allocation3], %s29
      %s32 = sshll.u32 [#allocation2], 4
      %s33 = int_to_ptr.vmem [resolvable:$true] %s32
      %35 = dma.hbm_to_vmem [thread:$0]  %s2, 32, %s33, [#allocation3]
    $region13: #{cifarcnn_forward.1} parent=1 // pred_fallthru
      _
    // Predicated region
    $region14: #{cifarcnn_forward.1} parent=1 // pred_check
      _
    $region15: #{cifarcnn_forward.1} parent=1 // pred_check_branch
      %37 = sbr.rel (0) target = $region17
    $region16: #{cifarcnn_forward.1} parent=1 // pred_region
      _
    $region17: #{cifarcnn_forward.1} parent=1 // pred_fallthru
      _
    // Predicated region
    $region18: #{cifarcnn_forward.1} parent=1 // pred_check
      _
    $region19: #{cifarcnn_forward.1} parent=1 // pred_check_branch
      %39 = sbr.rel (0) target = $region21
    $region20: #{cifarcnn_forward.1} parent=1 // pred_region
      _
    $region21: #{cifarcnn_forward.1} parent=1 // pred_fallthru
      _
    // Predicated region
    $region22: #{cifarcnn_forward.1} parent=1 // pred_check
      _
    $region23: #{cifarcnn_forward.1} parent=1 // pred_check_branch
      %41 = sbr.rel (0) target = $region25
    $region24: #{cifarcnn_forward.1} parent=1 // pred_region
      _
    $region25: #{cifarcnn_forward.1} parent=1 // pred_fallthru
      _
    // Predicated region
    $region26: #{cifarcnn_forward.1} parent=1 // pred_check
      _
    $region27: #{cifarcnn_forward.1} parent=1 // pred_check_branch
      %43 = sbr.rel (0) target = $region29
    $region28: #{cifarcnn_forward.1} parent=1 // pred_region
      %s45 = ssub.s32 32, 32
      %46 = vsyncadd [#allocation5], %s45
      %s48 = sshll.u32 [#allocation4], 4
      %s49 = int_to_ptr.vmem [resolvable:$true] %s48
      %51 = dma.hbm_to_vmem [thread:$0]  %s6, 32, %s49, [#allocation5]
    $region29: #{cifarcnn_forward.1} parent=1 // pred_fallthru
      _
    // Predicated region
    $region30: #{cifarcnn_forward.1} parent=1 // pred_check
      _
    $region31: #{cifarcnn_forward.1} parent=1 // pred_check_branch
      %53 = sbr.rel (0) target = $region33
    $region32: #{cifarcnn_forward.1} parent=1 // pred_region
      %s55 = ssub.s32 102400, 102400
      %56 = vsyncadd [#allocation5], %s55
      %s57 = sshll.u32 [#allocation6], 4
      %s58 = int_to_ptr.vmem [resolvable:$true] %s57
      %63 = dma.hbm_to_vmem [thread:$0]  %s7, 102400, %s58, [#allocation5], 512, 512, 32
    $region33: #{cifarcnn_forward.1} parent=1 // pred_fallthru
      _
    // Predicated region
    $region34: #{cifarcnn_forward.1} parent=1 // pred_check
      _
    $region35: #{cifarcnn_forward.1} parent=1 // pred_check_branch
      %65 = sbr.rel (0) target = $region37
    $region36: #{cifarcnn_forward.1} parent=1 // pred_region
      %s67 = ssub.s32 64, 64
      %68 = vsyncadd [#allocation8], %s67
      %s70 = sshll.u32 [#allocation7], 4
      %s71 = int_to_ptr.vmem [resolvable:$true] %s70
      %73 = dma.hbm_to_vmem [thread:$0]  %s8, 64, %s71, [#allocation8]
    $region37: #{cifarcnn_forward.1} parent=1 // pred_fallthru
      _
    // Predicated region
    $region38: #{cifarcnn_forward.1} parent=1 // pred_check
      _
    $region39: #{cifarcnn_forward.1} parent=1 // pred_check_branch
      %75 = sbr.rel (0) target = $region41
    $region40: #{cifarcnn_forward.1} parent=1 // pred_region
      _
    $region41: #{cifarcnn_forward.1} parent=1 // pred_fallthru
      _
    // Predicated region
    $region42: #{cifarcnn_forward.1} parent=1 // pred_check
      _
    $region43: #{cifarcnn_forward.1} parent=1 // pred_check_branch
      %77 = sbr.rel (0) target = $region45
    $region44: #{cifarcnn_forward.1} parent=1 // pred_region
      %s79 = ssub.s32 32, 32
      %80 = vsyncadd [#allocation8], %s79
      %s82 = sshll.u32 [#allocation9], 4
      %s83 = int_to_ptr.vmem [resolvable:$true] %s82
      %85 = dma.hbm_to_vmem [thread:$0]  %s10, 32, %s83, [#allocation8]
    $region45: #{cifarcnn_forward.1} parent=1 // pred_fallthru
      _
    // Predicated region
    $region46: #{cifarcnn_forward.1} parent=1 // pred_check
      _
    $region47: #{cifarcnn_forward.1} parent=1 // pred_check_branch
      %87 = sbr.rel (0) target = $region49
    $region48: #{cifarcnn_forward.1} parent=1 // pred_region
      _
    $region49: #{cifarcnn_forward.1} parent=1 // pred_fallthru
      _
    // Predicated region
    $region50: #{cifarcnn_forward.1} parent=1 // pred_check
      _
    $region51: #{cifarcnn_forward.1} parent=1 // pred_check_branch
      %89 = sbr.rel (0) target = $region53
    $region52: #{cifarcnn_forward.1} parent=1 // pred_region
      %s91 = ssub.s32 16, 16
      %92 = vsyncadd [#allocation11], %s91
      %s94 = sshll.u32 [#allocation10], 4
      %s95 = int_to_ptr.vmem [resolvable:$true] %s94
      %97 = dma.hbm_to_vmem [thread:$0]  %s12, 16, %s95, [#allocation11]
    $region53: #{cifarcnn_forward.1} parent=1 // pred_fallthru
      _
    // Predicated region
    $region54: #{cifarcnn_forward.1} parent=1 // pred_check
      _
    $region55: #{cifarcnn_forward.1} parent=1 // pred_check_branch
      %99 = sbr.rel (0) target = $region57
    $region56: #{cifarcnn_forward.1} parent=1 // pred_region
      %100 = dma.done [#allocation3], 32
    $region57: #{cifarcnn_forward.1} parent=1 // pred_fallthru
      _
    // Predicated region
    $region58: #{cifarcnn_forward.1} parent=1 // pred_check
      _
    $region59: #{cifarcnn_forward.1} parent=1 // pred_check_branch
      %102 = sbr.rel (0) target = $region61
    $region60: #{cifarcnn_forward.1} parent=1 // pred_region
      %103 = dma.done [#allocation5], 32
    $region61: #{cifarcnn_forward.1} parent=1 // pred_fallthru
      _
    // Predicated region
    $region62: #{cifarcnn_forward.1} parent=1 // pred_check
      _
    $region63: #{cifarcnn_forward.1} parent=1 // pred_check_branch
      %105 = sbr.rel (0) target = $region65
    $region64: #{cifarcnn_forward.1} parent=1 // pred_region
      %106 = dma.done [#allocation5], 102400
    $region65: #{cifarcnn_forward.1} parent=1 // pred_fallthru
      _
    // Predicated region
    $region66: #{cifarcnn_forward.1} parent=1 // pred_check
      _
    $region67: #{cifarcnn_forward.1} parent=1 // pred_check_branch
      %108 = sbr.rel (0) target = $region69
    $region68: #{cifarcnn_forward.1} parent=1 // pred_region
      %109 = dma.done [#allocation8], 64
    $region69: #{cifarcnn_forward.1} parent=1 // pred_fallthru
      _
    // Predicated region
    $region70: #{cifarcnn_forward.1} parent=1 // pred_check
      _
    $region71: #{cifarcnn_forward.1} parent=1 // pred_check_branch
      %111 = sbr.rel (0) target = $region73
    $region72: #{cifarcnn_forward.1} parent=1 // pred_region
      %112 = dma.done [#allocation8], 32
    $region73: #{cifarcnn_forward.1} parent=1 // pred_fallthru
      _
    // Predicated region
    $region74: #{cifarcnn_forward.1} parent=1 // pred_check
      _
    $region75: #{cifarcnn_forward.1} parent=1 // pred_check_branch
      %114 = sbr.rel (0) target = $region77
    $region76: #{cifarcnn_forward.1} parent=1 // pred_region
      %115 = dma.done [#allocation11], 16
    $region77: #{cifarcnn_forward.1} parent=1 // pred_fallthru
      _
    %v116 = vld [vmem:[%s0] sm:$0xff]
    %v117 = vld [vmem:[%s0 + $0x8] sm:$0xff]
    %v118 = vld [vmem:[%s0 + $0x10] sm:$0xff]
    %v119 = vld [vmem:[%s0 + $0x18] sm:$0xff]
    %v120 = vld [vmem:[%s0 + $0x20] sm:$0xff]
    %v121 = vld [vmem:[%s0 + $0x28] sm:$0xff]
    %v122 = vld [vmem:[%s0 + $0x30] sm:$0xff]
    %v123 = vld [vmem:[%s0 + $0x38] sm:$0xff]
    %v124 = vld [vmem:[%s0 + $0x40] sm:$0xff]
    %v125 = vld [vmem:[%s0 + $0x48] sm:$0xff]
    %v126 = vld [vmem:[%s0 + $0x50] sm:$0xff]
    %v127 = vld [vmem:[%s0 + $0x58] sm:$0xff]
    %v128 = vld [vmem:[%s0 + $0x60] sm:$0xff]
    %v129 = vld [vmem:[%s0 + $0x68] sm:$0xff]
    %v130 = vld [vmem:[%s0 + $0x70] sm:$0xff]
    %v131 = vld [vmem:[%s0 + $0x78] sm:$0xff]
    %v132 = vld [vmem:[%s0 + $0x80] sm:$0xff]
    %v133 = vld [vmem:[%s0 + $0x88] sm:$0xff]
    %v134 = vld [vmem:[%s0 + $0x90] sm:$0xff]
    %v135 = vld [vmem:[%s0 + $0x98] sm:$0xff]
    %v136 = vld [vmem:[%s0 + $0xa0] sm:$0xff]
    %v137 = vld [vmem:[%s0 + $0xa8] sm:$0xff]
    %v138 = vld [vmem:[%s0 + $0xb0] sm:$0xff]
    %v139 = vld [vmem:[%s0 + $0xb8] sm:$0xff]
    %v140 = vld [vmem:[%s0 + $0xc0] sm:$0xff]
    %v141 = vld [vmem:[%s0 + $0xc8] sm:$0xff]
    %v142 = vld [vmem:[%s0 + $0xd0] sm:$0xff]
    %v143 = vld [vmem:[%s0 + $0xd8] sm:$0xff]
    %v144 = vld [vmem:[%s1] sm:$0xff]
    %v145 = vld [vmem:[%s1 + $0x8] sm:$0xff]
    %v146 = vld [vmem:[%s1 + $0x10] sm:$0xff]
    %v147 = vld [vmem:[%s1 + $0x18] sm:$0xff]
    %v148 = vld [vmem:[%s1 + $0x20] sm:$0xff]
    %v149 = vld [vmem:[%s1 + $0x28] sm:$0xff]
    %v150 = vld [vmem:[%s1 + $0x30] sm:$0xff]
    %v151 = vld [vmem:[%s1 + $0x38] sm:$0xff]
    %v152 = vld [vmem:[%s1 + $0x40] sm:$0xff]
    %v153 = vld [vmem:[%s1 + $0x48] sm:$0xff]
    %v154 = vld [vmem:[%s1 + $0x50] sm:$0xff]
    %v155 = vld [vmem:[%s1 + $0x58] sm:$0xff]
    %v156 = vld [vmem:[%s1 + $0x60] sm:$0xff]
    %v157 = vld [vmem:[%s1 + $0x68] sm:$0xff]
    %v158 = vld [vmem:[%s1 + $0x70] sm:$0xff]
    %v159 = vld [vmem:[%s1 + $0x78] sm:$0xff]
    %v160 = vld [vmem:[%s1 + $0x80] sm:$0xff]
    %v161 = vld [vmem:[%s1 + $0x88] sm:$0xff]
    %v162 = vld [vmem:[%s1 + $0x90] sm:$0xff]
    %v163 = vld [vmem:[%s1 + $0x98] sm:$0xff]
    %v164 = vld [vmem:[%s1 + $0xa0] sm:$0xff]
    %v165 = vld [vmem:[%s1 + $0xa8] sm:$0xff]
    %v166 = vld [vmem:[%s1 + $0xb0] sm:$0xff]
    %v167 = vld [vmem:[%s1 + $0xb8] sm:$0xff]
    %v168 = vld [vmem:[%s0 + $0xe0] sm:$0xff]
    %s169 = scalar_lea.vmem %s1, 192
    %v170 = vld [vmem:[%s169] sm:$0xff]
    %v171 = vld [vmem:[%s169 + $0x8] sm:$0xff]
    %v172 = vld [vmem:[%s169 + $0x10] sm:$0xff]
    %v173 = vld [vmem:[%s169 + $0x18] sm:$0xff]
    %v174 = vld [vmem:[%s169 + $0x20] sm:$0xff]
    %v175 = vld [vmem:[%s169 + $0x28] sm:$0xff]
    %v176 = vld [vmem:[%s169 + $0x30] sm:$0xff]
    %v177 = vld [vmem:[%s169 + $0x38] sm:$0xff]
    %v178 = vld [vmem:[%s169 + $0x40] sm:$0xff]
    %v179 = vld [vmem:[%s169 + $0x48] sm:$0xff]
    %v180 = vld [vmem:[%s169 + $0x50] sm:$0xff]
    %v181 = vld [vmem:[%s169 + $0x58] sm:$0xff]
    %v182 = vld [vmem:[%s169 + $0x60] sm:$0xff]
    %v183 = vld [vmem:[%s169 + $0x68] sm:$0xff]
    %v184 = vld [vmem:[%s169 + $0x70] sm:$0xff]
    %v185 = vld [vmem:[%s169 + $0x78] sm:$0xff]
    %v186 = vld [vmem:[%s169 + $0x80] sm:$0xff]
    %v187 = vld [vmem:[%s169 + $0x88] sm:$0xff]
    %v188 = vld [vmem:[%s169 + $0x90] sm:$0xff]
    %v189 = vld [vmem:[%s169 + $0x98] sm:$0xff]
    %v190 = vld [vmem:[%s169 + $0xa0] sm:$0xff]
    %v191 = vld [vmem:[%s169 + $0xa8] sm:$0xff]
    %v192 = vld [vmem:[%s169 + $0xb0] sm:$0xff]
    %v193 = vld [vmem:[%s169 + $0xb8] sm:$0xff]
    %vm194 = vcmask 785408
    %v196 = vsel %vm194, %v117, 0
    %v199 = vsel %vm194, %v118, 0
    %v202 = vsel %vm194, %v119, 0
    %v205 = vsel %vm194, %v120, 0
    %v208 = vsel %vm194, %v121, 0
    %v211 = vsel %vm194, %v122, 0
    %v214 = vsel %vm194, %v123, 0
    %v217 = vsel %vm194, %v124, 0
    %v220 = vsel %vm194, %v125, 0
    %v223 = vsel %vm194, %v126, 0
    %v226 = vsel %vm194, %v127, 0
    %v229 = vsel %vm194, %v128, 0
    %v232 = vsel %vm194, %v129, 0
    %v235 = vsel %vm194, %v130, 0
    %v238 = vsel %vm194, %v131, 0
    %v241 = vsel %vm194, %v132, 0
    %v244 = vsel %vm194, %v133, 0
    %v247 = vsel %vm194, %v134, 0
    %v250 = vsel %vm194, %v135, 0
    %v253 = vsel %vm194, %v136, 0
    %v256 = vsel %vm194, %v137, 0
    %v259 = vsel %vm194, %v138, 0
    %v262 = vsel %vm194, %v139, 0
    %v265 = vsel %vm194, %v140, 0
    %v268 = vsel %vm194, %v141, 0
    %v271 = vsel %vm194, %v142, 0
    %v274 = vsel %vm194, %v143, 0
    %v277 = vsel %vm194, %v168, 0
    %279 = vmatprep.subr.mxu0 %v171
    %280 = vmatpush1.msra.mxu0 %v170
    %281 = vmatprep.subr.mxu0 %v173
    %282 = vmatpush1.msra.mxu0 %v172
    %283 = vmatprep.subr.mxu0 %v175
    %284 = vmatpush1.msra.mxu0 %v174
    %285 = vmatprep.subr.mxu0 %v177
    %286 = vmatpush1.msra.mxu0 %v176
    %287 = vmatprep.subr.mxu0 %v179
    %288 = vmatpush1.msra.mxu0 %v178
    %289 = vmatprep.subr.mxu0 %v181
    %290 = vmatpush1.msra.mxu0 %v180
    %291 = vmatprep.subr.mxu0 %v183
    %292 = vmatpush1.msra.mxu0 %v182
    %293 = vmatprep.subr.mxu0 %v185
    %294 = vmatpush1.msra.mxu0 %v184
    %295 = vmatprep.subr.mxu0 %v187
    %296 = vmatpush1.msra.mxu0 %v186
    %297 = vmatprep.subr.mxu0 %v189
    %298 = vmatpush1.msra.mxu0 %v188
    %299 = vmatprep.subr.mxu0 %v191
    %300 = vmatpush1.msra.mxu0 %v190
    %301 = vmatprep.subr.mxu0 %v193
    %302 = vmatpush1.msra.mxu0 %v192
    %303 = vmatprep.subr.mxu0 0.0
    %304 = vmatpush1.msra.mxu0 0.0
    %305 = vmatprep.subr.mxu0 0.0
    %306 = vmatpush1.msra.mxu0 0.0
    %307 = vmatprep.subr.mxu0 0.0
    %308 = vmatpush1.msra.mxu0 0.0
    %309 = vmatprep.subr.mxu0 0.0
    %310 = vmatpush1.msra.mxu0 0.0
    %311 = vmatprep.subr.mxu0 0.0
    %312 = vmatpush1.msra.mxu0 0.0
    %313 = vmatprep.subr.mxu0 0.0
    %314 = vmatpush1.msra.mxu0 0.0
    %315 = vmatprep.subr.mxu0 0.0
    %316 = vmatpush1.msra.mxu0 0.0
    %317 = vmatprep.subr.mxu0 0.0
    %318 = vmatpush1.msra.mxu0 0.0
    %319 = vmatprep.subr.mxu0 0.0
    %320 = vmatpush1.msra.mxu0 0.0
    %321 = vmatprep.subr.mxu0 0.0
    %322 = vmatpush1.msra.mxu0 0.0
    %323 = vmatprep.subr.mxu0 0.0
    %324 = vmatpush1.msra.mxu0 0.0
    %325 = vmatprep.subr.mxu0 0.0
    %326 = vmatpush1.msra.mxu0 0.0
    %327 = vmatprep.subr.mxu0 0.0
    %328 = vmatpush1.msra.mxu0 0.0
    %329 = vmatprep.subr.mxu0 0.0
    %330 = vmatpush1.msra.mxu0 0.0
    %331 = vmatprep.subr.mxu0 0.0
    %332 = vmatpush1.msra.mxu0 0.0
    %333 = vmatprep.subr.mxu0 0.0
    %334 = vmatpush1.msra.mxu0 0.0
    %335 = vmatprep.subr.mxu0 0.0
    %336 = vmatpush1.msra.mxu0 0.0
    %337 = vmatprep.subr.mxu0 0.0
    %338 = vmatpush1.msra.mxu0 0.0
    %339 = vmatprep.subr.mxu0 0.0
    %340 = vmatpush1.msra.mxu0 0.0
    %341 = vmatprep.subr.mxu0 0.0
    %342 = vmatpush1.msra.mxu0 0.0
    %343 = vmatprep.mubr.f32.mxu0 0.0
    %344 = vmatmul.mubr.f32.gmra.mrb[0].mxu0 %v196
    %v345 = vpop.f32.mrb[0].mxu0
    %v346 = vadd.f32 0.0, %v345
    %v347 = vpop.f32.mrb[0].mxu0
    %v348 = vadd.f32 0.0, %v347
    %349 = vmatprep.mubr.f32.mxu0 0.0
    %350 = vmatmul.mubr.f32.gmra.mrb[0].mxu0 %v199
    %v351 = vpop.f32.mrb[0].mxu0
    %v352 = vadd.f32 0.0, %v351
    %v353 = vpop.f32.mrb[0].mxu0
    %v354 = vadd.f32 0.0, %v353
    %355 = vmatprep.mubr.f32.mxu0 0.0
    %356 = vmatmul.mubr.f32.gmra.mrb[0].mxu0 %v202
    %v357 = vpop.f32.mrb[0].mxu0
    %v358 = vadd.f32 0.0, %v357
    %v359 = vpop.f32.mrb[0].mxu0
    %v360 = vadd.f32 0.0, %v359
    %361 = vmatprep.mubr.f32.mxu0 0.0
    %362 = vmatmul.mubr.f32.gmra.mrb[0].mxu0 %v205
    %v363 = vpop.f32.mrb[0].mxu0
    %v364 = vadd.f32 0.0, %v363
    %v365 = vpop.f32.mrb[0].mxu0
    %v366 = vadd.f32 0.0, %v365
    %367 = vmatprep.mubr.f32.mxu0 0.0
    %368 = vmatmul.mubr.f32.gmra.mrb[0].mxu0 %v208
    %v369 = vpop.f32.mrb[0].mxu0
    %v370 = vadd.f32 0.0, %v369
    %v371 = vpop.f32.mrb[0].mxu0
    %v372 = vadd.f32 0.0, %v371
    %373 = vmatprep.mubr.f32.mxu0 0.0
    %374 = vmatmul.mubr.f32.gmra.mrb[0].mxu0 %v211
    %v375 = vpop.f32.mrb[0].mxu0
    %v376 = vadd.f32 0.0, %v375
    %v377 = vpop.f32.mrb[0].mxu0
    %v378 = vadd.f32 0.0, %v377
    %379 = vmatprep.mubr.f32.mxu0 0.0
    %380 = vmatmul.mubr.f32.gmra.mrb[0].mxu0 %v214
    %v381 = vpop.f32.mrb[0].mxu0
    %v382 = vadd.f32 0.0, %v381
    %v383 = vpop.f32.mrb[0].mxu0
    %v384 = vadd.f32 0.0, %v383
    %385 = vmatprep.mubr.f32.mxu0 0.0
    %386 = vmatmul.mubr.f32.gmra.mrb[0].mxu0 %v217
    %v387 = vpop.f32.mrb[0].mxu0
    %v388 = vadd.f32 0.0, %v387
    %v389 = vpop.f32.mrb[0].mxu0
    %v390 = vadd.f32 0.0, %v389
    %391 = vmatprep.mubr.f32.mxu0 0.0
    %392 = vmatmul.mubr.f32.gmra.mrb[0].mxu0 %v220
    %v393 = vpop.f32.mrb[0].mxu0
    %v394 = vadd.f32 0.0, %v393
    %v395 = vpop.f32.mrb[0].mxu0
    %v396 = vadd.f32 0.0, %v395
    %397 = vmatprep.mubr.f32.mxu0 0.0
    %398 = vmatmul.mubr.f32.gmra.mrb[0].mxu0 %v223
    %v399 = vpop.f32.mrb[0].mxu0
    %v400 = vadd.f32 0.0, %v399
    %v401 = vpop.f32.mrb[0].mxu0
    %v402 = vadd.f32 0.0, %v401
    %403 = vmatprep.mubr.f32.mxu0 0.0
    %404 = vmatmul.mubr.f32.gmra.mrb[0].mxu0 %v226
    %v405 = vpop.f32.mrb[0].mxu0
    %v406 = vadd.f32 0.0, %v405
    %v407 = vpop.f32.mrb[0].mxu0
    %v408 = vadd.f32 0.0, %v407
    %409 = vmatprep.mubr.f32.mxu0 0.0
    %410 = vmatmul.mubr.f32.gmra.mrb[0].mxu0 %v229
    %v411 = vpop.f32.mrb[0].mxu0
    %v412 = vadd.f32 0.0, %v411
    %v413 = vpop.f32.mrb[0].mxu0
    %v414 = vadd.f32 0.0, %v413
    %415 = vmatprep.mubr.f32.mxu0 0.0
    %416 = vmatmul.mubr.f32.gmra.mrb[0].mxu0 %v232
    %v417 = vpop.f32.mrb[0].mxu0
    %v418 = vadd.f32 0.0, %v417
    %v419 = vpop.f32.mrb[0].mxu0
    %v420 = vadd.f32 0.0, %v419
    %421 = vmatprep.mubr.f32.mxu0 0.0
    %422 = vmatmul.mubr.f32.gmra.mrb[0].mxu0 %v235
    %v423 = vpop.f32.mrb[0].mxu0
    %v424 = vadd.f32 0.0, %v423
    %v425 = vpop.f32.mrb[0].mxu0
    %v426 = vadd.f32 0.0, %v425
    %427 = vmatprep.mubr.f32.mxu0 0.0
    %428 = vmatmul.mubr.f32.gmra.mrb[0].mxu0 %v238
    %v429 = vpop.f32.mrb[0].mxu0
    %v430 = vadd.f32 0.0, %v429
    %v431 = vpop.f32.mrb[0].mxu0
    %v432 = vadd.f32 0.0, %v431
    %433 = vmatprep.mubr.f32.mxu0 0.0
    %434 = vmatmul.mubr.f32.gmra.mrb[0].mxu0 %v241
    %v435 = vpop.f32.mrb[0].mxu0
    %v436 = vadd.f32 0.0, %v435
    %v437 = vpop.f32.mrb[0].mxu0
    %v438 = vadd.f32 0.0, %v437
    %439 = vmatprep.mubr.f32.mxu0 0.0
    %440 = vmatmul.mubr.f32.gmra.mrb[0].mxu0 %v244
    %v441 = vpop.f32.mrb[0].mxu0
    %v442 = vadd.f32 0.0, %v441
    %v443 = vpop.f32.mrb[0].mxu0
    %v444 = vadd.f32 0.0, %v443
    %445 = vmatprep.mubr.f32.mxu0 0.0
    %446 = vmatmul.mubr.f32.gmra.mrb[0].mxu0 %v247
    %v447 = vpop.f32.mrb[0].mxu0
    %v448 = vadd.f32 0.0, %v447
    %v449 = vpop.f32.mrb[0].mxu0
    %v450 = vadd.f32 0.0, %v449
    %451 = vmatprep.mubr.f32.mxu0 0.0
    %452 = vmatmul.mubr.f32.gmra.mrb[0].mxu0 %v250
    %v453 = vpop.f32.mrb[0].mxu0
    %v454 = vadd.f32 0.0, %v453
    %v455 = vpop.f32.mrb[0].mxu0
    %v456 = vadd.f32 0.0, %v455
    %457 = vmatprep.mubr.f32.mxu0 0.0
    %458 = vmatmul.mubr.f32.gmra.mrb[0].mxu0 %v253
    %v459 = vpop.f32.mrb[0].mxu0
    %v460 = vadd.f32 0.0, %v459
    %v461 = vpop.f32.mrb[0].mxu0
    %v462 = vadd.f32 0.0, %v461
    %463 = vmatprep.mubr.f32.mxu0 0.0
    %464 = vmatmul.mubr.f32.gmra.mrb[0].mxu0 %v256
    %v465 = vpop.f32.mrb[0].mxu0
    %v466 = vadd.f32 0.0, %v465
    %v467 = vpop.f32.mrb[0].mxu0
    %v468 = vadd.f32 0.0, %v467
    %469 = vmatprep.mubr.f32.mxu0 0.0
    %470 = vmatmul.mubr.f32.gmra.mrb[0].mxu0 %v259
    %v471 = vpop.f32.mrb[0].mxu0
    %v472 = vadd.f32 0.0, %v471
    %v473 = vpop.f32.mrb[0].mxu0
    %v474 = vadd.f32 0.0, %v473
    %475 = vmatprep.mubr.f32.mxu0 0.0
    %476 = vmatmul.mubr.f32.gmra.mrb[0].mxu0 %v262
    %v477 = vpop.f32.mrb[0].mxu0
    %v478 = vadd.f32 0.0, %v477
    %v479 = vpop.f32.mrb[0].mxu0
    %v480 = vadd.f32 0.0, %v479
    %481 = vmatprep.mubr.f32.mxu0 0.0
    %482 = vmatmul.mubr.f32.gmra.mrb[0].mxu0 %v265
    %v483 = vpop.f32.mrb[0].mxu0
    %v484 = vadd.f32 0.0, %v483
    %v485 = vpop.f32.mrb[0].mxu0
    %v486 = vadd.f32 0.0, %v485
    %487 = vmatprep.mubr.f32.mxu0 0.0
    %488 = vmatmul.mubr.f32.gmra.mrb[0].mxu0 %v268
    %v489 = vpop.f32.mrb[0].mxu0
    %v490 = vadd.f32 0.0, %v489
    %v491 = vpop.f32.mrb[0].mxu0
    %v492 = vadd.f32 0.0, %v491
    %493 = vmatprep.mubr.f32.mxu0 0.0
    %494 = vmatmul.mubr.f32.gmra.mrb[0].mxu0 %v271
    %v495 = vpop.f32.mrb[0].mxu0
    %v496 = vadd.f32 0.0, %v495
    %v497 = vpop.f32.mrb[0].mxu0
    %v498 = vadd.f32 0.0, %v497
    %499 = vmatprep.mubr.f32.mxu0 0.0
    %500 = vmatmul.mubr.f32.gmra.mrb[0].mxu0 %v274
    %v501 = vpop.f32.mrb[0].mxu0
    %v502 = vadd.f32 0.0, %v501
    %v503 = vpop.f32.mrb[0].mxu0
    %v504 = vadd.f32 0.0, %v503
    %505 = vmatprep.mubr.f32.mxu0 0.0
    %506 = vmatmul.mubr.f32.gmra.mrb[0].mxu0 %v277
    %v507 = vpop.f32.mrb[0].mxu0
    %v508 = vadd.f32 0.0, %v507
    %v509 = vpop.f32.mrb[0].mxu0
    %v510 = vadd.f32 0.0, %v509
    %511 = vdwg.mxu0
    %v513 = vsel %vm194, %v116, 0
    %515 = vmatprep.subr.mxu0 %v145
    %516 = vmatpush1.msra.mxu0 %v144
    %517 = vmatprep.subr.mxu0 %v147
    %518 = vmatpush1.msra.mxu0 %v146
    %519 = vmatprep.subr.mxu0 %v149
    %520 = vmatpush1.msra.mxu0 %v148
    %521 = vmatprep.subr.mxu0 %v151
    %522 = vmatpush1.msra.mxu0 %v150
    %523 = vmatprep.subr.mxu0 %v153
    %524 = vmatpush1.msra.mxu0 %v152
    %525 = vmatprep.subr.mxu0 %v155
    %526 = vmatpush1.msra.mxu0 %v154
    %527 = vmatprep.subr.mxu0 %v157
    %528 = vmatpush1.msra.mxu0 %v156
    %529 = vmatprep.subr.mxu0 %v159
    %530 = vmatpush1.msra.mxu0 %v158
    %531 = vmatprep.subr.mxu0 %v161
    %532 = vmatpush1.msra.mxu0 %v160
    %533 = vmatprep.subr.mxu0 %v163
    %534 = vmatpush1.msra.mxu0 %v162
    %535 = vmatprep.subr.mxu0 %v165
    %536 = vmatpush1.msra.mxu0 %v164
    %537 = vmatprep.subr.mxu0 %v167
    %538 = vmatpush1.msra.mxu0 %v166
    %539 = vmatprep.subr.mxu0 0.0
    %540 = vmatpush1.msra.mxu0 0.0
    %541 = vmatprep.subr.mxu0 0.0
    %542 = vmatpush1.msra.mxu0 0.0
    %543 = vmatprep.subr.mxu0 0.0
    %544 = vmatpush1.msra.mxu0 0.0
    %545 = vmatprep.subr.mxu0 0.0
    %546 = vmatpush1.msra.mxu0 0.0
    %547 = vmatprep.subr.mxu0 0.0
    %548 = vmatpush1.msra.mxu0 0.0
    %549 = vmatprep.subr.mxu0 0.0
    %550 = vmatpush1.msra.mxu0 0.0
    %551 = vmatprep.subr.mxu0 0.0
    %552 = vmatpush1.msra.mxu0 0.0
    %553 = vmatprep.subr.mxu0 0.0
    %554 = vmatpush1.msra.mxu0 0.0
    %555 = vmatprep.subr.mxu0 0.0
    %556 = vmatpush1.msra.mxu0 0.0
    %557 = vmatprep.subr.mxu0 0.0
    %558 = vmatpush1.msra.mxu0 0.0
    %559 = vmatprep.subr.mxu0 0.0
    %560 = vmatpush1.msra.mxu0 0.0
    %561 = vmatprep.subr.mxu0 0.0
    %562 = vmatpush1.msra.mxu0 0.0
    %563 = vmatprep.subr.mxu0 0.0
    %564 = vmatpush1.msra.mxu0 0.0
    %565 = vmatprep.subr.mxu0 0.0
    %566 = vmatpush1.msra.mxu0 0.0
    %567 = vmatprep.subr.mxu0 0.0
    %568 = vmatpush1.msra.mxu0 0.0
    %569 = vmatprep.subr.mxu0 0.0
    %570 = vmatpush1.msra.mxu0 0.0
    %571 = vmatprep.subr.mxu0 0.0
    %572 = vmatpush1.msra.mxu0 0.0
    %573 = vmatprep.subr.mxu0 0.0
    %574 = vmatpush1.msra.mxu0 0.0
    %575 = vmatprep.subr.mxu0 0.0
    %576 = vmatpush1.msra.mxu0 0.0
    %577 = vmatprep.subr.mxu0 0.0
    %578 = vmatpush1.msra.mxu0 0.0
    %579 = vmatprep.mubr.f32.mxu0 0.0
    %580 = vmatmul.mubr.f32.gmra.mrb[0].mxu0 %v513
    %v581 = vpop.f32.mrb[0].mxu0
    %v582 = vadd.f32 %v346, %v581
    %v583 = vpop.f32.mrb[0].mxu0
    %v584 = vadd.f32 %v348, %v583
    %585 = vmatprep.mubr.f32.mxu0 0.0
    %586 = vmatmul.mubr.f32.gmra.mrb[0].mxu0 %v196
    %v587 = vpop.f32.mrb[0].mxu0
    %v588 = vadd.f32 %v352, %v587
    %v589 = vpop.f32.mrb[0].mxu0
    %v590 = vadd.f32 %v354, %v589
    %591 = vmatprep.mubr.f32.mxu0 0.0
    %592 = vmatmul.mubr.f32.gmra.mrb[0].mxu0 %v199
    %v593 = vpop.f32.mrb[0].mxu0
    %v594 = vadd.f32 %v358, %v593
    %v595 = vpop.f32.mrb[0].mxu0
    %v596 = vadd.f32 %v360, %v595
    %597 = vmatprep.mubr.f32.mxu0 0.0
    %598 = vmatmul.mubr.f32.gmra.mrb[0].mxu0 %v202
    %v599 = vpop.f32.mrb[0].mxu0
    %v600 = vadd.f32 %v364, %v599
    %v601 = vpop.f32.mrb[0].mxu0
    %v602 = vadd.f32 %v366, %v601
    %603 = vmatprep.mubr.f32.mxu0 0.0
    %604 = vmatmul.mubr.f32.gmra.mrb[0].mxu0 %v205
    %v605 = vpop.f32.mrb[0].mxu0
    %v606 = vadd.f32 %v370, %v605
    %v607 = vpop.f32.mrb[0].mxu0
    %v608 = vadd.f32 %v372, %v607
    %609 = vmatprep.mubr.f32.mxu0 0.0
    %610 = vmatmul.mubr.f32.gmra.mrb[0].mxu0 %v208
    %v611 = vpop.f32.mrb[0].mxu0
    %v612 = vadd.f32 %v376, %v611
    %v613 = vpop.f32.mrb[0].mxu0
    %v614 = vadd.f32 %v378, %v613
    %615 = vmatprep.mubr.f32.mxu0 0.0
    %616 = vmatmul.mubr.f32.gmra.mrb[0].mxu0 %v211
    %v617 = vpop.f32.mrb[0].mxu0
    %v618 = vadd.f32 %v382, %v617
    %v619 = vpop.f32.mrb[0].mxu0
    %v620 = vadd.f32 %v384, %v619
    %621 = vmatprep.mubr.f32.mxu0 0.0
    %622 = vmatmul.mubr.f32.gmra.mrb[0].mxu0 %v214
    %v623 = vpop.f32.mrb[0].mxu0
    %v624 = vadd.f32 %v388, %v623
    %v625 = vpop.f32.mrb[0].mxu0
    %v626 = vadd.f32 %v390, %v625
    %627 = vmatprep.mubr.f32.mxu0 0.0
    %628 = vmatmul.mubr.f32.gmra.mrb[0].mxu0 %v217
    %v629 = vpop.f32.mrb[0].mxu0
    %v630 = vadd.f32 %v394, %v629
    %v631 = vpop.f32.mrb[0].mxu0
    %v632 = vadd.f32 %v396, %v631
    %633 = vmatprep.mubr.f32.mxu0 0.0
    %634 = vmatmul.mubr.f32.gmra.mrb[0].mxu0 %v220
    %v635 = vpop.f32.mrb[0].mxu0
    %v636 = vadd.f32 %v400, %v635
    %v637 = vpop.f32.mrb[0].mxu0
    %v638 = vadd.f32 %v402, %v637
    %639 = vmatprep.mubr.f32.mxu0 0.0
    %640 = vmatmul.mubr.f32.gmra.mrb[0].mxu0 %v223
    %v641 = vpop.f32.mrb[0].mxu0
    %v642 = vadd.f32 %v406, %v641
    %v643 = vpop.f32.mrb[0].mxu0
    %v644 = vadd.f32 %v408, %v643
    %645 = vmatprep.mubr.f32.mxu0 0.0
    %646 = vmatmul.mubr.f32.gmra.mrb[0].mxu0 %v226
    %v647 = vpop.f32.mrb[0].mxu0
    %v648 = vadd.f32 %v412, %v647
    %v649 = vpop.f32.mrb[0].mxu0
    %v650 = vadd.f32 %v414, %v649
    %651 = vmatprep.mubr.f32.mxu0 0.0
    %652 = vmatmul.mubr.f32.gmra.mrb[0].mxu0 %v229
    %v653 = vpop.f32.mrb[0].mxu0
    %v654 = vadd.f32 %v418, %v653
    %v655 = vpop.f32.mrb[0].mxu0
    %v656 = vadd.f32 %v420, %v655
    %657 = vmatprep.mubr.f32.mxu0 0.0
    %658 = vmatmul.mubr.f32.gmra.mrb[0].mxu0 %v232
    %v659 = vpop.f32.mrb[0].mxu0
    %v660 = vadd.f32 %v424, %v659
    %v661 = vpop.f32.mrb[0].mxu0
    %v662 = vadd.f32 %v426, %v661
    %663 = vmatprep.mubr.f32.mxu0 0.0
    %664 = vmatmul.mubr.f32.gmra.mrb[0].mxu0 %v235
    %v665 = vpop.f32.mrb[0].mxu0
    %v666 = vadd.f32 %v430, %v665
    %v667 = vpop.f32.mrb[0].mxu0
    %v668 = vadd.f32 %v432, %v667
    %669 = vmatprep.mubr.f32.mxu0 0.0
    %670 = vmatmul.mubr.f32.gmra.mrb[0].mxu0 %v238
    %v671 = vpop.f32.mrb[0].mxu0
    %v672 = vadd.f32 %v436, %v671
    %v673 = vpop.f32.mrb[0].mxu0
    %v674 = vadd.f32 %v438, %v673
    %675 = vmatprep.mubr.f32.mxu0 0.0
    %676 = vmatmul.mubr.f32.gmra.mrb[0].mxu0 %v241
    %v677 = vpop.f32.mrb[0].mxu0
    %v678 = vadd.f32 %v442, %v677
    %v679 = vpop.f32.mrb[0].mxu0
    %v680 = vadd.f32 %v444, %v679
    %681 = vmatprep.mubr.f32.mxu0 0.0
    %682 = vmatmul.mubr.f32.gmra.mrb[0].mxu0 %v244
    %v683 = vpop.f32.mrb[0].mxu0
    %v684 = vadd.f32 %v448, %v683
    %v685 = vpop.f32.mrb[0].mxu0
    %v686 = vadd.f32 %v450, %v685
    %687 = vmatprep.mubr.f32.mxu0 0.0
    %688 = vmatmul.mubr.f32.gmra.mrb[0].mxu0 %v247
    %v689 = vpop.f32.mrb[0].mxu0
    %v690 = vadd.f32 %v454, %v689
    %v691 = vpop.f32.mrb[0].mxu0
    %v692 = vadd.f32 %v456, %v691
    %693 = vmatprep.mubr.f32.mxu0 0.0
    %694 = vmatmul.mubr.f32.gmra.mrb[0].mxu0 %v250
    %v695 = vpop.f32.mrb[0].mxu0
    %v696 = vadd.f32 %v460, %v695
    %v697 = vpop.f32.mrb[0].mxu0
    %v698 = vadd.f32 %v462, %v697
    %699 = vmatprep.mubr.f32.mxu0 0.0
    %700 = vmatmul.mubr.f32.gmra.mrb[0].mxu0 %v253
    %v701 = vpop.f32.mrb[0].mxu0
    %v702 = vadd.f32 %v466, %v701
    %v703 = vpop.f32.mrb[0].mxu0
    %v704 = vadd.f32 %v468, %v703
    %705 = vmatprep.mubr.f32.mxu0 0.0
    %706 = vmatmul.mubr.f32.gmra.mrb[0].mxu0 %v256
    %v707 = vpop.f32.mrb[0].mxu0
    %v708 = vadd.f32 %v472, %v707
    %v709 = vpop.f32.mrb[0].mxu0
    %v710 = vadd.f32 %v474, %v709
    %711 = vmatprep.mubr.f32.mxu0 0.0
    %712 = vmatmul.mubr.f32.gmra.mrb[0].mxu0 %v259
    %v713 = vpop.f32.mrb[0].mxu0
    %v714 = vadd.f32 %v478, %v713
    %v715 = vpop.f32.mrb[0].mxu0
    %v716 = vadd.f32 %v480, %v715
    %717 = vmatprep.mubr.f32.mxu0 0.0
    %718 = vmatmul.mubr.f32.gmra.mrb[0].mxu0 %v262
    %v719 = vpop.f32.mrb[0].mxu0
    %v720 = vadd.f32 %v484, %v719
    %v721 = vpop.f32.mrb[0].mxu0
    %v722 = vadd.f32 %v486, %v721
    %723 = vmatprep.mubr.f32.mxu0 0.0
    %724 = vmatmul.mubr.f32.gmra.mrb[0].mxu0 %v265
    %v725 = vpop.f32.mrb[0].mxu0
    %v726 = vadd.f32 %v490, %v725
    %v727 = vpop.f32.mrb[0].mxu0
    %v728 = vadd.f32 %v492, %v727
    %729 = vmatprep.mubr.f32.mxu0 0.0
    %730 = vmatmul.mubr.f32.gmra.mrb[0].mxu0 %v268
    %v731 = vpop.f32.mrb[0].mxu0
    %v732 = vadd.f32 %v496, %v731
    %v733 = vpop.f32.mrb[0].mxu0
    %v734 = vadd.f32 %v498, %v733
    %735 = vmatprep.mubr.f32.mxu0 0.0
    %736 = vmatmul.mubr.f32.gmra.mrb[0].mxu0 %v271
    %v737 = vpop.f32.mrb[0].mxu0
    %v738 = vadd.f32 %v502, %v737
    %v739 = vpop.f32.mrb[0].mxu0
    %v740 = vadd.f32 %v504, %v739
    %741 = vmatprep.mubr.f32.mxu0 0.0
    %742 = vmatmul.mubr.f32.gmra.mrb[0].mxu0 %v274
    %v743 = vpop.f32.mrb[0].mxu0
    %v744 = vadd.f32 %v508, %v743
    %v745 = vpop.f32.mrb[0].mxu0
    %v746 = vadd.f32 %v510, %v745
    %747 = vdwg.mxu0
    %v748 = vld [vmem:[%s0 + $0x10] sm:$0xff]
    %v749 = vld [vmem:[%s0 + $0x18] sm:$0xff]
    %v750 = vld [vmem:[%s0 + $0x20] sm:$0xff]
    %v751 = vld [vmem:[%s0 + $0x28] sm:$0xff]
    %v752 = vld [vmem:[%s0 + $0x30] sm:$0xff]
    %v753 = vld [vmem:[%s0 + $0x38] sm:$0xff]
    %v754 = vld [vmem:[%s0 + $0x40] sm:$0xff]
    %v755 = vld [vmem:[%s0 + $0x48] sm:$0xff]
    %v756 = vld [vmem:[%s0 + $0x50] sm:$0xff]
    %v757 = vld [vmem:[%s0 + $0x58] sm:$0xff]
    %v758 = vld [vmem:[%s0 + $0x60] sm:$0xff]
    %v759 = vld [vmem:[%s0 + $0x68] sm:$0xff]
    %v760 = vld [vmem:[%s0 + $0x70] sm:$0xff]
    %v761 = vld [vmem:[%s0 + $0x78] sm:$0xff]
    %v762 = vld [vmem:[%s0 + $0x80] sm:$0xff]
    %v763 = vld [vmem:[%s0 + $0x88] sm:$0xff]
    %v764 = vld [vmem:[%s0 + $0x90] sm:$0xff]
    %v765 = vld [vmem:[%s0 + $0x98] sm:$0xff]
    %v766 = vld [vmem:[%s0 + $0xa0] sm:$0xff]
    %v767 = vld [vmem:[%s0 + $0xa8] sm:$0xff]
    %v768 = vld [vmem:[%s0 + $0xb0] sm:$0xff]
    %v769 = vld [vmem:[%s0 + $0xb8] sm:$0xff]
    %v770 = vld [vmem:[%s0 + $0xc0] sm:$0xff]
    %v771 = vld [vmem:[%s0 + $0xc8] sm:$0xff]
    %v772 = vld [vmem:[%s0 + $0xd0] sm:$0xff]
    %v773 = vld [vmem:[%s0 + $0xd8] sm:$0xff]
    %v774 = vld [vmem:[%s0 + $0xe0] sm:$0xff]
    %v775 = vld [vmem:[%s0 + $0xe8] sm:$0xff]
    %s776 = scalar_lea.vmem %s1, 384
    %v777 = vld [vmem:[%s776] sm:$0xff]
    %v778 = vld [vmem:[%s776 + $0x8] sm:$0xff]
    %v779 = vld [vmem:[%s776 + $0x10] sm:$0xff]
    %v780 = vld [vmem:[%s776 + $0x18] sm:$0xff]
    %v781 = vld [vmem:[%s776 + $0x20] sm:$0xff]
    %v782 = vld [vmem:[%s776 + $0x28] sm:$0xff]
    %v783 = vld [vmem:[%s776 + $0x30] sm:$0xff]
    %v784 = vld [vmem:[%s776 + $0x38] sm:$0xff]
    %v785 = vld [vmem:[%s776 + $0x40] sm:$0xff]
    %v786 = vld [vmem:[%s776 + $0x48] sm:$0xff]
    %v787 = vld [vmem:[%s776 + $0x50] sm:$0xff]
    %v788 = vld [vmem:[%s776 + $0x58] sm:$0xff]
    %v789 = vld [vmem:[%s776 + $0x60] sm:$0xff]
    %v790 = vld [vmem:[%s776 + $0x68] sm:$0xff]
    %v791 = vld [vmem:[%s776 + $0x70] sm:$0xff]
    %v792 = vld [vmem:[%s776 + $0x78] sm:$0xff]
    %v793 = vld [vmem:[%s776 + $0x80] sm:$0xff]
    %v794 = vld [vmem:[%s776 + $0x88] sm:$0xff]
    %v795 = vld [vmem:[%s776 + $0x90] sm:$0xff]
    %v796 = vld [vmem:[%s776 + $0x98] sm:$0xff]
    %v797 = vld [vmem:[%s776 + $0xa0] sm:$0xff]
    %v798 = vld [vmem:[%s776 + $0xa8] sm:$0xff]
    %v799 = vld [vmem:[%s776 + $0xb0] sm:$0xff]
    %v800 = vld [vmem:[%s776 + $0xb8] sm:$0xff]
    %v802 = vsel %vm194, %v748, 0
    %v805 = vsel %vm194, %v749, 0
    %v808 = vsel %vm194, %v750, 0
    %v811 = vsel %vm194, %v751, 0
    %v814 = vsel %vm194, %v752, 0
    %v817 = vsel %vm194, %v753, 0
    %v820 = vsel %vm194, %v754, 0
    %v823 = vsel %vm194, %v755, 0
    %v826 = vsel %vm194, %v756, 0
    %v829 = vsel %vm194, %v757, 0
    %v832 = vsel %vm194, %v758, 0
    %v835 = vsel %vm194, %v759, 0
    %v838 = vsel %vm194, %v760, 0
    %v841 = vsel %vm194, %v761, 0
    %v844 = vsel %vm194, %v762, 0
    %v847 = vsel %vm194, %v763, 0
    %v850 = vsel %vm194, %v764, 0
    %v853 = vsel %vm194, %v765, 0
    %v856 = vsel %vm194, %v766, 0
    %v859 = vsel %vm194, %v767, 0
    %v862 = vsel %vm194, %v768, 0
    %v865 = vsel %vm194, %v769, 0
    %v868 = vsel %vm194, %v770, 0
    %v871 = vsel %vm194, %v771, 0
    %v874 = vsel %vm194, %v772, 0
    %v877 = vsel %vm194, %v773, 0
    %v880 = vsel %vm194, %v774, 0
    %v883 = vsel %vm194, %v775, 0
    %885 = vmatprep.subr.mxu0 %v778
    %886 = vmatpush1.msra.mxu0 %v777
    %887 = vmatprep.subr.mxu0 %v780
    %888 = vmatpush1.msra.mxu0 %v779
    %889 = vmatprep.subr.mxu0 %v782
    %890 = vmatpush1.msra.mxu0 %v781
    %891 = vmatprep.subr.mxu0 %v784
    %892 = vmatpush1.msra.mxu0 %v783
    %893 = vmatprep.subr.mxu0 %v786
    %894 = vmatpush1.msra.mxu0 %v785
    %895 = vmatprep.subr.mxu0 %v788
    %896 = vmatpush1.msra.mxu0 %v787
    %897 = vmatprep.subr.mxu0 %v790
    %898 = vmatpush1.msra.mxu0 %v789
    %899 = vmatprep.subr.mxu0 %v792
    %900 = vmatpush1.msra.mxu0 %v791
    %901 = vmatprep.subr.mxu0 %v794
    %902 = vmatpush1.msra.mxu0 %v793
    %903 = vmatprep.subr.mxu0 %v796
    %904 = vmatpush1.msra.mxu0 %v795
    %905 = vmatprep.subr.mxu0 %v798
    %906 = vmatpush1.msra.mxu0 %v797
    %907 = vmatprep.subr.mxu0 %v800
    %908 = vmatpush1.msra.mxu0 %v799
    %909 = vmatprep.subr.mxu0 0.0
    %910 = vmatpush1.msra.mxu0 0.0
    %911 = vmatprep.subr.mxu0 0.0
    %912 = vmatpush1.msra.mxu0 0.0
    %913 = vmatprep.subr.mxu0 0.0
    %914 = vmatpush1.msra.mxu0 0.0
    %915 = vmatprep.subr.mxu0 0.0
    %916 = vmatpush1.msra.mxu0 0.0
    %917 = vmatprep.subr.mxu0 0.0
    %918 = vmatpush1.msra.mxu0 0.0
    %919 = vmatprep.subr.mxu0 0.0
    %920 = vmatpush1.msra.mxu0 0.0
    %921 = vmatprep.subr.mxu0 0.0
    %922 = vmatpush1.msra.mxu0 0.0
    %923 = vmatprep.subr.mxu0 0.0
    %924 = vmatpush1.msra.mxu0 0.0
    %925 = vmatprep.subr.mxu0 0.0
    %926 = vmatpush1.msra.mxu0 0.0
    %927 = vmatprep.subr.mxu0 0.0
    %928 = vmatpush1.msra.mxu0 0.0
    %929 = vmatprep.subr.mxu0 0.0
    %930 = vmatpush1.msra.mxu0 0.0
    %931 = vmatprep.subr.mxu0 0.0
    %932 = vmatpush1.msra.mxu0 0.0
    %933 = vmatprep.subr.mxu0 0.0
    %934 = vmatpush1.msra.mxu0 0.0
    %935 = vmatprep.subr.mxu0 0.0
    %936 = vmatpush1.msra.mxu0 0.0
    %937 = vmatprep.subr.mxu0 0.0
    %938 = vmatpush1.msra.mxu0 0.0
    %939 = vmatprep.subr.mxu0 0.0
    %940 = vmatpush1.msra.mxu0 0.0
    %941 = vmatprep.subr.mxu0 0.0
    %942 = vmatpush1.msra.mxu0 0.0
    %943 = vmatprep.subr.mxu0 0.0
    %944 = vmatpush1.msra.mxu0 0.0
    %945 = vmatprep.subr.mxu0 0.0
    %946 = vmatpush1.msra.mxu0 0.0
    %947 = vmatprep.subr.mxu0 0.0
    %948 = vmatpush1.msra.mxu0 0.0
    %949 = vmatprep.mubr.f32.mxu0 0.0
    %950 = vmatmul.mubr.f32.gmra.mrb[0].mxu0 %v802
    %v951 = vpop.f32.mrb[0].mxu0
    %v952 = vadd.f32 0.0, %v951
    %v953 = vpop.f32.mrb[0].mxu0
    %v954 = vadd.f32 0.0, %v953
    %955 = vmatprep.mubr.f32.mxu0 0.0
    %956 = vmatmul.mubr.f32.gmra.mrb[0].mxu0 %v805
    %v957 = vpop.f32.mrb[0].mxu0
    %v958 = vadd.f32 0.0, %v957
    %v959 = vpop.f32.mrb[0].mxu0
    %v960 = vadd.f32 0.0, %v959
    %961 = vmatprep.mubr.f32.mxu0 0.0
    %962 = vmatmul.mubr.f32.gmra.mrb[0].mxu0 %v808
    %v963 = vpop.f32.mrb[0].mxu0
    %v964 = vadd.f32 0.0, %v963
    %v965 = vpop.f32.mrb[0].mxu0
    %v966 = vadd.f32 0.0, %v965
    %967 = vmatprep.mubr.f32.mxu0 0.0
    %968 = vmatmul.mubr.f32.gmra.mrb[0].mxu0 %v811
    %v969 = vpop.f32.mrb[0].mxu0
    %v970 = vadd.f32 0.0, %v969
    %v971 = vpop.f32.mrb[0].mxu0
    %v972 = vadd.f32 0.0, %v971
    %973 = vmatprep.mubr.f32.mxu0 0.0
    %974 = vmatmul.mubr.f32.gmra.mrb[0].mxu0 %v814
    %v975 = vpop.f32.mrb[0].mxu0
    %v976 = vadd.f32 0.0, %v975
    %v977 = vpop.f32.mrb[0].mxu0
    %v978 = vadd.f32 0.0, %v977
    %979 = vmatprep.mubr.f32.mxu0 0.0
    %980 = vmatmul.mubr.f32.gmra.mrb[0].mxu0 %v817
    %v981 = vpop.f32.mrb[0].mxu0
    %v982 = vadd.f32 0.0, %v981
    %v983 = vpop.f32.mrb[0].mxu0
    %v984 = vadd.f32 0.0, %v983
    %985 = vmatprep.mubr.f32.mxu0 0.0
    %986 = vmatmul.mubr.f32.gmra.mrb[0].mxu0 %v820
    %v987 = vpop.f32.mrb[0].mxu0
    %v988 = vadd.f32 0.0, %v987
    %v989 = vpop.f32.mrb[0].mxu0
    %v990 = vadd.f32 0.0, %v989
    %991 = vmatprep.mubr.f32.mxu0 0.0
    %992 = vmatmul.mubr.f32.gmra.mrb[0].mxu0 %v823
    %v993 = vpop.f32.mrb[0].mxu0
    %v994 = vadd.f32 0.0, %v993
    %v995 = vpop.f32.mrb[0].mxu0
    %v996 = vadd.f32 0.0, %v995
    %997 = vmatprep.mubr.f32.mxu0 0.0
    %998 = vmatmul.mubr.f32.gmra.mrb[0].mxu0 %v826
    %v999 = vpop.f32.mrb[0].mxu0
    %v1000 = vadd.f32 0.0, %v999
    %v1001 = vpop.f32.mrb[0].mxu0
    %v1002 = vadd.f32 0.0, %v1001
    %1003 = vmatprep.mubr.f32.mxu0 0.0
    %1004 = vmatmul.mubr.f32.gmra.mrb[0].mxu0 %v829
    %v1005 = vpop.f32.mrb[0].mxu0
    %v1006 = vadd.f32 0.0, %v1005
    %v1007 = vpop.f32.mrb[0].mxu0
    %v1008 = vadd.f32 0.0, %v1007
    %1009 = vmatprep.mubr.f32.mxu0 0.0
    %1010 = vmatmul.mubr.f32.gmra.mrb[0].mxu0 %v832
    %v1011 = vpop.f32.mrb[0].mxu0
    %v1012 = vadd.f32 0.0, %v1011
    %v1013 = vpop.f32.mrb[0].mxu0
    %v1014 = vadd.f32 0.0, %v1013
    %1015 = vmatprep.mubr.f32.mxu0 0.0
    %1016 = vmatmul.mubr.f32.gmra.mrb[0].mxu0 %v835
    %v1017 = vpop.f32.mrb[0].mxu0
    %v1018 = vadd.f32 0.0, %v1017
    %v1019 = vpop.f32.mrb[0].mxu0
    %v1020 = vadd.f32 0.0, %v1019
    %1021 = vmatprep.mubr.f32.mxu0 0.0
    %1022 = vmatmul.mubr.f32.gmra.mrb[0].mxu0 %v838
    %v1023 = vpop.f32.mrb[0].mxu0
    %v1024 = vadd.f32 0.0, %v1023
    %v1025 = vpop.f32.mrb[0].mxu0
    %v1026 = vadd.f32 0.0, %v1025
    %1027 = vmatprep.mubr.f32.mxu0 0.0
    %1028 = vmatmul.mubr.f32.gmra.mrb[0].mxu0 %v841
    %v1029 = vpop.f32.mrb[0].mxu0
    %v1030 = vadd.f32 0.0, %v1029
    %v1031 = vpop.f32.mrb[0].mxu0
    %v1032 = vadd.f32 0.0, %v1031
    %1033 = vmatprep.mubr.f32.mxu0 0.0
    %1034 = vmatmul.mubr.f32.gmra.mrb[0].mxu0 %v844
    %v1035 = vpop.f32.mrb[0].mxu0
    %v1036 = vadd.f32 0.0, %v1035
    %v1037 = vpop.f32.mrb[0].mxu0
    %v1038 = vadd.f32 0.0, %v1037
    %1039 = vmatprep.mubr.f32.mxu0 0.0
    %1040 = vmatmul.mubr.f32.gmra.mrb[0].mxu0 %v847
    %v1041 = vpop.f32.mrb[0].mxu0
    %v1042 = vadd.f32 0.0, %v1041
    %v1043 = vpop.f32.mrb[0].mxu0
    %v1044 = vadd.f32 0.0, %v1043
    %1045 = vmatprep.mubr.f32.mxu0 0.0
    %1046 = vmatmul.mubr.f32.gmra.mrb[0].mxu0 %v850
    %v1047 = vpop.f32.mrb[0].mxu0
    %v1048 = vadd.f32 0.0, %v1047
    %v1049 = vpop.f32.mrb[0].mxu0
    %v1050 = vadd.f32 0.0, %v1049
    %1051 = vmatprep.mubr.f32.mxu0 0.0
    %1052 = vmatmul.mubr.f32.gmra.mrb[0].mxu0 %v853
    %v1053 = vpop.f32.mrb[0].mxu0
    %v1054 = vadd.f32 0.0, %v1053
    %v1055 = vpop.f32.mrb[0].mxu0
    %v1056 = vadd.f32 0.0, %v1055
    %1057 = vmatprep.mubr.f32.mxu0 0.0
    %1058 = vmatmul.mubr.f32.gmra.mrb[0].mxu0 %v856
    %v1059 = vpop.f32.mrb[0].mxu0
    %v1060 = vadd.f32 0.0, %v1059
    %v1061 = vpop.f32.mrb[0].mxu0
    %v1062 = vadd.f32 0.0, %v1061
    %1063 = vmatprep.mubr.f32.mxu0 0.0
    %1064 = vmatmul.mubr.f32.gmra.mrb[0].mxu0 %v859
    %v1065 = vpop.f32.mrb[0].mxu0
    %v1066 = vadd.f32 0.0, %v1065
    %v1067 = vpop.f32.mrb[0].mxu0
    %v1068 = vadd.f32 0.0, %v1067
    %1069 = vmatprep.mubr.f32.mxu0 0.0
    %1070 = vmatmul.mubr.f32.gmra.mrb[0].mxu0 %v862
    %v1071 = vpop.f32.mrb[0].mxu0
    %v1072 = vadd.f32 0.0, %v1071
    %v1073 = vpop.f32.mrb[0].mxu0
    %v1074 = vadd.f32 0.0, %v1073
    %1075 = vmatprep.mubr.f32.mxu0 0.0
    %1076 = vmatmul.mubr.f32.gmra.mrb[0].mxu0 %v865
    %v1077 = vpop.f32.mrb[0].mxu0
    %v1078 = vadd.f32 0.0, %v1077
    %v1079 = vpop.f32.mrb[0].mxu0
    %v1080 = vadd.f32 0.0, %v1079
    %1081 = vmatprep.mubr.f32.mxu0 0.0
    %1082 = vmatmul.mubr.f32.gmra.mrb[0].mxu0 %v868
    %v1083 = vpop.f32.mrb[0].mxu0
    %v1084 = vadd.f32 0.0, %v1083
    %v1085 = vpop.f32.mrb[0].mxu0
    %v1086 = vadd.f32 0.0, %v1085
    %1087 = vmatprep.mubr.f32.mxu0 0.0
    %1088 = vmatmul.mubr.f32.gmra.mrb[0].mxu0 %v871
    %v1089 = vpop.f32.mrb[0].mxu0
    %v1090 = vadd.f32 0.0, %v1089
    %v1091 = vpop.f32.mrb[0].mxu0
    %v1092 = vadd.f32 0.0, %v1091
    %1093 = vmatprep.mubr.f32.mxu0 0.0
    %1094 = vmatmul.mubr.f32.gmra.mrb[0].mxu0 %v874
    %v1095 = vpop.f32.mrb[0].mxu0
    %v1096 = vadd.f32 0.0, %v1095
    %v1097 = vpop.f32.mrb[0].mxu0
    %v1098 = vadd.f32 0.0, %v1097
    %1099 = vmatprep.mubr.f32.mxu0 0.0
    %1100 = vmatmul.mubr.f32.gmra.mrb[0].mxu0 %v877
    %v1101 = vpop.f32.mrb[0].mxu0
    %v1102 = vadd.f32 0.0, %v1101
    %v1103 = vpop.f32.mrb[0].mxu0
    %v1104 = vadd.f32 0.0, %v1103
    %1105 = vmatprep.mubr.f32.mxu0 0.0
    %1106 = vmatmul.mubr.f32.gmra.mrb[0].mxu0 %v880
    %v1107 = vpop.f32.mrb[0].mxu0
    %v1108 = vadd.f32 0.0, %v1107
    %v1109 = vpop.f32.mrb[0].mxu0
    %v1110 = vadd.f32 0.0, %v1109
    %1111 = vmatprep.mubr.f32.mxu0 0.0
    %1112 = vmatmul.mubr.f32.gmra.mrb[0].mxu0 %v883
    %v1113 = vpop.f32.mrb[0].mxu0
    %v1114 = vadd.f32 0.0, %v1113
    %v1115 = vpop.f32.mrb[0].mxu0
    %v1116 = vadd.f32 0.0, %v1115
    %1117 = vdwg.mxu0
    %v1118 = vadd.f32 %v582, %v952
    %v1119 = vadd.f32 %v584, %v954
    %v1120 = vadd.f32 %v588, %v958
    %v1121 = vadd.f32 %v590, %v960
    %v1122 = vadd.f32 %v594, %v964
    %v1123 = vadd.f32 %v596, %v966
    %v1124 = vadd.f32 %v600, %v970
    %v1125 = vadd.f32 %v602, %v972
    %v1126 = vadd.f32 %v606, %v976
    %v1127 = vadd.f32 %v608, %v978
    %v1128 = vadd.f32 %v612, %v982
    %v1129 = vadd.f32 %v614, %v984
    %v1130 = vadd.f32 %v618, %v988
    %v1131 = vadd.f32 %v620, %v990
    %v1132 = vadd.f32 %v624, %v994
    %v1133 = vadd.f32 %v626, %v996
    %v1134 = vadd.f32 %v630, %v1000
    %v1135 = vadd.f32 %v632, %v1002
    %v1136 = vadd.f32 %v636, %v1006
    %v1137 = vadd.f32 %v638, %v1008
    %v1138 = vadd.f32 %v642, %v1012
    %v1139 = vadd.f32 %v644, %v1014
    %v1140 = vadd.f32 %v648, %v1018
    %v1141 = vadd.f32 %v650, %v1020
    %v1142 = vadd.f32 %v654, %v1024
    %v1143 = vadd.f32 %v656, %v1026
    %v1144 = vadd.f32 %v660, %v1030
    %v1145 = vadd.f32 %v662, %v1032
    %v1146 = vadd.f32 %v666, %v1036
    %v1147 = vadd.f32 %v668, %v1038
    %v1148 = vadd.f32 %v672, %v1042
    %v1149 = vadd.f32 %v674, %v1044
    %v1150 = vadd.f32 %v678, %v1048
    %v1151 = vadd.f32 %v680, %v1050
    %v1152 = vadd.f32 %v684, %v1054
    %v1153 = vadd.f32 %v686, %v1056
    %v1154 = vadd.f32 %v690, %v1060
    %v1155 = vadd.f32 %v692, %v1062
    %v1156 = vadd.f32 %v696, %v1066
    %v1157 = vadd.f32 %v698, %v1068
    %v1158 = vadd.f32 %v702, %v1072
    %v1159 = vadd.f32 %v704, %v1074
    %v1160 = vadd.f32 %v708, %v1078
    %v1161 = vadd.f32 %v710, %v1080
    %v1162 = vadd.f32 %v714, %v1084
    %v1163 = vadd.f32 %v716, %v1086
    %v1164 = vadd.f32 %v720, %v1090
    %v1165 = vadd.f32 %v722, %v1092
    %v1166 = vadd.f32 %v726, %v1096
    %v1167 = vadd.f32 %v728, %v1098
    %v1168 = vadd.f32 %v732, %v1102
    %v1169 = vadd.f32 %v734, %v1104
    %v1170 = vadd.f32 %v738, %v1108
    %v1171 = vadd.f32 %v740, %v1110
    %v1172 = vadd.f32 %v744, %v1114
    %v1173 = vadd.f32 %v746, %v1116
    %v1174 = vld [vmem:[%s0 + $0x18] sm:$0xff]
    %v1175 = vld [vmem:[%s0 + $0x20] sm:$0xff]
    %v1176 = vld [vmem:[%s0 + $0x28] sm:$0xff]
    %v1177 = vld [vmem:[%s0 + $0x30] sm:$0xff]
    %v1178 = vld [vmem:[%s0 + $0x38] sm:$0xff]
    %v1179 = vld [vmem:[%s0 + $0x40] sm:$0xff]
    %v1180 = vld [vmem:[%s0 + $0x48] sm:$0xff]
    %v1181 = vld [vmem:[%s0 + $0x50] sm:$0xff]
    %v1182 = vld [vmem:[%s0 + $0x58] sm:$0xff]
    %v1183 = vld [vmem:[%s0 + $0x60] sm:$0xff]
    %v1184 = vld [vmem:[%s0 + $0x68] sm:$0xff]
    %v1185 = vld [vmem:[%s0 + $0x70] sm:$0xff]
    %v1186 = vld [vmem:[%s0 + $0x78] sm:$0xff]
    %v1187 = vld [vmem:[%s0 + $0x80] sm:$0xff]
    %v1188 = vld [vmem:[%s0 + $0x88] sm:$0xff]
    %v1189 = vld [vmem:[%s0 + $0x90] sm:$0xff]
    %v1190 = vld [vmem:[%s0 + $0x98] sm:$0xff]
    %v1191 = vld [vmem:[%s0 + $0xa0] sm:$0xff]
    %v1192 = vld [vmem:[%s0 + $0xa8] sm:$0xff]
    %v1193 = vld [vmem:[%s0 + $0xb0] sm:$0xff]
    %v1194 = vld [vmem:[%s0 + $0xb8] sm:$0xff]
    %v1195 = vld [vmem:[%s0 + $0xc0] sm:$0xff]
    %v1196 = vld [vmem:[%s0 + $0xc8] sm:$0xff]
    %v1197 = vld [vmem:[%s0 + $0xd0] sm:$0xff]
    %v1198 = vld [vmem:[%s0 + $0xd8] sm:$0xff]
    %v1199 = vld [vmem:[%s0 + $0xe0] sm:$0xff]
    %v1200 = vld [vmem:[%s0 + $0xe8] sm:$0xff]
    %v1201 = vld [vmem:[%s0 + $0xf0] sm:$0xff]
    %s1202 = scalar_lea.vmem %s1, 576
    %v1203 = vld [vmem:[%s1202] sm:$0xff]
    %v1204 = vld [vmem:[%s1202 + $0x8] sm:$0xff]
    %v1205 = vld [vmem:[%s1202 + $0x10] sm:$0xff]
    %v1206 = vld [vmem:[%s1202 + $0x18] sm:$0xff]
    %v1207 = vld [vmem:[%s1202 + $0x20] sm:$0xff]
    %v1208 = vld [vmem:[%s1202 + $0x28] sm:$0xff]
    %v1209 = vld [vmem:[%s1202 + $0x30] sm:$0xff]
    %v1210 = vld [vmem:[%s1202 + $0x38] sm:$0xff]
    %v1211 = vld [vmem:[%s1202 + $0x40] sm:$0xff]
    %v1212 = vld [vmem:[%s1202 + $0x48] sm:$0xff]
    %v1213 = vld [vmem:[%s1202 + $0x50] sm:$0xff]
    %v1214 = vld [vmem:[%s1202 + $0x58] sm:$0xff]
    %v1215 = vld [vmem:[%s1202 + $0x60] sm:$0xff]
    %v1216 = vld [vmem:[%s1202 + $0x68] sm:$0xff]
    %v1217 = vld [vmem:[%s1202 + $0x70] sm:$0xff]
    %v1218 = vld [vmem:[%s1202 + $0x78] sm:$0xff]
    %v1219 = vld [vmem:[%s1202 + $0x80] sm:$0xff]
    %v1220 = vld [vmem:[%s1202 + $0x88] sm:$0xff]
    %v1221 = vld [vmem:[%s1202 + $0x90] sm:$0xff]
    %v1222 = vld [vmem:[%s1202 + $0x98] sm:$0xff]
    %v1223 = vld [vmem:[%s1202 + $0xa0] sm:$0xff]
    %v1224 = vld [vmem:[%s1202 + $0xa8] sm:$0xff]
    %v1225 = vld [vmem:[%s1202 + $0xb0] sm:$0xff]
    %v1226 = vld [vmem:[%s1202 + $0xb8] sm:$0xff]
    %v1228 = vsel %vm194, %v1174, 0
    %v1231 = vsel %vm194, %v1175, 0
    %v1234 = vsel %vm194, %v1176, 0
    %v1237 = vsel %vm194, %v1177, 0
    %v1240 = vsel %vm194, %v1178, 0
    %v1243 = vsel %vm194, %v1179, 0
    %v1246 = vsel %vm194, %v1180, 0
    %v1249 = vsel %vm194, %v1181, 0
    %v1252 = vsel %vm194, %v1182, 0
    %v1255 = vsel %vm194, %v1183, 0
    %v1258 = vsel %vm194, %v1184, 0
    %v1261 = vsel %vm194, %v1185, 0
    %v1264 = vsel %vm194, %v1186, 0
    %v1267 = vsel %vm194, %v1187, 0
    %v1270 = vsel %vm194, %v1188, 0
    %v1273 = vsel %vm194, %v1189, 0
    %v1276 = vsel %vm194, %v1190, 0
    %v1279 = vsel %vm194, %v1191, 0
    %v1282 = vsel %vm194, %v1192, 0
    %v1285 = vsel %vm194, %v1193, 0
    %v1288 = vsel %vm194, %v1194, 0
    %v1291 = vsel %vm194, %v1195, 0
    %v1294 = vsel %vm194, %v1196, 0
    %v1297 = vsel %vm194, %v1197, 0
    %v1300 = vsel %vm194, %v1198, 0
    %v1303 = vsel %vm194, %v1199, 0
    %v1306 = vsel %vm194, %v1200, 0
    %v1309 = vsel %vm194, %v1201, 0
    %1311 = vmatprep.subr.mxu0 %v1204
    %1312 = vmatpush1.msra.mxu0 %v1203
    %1313 = vmatprep.subr.mxu0 %v1206
    %1314 = vmatpush1.msra.mxu0 %v1205
    %1315 = vmatprep.subr.mxu0 %v1208
    %1316 = vmatpush1.msra.mxu0 %v1207
    %1317 = vmatprep.subr.mxu0 %v1210
    %1318 = vmatpush1.msra.mxu0 %v1209
    %1319 = vmatprep.subr.mxu0 %v1212
    %1320 = vmatpush1.msra.mxu0 %v1211
    %1321 = vmatprep.subr.mxu0 %v1214
    %1322 = vmatpush1.msra.mxu0 %v1213
    %1323 = vmatprep.subr.mxu0 %v1216
    %1324 = vmatpush1.msra.mxu0 %v1215
    %1325 = vmatprep.subr.mxu0 %v1218
    %1326 = vmatpush1.msra.mxu0 %v1217
    %1327 = vmatprep.subr.mxu0 %v1220
    %1328 = vmatpush1.msra.mxu0 %v1219
    %1329 = vmatprep.subr.mxu0 %v1222
    %1330 = vmatpush1.msra.mxu0 %v1221
    %1331 = vmatprep.subr.mxu0 %v1224
    %1332 = vmatpush1.msra.mxu0 %v1223
    %1333 = vmatprep.subr.mxu0 %v1226
    %1334 = vmatpush1.msra.mxu0 %v1225
    %1335 = vmatprep.subr.mxu0 0.0
    %1336 = vmatpush1.msra.mxu0 0.0
    %1337 = vmatprep.subr.mxu0 0.0
    %1338 = vmatpush1.msra.mxu0 0.0
    %1339 = vmatprep.subr.mxu0 0.0
    %1340 = vmatpush1.msra.mxu0 0.0
    %1341 = vmatprep.subr.mxu0 0.0
    %1342 = vmatpush1.msra.mxu0 0.0
    %1343 = vmatprep.subr.mxu0 0.0
    %1344 = vmatpush1.msra.mxu0 0.0
    %1345 = vmatprep.subr.mxu0 0.0
    %1346 = vmatpush1.msra.mxu0 0.0
    %1347 = vmatprep.subr.mxu0 0.0
    %1348 = vmatpush1.msra.mxu0 0.0
    %1349 = vmatprep.subr.mxu0 0.0
    %1350 = vmatpush1.msra.mxu0 0.0
    %1351 = vmatprep.subr.mxu0 0.0
    %1352 = vmatpush1.msra.mxu0 0.0
    %1353 = vmatprep.subr.mxu0 0.0
    %1354 = vmatpush1.msra.mxu0 0.0
    %1355 = vmatprep.subr.mxu0 0.0
    %1356 = vmatpush1.msra.mxu0 0.0
    %1357 = vmatprep.subr.mxu0 0.0
    %1358 = vmatpush1.msra.mxu0 0.0
    %1359 = vmatprep.subr.mxu0 0.0
    %1360 = vmatpush1.msra.mxu0 0.0
    %1361 = vmatprep.subr.mxu0 0.0
    %1362 = vmatpush1.msra.mxu0 0.0
    %1363 = vmatprep.subr.mxu0 0.0
    %1364 = vmatpush1.msra.mxu0 0.0
    %1365 = vmatprep.subr.mxu0 0.0
    %1366 = vmatpush1.msra.mxu0 0.0
    %1367 = vmatprep.subr.mxu0 0.0
    %1368 = vmatpush1.msra.mxu0 0.0
    %1369 = vmatprep.subr.mxu0 0.0
    %1370 = vmatpush1.msra.mxu0 0.0
    %1371 = vmatprep.subr.mxu0 0.0
    %1372 = vmatpush1.msra.mxu0 0.0
    %1373 = vmatprep.subr.mxu0 0.0
    %1374 = vmatpush1.msra.mxu0 0.0
    %1375 = vmatprep.mubr.f32.mxu0 0.0
    %1376 = vmatmul.mubr.f32.gmra.mrb[0].mxu0 %v1228
    %v1377 = vpop.f32.mrb[0].mxu0
    %v1378 = vadd.f32 0.0, %v1377
    %v1379 = vpop.f32.mrb[0].mxu0
    %v1380 = vadd.f32 0.0, %v1379
    %1381 = vmatprep.mubr.f32.mxu0 0.0
    %1382 = vmatmul.mubr.f32.gmra.mrb[0].mxu0 %v1231
    %v1383 = vpop.f32.mrb[0].mxu0
    %v1384 = vadd.f32 0.0, %v1383
    %v1385 = vpop.f32.mrb[0].mxu0
    %v1386 = vadd.f32 0.0, %v1385
    %1387 = vmatprep.mubr.f32.mxu0 0.0
    %1388 = vmatmul.mubr.f32.gmra.mrb[0].mxu0 %v1234
    %v1389 = vpop.f32.mrb[0].mxu0
    %v1390 = vadd.f32 0.0, %v1389
    %v1391 = vpop.f32.mrb[0].mxu0
    %v1392 = vadd.f32 0.0, %v1391
    %1393 = vmatprep.mubr.f32.mxu0 0.0
    %1394 = vmatmul.mubr.f32.gmra.mrb[0].mxu0 %v1237
    %v1395 = vpop.f32.mrb[0].mxu0
    %v1396 = vadd.f32 0.0, %v1395
    %v1397 = vpop.f32.mrb[0].mxu0
    %v1398 = vadd.f32 0.0, %v1397
    %1399 = vmatprep.mubr.f32.mxu0 0.0
    %1400 = vmatmul.mubr.f32.gmra.mrb[0].mxu0 %v1240
    %v1401 = vpop.f32.mrb[0].mxu0
    %v1402 = vadd.f32 0.0, %v1401
    %v1403 = vpop.f32.mrb[0].mxu0
    %v1404 = vadd.f32 0.0, %v1403
    %1405 = vmatprep.mubr.f32.mxu0 0.0
    %1406 = vmatmul.mubr.f32.gmra.mrb[0].mxu0 %v1243
    %v1407 = vpop.f32.mrb[0].mxu0
    %v1408 = vadd.f32 0.0, %v1407
    %v1409 = vpop.f32.mrb[0].mxu0
    %v1410 = vadd.f32 0.0, %v1409
    %1411 = vmatprep.mubr.f32.mxu0 0.0
    %1412 = vmatmul.mubr.f32.gmra.mrb[0].mxu0 %v1246
    %v1413 = vpop.f32.mrb[0].mxu0
    %v1414 = vadd.f32 0.0, %v1413
    %v1415 = vpop.f32.mrb[0].mxu0
    %v1416 = vadd.f32 0.0, %v1415
    %1417 = vmatprep.mubr.f32.mxu0 0.0
    %1418 = vmatmul.mubr.f32.gmra.mrb[0].mxu0 %v1249
    %v1419 = vpop.f32.mrb[0].mxu0
    %v1420 = vadd.f32 0.0, %v1419
    %v1421 = vpop.f32.mrb[0].mxu0
    %v1422 = vadd.f32 0.0, %v1421
    %1423 = vmatprep.mubr.f32.mxu0 0.0
    %1424 = vmatmul.mubr.f32.gmra.mrb[0].mxu0 %v1252
    %v1425 = vpop.f32.mrb[0].mxu0
    %v1426 = vadd.f32 0.0, %v1425
    %v1427 = vpop.f32.mrb[0].mxu0
    %v1428 = vadd.f32 0.0, %v1427
    %1429 = vmatprep.mubr.f32.mxu0 0.0
    %1430 = vmatmul.mubr.f32.gmra.mrb[0].mxu0 %v1255
    %v1431 = vpop.f32.mrb[0].mxu0
    %v1432 = vadd.f32 0.0, %v1431
    %v1433 = vpop.f32.mrb[0].mxu0
    %v1434 = vadd.f32 0.0, %v1433
    %1435 = vmatprep.mubr.f32.mxu0 0.0
    %1436 = vmatmul.mubr.f32.gmra.mrb[0].mxu0 %v1258
    %v1437 = vpop.f32.mrb[0].mxu0
    %v1438 = vadd.f32 0.0, %v1437
    %v1439 = vpop.f32.mrb[0].mxu0
    %v1440 = vadd.f32 0.0, %v1439
    %1441 = vmatprep.mubr.f32.mxu0 0.0
    %1442 = vmatmul.mubr.f32.gmra.mrb[0].mxu0 %v1261
    %v1443 = vpop.f32.mrb[0].mxu0
    %v1444 = vadd.f32 0.0, %v1443
    %v1445 = vpop.f32.mrb[0].mxu0
    %v1446 = vadd.f32 0.0, %v1445
    %1447 = vmatprep.mubr.f32.mxu0 0.0
    %1448 = vmatmul.mubr.f32.gmra.mrb[0].mxu0 %v1264
    %v1449 = vpop.f32.mrb[0].mxu0
    %v1450 = vadd.f32 0.0, %v1449
    %v1451 = vpop.f32.mrb[0].mxu0
    %v1452 = vadd.f32 0.0, %v1451
    %1453 = vmatprep.mubr.f32.mxu0 0.0
    %1454 = vmatmul.mubr.f32.gmra.mrb[0].mxu0 %v1267
    %v1455 = vpop.f32.mrb[0].mxu0
    %v1456 = vadd.f32 0.0, %v1455
    %v1457 = vpop.f32.mrb[0].mxu0
    %v1458 = vadd.f32 0.0, %v1457
    %1459 = vmatprep.mubr.f32.mxu0 0.0
    %1460 = vmatmul.mubr.f32.gmra.mrb[0].mxu0 %v1270
    %v1461 = vpop.f32.mrb[0].mxu0
    %v1462 = vadd.f32 0.0, %v1461
    %v1463 = vpop.f32.mrb[0].mxu0
    %v1464 = vadd.f32 0.0, %v1463
    %1465 = vmatprep.mubr.f32.mxu0 0.0
    %1466 = vmatmul.mubr.f32.gmra.mrb[0].mxu0 %v1273
    %v1467 = vpop.f32.mrb[0].mxu0
    %v1468 = vadd.f32 0.0, %v1467
    %v1469 = vpop.f32.mrb[0].mxu0
    %v1470 = vadd.f32 0.0, %v1469
    %1471 = vmatprep.mubr.f32.mxu0 0.0
    %1472 = vmatmul.mubr.f32.gmra.mrb[0].mxu0 %v1276
    %v1473 = vpop.f32.mrb[0].mxu0
    %v1474 = vadd.f32 0.0, %v1473
    %v1475 = vpop.f32.mrb[0].mxu0
    %v1476 = vadd.f32 0.0, %v1475
    %1477 = vmatprep.mubr.f32.mxu0 0.0
    %1478 = vmatmul.mubr.f32.gmra.mrb[0].mxu0 %v1279
    %v1479 = vpop.f32.mrb[0].mxu0
    %v1480 = vadd.f32 0.0, %v1479
    %v1481 = vpop.f32.mrb[0].mxu0
    %v1482 = vadd.f32 0.0, %v1481
    %1483 = vmatprep.mubr.f32.mxu0 0.0
    %1484 = vmatmul.mubr.f32.gmra.mrb[0].mxu0 %v1282
    %v1485 = vpop.f32.mrb[0].mxu0
    %v1486 = vadd.f32 0.0, %v1485
    %v1487 = vpop.f32.mrb[0].mxu0
    %v1488 = vadd.f32 0.0, %v1487
    %1489 = vmatprep.mubr.f32.mxu0 0.0
    %1490 = vmatmul.mubr.f32.gmra.mrb[0].mxu0 %v1285
    %v1491 = vpop.f32.mrb[0].mxu0
    %v1492 = vadd.f32 0.0, %v1491
    %v1493 = vpop.f32.mrb[0].mxu0
    %v1494 = vadd.f32 0.0, %v1493
    %1495 = vmatprep.mubr.f32.mxu0 0.0
    %1496 = vmatmul.mubr.f32.gmra.mrb[0].mxu0 %v1288
    %v1497 = vpop.f32.mrb[0].mxu0
    %v1498 = vadd.f32 0.0, %v1497
    %v1499 = vpop.f32.mrb[0].mxu0
    %v1500 = vadd.f32 0.0, %v1499
    %1501 = vmatprep.mubr.f32.mxu0 0.0
    %1502 = vmatmul.mubr.f32.gmra.mrb[0].mxu0 %v1291
    %v1503 = vpop.f32.mrb[0].mxu0
    %v1504 = vadd.f32 0.0, %v1503
    %v1505 = vpop.f32.mrb[0].mxu0
    %v1506 = vadd.f32 0.0, %v1505
    %1507 = vmatprep.mubr.f32.mxu0 0.0
    %1508 = vmatmul.mubr.f32.gmra.mrb[0].mxu0 %v1294
    %v1509 = vpop.f32.mrb[0].mxu0
    %v1510 = vadd.f32 0.0, %v1509
    %v1511 = vpop.f32.mrb[0].mxu0
    %v1512 = vadd.f32 0.0, %v1511
    %1513 = vmatprep.mubr.f32.mxu0 0.0
    %1514 = vmatmul.mubr.f32.gmra.mrb[0].mxu0 %v1297
    %v1515 = vpop.f32.mrb[0].mxu0
    %v1516 = vadd.f32 0.0, %v1515
    %v1517 = vpop.f32.mrb[0].mxu0
    %v1518 = vadd.f32 0.0, %v1517
    %1519 = vmatprep.mubr.f32.mxu0 0.0
    %1520 = vmatmul.mubr.f32.gmra.mrb[0].mxu0 %v1300
    %v1521 = vpop.f32.mrb[0].mxu0
    %v1522 = vadd.f32 0.0, %v1521
    %v1523 = vpop.f32.mrb[0].mxu0
    %v1524 = vadd.f32 0.0, %v1523
    %1525 = vmatprep.mubr.f32.mxu0 0.0
    %1526 = vmatmul.mubr.f32.gmra.mrb[0].mxu0 %v1303
    %v1527 = vpop.f32.mrb[0].mxu0
    %v1528 = vadd.f32 0.0, %v1527
    %v1529 = vpop.f32.mrb[0].mxu0
    %v1530 = vadd.f32 0.0, %v1529
    %1531 = vmatprep.mubr.f32.mxu0 0.0
    %1532 = vmatmul.mubr.f32.gmra.mrb[0].mxu0 %v1306
    %v1533 = vpop.f32.mrb[0].mxu0
    %v1534 = vadd.f32 0.0, %v1533
    %v1535 = vpop.f32.mrb[0].mxu0
    %v1536 = vadd.f32 0.0, %v1535
    %1537 = vmatprep.mubr.f32.mxu0 0.0
    %1538 = vmatmul.mubr.f32.gmra.mrb[0].mxu0 %v1309
    %v1539 = vpop.f32.mrb[0].mxu0
    %v1540 = vadd.f32 0.0, %v1539
    %v1541 = vpop.f32.mrb[0].mxu0
    %v1542 = vadd.f32 0.0, %v1541
    %1543 = vdwg.mxu0
    %v1544 = vadd.f32 %v1118, %v1378
    %v1545 = vadd.f32 %v1119, %v1380
    %v1546 = vadd.f32 %v1120, %v1384
    %v1547 = vadd.f32 %v1121, %v1386
    %v1548 = vadd.f32 %v1122, %v1390
    %v1549 = vadd.f32 %v1123, %v1392
    %v1550 = vadd.f32 %v1124, %v1396
    %v1551 = vadd.f32 %v1125, %v1398
    %v1552 = vadd.f32 %v1126, %v1402
    %v1553 = vadd.f32 %v1127, %v1404
    %v1554 = vadd.f32 %v1128, %v1408
    %v1555 = vadd.f32 %v1129, %v1410
    %v1556 = vadd.f32 %v1130, %v1414
    %v1557 = vadd.f32 %v1131, %v1416
    %v1558 = vadd.f32 %v1132, %v1420
    %v1559 = vadd.f32 %v1133, %v1422
    %v1560 = vadd.f32 %v1134, %v1426
    %v1561 = vadd.f32 %v1135, %v1428
    %v1562 = vadd.f32 %v1136, %v1432
    %v1563 = vadd.f32 %v1137, %v1434
    %v1564 = vadd.f32 %v1138, %v1438
    %v1565 = vadd.f32 %v1139, %v1440
    %v1566 = vadd.f32 %v1140, %v1444
    %v1567 = vadd.f32 %v1141, %v1446
    %v1568 = vadd.f32 %v1142, %v1450
    %v1569 = vadd.f32 %v1143, %v1452
    %v1570 = vadd.f32 %v1144, %v1456
    %v1571 = vadd.f32 %v1145, %v1458
    %v1572 = vadd.f32 %v1146, %v1462
    %v1573 = vadd.f32 %v1147, %v1464
    %v1574 = vadd.f32 %v1148, %v1468
    %v1575 = vadd.f32 %v1149, %v1470
    %v1576 = vadd.f32 %v1150, %v1474
    %v1577 = vadd.f32 %v1151, %v1476
    %v1578 = vadd.f32 %v1152, %v1480
    %v1579 = vadd.f32 %v1153, %v1482
    %v1580 = vadd.f32 %v1154, %v1486
    %v1581 = vadd.f32 %v1155, %v1488
    %v1582 = vadd.f32 %v1156, %v1492
    %v1583 = vadd.f32 %v1157, %v1494
    %v1584 = vadd.f32 %v1158, %v1498
    %v1585 = vadd.f32 %v1159, %v1500
    %v1586 = vadd.f32 %v1160, %v1504
    %v1587 = vadd.f32 %v1161, %v1506
    %v1588 = vadd.f32 %v1162, %v1510
    %v1589 = vadd.f32 %v1163, %v1512
    %v1590 = vadd.f32 %v1164, %v1516
    %v1591 = vadd.f32 %v1165, %v1518
    %v1592 = vadd.f32 %v1166, %v1522
    %v1593 = vadd.f32 %v1167, %v1524
    %v1594 = vadd.f32 %v1168, %v1528
    %v1595 = vadd.f32 %v1169, %v1530
    %v1596 = vadd.f32 %v1170, %v1534
    %v1597 = vadd.f32 %v1171, %v1536
    %v1598 = vadd.f32 %v1172, %v1540
    %v1599 = vadd.f32 %v1173, %v1542
    %v1600 = vld [vmem:[%s0 + $0x20] sm:$0xff]
    %v1601 = vld [vmem:[%s0 + $0x28] sm:$0xff]
    %v1602 = vld [vmem:[%s0 + $0x30] sm:$0xff]
    %v1603 = vld [vmem:[%s0 + $0x38] sm:$0xff]
    %v1604 = vld [vmem:[%s0 + $0x40] sm:$0xff]
    %v1605 = vld [vmem:[%s0 + $0x48] sm:$0xff]
    %v1606 = vld [vmem:[%s0 + $0x50] sm:$0xff]
    %v1607 = vld [vmem:[%s0 + $0x58] sm:$0xff]
    %v1608 = vld [vmem:[%s0 + $0x60] sm:$0xff]
    %v1609 = vld [vmem:[%s0 + $0x68] sm:$0xff]
    %v1610 = vld [vmem:[%s0 + $0x70] sm:$0xff]
    %v1611 = vld [vmem:[%s0 + $0x78] sm:$0xff]
    %v1612 = vld [vmem:[%s0 + $0x80] sm:$0xff]
    %v1613 = vld [vmem:[%s0 + $0x88] sm:$0xff]
    %v1614 = vld [vmem:[%s0 + $0x90] sm:$0xff]
    %v1615 = vld [vmem:[%s0 + $0x98] sm:$0xff]
    %v1616 = vld [vmem:[%s0 + $0xa0] sm:$0xff]
    %v1617 = vld [vmem:[%s0 + $0xa8] sm:$0xff]
    %v1618 = vld [vmem:[%s0 + $0xb0] sm:$0xff]
    %v1619 = vld [vmem:[%s0 + $0xb8] sm:$0xff]
    %v1620 = vld [vmem:[%s0 + $0xc0] sm:$0xff]
    %v1621 = vld [vmem:[%s0 + $0xc8] sm:$0xff]
    %v1622 = vld [vmem:[%s0 + $0xd0] sm:$0xff]
    %v1623 = vld [vmem:[%s0 + $0xd8] sm:$0xff]
    %v1624 = vld [vmem:[%s0 + $0xe0] sm:$0xff]
    %v1625 = vld [vmem:[%s0 + $0xe8] sm:$0xff]
    %v1626 = vld [vmem:[%s0 + $0xf0] sm:$0xff]
    %v1627 = vld [vmem:[%s0 + $0xf8] sm:$0xff]
    %s1628 = scalar_lea.vmem %s1, 768
    %v1629 = vld [vmem:[%s1628] sm:$0xff]
    %v1630 = vld [vmem:[%s1628 + $0x8] sm:$0xff]
    %v1631 = vld [vmem:[%s1628 + $0x10] sm:$0xff]
    %v1632 = vld [vmem:[%s1628 + $0x18] sm:$0xff]
    %v1633 = vld [vmem:[%s1628 + $0x20] sm:$0xff]
    %v1634 = vld [vmem:[%s1628 + $0x28] sm:$0xff]
    %v1635 = vld [vmem:[%s1628 + $0x30] sm:$0xff]
    %v1636 = vld [vmem:[%s1628 + $0x38] sm:$0xff]
    %v1637 = vld [vmem:[%s1628 + $0x40] sm:$0xff]
    %v1638 = vld [vmem:[%s1628 + $0x48] sm:$0xff]
    %v1639 = vld [vmem:[%s1628 + $0x50] sm:$0xff]
    %v1640 = vld [vmem:[%s1628 + $0x58] sm:$0xff]
    %v1641 = vld [vmem:[%s1628 + $0x60] sm:$0xff]
    %v1642 = vld [vmem:[%s1628 + $0x68] sm:$0xff]
    %v1643 = vld [vmem:[%s1628 + $0x70] sm:$0xff]
    %v1644 = vld [vmem:[%s1628 + $0x78] sm:$0xff]
    %v1645 = vld [vmem:[%s1628 + $0x80] sm:$0xff]
    %v1646 = vld [vmem:[%s1628 + $0x88] sm:$0xff]
    %v1647 = vld [vmem:[%s1628 + $0x90] sm:$0xff]
    %v1648 = vld [vmem:[%s1628 + $0x98] sm:$0xff]
    %v1649 = vld [vmem:[%s1628 + $0xa0] sm:$0xff]
    %v1650 = vld [vmem:[%s1628 + $0xa8] sm:$0xff]
    %v1651 = vld [vmem:[%s1628 + $0xb0] sm:$0xff]
    %v1652 = vld [vmem:[%s1628 + $0xb8] sm:$0xff]
    %v1654 = vsel %vm194, %v1600, 0
    %v1657 = vsel %vm194, %v1601, 0
    %v1660 = vsel %vm194, %v1602, 0
    %v1663 = vsel %vm194, %v1603, 0
    %v1666 = vsel %vm194, %v1604, 0
    %v1669 = vsel %vm194, %v1605, 0
    %v1672 = vsel %vm194, %v1606, 0
    %v1675 = vsel %vm194, %v1607, 0
    %v1678 = vsel %vm194, %v1608, 0
    %v1681 = vsel %vm194, %v1609, 0
    %v1684 = vsel %vm194, %v1610, 0
    %v1687 = vsel %vm194, %v1611, 0
    %v1690 = vsel %vm194, %v1612, 0
    %v1693 = vsel %vm194, %v1613, 0
    %v1696 = vsel %vm194, %v1614, 0
    %v1699 = vsel %vm194, %v1615, 0
    %v1702 = vsel %vm194, %v1616, 0
    %v1705 = vsel %vm194, %v1617, 0
    %v1708 = vsel %vm194, %v1618, 0
    %v1711 = vsel %vm194, %v1619, 0
    %v1714 = vsel %vm194, %v1620, 0
    %v1717 = vsel %vm194, %v1621, 0
    %v1720 = vsel %vm194, %v1622, 0
    %v1723 = vsel %vm194, %v1623, 0
    %v1726 = vsel %vm194, %v1624, 0
    %v1729 = vsel %vm194, %v1625, 0
    %v1732 = vsel %vm194, %v1626, 0
    %v1735 = vsel %vm194, %v1627, 0
    %1737 = vmatprep.subr.mxu0 %v1630
    %1738 = vmatpush1.msra.mxu0 %v1629
    %1739 = vmatprep.subr.mxu0 %v1632
    %1740 = vmatpush1.msra.mxu0 %v1631
    %1741 = vmatprep.subr.mxu0 %v1634
    %1742 = vmatpush1.msra.mxu0 %v1633
    %1743 = vmatprep.subr.mxu0 %v1636
    %1744 = vmatpush1.msra.mxu0 %v1635
    %1745 = vmatprep.subr.mxu0 %v1638
    %1746 = vmatpush1.msra.mxu0 %v1637
    %1747 = vmatprep.subr.mxu0 %v1640
    %1748 = vmatpush1.msra.mxu0 %v1639
    %1749 = vmatprep.subr.mxu0 %v1642
    %1750 = vmatpush1.msra.mxu0 %v1641
    %1751 = vmatprep.subr.mxu0 %v1644
    %1752 = vmatpush1.msra.mxu0 %v1643
    %1753 = vmatprep.subr.mxu0 %v1646
    %1754 = vmatpush1.msra.mxu0 %v1645
    %1755 = vmatprep.subr.mxu0 %v1648
    %1756 = vmatpush1.msra.mxu0 %v1647
    %1757 = vmatprep.subr.mxu0 %v1650
    %1758 = vmatpush1.msra.mxu0 %v1649
    %1759 = vmatprep.subr.mxu0 %v1652
    %1760 = vmatpush1.msra.mxu0 %v1651
    %1761 = vmatprep.subr.mxu0 0.0
    %1762 = vmatpush1.msra.mxu0 0.0
    %1763 = vmatprep.subr.mxu0 0.0
    %1764 = vmatpush1.msra.mxu0 0.0
    %1765 = vmatprep.subr.mxu0 0.0
    %1766 = vmatpush1.msra.mxu0 0.0
    %1767 = vmatprep.subr.mxu0 0.0
    %1768 = vmatpush1.msra.mxu0 0.0
    %1769 = vmatprep.subr.mxu0 0.0
    %1770 = vmatpush1.msra.mxu0 0.0
    %1771 = vmatprep.subr.mxu0 0.0
    %1772 = vmatpush1.msra.mxu0 0.0
    %1773 = vmatprep.subr.mxu0 0.0
    %1774 = vmatpush1.msra.mxu0 0.0
    %1775 = vmatprep.subr.mxu0 0.0
    %1776 = vmatpush1.msra.mxu0 0.0
    %1777 = vmatprep.subr.mxu0 0.0
    %1778 = vmatpush1.msra.mxu0 0.0
    %1779 = vmatprep.subr.mxu0 0.0
    %1780 = vmatpush1.msra.mxu0 0.0
    %1781 = vmatprep.subr.mxu0 0.0
    %1782 = vmatpush1.msra.mxu0 0.0
    %1783 = vmatprep.subr.mxu0 0.0
    %1784 = vmatpush1.msra.mxu0 0.0
    %1785 = vmatprep.subr.mxu0 0.0
    %1786 = vmatpush1.msra.mxu0 0.0
    %1787 = vmatprep.subr.mxu0 0.0
    %1788 = vmatpush1.msra.mxu0 0.0
    %1789 = vmatprep.subr.mxu0 0.0
    %1790 = vmatpush1.msra.mxu0 0.0
    %1791 = vmatprep.subr.mxu0 0.0
    %1792 = vmatpush1.msra.mxu0 0.0
    %1793 = vmatprep.subr.mxu0 0.0
    %1794 = vmatpush1.msra.mxu0 0.0
    %1795 = vmatprep.subr.mxu0 0.0
    %1796 = vmatpush1.msra.mxu0 0.0
    %1797 = vmatprep.subr.mxu0 0.0
    %1798 = vmatpush1.msra.mxu0 0.0
    %1799 = vmatprep.subr.mxu0 0.0
    %1800 = vmatpush1.msra.mxu0 0.0
    %1801 = vmatprep.mubr.f32.mxu0 0.0
    %1802 = vmatmul.mubr.f32.gmra.mrb[0].mxu0 %v1654
    %v1803 = vpop.f32.mrb[0].mxu0
    %v1804 = vadd.f32 0.0, %v1803
    %v1805 = vpop.f32.mrb[0].mxu0
    %v1806 = vadd.f32 0.0, %v1805
    %1807 = vmatprep.mubr.f32.mxu0 0.0
    %1808 = vmatmul.mubr.f32.gmra.mrb[0].mxu0 %v1657
    %v1809 = vpop.f32.mrb[0].mxu0
    %v1810 = vadd.f32 0.0, %v1809
    %v1811 = vpop.f32.mrb[0].mxu0
    %v1812 = vadd.f32 0.0, %v1811
    %1813 = vmatprep.mubr.f32.mxu0 0.0
    %1814 = vmatmul.mubr.f32.gmra.mrb[0].mxu0 %v1660
    %v1815 = vpop.f32.mrb[0].mxu0
    %v1816 = vadd.f32 0.0, %v1815
    %v1817 = vpop.f32.mrb[0].mxu0
    %v1818 = vadd.f32 0.0, %v1817
    %1819 = vmatprep.mubr.f32.mxu0 0.0
    %1820 = vmatmul.mubr.f32.gmra.mrb[0].mxu0 %v1663
    %v1821 = vpop.f32.mrb[0].mxu0
    %v1822 = vadd.f32 0.0, %v1821
    %v1823 = vpop.f32.mrb[0].mxu0
    %v1824 = vadd.f32 0.0, %v1823
    %1825 = vmatprep.mubr.f32.mxu0 0.0
    %1826 = vmatmul.mubr.f32.gmra.mrb[0].mxu0 %v1666
    %v1827 = vpop.f32.mrb[0].mxu0
    %v1828 = vadd.f32 0.0, %v1827
    %v1829 = vpop.f32.mrb[0].mxu0
    %v1830 = vadd.f32 0.0, %v1829
    %1831 = vmatprep.mubr.f32.mxu0 0.0
    %1832 = vmatmul.mubr.f32.gmra.mrb[0].mxu0 %v1669
    %v1833 = vpop.f32.mrb[0].mxu0
    %v1834 = vadd.f32 0.0, %v1833
    %v1835 = vpop.f32.mrb[0].mxu0
    %v1836 = vadd.f32 0.0, %v1835
    %1837 = vmatprep.mubr.f32.mxu0 0.0
    %1838 = vmatmul.mubr.f32.gmra.mrb[0].mxu0 %v1672
    %v1839 = vpop.f32.mrb[0].mxu0
    %v1840 = vadd.f32 0.0, %v1839
    %v1841 = vpop.f32.mrb[0].mxu0
    %v1842 = vadd.f32 0.0, %v1841
    %1843 = vmatprep.mubr.f32.mxu0 0.0
    %1844 = vmatmul.mubr.f32.gmra.mrb[0].mxu0 %v1675
    %v1845 = vpop.f32.mrb[0].mxu0
    %v1846 = vadd.f32 0.0, %v1845
    %v1847 = vpop.f32.mrb[0].mxu0
    %v1848 = vadd.f32 0.0, %v1847
    %1849 = vmatprep.mubr.f32.mxu0 0.0
    %1850 = vmatmul.mubr.f32.gmra.mrb[0].mxu0 %v1678
    %v1851 = vpop.f32.mrb[0].mxu0
    %v1852 = vadd.f32 0.0, %v1851
    %v1853 = vpop.f32.mrb[0].mxu0
    %v1854 = vadd.f32 0.0, %v1853
    %1855 = vmatprep.mubr.f32.mxu0 0.0
    %1856 = vmatmul.mubr.f32.gmra.mrb[0].mxu0 %v1681
    %v1857 = vpop.f32.mrb[0].mxu0
    %v1858 = vadd.f32 0.0, %v1857
    %v1859 = vpop.f32.mrb[0].mxu0
    %v1860 = vadd.f32 0.0, %v1859
    %1861 = vmatprep.mubr.f32.mxu0 0.0
    %1862 = vmatmul.mubr.f32.gmra.mrb[0].mxu0 %v1684
    %v1863 = vpop.f32.mrb[0].mxu0
    %v1864 = vadd.f32 0.0, %v1863
    %v1865 = vpop.f32.mrb[0].mxu0
    %v1866 = vadd.f32 0.0, %v1865
    %1867 = vmatprep.mubr.f32.mxu0 0.0
    %1868 = vmatmul.mubr.f32.gmra.mrb[0].mxu0 %v1687
    %v1869 = vpop.f32.mrb[0].mxu0
    %v1870 = vadd.f32 0.0, %v1869
    %v1871 = vpop.f32.mrb[0].mxu0
    %v1872 = vadd.f32 0.0, %v1871
    %1873 = vmatprep.mubr.f32.mxu0 0.0
    %1874 = vmatmul.mubr.f32.gmra.mrb[0].mxu0 %v1690
    %v1875 = vpop.f32.mrb[0].mxu0
    %v1876 = vadd.f32 0.0, %v1875
    %v1877 = vpop.f32.mrb[0].mxu0
    %v1878 = vadd.f32 0.0, %v1877
    %1879 = vmatprep.mubr.f32.mxu0 0.0
    %1880 = vmatmul.mubr.f32.gmra.mrb[0].mxu0 %v1693
    %v1881 = vpop.f32.mrb[0].mxu0
    %v1882 = vadd.f32 0.0, %v1881
    %v1883 = vpop.f32.mrb[0].mxu0
    %v1884 = vadd.f32 0.0, %v1883
    %1885 = vmatprep.mubr.f32.mxu0 0.0
    %1886 = vmatmul.mubr.f32.gmra.mrb[0].mxu0 %v1696
    %v1887 = vpop.f32.mrb[0].mxu0
    %v1888 = vadd.f32 0.0, %v1887
    %v1889 = vpop.f32.mrb[0].mxu0
    %v1890 = vadd.f32 0.0, %v1889
    %1891 = vmatprep.mubr.f32.mxu0 0.0
    %1892 = vmatmul.mubr.f32.gmra.mrb[0].mxu0 %v1699
    %v1893 = vpop.f32.mrb[0].mxu0
    %v1894 = vadd.f32 0.0, %v1893
    %v1895 = vpop.f32.mrb[0].mxu0
    %v1896 = vadd.f32 0.0, %v1895
    %1897 = vmatprep.mubr.f32.mxu0 0.0
    %1898 = vmatmul.mubr.f32.gmra.mrb[0].mxu0 %v1702
    %v1899 = vpop.f32.mrb[0].mxu0
    %v1900 = vadd.f32 0.0, %v1899
    %v1901 = vpop.f32.mrb[0].mxu0
    %v1902 = vadd.f32 0.0, %v1901
    %1903 = vmatprep.mubr.f32.mxu0 0.0
    %1904 = vmatmul.mubr.f32.gmra.mrb[0].mxu0 %v1705
    %v1905 = vpop.f32.mrb[0].mxu0
    %v1906 = vadd.f32 0.0, %v1905
    %v1907 = vpop.f32.mrb[0].mxu0
    %v1908 = vadd.f32 0.0, %v1907
    %1909 = vmatprep.mubr.f32.mxu0 0.0
    %1910 = vmatmul.mubr.f32.gmra.mrb[0].mxu0 %v1708
    %v1911 = vpop.f32.mrb[0].mxu0
    %v1912 = vadd.f32 0.0, %v1911
    %v1913 = vpop.f32.mrb[0].mxu0
    %v1914 = vadd.f32 0.0, %v1913
    %1915 = vmatprep.mubr.f32.mxu0 0.0
    %1916 = vmatmul.mubr.f32.gmra.mrb[0].mxu0 %v1711
    %v1917 = vpop.f32.mrb[0].mxu0
    %v1918 = vadd.f32 0.0, %v1917
    %v1919 = vpop.f32.mrb[0].mxu0
    %v1920 = vadd.f32 0.0, %v1919
    %1921 = vmatprep.mubr.f32.mxu0 0.0
    %1922 = vmatmul.mubr.f32.gmra.mrb[0].mxu0 %v1714
    %v1923 = vpop.f32.mrb[0].mxu0
    %v1924 = vadd.f32 0.0, %v1923
    %v1925 = vpop.f32.mrb[0].mxu0
    %v1926 = vadd.f32 0.0, %v1925
    %1927 = vmatprep.mubr.f32.mxu0 0.0
    %1928 = vmatmul.mubr.f32.gmra.mrb[0].mxu0 %v1717
    %v1929 = vpop.f32.mrb[0].mxu0
    %v1930 = vadd.f32 0.0, %v1929
    %v1931 = vpop.f32.mrb[0].mxu0
    %v1932 = vadd.f32 0.0, %v1931
    %1933 = vmatprep.mubr.f32.mxu0 0.0
    %1934 = vmatmul.mubr.f32.gmra.mrb[0].mxu0 %v1720
    %v1935 = vpop.f32.mrb[0].mxu0
    %v1936 = vadd.f32 0.0, %v1935
    %v1937 = vpop.f32.mrb[0].mxu0
    %v1938 = vadd.f32 0.0, %v1937
    %1939 = vmatprep.mubr.f32.mxu0 0.0
    %1940 = vmatmul.mubr.f32.gmra.mrb[0].mxu0 %v1723
    %v1941 = vpop.f32.mrb[0].mxu0
    %v1942 = vadd.f32 0.0, %v1941
    %v1943 = vpop.f32.mrb[0].mxu0
    %v1944 = vadd.f32 0.0, %v1943
    %1945 = vmatprep.mubr.f32.mxu0 0.0
    %1946 = vmatmul.mubr.f32.gmra.mrb[0].mxu0 %v1726
    %v1947 = vpop.f32.mrb[0].mxu0
    %v1948 = vadd.f32 0.0, %v1947
    %v1949 = vpop.f32.mrb[0].mxu0
    %v1950 = vadd.f32 0.0, %v1949
    %1951 = vmatprep.mubr.f32.mxu0 0.0
    %1952 = vmatmul.mubr.f32.gmra.mrb[0].mxu0 %v1729
    %v1953 = vpop.f32.mrb[0].mxu0
    %v1954 = vadd.f32 0.0, %v1953
    %v1955 = vpop.f32.mrb[0].mxu0
    %v1956 = vadd.f32 0.0, %v1955
    %1957 = vmatprep.mubr.f32.mxu0 0.0
    %1958 = vmatmul.mubr.f32.gmra.mrb[0].mxu0 %v1732
    %v1959 = vpop.f32.mrb[0].mxu0
    %v1960 = vadd.f32 0.0, %v1959
    %v1961 = vpop.f32.mrb[0].mxu0
    %v1962 = vadd.f32 0.0, %v1961
    %1963 = vmatprep.mubr.f32.mxu0 0.0
    %1964 = vmatmul.mubr.f32.gmra.mrb[0].mxu0 %v1735
    %v1965 = vpop.f32.mrb[0].mxu0
    %v1966 = vadd.f32 0.0, %v1965
    %v1967 = vpop.f32.mrb[0].mxu0
    %v1968 = vadd.f32 0.0, %v1967
    %1969 = vdwg.mxu0
    %v1970 = vadd.f32 %v1544, %v1804
    %v1971 = vadd.f32 %v1545, %v1806
    %v1972 = vadd.f32 %v1546, %v1810
    %v1973 = vadd.f32 %v1547, %v1812
    %v1974 = vadd.f32 %v1548, %v1816
    %v1975 = vadd.f32 %v1549, %v1818
    %v1976 = vadd.f32 %v1550, %v1822
    %v1977 = vadd.f32 %v1551, %v1824
    %v1978 = vadd.f32 %v1552, %v1828
    %v1979 = vadd.f32 %v1553, %v1830
    %v1980 = vadd.f32 %v1554, %v1834
    %v1981 = vadd.f32 %v1555, %v1836
    %v1982 = vadd.f32 %v1556, %v1840
    %v1983 = vadd.f32 %v1557, %v1842
    %v1984 = vadd.f32 %v1558, %v1846
    %v1985 = vadd.f32 %v1559, %v1848
    %v1986 = vadd.f32 %v1560, %v1852
    %v1987 = vadd.f32 %v1561, %v1854
    %v1988 = vadd.f32 %v1562, %v1858
    %v1989 = vadd.f32 %v1563, %v1860
    %v1990 = vadd.f32 %v1564, %v1864
    %v1991 = vadd.f32 %v1565, %v1866
    %v1992 = vadd.f32 %v1566, %v1870
    %v1993 = vadd.f32 %v1567, %v1872
    %v1994 = vadd.f32 %v1568, %v1876
    %v1995 = vadd.f32 %v1569, %v1878
    %v1996 = vadd.f32 %v1570, %v1882
    %v1997 = vadd.f32 %v1571, %v1884
    %v1998 = vadd.f32 %v1572, %v1888
    %v1999 = vadd.f32 %v1573, %v1890
    %v2000 = vadd.f32 %v1574, %v1894
    %v2001 = vadd.f32 %v1575, %v1896
    %v2002 = vadd.f32 %v1576, %v1900
    %v2003 = vadd.f32 %v1577, %v1902
    %v2004 = vadd.f32 %v1578, %v1906
    %v2005 = vadd.f32 %v1579, %v1908
    %v2006 = vadd.f32 %v1580, %v1912
    %v2007 = vadd.f32 %v1581, %v1914
    %v2008 = vadd.f32 %v1582, %v1918
    %v2009 = vadd.f32 %v1583, %v1920
    %v2010 = vadd.f32 %v1584, %v1924
    %v2011 = vadd.f32 %v1585, %v1926
    %v2012 = vadd.f32 %v1586, %v1930
    %v2013 = vadd.f32 %v1587, %v1932
    %v2014 = vadd.f32 %v1588, %v1936
    %v2015 = vadd.f32 %v1589, %v1938
    %v2016 = vadd.f32 %v1590, %v1942
    %v2017 = vadd.f32 %v1591, %v1944
    %v2018 = vadd.f32 %v1592, %v1948
    %v2019 = vadd.f32 %v1593, %v1950
    %v2020 = vadd.f32 %v1594, %v1954
    %v2021 = vadd.f32 %v1595, %v1956
    %v2022 = vadd.f32 %v1596, %v1960
    %v2023 = vadd.f32 %v1597, %v1962
    %v2024 = vadd.f32 %v1598, %v1966
    %v2025 = vadd.f32 %v1599, %v1968
    %v2026 = vld [vmem:[#allocation2] sm:$0x3]
    %v2028 = vlaneseq
    %v2029 = vshrl.u32 %v2028, 7
    %v2030 = vsub.s32 0, %v2029
    %v2031 = vrot.slane %v2026, %v2030
    %v2032 = vlaneseq
    %v2033 = vshrl.u32 %v2032, 7
    %v2034 = vsub.s32 1, %v2033
    %v2035 = vrot.slane %v2026, %v2034
    %v2038 = vadd.f32 %v1970, %v2031
    %v2039 = vadd.f32 %v1971, %v2035
    %v2040 = vadd.f32 %v1972, %v2031
    %v2041 = vadd.f32 %v1973, %v2035
    %v2042 = vadd.f32 %v1974, %v2031
    %v2043 = vadd.f32 %v1975, %v2035
    %v2044 = vadd.f32 %v1976, %v2031
    %v2045 = vadd.f32 %v1977, %v2035
    %v2046 = vadd.f32 %v1978, %v2031
    %v2047 = vadd.f32 %v1979, %v2035
    %v2048 = vadd.f32 %v1980, %v2031
    %v2049 = vadd.f32 %v1981, %v2035
    %v2050 = vadd.f32 %v1982, %v2031
    %v2051 = vadd.f32 %v1983, %v2035
    %v2052 = vadd.f32 %v1984, %v2031
    %v2053 = vadd.f32 %v1985, %v2035
    %v2054 = vadd.f32 %v1986, %v2031
    %v2055 = vadd.f32 %v1987, %v2035
    %v2056 = vadd.f32 %v1988, %v2031
    %v2057 = vadd.f32 %v1989, %v2035
    %v2058 = vadd.f32 %v1990, %v2031
    %v2059 = vadd.f32 %v1991, %v2035
    %v2060 = vadd.f32 %v1992, %v2031
    %v2061 = vadd.f32 %v1993, %v2035
    %v2062 = vadd.f32 %v1994, %v2031
    %v2063 = vadd.f32 %v1995, %v2035
    %v2064 = vadd.f32 %v1996, %v2031
    %v2065 = vadd.f32 %v1997, %v2035
    %v2066 = vadd.f32 %v1998, %v2031
    %v2067 = vadd.f32 %v1999, %v2035
    %v2068 = vadd.f32 %v2000, %v2031
    %v2069 = vadd.f32 %v2001, %v2035
    %v2070 = vadd.f32 %v2002, %v2031
    %v2071 = vadd.f32 %v2003, %v2035
    %v2072 = vadd.f32 %v2004, %v2031
    %v2073 = vadd.f32 %v2005, %v2035
    %v2074 = vadd.f32 %v2006, %v2031
    %v2075 = vadd.f32 %v2007, %v2035
    %v2076 = vadd.f32 %v2008, %v2031
    %v2077 = vadd.f32 %v2009, %v2035
    %v2078 = vadd.f32 %v2010, %v2031
    %v2079 = vadd.f32 %v2011, %v2035
    %v2080 = vadd.f32 %v2012, %v2031
    %v2081 = vadd.f32 %v2013, %v2035
    %v2082 = vadd.f32 %v2014, %v2031
    %v2083 = vadd.f32 %v2015, %v2035
    %v2084 = vadd.f32 %v2016, %v2031
    %v2085 = vadd.f32 %v2017, %v2035
    %v2086 = vadd.f32 %v2018, %v2031
    %v2087 = vadd.f32 %v2019, %v2035
    %v2088 = vadd.f32 %v2020, %v2031
    %v2089 = vadd.f32 %v2021, %v2035
    %v2090 = vadd.f32 %v2022, %v2031
    %v2091 = vadd.f32 %v2023, %v2035
    %v2092 = vadd.f32 %v2024, %v2031
    %v2093 = vadd.f32 %v2025, %v2035
    %v2094 = vmax.f32 %v2038, 0.0
    %v2095 = vmax.f32 %v2039, 0.0
    %v2096 = vmax.f32 %v2040, 0.0
    %v2097 = vmax.f32 %v2041, 0.0
    %v2098 = vmax.f32 %v2042, 0.0
    %v2099 = vmax.f32 %v2043, 0.0
    %v2100 = vmax.f32 %v2044, 0.0
    %v2101 = vmax.f32 %v2045, 0.0
    %v2102 = vmax.f32 %v2046, 0.0
    %v2103 = vmax.f32 %v2047, 0.0
    %v2104 = vmax.f32 %v2048, 0.0
    %v2105 = vmax.f32 %v2049, 0.0
    %v2106 = vmax.f32 %v2050, 0.0
    %v2107 = vmax.f32 %v2051, 0.0
    %v2108 = vmax.f32 %v2052, 0.0
    %v2109 = vmax.f32 %v2053, 0.0
    %v2110 = vmax.f32 %v2054, 0.0
    %v2111 = vmax.f32 %v2055, 0.0
    %v2112 = vmax.f32 %v2056, 0.0
    %v2113 = vmax.f32 %v2057, 0.0
    %v2114 = vmax.f32 %v2058, 0.0
    %v2115 = vmax.f32 %v2059, 0.0
    %v2116 = vmax.f32 %v2060, 0.0
    %v2117 = vmax.f32 %v2061, 0.0
    %v2118 = vmax.f32 %v2062, 0.0
    %v2119 = vmax.f32 %v2063, 0.0
    %v2120 = vmax.f32 %v2064, 0.0
    %v2121 = vmax.f32 %v2065, 0.0
    %v2122 = vmax.f32 %v2066, 0.0
    %v2123 = vmax.f32 %v2067, 0.0
    %v2124 = vmax.f32 %v2068, 0.0
    %v2125 = vmax.f32 %v2069, 0.0
    %v2126 = vmax.f32 %v2070, 0.0
    %v2127 = vmax.f32 %v2071, 0.0
    %v2128 = vmax.f32 %v2072, 0.0
    %v2129 = vmax.f32 %v2073, 0.0
    %v2130 = vmax.f32 %v2074, 0.0
    %v2131 = vmax.f32 %v2075, 0.0
    %v2132 = vmax.f32 %v2076, 0.0
    %v2133 = vmax.f32 %v2077, 0.0
    %v2134 = vmax.f32 %v2078, 0.0
    %v2135 = vmax.f32 %v2079, 0.0
    %v2136 = vmax.f32 %v2080, 0.0
    %v2137 = vmax.f32 %v2081, 0.0
    %v2138 = vmax.f32 %v2082, 0.0
    %v2139 = vmax.f32 %v2083, 0.0
    %v2140 = vmax.f32 %v2084, 0.0
    %v2141 = vmax.f32 %v2085, 0.0
    %v2142 = vmax.f32 %v2086, 0.0
    %v2143 = vmax.f32 %v2087, 0.0
    %v2144 = vmax.f32 %v2088, 0.0
    %v2145 = vmax.f32 %v2089, 0.0
    %v2146 = vmax.f32 %v2090, 0.0
    %v2147 = vmax.f32 %v2091, 0.0
    %v2148 = vmax.f32 %v2092, 0.0
    %v2149 = vmax.f32 %v2093, 0.0
    %v2150 = vld [vmem:[%s3] sm:$0xff]
    %v2151 = vld [vmem:[%s3 + $0x8] sm:$0xff]
    %v2152 = vld [vmem:[%s3 + $0x10] sm:$0xff]
    %v2153 = vld [vmem:[%s3 + $0x18] sm:$0xff]
    %v2154 = vld [vmem:[%s3 + $0x20] sm:$0xff]
    %v2155 = vld [vmem:[%s3 + $0x28] sm:$0xff]
    %v2156 = vld [vmem:[%s3 + $0x30] sm:$0xff]
    %v2157 = vld [vmem:[%s3 + $0x38] sm:$0xff]
    %v2158 = vld [vmem:[%s3 + $0x40] sm:$0xff]
    %v2159 = vld [vmem:[%s3 + $0x48] sm:$0xff]
    %v2160 = vld [vmem:[%s3 + $0x50] sm:$0xff]
    %v2161 = vld [vmem:[%s3 + $0x58] sm:$0xff]
    %v2162 = vld [vmem:[%s3 + $0x60] sm:$0xff]
    %v2163 = vld [vmem:[%s3 + $0x68] sm:$0xff]
    %v2164 = vld [vmem:[%s3 + $0x70] sm:$0xff]
    %v2165 = vld [vmem:[%s3 + $0x78] sm:$0xff]
    %v2166 = vld [vmem:[%s3 + $0x80] sm:$0xff]
    %v2167 = vld [vmem:[%s3 + $0x88] sm:$0xff]
    %v2168 = vld [vmem:[%s3 + $0x90] sm:$0xff]
    %v2169 = vld [vmem:[%s3 + $0x98] sm:$0xff]
    %v2170 = vld [vmem:[%s3 + $0xa0] sm:$0xff]
    %v2171 = vld [vmem:[%s3 + $0xa8] sm:$0xff]
    %v2172 = vld [vmem:[%s3 + $0xb0] sm:$0xff]
    %v2173 = vld [vmem:[%s3 + $0xb8] sm:$0xff]
    %v2174 = vld [vmem:[%s3 + $0xc0] sm:$0xff]
    %v2175 = vld [vmem:[%s3 + $0xc8] sm:$0xff]
    %v2176 = vld [vmem:[%s3 + $0xd0] sm:$0xff]
    %v2177 = vld [vmem:[%s3 + $0xd8] sm:$0xff]
    %v2179 = vsel %vm194, %v2151, 0
    %v2182 = vsel %vm194, %v2153, 0
    %v2185 = vsel %vm194, %v2155, 0
    %v2188 = vsel %vm194, %v2157, 0
    %v2191 = vsel %vm194, %v2159, 0
    %v2194 = vsel %vm194, %v2161, 0
    %v2197 = vsel %vm194, %v2163, 0
    %v2200 = vsel %vm194, %v2165, 0
    %v2203 = vsel %vm194, %v2167, 0
    %v2206 = vsel %vm194, %v2169, 0
    %v2209 = vsel %vm194, %v2171, 0
    %v2212 = vsel %vm194, %v2173, 0
    %v2215 = vsel %vm194, %v2175, 0
    %v2218 = vsel %vm194, %v2177, 0
    %2220 = vmatprep.subr.mxu0 %v2095
    %2221 = vmatpush1.msra.mxu0 %v2094
    %2222 = vmatprep.subr.mxu0 %v2097
    %2223 = vmatpush1.msra.mxu0 %v2096
    %2224 = vmatprep.subr.mxu0 %v2099
    %2225 = vmatpush1.msra.mxu0 %v2098
    %2226 = vmatprep.subr.mxu0 %v2101
    %2227 = vmatpush1.msra.mxu0 %v2100
    %2228 = vmatprep.subr.mxu0 %v2103
    %2229 = vmatpush1.msra.mxu0 %v2102
    %2230 = vmatprep.subr.mxu0 %v2105
    %2231 = vmatpush1.msra.mxu0 %v2104
    %2232 = vmatprep.subr.mxu0 %v2107
    %2233 = vmatpush1.msra.mxu0 %v2106
    %2234 = vmatprep.subr.mxu0 %v2109
    %2235 = vmatpush1.msra.mxu0 %v2108
    %2236 = vmatprep.subr.mxu0 %v2111
    %2237 = vmatpush1.msra.mxu0 %v2110
    %2238 = vmatprep.subr.mxu0 %v2113
    %2239 = vmatpush1.msra.mxu0 %v2112
    %2240 = vmatprep.subr.mxu0 %v2115
    %2241 = vmatpush1.msra.mxu0 %v2114
    %2242 = vmatprep.subr.mxu0 %v2117
    %2243 = vmatpush1.msra.mxu0 %v2116
    %2244 = vmatprep.subr.mxu0 %v2119
    %2245 = vmatpush1.msra.mxu0 %v2118
    %2246 = vmatprep.subr.mxu0 %v2121
    %2247 = vmatpush1.msra.mxu0 %v2120
    %2248 = vmatprep.subr.mxu0 %v2123
    %2249 = vmatpush1.msra.mxu0 %v2122
    %2250 = vmatprep.subr.mxu0 %v2125
    %2251 = vmatpush1.msra.mxu0 %v2124
    %2252 = vmatprep.subr.mxu0 %v2127
    %2253 = vmatpush1.msra.mxu0 %v2126
    %2254 = vmatprep.subr.mxu0 %v2129
    %2255 = vmatpush1.msra.mxu0 %v2128
    %2256 = vmatprep.subr.mxu0 %v2131
    %2257 = vmatpush1.msra.mxu0 %v2130
    %2258 = vmatprep.subr.mxu0 %v2133
    %2259 = vmatpush1.msra.mxu0 %v2132
    %2260 = vmatprep.subr.mxu0 %v2135
    %2261 = vmatpush1.msra.mxu0 %v2134
    %2262 = vmatprep.subr.mxu0 %v2137
    %2263 = vmatpush1.msra.mxu0 %v2136
    %2264 = vmatprep.subr.mxu0 %v2139
    %2265 = vmatpush1.msra.mxu0 %v2138
    %2266 = vmatprep.subr.mxu0 %v2141
    %2267 = vmatpush1.msra.mxu0 %v2140
    %2268 = vmatprep.subr.mxu0 %v2143
    %2269 = vmatpush1.msra.mxu0 %v2142
    %2270 = vmatprep.subr.mxu0 %v2145
    %2271 = vmatpush1.msra.mxu0 %v2144
    %2272 = vmatprep.subr.mxu0 %v2147
    %2273 = vmatpush1.msra.mxu0 %v2146
    %2274 = vmatprep.subr.mxu0 %v2149
    %2275 = vmatpush1.msra.mxu0 %v2148
    %2276 = vmatprep.subr.mxu0 0.0
    %2277 = vmatpush1.msra.mxu0 0.0
    %2278 = vmatprep.subr.mxu0 0.0
    %2279 = vmatpush1.msra.mxu0 0.0
    %2280 = vmatprep.subr.mxu0 0.0
    %2281 = vmatpush1.msra.mxu0 0.0
    %2282 = vmatprep.subr.mxu0 0.0
    %2283 = vmatpush1.msra.mxu0 0.0
    %2284 = vmatprep.mubr.f32.mxu0 %v2179
    %2285 = vmatmul.mubr.f32.gmra.mrb[0].mxu0 %v2150
    %v2286 = vpop.f32.mrb[0].mxu0
    %v2287 = vadd.f32 0.0, %v2286
    %v2288 = vpop.f32.mrb[0].mxu0
    %v2289 = vadd.f32 0.0, %v2288
    %2290 = vmatprep.mubr.f32.mxu0 %v2182
    %2291 = vmatmul.mubr.f32.gmra.mrb[0].mxu0 %v2152
    %v2292 = vpop.f32.mrb[0].mxu0
    %v2293 = vadd.f32 0.0, %v2292
    %v2294 = vpop.f32.mrb[0].mxu0
    %v2295 = vadd.f32 0.0, %v2294
    %2296 = vmatprep.mubr.f32.mxu0 %v2185
    %2297 = vmatmul.mubr.f32.gmra.mrb[0].mxu0 %v2154
    %v2298 = vpop.f32.mrb[0].mxu0
    %v2299 = vadd.f32 0.0, %v2298
    %v2300 = vpop.f32.mrb[0].mxu0
    %v2301 = vadd.f32 0.0, %v2300
    %2302 = vmatprep.mubr.f32.mxu0 %v2188
    %2303 = vmatmul.mubr.f32.gmra.mrb[0].mxu0 %v2156
    %v2304 = vpop.f32.mrb[0].mxu0
    %v2305 = vadd.f32 0.0, %v2304
    %v2306 = vpop.f32.mrb[0].mxu0
    %v2307 = vadd.f32 0.0, %v2306
    %2308 = vmatprep.mubr.f32.mxu0 %v2191
    %2309 = vmatmul.mubr.f32.gmra.mrb[0].mxu0 %v2158
    %v2310 = vpop.f32.mrb[0].mxu0
    %v2311 = vadd.f32 0.0, %v2310
    %v2312 = vpop.f32.mrb[0].mxu0
    %v2313 = vadd.f32 0.0, %v2312
    %2314 = vmatprep.mubr.f32.mxu0 %v2194
    %2315 = vmatmul.mubr.f32.gmra.mrb[0].mxu0 %v2160
    %v2316 = vpop.f32.mrb[0].mxu0
    %v2317 = vadd.f32 0.0, %v2316
    %v2318 = vpop.f32.mrb[0].mxu0
    %v2319 = vadd.f32 0.0, %v2318
    %2320 = vmatprep.mubr.f32.mxu0 %v2197
    %2321 = vmatmul.mubr.f32.gmra.mrb[0].mxu0 %v2162
    %v2322 = vpop.f32.mrb[0].mxu0
    %v2323 = vadd.f32 0.0, %v2322
    %v2324 = vpop.f32.mrb[0].mxu0
    %v2325 = vadd.f32 0.0, %v2324
    %2326 = vmatprep.mubr.f32.mxu0 %v2200
    %2327 = vmatmul.mubr.f32.gmra.mrb[0].mxu0 %v2164
    %v2328 = vpop.f32.mrb[0].mxu0
    %v2329 = vadd.f32 0.0, %v2328
    %v2330 = vpop.f32.mrb[0].mxu0
    %v2331 = vadd.f32 0.0, %v2330
    %2332 = vmatprep.mubr.f32.mxu0 %v2203
    %2333 = vmatmul.mubr.f32.gmra.mrb[0].mxu0 %v2166
    %v2334 = vpop.f32.mrb[0].mxu0
    %v2335 = vadd.f32 0.0, %v2334
    %v2336 = vpop.f32.mrb[0].mxu0
    %v2337 = vadd.f32 0.0, %v2336
    %2338 = vmatprep.mubr.f32.mxu0 %v2206
    %2339 = vmatmul.mubr.f32.gmra.mrb[0].mxu0 %v2168
    %v2340 = vpop.f32.mrb[0].mxu0
    %v2341 = vadd.f32 0.0, %v2340
    %v2342 = vpop.f32.mrb[0].mxu0
    %v2343 = vadd.f32 0.0, %v2342
    %2344 = vmatprep.mubr.f32.mxu0 %v2209
    %2345 = vmatmul.mubr.f32.gmra.mrb[0].mxu0 %v2170
    %v2346 = vpop.f32.mrb[0].mxu0
    %v2347 = vadd.f32 0.0, %v2346
    %v2348 = vpop.f32.mrb[0].mxu0
    %v2349 = vadd.f32 0.0, %v2348
    %2350 = vmatprep.mubr.f32.mxu0 %v2212
    %2351 = vmatmul.mubr.f32.gmra.mrb[0].mxu0 %v2172
    %v2352 = vpop.f32.mrb[0].mxu0
    %v2353 = vadd.f32 0.0, %v2352
    %v2354 = vpop.f32.mrb[0].mxu0
    %v2355 = vadd.f32 0.0, %v2354
    %2356 = vmatprep.mubr.f32.mxu0 %v2215
    %2357 = vmatmul.mubr.f32.gmra.mrb[0].mxu0 %v2174
    %v2358 = vpop.f32.mrb[0].mxu0
    %v2359 = vadd.f32 0.0, %v2358
    %v2360 = vpop.f32.mrb[0].mxu0
    %v2361 = vadd.f32 0.0, %v2360
    %2362 = vmatprep.mubr.f32.mxu0 %v2218
    %2363 = vmatmul.mubr.f32.gmra.mrb[0].mxu0 %v2176
    %v2364 = vpop.f32.mrb[0].mxu0
    %v2365 = vadd.f32 0.0, %v2364
    %v2366 = vpop.f32.mrb[0].mxu0
    %v2367 = vadd.f32 0.0, %v2366
    %2368 = vdwg.mxu0
    %s2369 = scalar_lea.vmem %s3, 224
    %v2370 = vld [vmem:[%s2369] sm:$0xff]
    %v2371 = vld [vmem:[%s2369 + $0x8] sm:$0xff]
    %v2372 = vld [vmem:[%s2369 + $0x10] sm:$0xff]
    %v2373 = vld [vmem:[%s2369 + $0x18] sm:$0xff]
    %v2374 = vld [vmem:[%s2369 + $0x20] sm:$0xff]
    %v2375 = vld [vmem:[%s2369 + $0x28] sm:$0xff]
    %v2376 = vld [vmem:[%s2369 + $0x30] sm:$0xff]
    %v2377 = vld [vmem:[%s2369 + $0x38] sm:$0xff]
    %v2378 = vld [vmem:[%s2369 + $0x40] sm:$0xff]
    %v2379 = vld [vmem:[%s2369 + $0x48] sm:$0xff]
    %v2380 = vld [vmem:[%s2369 + $0x50] sm:$0xff]
    %v2381 = vld [vmem:[%s2369 + $0x58] sm:$0xff]
    %v2382 = vld [vmem:[%s2369 + $0x60] sm:$0xff]
    %v2383 = vld [vmem:[%s2369 + $0x68] sm:$0xff]
    %v2384 = vld [vmem:[%s2369 + $0x70] sm:$0xff]
    %v2385 = vld [vmem:[%s2369 + $0x78] sm:$0xff]
    %v2386 = vld [vmem:[%s2369 + $0x80] sm:$0xff]
    %v2387 = vld [vmem:[%s2369 + $0x88] sm:$0xff]
    %v2388 = vld [vmem:[%s2369 + $0x90] sm:$0xff]
    %v2389 = vld [vmem:[%s2369 + $0x98] sm:$0xff]
    %v2390 = vld [vmem:[%s2369 + $0xa0] sm:$0xff]
    %v2391 = vld [vmem:[%s2369 + $0xa8] sm:$0xff]
    %v2392 = vld [vmem:[%s2369 + $0xb0] sm:$0xff]
    %v2393 = vld [vmem:[%s2369 + $0xb8] sm:$0xff]
    %v2394 = vld [vmem:[%s2369 + $0xc0] sm:$0xff]
    %v2395 = vld [vmem:[%s2369 + $0xc8] sm:$0xff]
    %v2396 = vld [vmem:[%s2369 + $0xd0] sm:$0xff]
    %v2397 = vld [vmem:[%s2369 + $0xd8] sm:$0xff]
    %v2399 = vsel %vm194, %v2371, 0
    %v2402 = vsel %vm194, %v2373, 0
    %v2405 = vsel %vm194, %v2375, 0
    %v2408 = vsel %vm194, %v2377, 0
    %v2411 = vsel %vm194, %v2379, 0
    %v2414 = vsel %vm194, %v2381, 0
    %v2417 = vsel %vm194, %v2383, 0
    %v2420 = vsel %vm194, %v2385, 0
    %v2423 = vsel %vm194, %v2387, 0
    %v2426 = vsel %vm194, %v2389, 0
    %v2429 = vsel %vm194, %v2391, 0
    %v2432 = vsel %vm194, %v2393, 0
    %v2435 = vsel %vm194, %v2395, 0
    %v2438 = vsel %vm194, %v2397, 0
    %2440 = vmatprep.subr.mxu0 %v2095
    %2441 = vmatpush1.msra.mxu0 %v2094
    %2442 = vmatprep.subr.mxu0 %v2097
    %2443 = vmatpush1.msra.mxu0 %v2096
    %2444 = vmatprep.subr.mxu0 %v2099
    %2445 = vmatpush1.msra.mxu0 %v2098
    %2446 = vmatprep.subr.mxu0 %v2101
    %2447 = vmatpush1.msra.mxu0 %v2100
    %2448 = vmatprep.subr.mxu0 %v2103
    %2449 = vmatpush1.msra.mxu0 %v2102
    %2450 = vmatprep.subr.mxu0 %v2105
    %2451 = vmatpush1.msra.mxu0 %v2104
    %2452 = vmatprep.subr.mxu0 %v2107
    %2453 = vmatpush1.msra.mxu0 %v2106
    %2454 = vmatprep.subr.mxu0 %v2109
    %2455 = vmatpush1.msra.mxu0 %v2108
    %2456 = vmatprep.subr.mxu0 %v2111
    %2457 = vmatpush1.msra.mxu0 %v2110
    %2458 = vmatprep.subr.mxu0 %v2113
    %2459 = vmatpush1.msra.mxu0 %v2112
    %2460 = vmatprep.subr.mxu0 %v2115
    %2461 = vmatpush1.msra.mxu0 %v2114
    %2462 = vmatprep.subr.mxu0 %v2117
    %2463 = vmatpush1.msra.mxu0 %v2116
    %2464 = vmatprep.subr.mxu0 %v2119
    %2465 = vmatpush1.msra.mxu0 %v2118
    %2466 = vmatprep.subr.mxu0 %v2121
    %2467 = vmatpush1.msra.mxu0 %v2120
    %2468 = vmatprep.subr.mxu0 %v2123
    %2469 = vmatpush1.msra.mxu0 %v2122
    %2470 = vmatprep.subr.mxu0 %v2125
    %2471 = vmatpush1.msra.mxu0 %v2124
    %2472 = vmatprep.subr.mxu0 %v2127
    %2473 = vmatpush1.msra.mxu0 %v2126
    %2474 = vmatprep.subr.mxu0 %v2129
    %2475 = vmatpush1.msra.mxu0 %v2128
    %2476 = vmatprep.subr.mxu0 %v2131
    %2477 = vmatpush1.msra.mxu0 %v2130
    %2478 = vmatprep.subr.mxu0 %v2133
    %2479 = vmatpush1.msra.mxu0 %v2132
    %2480 = vmatprep.subr.mxu0 %v2135
    %2481 = vmatpush1.msra.mxu0 %v2134
    %2482 = vmatprep.subr.mxu0 %v2137
    %2483 = vmatpush1.msra.mxu0 %v2136
    %2484 = vmatprep.subr.mxu0 %v2139
    %2485 = vmatpush1.msra.mxu0 %v2138
    %2486 = vmatprep.subr.mxu0 %v2141
    %2487 = vmatpush1.msra.mxu0 %v2140
    %2488 = vmatprep.subr.mxu0 %v2143
    %2489 = vmatpush1.msra.mxu0 %v2142
    %2490 = vmatprep.subr.mxu0 %v2145
    %2491 = vmatpush1.msra.mxu0 %v2144
    %2492 = vmatprep.subr.mxu0 %v2147
    %2493 = vmatpush1.msra.mxu0 %v2146
    %2494 = vmatprep.subr.mxu0 %v2149
    %2495 = vmatpush1.msra.mxu0 %v2148
    %2496 = vmatprep.subr.mxu0 0.0
    %2497 = vmatpush1.msra.mxu0 0.0
    %2498 = vmatprep.subr.mxu0 0.0
    %2499 = vmatpush1.msra.mxu0 0.0
    %2500 = vmatprep.subr.mxu0 0.0
    %2501 = vmatpush1.msra.mxu0 0.0
    %2502 = vmatprep.subr.mxu0 0.0
    %2503 = vmatpush1.msra.mxu0 0.0
    %2504 = vmatprep.mubr.f32.mxu0 %v2399
    %2505 = vmatmul.mubr.f32.gmra.mrb[0].mxu0 %v2370
    %v2506 = vpop.f32.mrb[0].mxu0
    %v2507 = vadd.f32 0.0, %v2506
    %v2508 = vpop.f32.mrb[0].mxu0
    %v2509 = vadd.f32 0.0, %v2508
    %2510 = vmatprep.mubr.f32.mxu0 %v2402
    %2511 = vmatmul.mubr.f32.gmra.mrb[0].mxu0 %v2372
    %v2512 = vpop.f32.mrb[0].mxu0
    %v2513 = vadd.f32 0.0, %v2512
    %v2514 = vpop.f32.mrb[0].mxu0
    %v2515 = vadd.f32 0.0, %v2514
    %2516 = vmatprep.mubr.f32.mxu0 %v2405
    %2517 = vmatmul.mubr.f32.gmra.mrb[0].mxu0 %v2374
    %v2518 = vpop.f32.mrb[0].mxu0
    %v2519 = vadd.f32 0.0, %v2518
    %v2520 = vpop.f32.mrb[0].mxu0
    %v2521 = vadd.f32 0.0, %v2520
    %2522 = vmatprep.mubr.f32.mxu0 %v2408
    %2523 = vmatmul.mubr.f32.gmra.mrb[0].mxu0 %v2376
    %v2524 = vpop.f32.mrb[0].mxu0
    %v2525 = vadd.f32 0.0, %v2524
    %v2526 = vpop.f32.mrb[0].mxu0
    %v2527 = vadd.f32 0.0, %v2526
    %2528 = vmatprep.mubr.f32.mxu0 %v2411
    %2529 = vmatmul.mubr.f32.gmra.mrb[0].mxu0 %v2378
    %v2530 = vpop.f32.mrb[0].mxu0
    %v2531 = vadd.f32 0.0, %v2530
    %v2532 = vpop.f32.mrb[0].mxu0
    %v2533 = vadd.f32 0.0, %v2532
    %2534 = vmatprep.mubr.f32.mxu0 %v2414
    %2535 = vmatmul.mubr.f32.gmra.mrb[0].mxu0 %v2380
    %v2536 = vpop.f32.mrb[0].mxu0
    %v2537 = vadd.f32 0.0, %v2536
    %v2538 = vpop.f32.mrb[0].mxu0
    %v2539 = vadd.f32 0.0, %v2538
    %2540 = vmatprep.mubr.f32.mxu0 %v2417
    %2541 = vmatmul.mubr.f32.gmra.mrb[0].mxu0 %v2382
    %v2542 = vpop.f32.mrb[0].mxu0
    %v2543 = vadd.f32 0.0, %v2542
    %v2544 = vpop.f32.mrb[0].mxu0
    %v2545 = vadd.f32 0.0, %v2544
    %2546 = vmatprep.mubr.f32.mxu0 %v2420
    %2547 = vmatmul.mubr.f32.gmra.mrb[0].mxu0 %v2384
    %v2548 = vpop.f32.mrb[0].mxu0
    %v2549 = vadd.f32 0.0, %v2548
    %v2550 = vpop.f32.mrb[0].mxu0
    %v2551 = vadd.f32 0.0, %v2550
    %2552 = vmatprep.mubr.f32.mxu0 %v2423
    %2553 = vmatmul.mubr.f32.gmra.mrb[0].mxu0 %v2386
    %v2554 = vpop.f32.mrb[0].mxu0
    %v2555 = vadd.f32 0.0, %v2554
    %v2556 = vpop.f32.mrb[0].mxu0
    %v2557 = vadd.f32 0.0, %v2556
    %2558 = vmatprep.mubr.f32.mxu0 %v2426
    %2559 = vmatmul.mubr.f32.gmra.mrb[0].mxu0 %v2388
    %v2560 = vpop.f32.mrb[0].mxu0
    %v2561 = vadd.f32 0.0, %v2560
    %v2562 = vpop.f32.mrb[0].mxu0
    %v2563 = vadd.f32 0.0, %v2562
    %2564 = vmatprep.mubr.f32.mxu0 %v2429
    %2565 = vmatmul.mubr.f32.gmra.mrb[0].mxu0 %v2390
    %v2566 = vpop.f32.mrb[0].mxu0
    %v2567 = vadd.f32 0.0, %v2566
    %v2568 = vpop.f32.mrb[0].mxu0
    %v2569 = vadd.f32 0.0, %v2568
    %2570 = vmatprep.mubr.f32.mxu0 %v2432
    %2571 = vmatmul.mubr.f32.gmra.mrb[0].mxu0 %v2392
    %v2572 = vpop.f32.mrb[0].mxu0
    %v2573 = vadd.f32 0.0, %v2572
    %v2574 = vpop.f32.mrb[0].mxu0
    %v2575 = vadd.f32 0.0, %v2574
    %2576 = vmatprep.mubr.f32.mxu0 %v2435
    %2577 = vmatmul.mubr.f32.gmra.mrb[0].mxu0 %v2394
    %v2578 = vpop.f32.mrb[0].mxu0
    %v2579 = vadd.f32 0.0, %v2578
    %v2580 = vpop.f32.mrb[0].mxu0
    %v2581 = vadd.f32 0.0, %v2580
    %2582 = vmatprep.mubr.f32.mxu0 %v2438
    %2583 = vmatmul.mubr.f32.gmra.mrb[0].mxu0 %v2396
    %v2584 = vpop.f32.mrb[0].mxu0
    %v2585 = vadd.f32 0.0, %v2584
    %v2586 = vpop.f32.mrb[0].mxu0
    %v2587 = vadd.f32 0.0, %v2586
    %2588 = vdwg.mxu0
    %v2589 = vmax.f32 %v2287, %v2507
    %v2590 = vmax.f32 %v2289, %v2509
    %v2591 = vmax.f32 %v2293, %v2513
    %v2592 = vmax.f32 %v2295, %v2515
    %v2593 = vmax.f32 %v2299, %v2519
    %v2594 = vmax.f32 %v2301, %v2521
    %v2595 = vmax.f32 %v2305, %v2525
    %v2596 = vmax.f32 %v2307, %v2527
    %v2597 = vmax.f32 %v2311, %v2531
    %v2598 = vmax.f32 %v2313, %v2533
    %v2599 = vmax.f32 %v2317, %v2537
    %v2600 = vmax.f32 %v2319, %v2539
    %v2601 = vmax.f32 %v2323, %v2543
    %v2602 = vmax.f32 %v2325, %v2545
    %v2603 = vmax.f32 %v2329, %v2549
    %v2604 = vmax.f32 %v2331, %v2551
    %v2605 = vmax.f32 %v2335, %v2555
    %v2606 = vmax.f32 %v2337, %v2557
    %v2607 = vmax.f32 %v2341, %v2561
    %v2608 = vmax.f32 %v2343, %v2563
    %v2609 = vmax.f32 %v2347, %v2567
    %v2610 = vmax.f32 %v2349, %v2569
    %v2611 = vmax.f32 %v2353, %v2573
    %v2612 = vmax.f32 %v2355, %v2575
    %v2613 = vmax.f32 %v2359, %v2579
    %v2614 = vmax.f32 %v2361, %v2581
    %v2615 = vmax.f32 %v2365, %v2585
    %v2616 = vmax.f32 %v2367, %v2587
    %v2617 = vld [vmem:[%s4] sm:$0xff]
    %v2618 = vld [vmem:[%s4 + $0x8] sm:$0xff]
    %v2619 = vld [vmem:[%s4 + $0x10] sm:$0xff]
    %v2620 = vld [vmem:[%s4 + $0x18] sm:$0xff]
    %v2621 = vld [vmem:[%s4 + $0x20] sm:$0xff]
    %v2622 = vld [vmem:[%s4 + $0x28] sm:$0xff]
    %v2623 = vld [vmem:[%s4 + $0x30] sm:$0xff]
    %v2624 = vld [vmem:[%s4 + $0x38] sm:$0xff]
    %v2625 = vld [vmem:[%s4 + $0x40] sm:$0xff]
    %v2626 = vld [vmem:[%s4 + $0x48] sm:$0xff]
    %v2627 = vld [vmem:[%s4 + $0x50] sm:$0xff]
    %v2628 = vld [vmem:[%s4 + $0x58] sm:$0xff]
    %v2629 = vld [vmem:[%s4 + $0x60] sm:$0xff]
    %v2630 = vld [vmem:[%s4 + $0x68] sm:$0xff]
    %v2631 = vld [vmem:[%s4 + $0x70] sm:$0xff]
    %v2632 = vld [vmem:[%s4 + $0x78] sm:$0xff]
    %v2633 = vld [vmem:[%s4 + $0x80] sm:$0xff]
    %v2634 = vld [vmem:[%s4 + $0x88] sm:$0xff]
    %v2635 = vld [vmem:[%s4 + $0x90] sm:$0xff]
    %v2636 = vld [vmem:[%s4 + $0x98] sm:$0xff]
    %v2637 = vld [vmem:[%s4 + $0xa0] sm:$0xff]
    %vm2638 = vcmask 326656
    %v2640 = vsel %vm2638, %v2590, 0
    %v2643 = vsel %vm2638, %v2592, 0
    %v2646 = vsel %vm2638, %v2594, 0
    %v2649 = vsel %vm2638, %v2596, 0
    %v2652 = vsel %vm2638, %v2598, 0
    %v2655 = vsel %vm2638, %v2600, 0
    %v2658 = vsel %vm2638, %v2602, 0
    %v2661 = vsel %vm2638, %v2604, 0
    %v2664 = vsel %vm2638, %v2606, 0
    %v2667 = vsel %vm2638, %v2608, 0
    %v2670 = vsel %vm2638, %v2610, 0
    %v2673 = vsel %vm2638, %v2612, 0
    %v2676 = vsel %vm2638, %v2614, 0
    %v2679 = vsel %vm2638, %v2616, 0
    %2681 = vmatprep.subr.mxu0 0.0
    %2682 = vmatpush1.msra.mxu0 %v2617
    %2683 = vmatprep.subr.mxu0 0.0
    %2684 = vmatpush1.msra.mxu0 %v2618
    %2685 = vmatprep.subr.mxu0 0.0
    %2686 = vmatpush1.msra.mxu0 %v2619
    %2687 = vmatprep.subr.mxu0 0.0
    %2688 = vmatpush1.msra.mxu0 %v2620
    %2689 = vmatprep.subr.mxu0 0.0
    %2690 = vmatpush1.msra.mxu0 %v2621
    %2691 = vmatprep.subr.mxu0 0.0
    %2692 = vmatpush1.msra.mxu0 %v2622
    %2693 = vmatprep.subr.mxu0 0.0
    %2694 = vmatpush1.msra.mxu0 %v2623
    %2695 = vmatprep.subr.mxu0 0.0
    %2696 = vmatpush1.msra.mxu0 %v2624
    %2697 = vmatprep.subr.mxu0 0.0
    %2698 = vmatpush1.msra.mxu0 %v2625
    %2699 = vmatprep.subr.mxu0 0.0
    %2700 = vmatpush1.msra.mxu0 %v2626
    %2701 = vmatprep.subr.mxu0 0.0
    %2702 = vmatpush1.msra.mxu0 %v2627
    %2703 = vmatprep.subr.mxu0 0.0
    %2704 = vmatpush1.msra.mxu0 %v2628
    %2705 = vmatprep.subr.mxu0 0.0
    %2706 = vmatpush1.msra.mxu0 %v2629
    %2707 = vmatprep.subr.mxu0 0.0
    %2708 = vmatpush1.msra.mxu0 %v2630
    %2709 = vmatprep.subr.mxu0 0.0
    %2710 = vmatpush1.msra.mxu0 %v2631
    %2711 = vmatprep.subr.mxu0 0.0
    %2712 = vmatpush1.msra.mxu0 %v2632
    %2713 = vmatprep.subr.mxu0 0.0
    %2714 = vmatpush1.msra.mxu0 %v2633
    %2715 = vmatprep.subr.mxu0 0.0
    %2716 = vmatpush1.msra.mxu0 %v2634
    %2717 = vmatprep.subr.mxu0 0.0
    %2718 = vmatpush1.msra.mxu0 %v2635
    %2719 = vmatprep.subr.mxu0 0.0
    %2720 = vmatpush1.msra.mxu0 %v2636
    %2721 = vmatprep.subr.mxu0 0.0
    %2722 = vmatpush1.msra.mxu0 %v2637
    %2723 = vmatprep.subr.mxu0 0.0
    %2724 = vmatpush1.msra.mxu0 0.0
    %2725 = vmatprep.subr.mxu0 0.0
    %2726 = vmatpush1.msra.mxu0 0.0
    %2727 = vmatprep.subr.mxu0 0.0
    %2728 = vmatpush1.msra.mxu0 0.0
    %2729 = vmatprep.subr.mxu0 0.0
    %2730 = vmatpush1.msra.mxu0 0.0
    %2731 = vmatprep.subr.mxu0 0.0
    %2732 = vmatpush1.msra.mxu0 0.0
    %2733 = vmatprep.subr.mxu0 0.0
    %2734 = vmatpush1.msra.mxu0 0.0
    %2735 = vmatprep.subr.mxu0 0.0
    %2736 = vmatpush1.msra.mxu0 0.0
    %2737 = vmatprep.subr.mxu0 0.0
    %2738 = vmatpush1.msra.mxu0 0.0
    %2739 = vmatprep.subr.mxu0 0.0
    %2740 = vmatpush1.msra.mxu0 0.0
    %2741 = vmatprep.subr.mxu0 0.0
    %2742 = vmatpush1.msra.mxu0 0.0
    %2743 = vmatprep.subr.mxu0 0.0
    %2744 = vmatpush1.msra.mxu0 0.0
    %2745 = vmatprep.mubr.f32.mxu0 %v2640
    %2746 = vmatmul.mubr.f32.gmra.mrb[0].mxu0 %v2589
    %v2747 = vpop.f32.mrb[0].mxu0
    %v2748 = vadd.f32 0.0, %v2747
    %v2749 = vpop.f32.mrb[0].mxu0
    %2750 = vmatprep.mubr.f32.mxu0 %v2643
    %2751 = vmatmul.mubr.f32.gmra.mrb[0].mxu0 %v2591
    %v2752 = vpop.f32.mrb[0].mxu0
    %v2753 = vadd.f32 0.0, %v2752
    %v2754 = vpop.f32.mrb[0].mxu0
    %2755 = vmatprep.mubr.f32.mxu0 %v2646
    %2756 = vmatmul.mubr.f32.gmra.mrb[0].mxu0 %v2593
    %v2757 = vpop.f32.mrb[0].mxu0
    %v2758 = vadd.f32 0.0, %v2757
    %v2759 = vpop.f32.mrb[0].mxu0
    %2760 = vmatprep.mubr.f32.mxu0 %v2649
    %2761 = vmatmul.mubr.f32.gmra.mrb[0].mxu0 %v2595
    %v2762 = vpop.f32.mrb[0].mxu0
    %v2763 = vadd.f32 0.0, %v2762
    %v2764 = vpop.f32.mrb[0].mxu0
    %2765 = vmatprep.mubr.f32.mxu0 %v2652
    %2766 = vmatmul.mubr.f32.gmra.mrb[0].mxu0 %v2597
    %v2767 = vpop.f32.mrb[0].mxu0
    %v2768 = vadd.f32 0.0, %v2767
    %v2769 = vpop.f32.mrb[0].mxu0
    %2770 = vmatprep.mubr.f32.mxu0 %v2655
    %2771 = vmatmul.mubr.f32.gmra.mrb[0].mxu0 %v2599
    %v2772 = vpop.f32.mrb[0].mxu0
    %v2773 = vadd.f32 0.0, %v2772
    %v2774 = vpop.f32.mrb[0].mxu0
    %2775 = vmatprep.mubr.f32.mxu0 %v2658
    %2776 = vmatmul.mubr.f32.gmra.mrb[0].mxu0 %v2601
    %v2777 = vpop.f32.mrb[0].mxu0
    %v2778 = vadd.f32 0.0, %v2777
    %v2779 = vpop.f32.mrb[0].mxu0
    %2780 = vmatprep.mubr.f32.mxu0 %v2661
    %2781 = vmatmul.mubr.f32.gmra.mrb[0].mxu0 %v2603
    %v2782 = vpop.f32.mrb[0].mxu0
    %v2783 = vadd.f32 0.0, %v2782
    %v2784 = vpop.f32.mrb[0].mxu0
    %2785 = vmatprep.mubr.f32.mxu0 %v2664
    %2786 = vmatmul.mubr.f32.gmra.mrb[0].mxu0 %v2605
    %v2787 = vpop.f32.mrb[0].mxu0
    %v2788 = vadd.f32 0.0, %v2787
    %v2789 = vpop.f32.mrb[0].mxu0
    %2790 = vmatprep.mubr.f32.mxu0 %v2667
    %2791 = vmatmul.mubr.f32.gmra.mrb[0].mxu0 %v2607
    %v2792 = vpop.f32.mrb[0].mxu0
    %v2793 = vadd.f32 0.0, %v2792
    %v2794 = vpop.f32.mrb[0].mxu0
    %2795 = vmatprep.mubr.f32.mxu0 %v2670
    %2796 = vmatmul.mubr.f32.gmra.mrb[0].mxu0 %v2609
    %v2797 = vpop.f32.mrb[0].mxu0
    %v2798 = vadd.f32 0.0, %v2797
    %v2799 = vpop.f32.mrb[0].mxu0
    %2800 = vmatprep.mubr.f32.mxu0 %v2673
    %2801 = vmatmul.mubr.f32.gmra.mrb[0].mxu0 %v2611
    %v2802 = vpop.f32.mrb[0].mxu0
    %v2803 = vadd.f32 0.0, %v2802
    %v2804 = vpop.f32.mrb[0].mxu0
    %2805 = vmatprep.mubr.f32.mxu0 %v2676
    %2806 = vmatmul.mubr.f32.gmra.mrb[0].mxu0 %v2613
    %v2807 = vpop.f32.mrb[0].mxu0
    %v2808 = vadd.f32 0.0, %v2807
    %v2809 = vpop.f32.mrb[0].mxu0
    %2810 = vmatprep.mubr.f32.mxu0 %v2679
    %2811 = vmatmul.mubr.f32.gmra.mrb[0].mxu0 %v2615
    %v2812 = vpop.f32.mrb[0].mxu0
    %v2813 = vadd.f32 0.0, %v2812
    %v2814 = vpop.f32.mrb[0].mxu0
    %2815 = vdwg.mxu0
    %s2816 = scalar_lea.vmem %s4, 168
    %v2817 = vld [vmem:[%s2816] sm:$0xff]
    %v2818 = vld [vmem:[%s2816 + $0x8] sm:$0xff]
    %v2819 = vld [vmem:[%s2816 + $0x10] sm:$0xff]
    %v2820 = vld [vmem:[%s2816 + $0x18] sm:$0xff]
    %v2821 = vld [vmem:[%s2816 + $0x20] sm:$0xff]
    %v2822 = vld [vmem:[%s2816 + $0x28] sm:$0xff]
    %v2823 = vld [vmem:[%s2816 + $0x30] sm:$0xff]
    %v2824 = vld [vmem:[%s2816 + $0x38] sm:$0xff]
    %v2825 = vld [vmem:[%s2816 + $0x40] sm:$0xff]
    %v2826 = vld [vmem:[%s2816 + $0x48] sm:$0xff]
    %v2827 = vld [vmem:[%s2816 + $0x50] sm:$0xff]
    %v2828 = vld [vmem:[%s2816 + $0x58] sm:$0xff]
    %v2829 = vld [vmem:[%s2816 + $0x60] sm:$0xff]
    %v2830 = vld [vmem:[%s2816 + $0x68] sm:$0xff]
    %v2831 = vld [vmem:[%s2816 + $0x70] sm:$0xff]
    %v2832 = vld [vmem:[%s2816 + $0x78] sm:$0xff]
    %v2833 = vld [vmem:[%s2816 + $0x80] sm:$0xff]
    %v2834 = vld [vmem:[%s2816 + $0x88] sm:$0xff]
    %v2835 = vld [vmem:[%s2816 + $0x90] sm:$0xff]
    %v2836 = vld [vmem:[%s2816 + $0x98] sm:$0xff]
    %v2837 = vld [vmem:[%s2816 + $0xa0] sm:$0xff]
    %2838 = vmatprep.subr.mxu0 0.0
    %2839 = vmatpush1.msra.mxu0 %v2817
    %2840 = vmatprep.subr.mxu0 0.0
    %2841 = vmatpush1.msra.mxu0 %v2818
    %2842 = vmatprep.subr.mxu0 0.0
    %2843 = vmatpush1.msra.mxu0 %v2819
    %2844 = vmatprep.subr.mxu0 0.0
    %2845 = vmatpush1.msra.mxu0 %v2820
    %2846 = vmatprep.subr.mxu0 0.0
    %2847 = vmatpush1.msra.mxu0 %v2821
    %2848 = vmatprep.subr.mxu0 0.0
    %2849 = vmatpush1.msra.mxu0 %v2822
    %2850 = vmatprep.subr.mxu0 0.0
    %2851 = vmatpush1.msra.mxu0 %v2823
    %2852 = vmatprep.subr.mxu0 0.0
    %2853 = vmatpush1.msra.mxu0 %v2824
    %2854 = vmatprep.subr.mxu0 0.0
    %2855 = vmatpush1.msra.mxu0 %v2825
    %2856 = vmatprep.subr.mxu0 0.0
    %2857 = vmatpush1.msra.mxu0 %v2826
    %2858 = vmatprep.subr.mxu0 0.0
    %2859 = vmatpush1.msra.mxu0 %v2827
    %2860 = vmatprep.subr.mxu0 0.0
    %2861 = vmatpush1.msra.mxu0 %v2828
    %2862 = vmatprep.subr.mxu0 0.0
    %2863 = vmatpush1.msra.mxu0 %v2829
    %2864 = vmatprep.subr.mxu0 0.0
    %2865 = vmatpush1.msra.mxu0 %v2830
    %2866 = vmatprep.subr.mxu0 0.0
    %2867 = vmatpush1.msra.mxu0 %v2831
    %2868 = vmatprep.subr.mxu0 0.0
    %2869 = vmatpush1.msra.mxu0 %v2832
    %2870 = vmatprep.subr.mxu0 0.0
    %2871 = vmatpush1.msra.mxu0 %v2833
    %2872 = vmatprep.subr.mxu0 0.0
    %2873 = vmatpush1.msra.mxu0 %v2834
    %2874 = vmatprep.subr.mxu0 0.0
    %2875 = vmatpush1.msra.mxu0 %v2835
    %2876 = vmatprep.subr.mxu0 0.0
    %2877 = vmatpush1.msra.mxu0 %v2836
    %2878 = vmatprep.subr.mxu0 0.0
    %2879 = vmatpush1.msra.mxu0 %v2837
    %2880 = vmatprep.subr.mxu0 0.0
    %2881 = vmatpush1.msra.mxu0 0.0
    %2882 = vmatprep.subr.mxu0 0.0
    %2883 = vmatpush1.msra.mxu0 0.0
    %2884 = vmatprep.subr.mxu0 0.0
    %2885 = vmatpush1.msra.mxu0 0.0
    %2886 = vmatprep.subr.mxu0 0.0
    %2887 = vmatpush1.msra.mxu0 0.0
    %2888 = vmatprep.subr.mxu0 0.0
    %2889 = vmatpush1.msra.mxu0 0.0
    %2890 = vmatprep.subr.mxu0 0.0
    %2891 = vmatpush1.msra.mxu0 0.0
    %2892 = vmatprep.subr.mxu0 0.0
    %2893 = vmatpush1.msra.mxu0 0.0
    %2894 = vmatprep.subr.mxu0 0.0
    %2895 = vmatpush1.msra.mxu0 0.0
    %2896 = vmatprep.subr.mxu0 0.0
    %2897 = vmatpush1.msra.mxu0 0.0
    %2898 = vmatprep.subr.mxu0 0.0
    %2899 = vmatpush1.msra.mxu0 0.0
    %2900 = vmatprep.subr.mxu0 0.0
    %2901 = vmatpush1.msra.mxu0 0.0
    %2902 = vmatprep.mubr.f32.mxu0 %v2640
    %2903 = vmatmul.mubr.f32.gmra.mrb[0].mxu0 %v2589
    %v2904 = vpop.f32.mrb[0].mxu0
    %v2905 = vadd.f32 0.0, %v2904
    %v2906 = vpop.f32.mrb[0].mxu0
    %2907 = vmatprep.mubr.f32.mxu0 %v2643
    %2908 = vmatmul.mubr.f32.gmra.mrb[0].mxu0 %v2591
    %v2909 = vpop.f32.mrb[0].mxu0
    %v2910 = vadd.f32 0.0, %v2909
    %v2911 = vpop.f32.mrb[0].mxu0
    %2912 = vmatprep.mubr.f32.mxu0 %v2646
    %2913 = vmatmul.mubr.f32.gmra.mrb[0].mxu0 %v2593
    %v2914 = vpop.f32.mrb[0].mxu0
    %v2915 = vadd.f32 0.0, %v2914
    %v2916 = vpop.f32.mrb[0].mxu0
    %2917 = vmatprep.mubr.f32.mxu0 %v2649
    %2918 = vmatmul.mubr.f32.gmra.mrb[0].mxu0 %v2595
    %v2919 = vpop.f32.mrb[0].mxu0
    %v2920 = vadd.f32 0.0, %v2919
    %v2921 = vpop.f32.mrb[0].mxu0
    %2922 = vmatprep.mubr.f32.mxu0 %v2652
    %2923 = vmatmul.mubr.f32.gmra.mrb[0].mxu0 %v2597
    %v2924 = vpop.f32.mrb[0].mxu0
    %v2925 = vadd.f32 0.0, %v2924
    %v2926 = vpop.f32.mrb[0].mxu0
    %2927 = vmatprep.mubr.f32.mxu0 %v2655
    %2928 = vmatmul.mubr.f32.gmra.mrb[0].mxu0 %v2599
    %v2929 = vpop.f32.mrb[0].mxu0
    %v2930 = vadd.f32 0.0, %v2929
    %v2931 = vpop.f32.mrb[0].mxu0
    %2932 = vmatprep.mubr.f32.mxu0 %v2658
    %2933 = vmatmul.mubr.f32.gmra.mrb[0].mxu0 %v2601
    %v2934 = vpop.f32.mrb[0].mxu0
    %v2935 = vadd.f32 0.0, %v2934
    %v2936 = vpop.f32.mrb[0].mxu0
    %2937 = vmatprep.mubr.f32.mxu0 %v2661
    %2938 = vmatmul.mubr.f32.gmra.mrb[0].mxu0 %v2603
    %v2939 = vpop.f32.mrb[0].mxu0
    %v2940 = vadd.f32 0.0, %v2939
    %v2941 = vpop.f32.mrb[0].mxu0
    %2942 = vmatprep.mubr.f32.mxu0 %v2664
    %2943 = vmatmul.mubr.f32.gmra.mrb[0].mxu0 %v2605
    %v2944 = vpop.f32.mrb[0].mxu0
    %v2945 = vadd.f32 0.0, %v2944
    %v2946 = vpop.f32.mrb[0].mxu0
    %2947 = vmatprep.mubr.f32.mxu0 %v2667
    %2948 = vmatmul.mubr.f32.gmra.mrb[0].mxu0 %v2607
    %v2949 = vpop.f32.mrb[0].mxu0
    %v2950 = vadd.f32 0.0, %v2949
    %v2951 = vpop.f32.mrb[0].mxu0
    %2952 = vmatprep.mubr.f32.mxu0 %v2670
    %2953 = vmatmul.mubr.f32.gmra.mrb[0].mxu0 %v2609
    %v2954 = vpop.f32.mrb[0].mxu0
    %v2955 = vadd.f32 0.0, %v2954
    %v2956 = vpop.f32.mrb[0].mxu0
    %2957 = vmatprep.mubr.f32.mxu0 %v2673
    %2958 = vmatmul.mubr.f32.gmra.mrb[0].mxu0 %v2611
    %v2959 = vpop.f32.mrb[0].mxu0
    %v2960 = vadd.f32 0.0, %v2959
    %v2961 = vpop.f32.mrb[0].mxu0
    %2962 = vmatprep.mubr.f32.mxu0 %v2676
    %2963 = vmatmul.mubr.f32.gmra.mrb[0].mxu0 %v2613
    %v2964 = vpop.f32.mrb[0].mxu0
    %v2965 = vadd.f32 0.0, %v2964
    %v2966 = vpop.f32.mrb[0].mxu0
    %2967 = vmatprep.mubr.f32.mxu0 %v2679
    %2968 = vmatmul.mubr.f32.gmra.mrb[0].mxu0 %v2615
    %v2969 = vpop.f32.mrb[0].mxu0
    %v2970 = vadd.f32 0.0, %v2969
    %v2971 = vpop.f32.mrb[0].mxu0
    %2972 = vdwg.mxu0
    %v2973 = vmax.f32 %v2748, %v2905
    %v2974 = vmax.f32 %v2753, %v2910
    %v2975 = vmax.f32 %v2758, %v2915
    %v2976 = vmax.f32 %v2763, %v2920
    %v2977 = vmax.f32 %v2768, %v2925
    %v2978 = vmax.f32 %v2773, %v2930
    %v2979 = vmax.f32 %v2778, %v2935
    %v2980 = vmax.f32 %v2783, %v2940
    %v2981 = vmax.f32 %v2788, %v2945
    %v2982 = vmax.f32 %v2793, %v2950
    %v2983 = vmax.f32 %v2798, %v2955
    %v2984 = vmax.f32 %v2803, %v2960
    %v2985 = vmax.f32 %v2808, %v2965
    %v2986 = vmax.f32 %v2813, %v2970
    %v2987 = vld [vmem:[%s5] sm:$0xff]
    %v2988 = vld [vmem:[%s5 + $0x8] sm:$0xff]
    %v2989 = vld [vmem:[%s5 + $0x10] sm:$0xff]
    %v2990 = vld [vmem:[%s5 + $0x18] sm:$0xff]
    %v2991 = vld [vmem:[%s5 + $0x20] sm:$0xff]
    %v2992 = vld [vmem:[%s5 + $0x28] sm:$0xff]
    %v2993 = vld [vmem:[%s5 + $0x30] sm:$0xff]
    %v2994 = vld [vmem:[%s5 + $0x38] sm:$0xff]
    %v2995 = vld [vmem:[%s5 + $0x40] sm:$0xff]
    %v2996 = vld [vmem:[%s5 + $0x48] sm:$0xff]
    %v2997 = vld [vmem:[%s5 + $0x50] sm:$0xff]
    %v2998 = vld [vmem:[%s5 + $0x58] sm:$0xff]
    %v2999 = vld [vmem:[%s5 + $0x60] sm:$0xff]
    %v3000 = vld [vmem:[%s5 + $0x68] sm:$0xff]
    %v3001 = vld [vmem:[%s5 + $0x70] sm:$0xff]
    %v3002 = vld [vmem:[%s5 + $0x78] sm:$0xff]
    %v3003 = vld [vmem:[%s5 + $0x80] sm:$0xff]
    %v3004 = vld [vmem:[%s5 + $0x88] sm:$0xff]
    %v3005 = vld [vmem:[%s5 + $0x90] sm:$0xff]
    %v3006 = vld [vmem:[%s5 + $0x98] sm:$0xff]
    %v3007 = vld [vmem:[%s5 + $0xa0] sm:$0xf]
    %v3008 = vld [vmem:[%s5 + $0xa8] sm:$0xf]
    %s3009 = scalar_lea.vmem %s5, 176
    %v3010 = vld [vmem:[%s3009] sm:$0xff]
    %v3011 = vld [vmem:[%s3009 + $0x8] sm:$0xff]
    %v3012 = vld [vmem:[%s3009 + $0x10] sm:$0xff]
    %v3013 = vld [vmem:[%s3009 + $0x18] sm:$0xff]
    %v3014 = vld [vmem:[%s3009 + $0x20] sm:$0xff]
    %v3015 = vld [vmem:[%s3009 + $0x28] sm:$0xff]
    %v3016 = vld [vmem:[%s3009 + $0x30] sm:$0xff]
    %v3017 = vld [vmem:[%s3009 + $0x38] sm:$0xff]
    %v3018 = vld [vmem:[%s3009 + $0x40] sm:$0xff]
    %v3019 = vld [vmem:[%s3009 + $0x48] sm:$0xff]
    %v3020 = vld [vmem:[%s3009 + $0x50] sm:$0xff]
    %v3021 = vld [vmem:[%s3009 + $0x58] sm:$0xff]
    %v3022 = vld [vmem:[%s3009 + $0x60] sm:$0xff]
    %v3023 = vld [vmem:[%s3009 + $0x68] sm:$0xff]
    %v3024 = vld [vmem:[%s3009 + $0x70] sm:$0xff]
    %v3025 = vld [vmem:[%s3009 + $0x78] sm:$0xff]
    %v3026 = vld [vmem:[%s3009 + $0x80] sm:$0xff]
    %v3027 = vld [vmem:[%s3009 + $0x88] sm:$0xff]
    %v3028 = vld [vmem:[%s3009 + $0x90] sm:$0xff]
    %v3029 = vld [vmem:[%s3009 + $0x98] sm:$0xff]
    %v3030 = vld [vmem:[%s3009 + $0xa0] sm:$0xf]
    %v3031 = vld [vmem:[%s3009 + $0xa8] sm:$0xf]
    %vm3032 = vcmask 687104
    %v3034 = vsel %vm3032, %v2974, 0
    %v3037 = vsel %vm3032, %v2975, 0
    %v3040 = vsel %vm3032, %v2976, 0
    %v3043 = vsel %vm3032, %v2977, 0
    %v3046 = vsel %vm3032, %v2978, 0
    %v3049 = vsel %vm3032, %v2979, 0
    %v3052 = vsel %vm3032, %v2980, 0
    %v3055 = vsel %vm3032, %v2981, 0
    %v3058 = vsel %vm3032, %v2982, 0
    %v3061 = vsel %vm3032, %v2983, 0
    %vm3063 = vcmask 1043456
    %v3065 = vsel %vm3063, %v3030, 0
    %v3068 = vsel %vm3063, %v3031, 0
    %3070 = vmatprep.subr.mxu0 %v3011
    %3071 = vmatpush1.msra.mxu0 %v3010
    %3072 = vmatprep.subr.mxu0 %v3013
    %3073 = vmatpush1.msra.mxu0 %v3012
    %3074 = vmatprep.subr.mxu0 %v3015
    %3075 = vmatpush1.msra.mxu0 %v3014
    %3076 = vmatprep.subr.mxu0 %v3017
    %3077 = vmatpush1.msra.mxu0 %v3016
    %3078 = vmatprep.subr.mxu0 %v3019
    %3079 = vmatpush1.msra.mxu0 %v3018
    %3080 = vmatprep.subr.mxu0 %v3021
    %3081 = vmatpush1.msra.mxu0 %v3020
    %3082 = vmatprep.subr.mxu0 %v3023
    %3083 = vmatpush1.msra.mxu0 %v3022
    %3084 = vmatprep.subr.mxu0 %v3025
    %3085 = vmatpush1.msra.mxu0 %v3024
    %3086 = vmatprep.subr.mxu0 %v3027
    %3087 = vmatpush1.msra.mxu0 %v3026
    %3088 = vmatprep.subr.mxu0 %v3029
    %3089 = vmatpush1.msra.mxu0 %v3028
    %3090 = vmatprep.subr.mxu0 %v3068
    %3091 = vmatpush1.msra.mxu0 %v3065
    %3092 = vmatprep.subr.mxu0 0.0
    %3093 = vmatpush1.msra.mxu0 0.0
    %3094 = vmatprep.subr.mxu0 0.0
    %3095 = vmatpush1.msra.mxu0 0.0
    %3096 = vmatprep.subr.mxu0 0.0
    %3097 = vmatpush1.msra.mxu0 0.0
    %3098 = vmatprep.subr.mxu0 0.0
    %3099 = vmatpush1.msra.mxu0 0.0
    %3100 = vmatprep.subr.mxu0 0.0
    %3101 = vmatpush1.msra.mxu0 0.0
    %3102 = vmatprep.subr.mxu0 0.0
    %3103 = vmatpush1.msra.mxu0 0.0
    %3104 = vmatprep.subr.mxu0 0.0
    %3105 = vmatpush1.msra.mxu0 0.0
    %3106 = vmatprep.subr.mxu0 0.0
    %3107 = vmatpush1.msra.mxu0 0.0
    %3108 = vmatprep.subr.mxu0 0.0
    %3109 = vmatpush1.msra.mxu0 0.0
    %3110 = vmatprep.subr.mxu0 0.0
    %3111 = vmatpush1.msra.mxu0 0.0
    %3112 = vmatprep.subr.mxu0 0.0
    %3113 = vmatpush1.msra.mxu0 0.0
    %3114 = vmatprep.subr.mxu0 0.0
    %3115 = vmatpush1.msra.mxu0 0.0
    %3116 = vmatprep.subr.mxu0 0.0
    %3117 = vmatpush1.msra.mxu0 0.0
    %3118 = vmatprep.subr.mxu0 0.0
    %3119 = vmatpush1.msra.mxu0 0.0
    %3120 = vmatprep.subr.mxu0 0.0
    %3121 = vmatpush1.msra.mxu0 0.0
    %3122 = vmatprep.subr.mxu0 0.0
    %3123 = vmatpush1.msra.mxu0 0.0
    %3124 = vmatprep.subr.mxu0 0.0
    %3125 = vmatpush1.msra.mxu0 0.0
    %3126 = vmatprep.subr.mxu0 0.0
    %3127 = vmatpush1.msra.mxu0 0.0
    %3128 = vmatprep.subr.mxu0 0.0
    %3129 = vmatpush1.msra.mxu0 0.0
    %3130 = vmatprep.subr.mxu0 0.0
    %3131 = vmatpush1.msra.mxu0 0.0
    %3132 = vmatprep.subr.mxu0 0.0
    %3133 = vmatpush1.msra.mxu0 0.0
    %3134 = vmatprep.mubr.f32.mxu0 0.0
    %3135 = vmatmul.mubr.f32.gmra.mrb[0].mxu0 %v3034
    %v3136 = vpop.f32.mrb[0].mxu0
    %v3137 = vadd.f32 0.0, %v3136
    %v3138 = vpop.f32.mrb[0].mxu0
    %v3139 = vadd.f32 0.0, %v3138
    %3140 = vmatprep.mubr.f32.mxu0 0.0
    %3141 = vmatmul.mubr.f32.gmra.mrb[0].mxu0 %v3037
    %v3142 = vpop.f32.mrb[0].mxu0
    %v3143 = vadd.f32 0.0, %v3142
    %v3144 = vpop.f32.mrb[0].mxu0
    %v3145 = vadd.f32 0.0, %v3144
    %3146 = vmatprep.mubr.f32.mxu0 0.0
    %3147 = vmatmul.mubr.f32.gmra.mrb[0].mxu0 %v3040
    %v3148 = vpop.f32.mrb[0].mxu0
    %v3149 = vadd.f32 0.0, %v3148
    %v3150 = vpop.f32.mrb[0].mxu0
    %v3151 = vadd.f32 0.0, %v3150
    %3152 = vmatprep.mubr.f32.mxu0 0.0
    %3153 = vmatmul.mubr.f32.gmra.mrb[0].mxu0 %v3043
    %v3154 = vpop.f32.mrb[0].mxu0
    %v3155 = vadd.f32 0.0, %v3154
    %v3156 = vpop.f32.mrb[0].mxu0
    %v3157 = vadd.f32 0.0, %v3156
    %3158 = vmatprep.mubr.f32.mxu0 0.0
    %3159 = vmatmul.mubr.f32.gmra.mrb[0].mxu0 %v3046
    %v3160 = vpop.f32.mrb[0].mxu0
    %v3161 = vadd.f32 0.0, %v3160
    %v3162 = vpop.f32.mrb[0].mxu0
    %v3163 = vadd.f32 0.0, %v3162
    %3164 = vmatprep.mubr.f32.mxu0 0.0
    %3165 = vmatmul.mubr.f32.gmra.mrb[0].mxu0 %v3049
    %v3166 = vpop.f32.mrb[0].mxu0
    %v3167 = vadd.f32 0.0, %v3166
    %v3168 = vpop.f32.mrb[0].mxu0
    %v3169 = vadd.f32 0.0, %v3168
    %3170 = vmatprep.mubr.f32.mxu0 0.0
    %3171 = vmatmul.mubr.f32.gmra.mrb[0].mxu0 %v3052
    %v3172 = vpop.f32.mrb[0].mxu0
    %v3173 = vadd.f32 0.0, %v3172
    %v3174 = vpop.f32.mrb[0].mxu0
    %v3175 = vadd.f32 0.0, %v3174
    %3176 = vmatprep.mubr.f32.mxu0 0.0
    %3177 = vmatmul.mubr.f32.gmra.mrb[0].mxu0 %v3055
    %v3178 = vpop.f32.mrb[0].mxu0
    %v3179 = vadd.f32 0.0, %v3178
    %v3180 = vpop.f32.mrb[0].mxu0
    %v3181 = vadd.f32 0.0, %v3180
    %3182 = vmatprep.mubr.f32.mxu0 0.0
    %3183 = vmatmul.mubr.f32.gmra.mrb[0].mxu0 %v3058
    %v3184 = vpop.f32.mrb[0].mxu0
    %v3185 = vadd.f32 0.0, %v3184
    %v3186 = vpop.f32.mrb[0].mxu0
    %v3187 = vadd.f32 0.0, %v3186
    %3188 = vmatprep.mubr.f32.mxu0 0.0
    %3189 = vmatmul.mubr.f32.gmra.mrb[0].mxu0 %v3061
    %v3190 = vpop.f32.mrb[0].mxu0
    %v3191 = vadd.f32 0.0, %v3190
    %v3192 = vpop.f32.mrb[0].mxu0
    %v3193 = vadd.f32 0.0, %v3192
    %3194 = vdwg.mxu0
    %v3196 = vsel %vm3032, %v2973, 0
    %v3199 = vsel %vm3063, %v3007, 0
    %v3202 = vsel %vm3063, %v3008, 0
    %3204 = vmatprep.subr.mxu0 %v2988
    %3205 = vmatpush1.msra.mxu0 %v2987
    %3206 = vmatprep.subr.mxu0 %v2990
    %3207 = vmatpush1.msra.mxu0 %v2989
    %3208 = vmatprep.subr.mxu0 %v2992
    %3209 = vmatpush1.msra.mxu0 %v2991
    %3210 = vmatprep.subr.mxu0 %v2994
    %3211 = vmatpush1.msra.mxu0 %v2993
    %3212 = vmatprep.subr.mxu0 %v2996
    %3213 = vmatpush1.msra.mxu0 %v2995
    %3214 = vmatprep.subr.mxu0 %v2998
    %3215 = vmatpush1.msra.mxu0 %v2997
    %3216 = vmatprep.subr.mxu0 %v3000
    %3217 = vmatpush1.msra.mxu0 %v2999
    %3218 = vmatprep.subr.mxu0 %v3002
    %3219 = vmatpush1.msra.mxu0 %v3001
    %3220 = vmatprep.subr.mxu0 %v3004
    %3221 = vmatpush1.msra.mxu0 %v3003
    %3222 = vmatprep.subr.mxu0 %v3006
    %3223 = vmatpush1.msra.mxu0 %v3005
    %3224 = vmatprep.subr.mxu0 %v3202
    %3225 = vmatpush1.msra.mxu0 %v3199
    %3226 = vmatprep.subr.mxu0 0.0
    %3227 = vmatpush1.msra.mxu0 0.0
    %3228 = vmatprep.subr.mxu0 0.0
    %3229 = vmatpush1.msra.mxu0 0.0
    %3230 = vmatprep.subr.mxu0 0.0
    %3231 = vmatpush1.msra.mxu0 0.0
    %3232 = vmatprep.subr.mxu0 0.0
    %3233 = vmatpush1.msra.mxu0 0.0
    %3234 = vmatprep.subr.mxu0 0.0
    %3235 = vmatpush1.msra.mxu0 0.0
    %3236 = vmatprep.subr.mxu0 0.0
    %3237 = vmatpush1.msra.mxu0 0.0
    %3238 = vmatprep.subr.mxu0 0.0
    %3239 = vmatpush1.msra.mxu0 0.0
    %3240 = vmatprep.subr.mxu0 0.0
    %3241 = vmatpush1.msra.mxu0 0.0
    %3242 = vmatprep.subr.mxu0 0.0
    %3243 = vmatpush1.msra.mxu0 0.0
    %3244 = vmatprep.subr.mxu0 0.0
    %3245 = vmatpush1.msra.mxu0 0.0
    %3246 = vmatprep.subr.mxu0 0.0
    %3247 = vmatpush1.msra.mxu0 0.0
    %3248 = vmatprep.subr.mxu0 0.0
    %3249 = vmatpush1.msra.mxu0 0.0
    %3250 = vmatprep.subr.mxu0 0.0
    %3251 = vmatpush1.msra.mxu0 0.0
    %3252 = vmatprep.subr.mxu0 0.0
    %3253 = vmatpush1.msra.mxu0 0.0
    %3254 = vmatprep.subr.mxu0 0.0
    %3255 = vmatpush1.msra.mxu0 0.0
    %3256 = vmatprep.subr.mxu0 0.0
    %3257 = vmatpush1.msra.mxu0 0.0
    %3258 = vmatprep.subr.mxu0 0.0
    %3259 = vmatpush1.msra.mxu0 0.0
    %3260 = vmatprep.subr.mxu0 0.0
    %3261 = vmatpush1.msra.mxu0 0.0
    %3262 = vmatprep.subr.mxu0 0.0
    %3263 = vmatpush1.msra.mxu0 0.0
    %3264 = vmatprep.subr.mxu0 0.0
    %3265 = vmatpush1.msra.mxu0 0.0
    %3266 = vmatprep.subr.mxu0 0.0
    %3267 = vmatpush1.msra.mxu0 0.0
    %3268 = vmatprep.mubr.f32.mxu0 0.0
    %3269 = vmatmul.mubr.f32.gmra.mrb[0].mxu0 %v3196
    %v3270 = vpop.f32.mrb[0].mxu0
    %v3271 = vadd.f32 %v3137, %v3270
    %v3272 = vpop.f32.mrb[0].mxu0
    %v3273 = vadd.f32 %v3139, %v3272
    %3274 = vmatprep.mubr.f32.mxu0 0.0
    %3275 = vmatmul.mubr.f32.gmra.mrb[0].mxu0 %v3034
    %v3276 = vpop.f32.mrb[0].mxu0
    %v3277 = vadd.f32 %v3143, %v3276
    %v3278 = vpop.f32.mrb[0].mxu0
    %v3279 = vadd.f32 %v3145, %v3278
    %3280 = vmatprep.mubr.f32.mxu0 0.0
    %3281 = vmatmul.mubr.f32.gmra.mrb[0].mxu0 %v3037
    %v3282 = vpop.f32.mrb[0].mxu0
    %v3283 = vadd.f32 %v3149, %v3282
    %v3284 = vpop.f32.mrb[0].mxu0
    %v3285 = vadd.f32 %v3151, %v3284
    %3286 = vmatprep.mubr.f32.mxu0 0.0
    %3287 = vmatmul.mubr.f32.gmra.mrb[0].mxu0 %v3040
    %v3288 = vpop.f32.mrb[0].mxu0
    %v3289 = vadd.f32 %v3155, %v3288
    %v3290 = vpop.f32.mrb[0].mxu0
    %v3291 = vadd.f32 %v3157, %v3290
    %3292 = vmatprep.mubr.f32.mxu0 0.0
    %3293 = vmatmul.mubr.f32.gmra.mrb[0].mxu0 %v3043
    %v3294 = vpop.f32.mrb[0].mxu0
    %v3295 = vadd.f32 %v3161, %v3294
    %v3296 = vpop.f32.mrb[0].mxu0
    %v3297 = vadd.f32 %v3163, %v3296
    %3298 = vmatprep.mubr.f32.mxu0 0.0
    %3299 = vmatmul.mubr.f32.gmra.mrb[0].mxu0 %v3046
    %v3300 = vpop.f32.mrb[0].mxu0
    %v3301 = vadd.f32 %v3167, %v3300
    %v3302 = vpop.f32.mrb[0].mxu0
    %v3303 = vadd.f32 %v3169, %v3302
    %3304 = vmatprep.mubr.f32.mxu0 0.0
    %3305 = vmatmul.mubr.f32.gmra.mrb[0].mxu0 %v3049
    %v3306 = vpop.f32.mrb[0].mxu0
    %v3307 = vadd.f32 %v3173, %v3306
    %v3308 = vpop.f32.mrb[0].mxu0
    %v3309 = vadd.f32 %v3175, %v3308
    %3310 = vmatprep.mubr.f32.mxu0 0.0
    %3311 = vmatmul.mubr.f32.gmra.mrb[0].mxu0 %v3052
    %v3312 = vpop.f32.mrb[0].mxu0
    %v3313 = vadd.f32 %v3179, %v3312
    %v3314 = vpop.f32.mrb[0].mxu0
    %v3315 = vadd.f32 %v3181, %v3314
    %3316 = vmatprep.mubr.f32.mxu0 0.0
    %3317 = vmatmul.mubr.f32.gmra.mrb[0].mxu0 %v3055
    %v3318 = vpop.f32.mrb[0].mxu0
    %v3319 = vadd.f32 %v3185, %v3318
    %v3320 = vpop.f32.mrb[0].mxu0
    %v3321 = vadd.f32 %v3187, %v3320
    %3322 = vmatprep.mubr.f32.mxu0 0.0
    %3323 = vmatmul.mubr.f32.gmra.mrb[0].mxu0 %v3058
    %v3324 = vpop.f32.mrb[0].mxu0
    %v3325 = vadd.f32 %v3191, %v3324
    %v3326 = vpop.f32.mrb[0].mxu0
    %v3327 = vadd.f32 %v3193, %v3326
    %3328 = vdwg.mxu0
    %s3329 = scalar_lea.vmem %s5, 352
    %v3330 = vld [vmem:[%s3329] sm:$0xff]
    %v3331 = vld [vmem:[%s3329 + $0x8] sm:$0xff]
    %v3332 = vld [vmem:[%s3329 + $0x10] sm:$0xff]
    %v3333 = vld [vmem:[%s3329 + $0x18] sm:$0xff]
    %v3334 = vld [vmem:[%s3329 + $0x20] sm:$0xff]
    %v3335 = vld [vmem:[%s3329 + $0x28] sm:$0xff]
    %v3336 = vld [vmem:[%s3329 + $0x30] sm:$0xff]
    %v3337 = vld [vmem:[%s3329 + $0x38] sm:$0xff]
    %v3338 = vld [vmem:[%s3329 + $0x40] sm:$0xff]
    %v3339 = vld [vmem:[%s3329 + $0x48] sm:$0xff]
    %v3340 = vld [vmem:[%s3329 + $0x50] sm:$0xff]
    %v3341 = vld [vmem:[%s3329 + $0x58] sm:$0xff]
    %v3342 = vld [vmem:[%s3329 + $0x60] sm:$0xff]
    %v3343 = vld [vmem:[%s3329 + $0x68] sm:$0xff]
    %v3344 = vld [vmem:[%s3329 + $0x70] sm:$0xff]
    %v3345 = vld [vmem:[%s3329 + $0x78] sm:$0xff]
    %v3346 = vld [vmem:[%s3329 + $0x80] sm:$0xff]
    %v3347 = vld [vmem:[%s3329 + $0x88] sm:$0xff]
    %v3348 = vld [vmem:[%s3329 + $0x90] sm:$0xff]
    %v3349 = vld [vmem:[%s3329 + $0x98] sm:$0xff]
    %v3350 = vld [vmem:[%s3329 + $0xa0] sm:$0xf]
    %v3351 = vld [vmem:[%s3329 + $0xa8] sm:$0xf]
    %v3353 = vsel %vm3032, %v2984, 0
    %v3356 = vsel %vm3063, %v3350, 0
    %v3359 = vsel %vm3063, %v3351, 0
    %3361 = vmatprep.subr.mxu0 %v3331
    %3362 = vmatpush1.msra.mxu0 %v3330
    %3363 = vmatprep.subr.mxu0 %v3333
    %3364 = vmatpush1.msra.mxu0 %v3332
    %3365 = vmatprep.subr.mxu0 %v3335
    %3366 = vmatpush1.msra.mxu0 %v3334
    %3367 = vmatprep.subr.mxu0 %v3337
    %3368 = vmatpush1.msra.mxu0 %v3336
    %3369 = vmatprep.subr.mxu0 %v3339
    %3370 = vmatpush1.msra.mxu0 %v3338
    %3371 = vmatprep.subr.mxu0 %v3341
    %3372 = vmatpush1.msra.mxu0 %v3340
    %3373 = vmatprep.subr.mxu0 %v3343
    %3374 = vmatpush1.msra.mxu0 %v3342
    %3375 = vmatprep.subr.mxu0 %v3345
    %3376 = vmatpush1.msra.mxu0 %v3344
    %3377 = vmatprep.subr.mxu0 %v3347
    %3378 = vmatpush1.msra.mxu0 %v3346
    %3379 = vmatprep.subr.mxu0 %v3349
    %3380 = vmatpush1.msra.mxu0 %v3348
    %3381 = vmatprep.subr.mxu0 %v3359
    %3382 = vmatpush1.msra.mxu0 %v3356
    %3383 = vmatprep.subr.mxu0 0.0
    %3384 = vmatpush1.msra.mxu0 0.0
    %3385 = vmatprep.subr.mxu0 0.0
    %3386 = vmatpush1.msra.mxu0 0.0
    %3387 = vmatprep.subr.mxu0 0.0
    %3388 = vmatpush1.msra.mxu0 0.0
    %3389 = vmatprep.subr.mxu0 0.0
    %3390 = vmatpush1.msra.mxu0 0.0
    %3391 = vmatprep.subr.mxu0 0.0
    %3392 = vmatpush1.msra.mxu0 0.0
    %3393 = vmatprep.subr.mxu0 0.0
    %3394 = vmatpush1.msra.mxu0 0.0
    %3395 = vmatprep.subr.mxu0 0.0
    %3396 = vmatpush1.msra.mxu0 0.0
    %3397 = vmatprep.subr.mxu0 0.0
    %3398 = vmatpush1.msra.mxu0 0.0
    %3399 = vmatprep.subr.mxu0 0.0
    %3400 = vmatpush1.msra.mxu0 0.0
    %3401 = vmatprep.subr.mxu0 0.0
    %3402 = vmatpush1.msra.mxu0 0.0
    %3403 = vmatprep.subr.mxu0 0.0
    %3404 = vmatpush1.msra.mxu0 0.0
    %3405 = vmatprep.subr.mxu0 0.0
    %3406 = vmatpush1.msra.mxu0 0.0
    %3407 = vmatprep.subr.mxu0 0.0
    %3408 = vmatpush1.msra.mxu0 0.0
    %3409 = vmatprep.subr.mxu0 0.0
    %3410 = vmatpush1.msra.mxu0 0.0
    %3411 = vmatprep.subr.mxu0 0.0
    %3412 = vmatpush1.msra.mxu0 0.0
    %3413 = vmatprep.subr.mxu0 0.0
    %3414 = vmatpush1.msra.mxu0 0.0
    %3415 = vmatprep.subr.mxu0 0.0
    %3416 = vmatpush1.msra.mxu0 0.0
    %3417 = vmatprep.subr.mxu0 0.0
    %3418 = vmatpush1.msra.mxu0 0.0
    %3419 = vmatprep.subr.mxu0 0.0
    %3420 = vmatpush1.msra.mxu0 0.0
    %3421 = vmatprep.subr.mxu0 0.0
    %3422 = vmatpush1.msra.mxu0 0.0
    %3423 = vmatprep.subr.mxu0 0.0
    %3424 = vmatpush1.msra.mxu0 0.0
    %3425 = vmatprep.mubr.f32.mxu0 0.0
    %3426 = vmatmul.mubr.f32.gmra.mrb[0].mxu0 %v3037
    %v3427 = vpop.f32.mrb[0].mxu0
    %v3428 = vadd.f32 0.0, %v3427
    %v3429 = vpop.f32.mrb[0].mxu0
    %v3430 = vadd.f32 0.0, %v3429
    %3431 = vmatprep.mubr.f32.mxu0 0.0
    %3432 = vmatmul.mubr.f32.gmra.mrb[0].mxu0 %v3040
    %v3433 = vpop.f32.mrb[0].mxu0
    %v3434 = vadd.f32 0.0, %v3433
    %v3435 = vpop.f32.mrb[0].mxu0
    %v3436 = vadd.f32 0.0, %v3435
    %3437 = vmatprep.mubr.f32.mxu0 0.0
    %3438 = vmatmul.mubr.f32.gmra.mrb[0].mxu0 %v3043
    %v3439 = vpop.f32.mrb[0].mxu0
    %v3440 = vadd.f32 0.0, %v3439
    %v3441 = vpop.f32.mrb[0].mxu0
    %v3442 = vadd.f32 0.0, %v3441
    %3443 = vmatprep.mubr.f32.mxu0 0.0
    %3444 = vmatmul.mubr.f32.gmra.mrb[0].mxu0 %v3046
    %v3445 = vpop.f32.mrb[0].mxu0
    %v3446 = vadd.f32 0.0, %v3445
    %v3447 = vpop.f32.mrb[0].mxu0
    %v3448 = vadd.f32 0.0, %v3447
    %3449 = vmatprep.mubr.f32.mxu0 0.0
    %3450 = vmatmul.mubr.f32.gmra.mrb[0].mxu0 %v3049
    %v3451 = vpop.f32.mrb[0].mxu0
    %v3452 = vadd.f32 0.0, %v3451
    %v3453 = vpop.f32.mrb[0].mxu0
    %v3454 = vadd.f32 0.0, %v3453
    %3455 = vmatprep.mubr.f32.mxu0 0.0
    %3456 = vmatmul.mubr.f32.gmra.mrb[0].mxu0 %v3052
    %v3457 = vpop.f32.mrb[0].mxu0
    %v3458 = vadd.f32 0.0, %v3457
    %v3459 = vpop.f32.mrb[0].mxu0
    %v3460 = vadd.f32 0.0, %v3459
    %3461 = vmatprep.mubr.f32.mxu0 0.0
    %3462 = vmatmul.mubr.f32.gmra.mrb[0].mxu0 %v3055
    %v3463 = vpop.f32.mrb[0].mxu0
    %v3464 = vadd.f32 0.0, %v3463
    %v3465 = vpop.f32.mrb[0].mxu0
    %v3466 = vadd.f32 0.0, %v3465
    %3467 = vmatprep.mubr.f32.mxu0 0.0
    %3468 = vmatmul.mubr.f32.gmra.mrb[0].mxu0 %v3058
    %v3469 = vpop.f32.mrb[0].mxu0
    %v3470 = vadd.f32 0.0, %v3469
    %v3471 = vpop.f32.mrb[0].mxu0
    %v3472 = vadd.f32 0.0, %v3471
    %3473 = vmatprep.mubr.f32.mxu0 0.0
    %3474 = vmatmul.mubr.f32.gmra.mrb[0].mxu0 %v3061
    %v3475 = vpop.f32.mrb[0].mxu0
    %v3476 = vadd.f32 0.0, %v3475
    %v3477 = vpop.f32.mrb[0].mxu0
    %v3478 = vadd.f32 0.0, %v3477
    %3479 = vmatprep.mubr.f32.mxu0 0.0
    %3480 = vmatmul.mubr.f32.gmra.mrb[0].mxu0 %v3353
    %v3481 = vpop.f32.mrb[0].mxu0
    %v3482 = vadd.f32 0.0, %v3481
    %v3483 = vpop.f32.mrb[0].mxu0
    %v3484 = vadd.f32 0.0, %v3483
    %3485 = vdwg.mxu0
    %v3486 = vadd.f32 %v3271, %v3428
    %v3487 = vadd.f32 %v3273, %v3430
    %v3488 = vadd.f32 %v3277, %v3434
    %v3489 = vadd.f32 %v3279, %v3436
    %v3490 = vadd.f32 %v3283, %v3440
    %v3491 = vadd.f32 %v3285, %v3442
    %v3492 = vadd.f32 %v3289, %v3446
    %v3493 = vadd.f32 %v3291, %v3448
    %v3494 = vadd.f32 %v3295, %v3452
    %v3495 = vadd.f32 %v3297, %v3454
    %v3496 = vadd.f32 %v3301, %v3458
    %v3497 = vadd.f32 %v3303, %v3460
    %v3498 = vadd.f32 %v3307, %v3464
    %v3499 = vadd.f32 %v3309, %v3466
    %v3500 = vadd.f32 %v3313, %v3470
    %v3501 = vadd.f32 %v3315, %v3472
    %v3502 = vadd.f32 %v3319, %v3476
    %v3503 = vadd.f32 %v3321, %v3478
    %v3504 = vadd.f32 %v3325, %v3482
    %v3505 = vadd.f32 %v3327, %v3484
    %s3506 = scalar_lea.vmem %s5, 528
    %v3507 = vld [vmem:[%s3506] sm:$0xff]
    %v3508 = vld [vmem:[%s3506 + $0x8] sm:$0xff]
    %v3509 = vld [vmem:[%s3506 + $0x10] sm:$0xff]
    %v3510 = vld [vmem:[%s3506 + $0x18] sm:$0xff]
    %v3511 = vld [vmem:[%s3506 + $0x20] sm:$0xff]
    %v3512 = vld [vmem:[%s3506 + $0x28] sm:$0xff]
    %v3513 = vld [vmem:[%s3506 + $0x30] sm:$0xff]
    %v3514 = vld [vmem:[%s3506 + $0x38] sm:$0xff]
    %v3515 = vld [vmem:[%s3506 + $0x40] sm:$0xff]
    %v3516 = vld [vmem:[%s3506 + $0x48] sm:$0xff]
    %v3517 = vld [vmem:[%s3506 + $0x50] sm:$0xff]
    %v3518 = vld [vmem:[%s3506 + $0x58] sm:$0xff]
    %v3519 = vld [vmem:[%s3506 + $0x60] sm:$0xff]
    %v3520 = vld [vmem:[%s3506 + $0x68] sm:$0xff]
    %v3521 = vld [vmem:[%s3506 + $0x70] sm:$0xff]
    %v3522 = vld [vmem:[%s3506 + $0x78] sm:$0xff]
    %v3523 = vld [vmem:[%s3506 + $0x80] sm:$0xff]
    %v3524 = vld [vmem:[%s3506 + $0x88] sm:$0xff]
    %v3525 = vld [vmem:[%s3506 + $0x90] sm:$0xff]
    %v3526 = vld [vmem:[%s3506 + $0x98] sm:$0xff]
    %v3527 = vld [vmem:[%s3506 + $0xa0] sm:$0xf]
    %v3528 = vld [vmem:[%s3506 + $0xa8] sm:$0xf]
    %v3530 = vsel %vm3032, %v2985, 0
    %v3533 = vsel %vm3063, %v3527, 0
    %v3536 = vsel %vm3063, %v3528, 0
    %3538 = vmatprep.subr.mxu0 %v3508
    %3539 = vmatpush1.msra.mxu0 %v3507
    %3540 = vmatprep.subr.mxu0 %v3510
    %3541 = vmatpush1.msra.mxu0 %v3509
    %3542 = vmatprep.subr.mxu0 %v3512
    %3543 = vmatpush1.msra.mxu0 %v3511
    %3544 = vmatprep.subr.mxu0 %v3514
    %3545 = vmatpush1.msra.mxu0 %v3513
    %3546 = vmatprep.subr.mxu0 %v3516
    %3547 = vmatpush1.msra.mxu0 %v3515
    %3548 = vmatprep.subr.mxu0 %v3518
    %3549 = vmatpush1.msra.mxu0 %v3517
    %3550 = vmatprep.subr.mxu0 %v3520
    %3551 = vmatpush1.msra.mxu0 %v3519
    %3552 = vmatprep.subr.mxu0 %v3522
    %3553 = vmatpush1.msra.mxu0 %v3521
    %3554 = vmatprep.subr.mxu0 %v3524
    %3555 = vmatpush1.msra.mxu0 %v3523
    %3556 = vmatprep.subr.mxu0 %v3526
    %3557 = vmatpush1.msra.mxu0 %v3525
    %3558 = vmatprep.subr.mxu0 %v3536
    %3559 = vmatpush1.msra.mxu0 %v3533
    %3560 = vmatprep.subr.mxu0 0.0
    %3561 = vmatpush1.msra.mxu0 0.0
    %3562 = vmatprep.subr.mxu0 0.0
    %3563 = vmatpush1.msra.mxu0 0.0
    %3564 = vmatprep.subr.mxu0 0.0
    %3565 = vmatpush1.msra.mxu0 0.0
    %3566 = vmatprep.subr.mxu0 0.0
    %3567 = vmatpush1.msra.mxu0 0.0
    %3568 = vmatprep.subr.mxu0 0.0
    %3569 = vmatpush1.msra.mxu0 0.0
    %3570 = vmatprep.subr.mxu0 0.0
    %3571 = vmatpush1.msra.mxu0 0.0
    %3572 = vmatprep.subr.mxu0 0.0
    %3573 = vmatpush1.msra.mxu0 0.0
    %3574 = vmatprep.subr.mxu0 0.0
    %3575 = vmatpush1.msra.mxu0 0.0
    %3576 = vmatprep.subr.mxu0 0.0
    %3577 = vmatpush1.msra.mxu0 0.0
    %3578 = vmatprep.subr.mxu0 0.0
    %3579 = vmatpush1.msra.mxu0 0.0
    %3580 = vmatprep.subr.mxu0 0.0
    %3581 = vmatpush1.msra.mxu0 0.0
    %3582 = vmatprep.subr.mxu0 0.0
    %3583 = vmatpush1.msra.mxu0 0.0
    %3584 = vmatprep.subr.mxu0 0.0
    %3585 = vmatpush1.msra.mxu0 0.0
    %3586 = vmatprep.subr.mxu0 0.0
    %3587 = vmatpush1.msra.mxu0 0.0
    %3588 = vmatprep.subr.mxu0 0.0
    %3589 = vmatpush1.msra.mxu0 0.0
    %3590 = vmatprep.subr.mxu0 0.0
    %3591 = vmatpush1.msra.mxu0 0.0
    %3592 = vmatprep.subr.mxu0 0.0
    %3593 = vmatpush1.msra.mxu0 0.0
    %3594 = vmatprep.subr.mxu0 0.0
    %3595 = vmatpush1.msra.mxu0 0.0
    %3596 = vmatprep.subr.mxu0 0.0
    %3597 = vmatpush1.msra.mxu0 0.0
    %3598 = vmatprep.subr.mxu0 0.0
    %3599 = vmatpush1.msra.mxu0 0.0
    %3600 = vmatprep.subr.mxu0 0.0
    %3601 = vmatpush1.msra.mxu0 0.0
    %3602 = vmatprep.mubr.f32.mxu0 0.0
    %3603 = vmatmul.mubr.f32.gmra.mrb[0].mxu0 %v3040
    %v3604 = vpop.f32.mrb[0].mxu0
    %v3605 = vadd.f32 0.0, %v3604
    %v3606 = vpop.f32.mrb[0].mxu0
    %v3607 = vadd.f32 0.0, %v3606
    %3608 = vmatprep.mubr.f32.mxu0 0.0
    %3609 = vmatmul.mubr.f32.gmra.mrb[0].mxu0 %v3043
    %v3610 = vpop.f32.mrb[0].mxu0
    %v3611 = vadd.f32 0.0, %v3610
    %v3612 = vpop.f32.mrb[0].mxu0
    %v3613 = vadd.f32 0.0, %v3612
    %3614 = vmatprep.mubr.f32.mxu0 0.0
    %3615 = vmatmul.mubr.f32.gmra.mrb[0].mxu0 %v3046
    %v3616 = vpop.f32.mrb[0].mxu0
    %v3617 = vadd.f32 0.0, %v3616
    %v3618 = vpop.f32.mrb[0].mxu0
    %v3619 = vadd.f32 0.0, %v3618
    %3620 = vmatprep.mubr.f32.mxu0 0.0
    %3621 = vmatmul.mubr.f32.gmra.mrb[0].mxu0 %v3049
    %v3622 = vpop.f32.mrb[0].mxu0
    %v3623 = vadd.f32 0.0, %v3622
    %v3624 = vpop.f32.mrb[0].mxu0
    %v3625 = vadd.f32 0.0, %v3624
    %3626 = vmatprep.mubr.f32.mxu0 0.0
    %3627 = vmatmul.mubr.f32.gmra.mrb[0].mxu0 %v3052
    %v3628 = vpop.f32.mrb[0].mxu0
    %v3629 = vadd.f32 0.0, %v3628
    %v3630 = vpop.f32.mrb[0].mxu0
    %v3631 = vadd.f32 0.0, %v3630
    %3632 = vmatprep.mubr.f32.mxu0 0.0
    %3633 = vmatmul.mubr.f32.gmra.mrb[0].mxu0 %v3055
    %v3634 = vpop.f32.mrb[0].mxu0
    %v3635 = vadd.f32 0.0, %v3634
    %v3636 = vpop.f32.mrb[0].mxu0
    %v3637 = vadd.f32 0.0, %v3636
    %3638 = vmatprep.mubr.f32.mxu0 0.0
    %3639 = vmatmul.mubr.f32.gmra.mrb[0].mxu0 %v3058
    %v3640 = vpop.f32.mrb[0].mxu0
    %v3641 = vadd.f32 0.0, %v3640
    %v3642 = vpop.f32.mrb[0].mxu0
    %v3643 = vadd.f32 0.0, %v3642
    %3644 = vmatprep.mubr.f32.mxu0 0.0
    %3645 = vmatmul.mubr.f32.gmra.mrb[0].mxu0 %v3061
    %v3646 = vpop.f32.mrb[0].mxu0
    %v3647 = vadd.f32 0.0, %v3646
    %v3648 = vpop.f32.mrb[0].mxu0
    %v3649 = vadd.f32 0.0, %v3648
    %3650 = vmatprep.mubr.f32.mxu0 0.0
    %3651 = vmatmul.mubr.f32.gmra.mrb[0].mxu0 %v3353
    %v3652 = vpop.f32.mrb[0].mxu0
    %v3653 = vadd.f32 0.0, %v3652
    %v3654 = vpop.f32.mrb[0].mxu0
    %v3655 = vadd.f32 0.0, %v3654
    %3656 = vmatprep.mubr.f32.mxu0 0.0
    %3657 = vmatmul.mubr.f32.gmra.mrb[0].mxu0 %v3530
    %v3658 = vpop.f32.mrb[0].mxu0
    %v3659 = vadd.f32 0.0, %v3658
    %v3660 = vpop.f32.mrb[0].mxu0
    %v3661 = vadd.f32 0.0, %v3660
    %3662 = vdwg.mxu0
    %v3663 = vadd.f32 %v3486, %v3605
    %v3664 = vadd.f32 %v3487, %v3607
    %v3665 = vadd.f32 %v3488, %v3611
    %v3666 = vadd.f32 %v3489, %v3613
    %v3667 = vadd.f32 %v3490, %v3617
    %v3668 = vadd.f32 %v3491, %v3619
    %v3669 = vadd.f32 %v3492, %v3623
    %v3670 = vadd.f32 %v3493, %v3625
    %v3671 = vadd.f32 %v3494, %v3629
    %v3672 = vadd.f32 %v3495, %v3631
    %v3673 = vadd.f32 %v3496, %v3635
    %v3674 = vadd.f32 %v3497, %v3637
    %v3675 = vadd.f32 %v3498, %v3641
    %v3676 = vadd.f32 %v3499, %v3643
    %v3677 = vadd.f32 %v3500, %v3647
    %v3678 = vadd.f32 %v3501, %v3649
    %v3679 = vadd.f32 %v3502, %v3653
    %v3680 = vadd.f32 %v3503, %v3655
    %v3681 = vadd.f32 %v3504, %v3659
    %v3682 = vadd.f32 %v3505, %v3661
    %s3683 = scalar_lea.vmem %s5, 704
    %v3684 = vld [vmem:[%s3683] sm:$0xff]
    %v3685 = vld [vmem:[%s3683 + $0x8] sm:$0xff]
    %v3686 = vld [vmem:[%s3683 + $0x10] sm:$0xff]
    %v3687 = vld [vmem:[%s3683 + $0x18] sm:$0xff]
    %v3688 = vld [vmem:[%s3683 + $0x20] sm:$0xff]
    %v3689 = vld [vmem:[%s3683 + $0x28] sm:$0xff]
    %v3690 = vld [vmem:[%s3683 + $0x30] sm:$0xff]
    %v3691 = vld [vmem:[%s3683 + $0x38] sm:$0xff]
    %v3692 = vld [vmem:[%s3683 + $0x40] sm:$0xff]
    %v3693 = vld [vmem:[%s3683 + $0x48] sm:$0xff]
    %v3694 = vld [vmem:[%s3683 + $0x50] sm:$0xff]
    %v3695 = vld [vmem:[%s3683 + $0x58] sm:$0xff]
    %v3696 = vld [vmem:[%s3683 + $0x60] sm:$0xff]
    %v3697 = vld [vmem:[%s3683 + $0x68] sm:$0xff]
    %v3698 = vld [vmem:[%s3683 + $0x70] sm:$0xff]
    %v3699 = vld [vmem:[%s3683 + $0x78] sm:$0xff]
    %v3700 = vld [vmem:[%s3683 + $0x80] sm:$0xff]
    %v3701 = vld [vmem:[%s3683 + $0x88] sm:$0xff]
    %v3702 = vld [vmem:[%s3683 + $0x90] sm:$0xff]
    %v3703 = vld [vmem:[%s3683 + $0x98] sm:$0xff]
    %v3704 = vld [vmem:[%s3683 + $0xa0] sm:$0xf]
    %v3705 = vld [vmem:[%s3683 + $0xa8] sm:$0xf]
    %v3707 = vsel %vm3032, %v2986, 0
    %v3710 = vsel %vm3063, %v3704, 0
    %v3713 = vsel %vm3063, %v3705, 0
    %3715 = vmatprep.subr.mxu0 %v3685
    %3716 = vmatpush1.msra.mxu0 %v3684
    %3717 = vmatprep.subr.mxu0 %v3687
    %3718 = vmatpush1.msra.mxu0 %v3686
    %3719 = vmatprep.subr.mxu0 %v3689
    %3720 = vmatpush1.msra.mxu0 %v3688
    %3721 = vmatprep.subr.mxu0 %v3691
    %3722 = vmatpush1.msra.mxu0 %v3690
    %3723 = vmatprep.subr.mxu0 %v3693
    %3724 = vmatpush1.msra.mxu0 %v3692
    %3725 = vmatprep.subr.mxu0 %v3695
    %3726 = vmatpush1.msra.mxu0 %v3694
    %3727 = vmatprep.subr.mxu0 %v3697
    %3728 = vmatpush1.msra.mxu0 %v3696
    %3729 = vmatprep.subr.mxu0 %v3699
    %3730 = vmatpush1.msra.mxu0 %v3698
    %3731 = vmatprep.subr.mxu0 %v3701
    %3732 = vmatpush1.msra.mxu0 %v3700
    %3733 = vmatprep.subr.mxu0 %v3703
    %3734 = vmatpush1.msra.mxu0 %v3702
    %3735 = vmatprep.subr.mxu0 %v3713
    %3736 = vmatpush1.msra.mxu0 %v3710
    %3737 = vmatprep.subr.mxu0 0.0
    %3738 = vmatpush1.msra.mxu0 0.0
    %3739 = vmatprep.subr.mxu0 0.0
    %3740 = vmatpush1.msra.mxu0 0.0
    %3741 = vmatprep.subr.mxu0 0.0
    %3742 = vmatpush1.msra.mxu0 0.0
    %3743 = vmatprep.subr.mxu0 0.0
    %3744 = vmatpush1.msra.mxu0 0.0
    %3745 = vmatprep.subr.mxu0 0.0
    %3746 = vmatpush1.msra.mxu0 0.0
    %3747 = vmatprep.subr.mxu0 0.0
    %3748 = vmatpush1.msra.mxu0 0.0
    %3749 = vmatprep.subr.mxu0 0.0
    %3750 = vmatpush1.msra.mxu0 0.0
    %3751 = vmatprep.subr.mxu0 0.0
    %3752 = vmatpush1.msra.mxu0 0.0
    %3753 = vmatprep.subr.mxu0 0.0
    %3754 = vmatpush1.msra.mxu0 0.0
    %3755 = vmatprep.subr.mxu0 0.0
    %3756 = vmatpush1.msra.mxu0 0.0
    %3757 = vmatprep.subr.mxu0 0.0
    %3758 = vmatpush1.msra.mxu0 0.0
    %3759 = vmatprep.subr.mxu0 0.0
    %3760 = vmatpush1.msra.mxu0 0.0
    %3761 = vmatprep.subr.mxu0 0.0
    %3762 = vmatpush1.msra.mxu0 0.0
    %3763 = vmatprep.subr.mxu0 0.0
    %3764 = vmatpush1.msra.mxu0 0.0
    %3765 = vmatprep.subr.mxu0 0.0
    %3766 = vmatpush1.msra.mxu0 0.0
    %3767 = vmatprep.subr.mxu0 0.0
    %3768 = vmatpush1.msra.mxu0 0.0
    %3769 = vmatprep.subr.mxu0 0.0
    %3770 = vmatpush1.msra.mxu0 0.0
    %3771 = vmatprep.subr.mxu0 0.0
    %3772 = vmatpush1.msra.mxu0 0.0
    %3773 = vmatprep.subr.mxu0 0.0
    %3774 = vmatpush1.msra.mxu0 0.0
    %3775 = vmatprep.subr.mxu0 0.0
    %3776 = vmatpush1.msra.mxu0 0.0
    %3777 = vmatprep.subr.mxu0 0.0
    %3778 = vmatpush1.msra.mxu0 0.0
    %3779 = vmatprep.mubr.f32.mxu0 0.0
    %3780 = vmatmul.mubr.f32.gmra.mrb[0].mxu0 %v3043
    %v3781 = vpop.f32.mrb[0].mxu0
    %v3782 = vadd.f32 0.0, %v3781
    %v3783 = vpop.f32.mrb[0].mxu0
    %v3784 = vadd.f32 0.0, %v3783
    %3785 = vmatprep.mubr.f32.mxu0 0.0
    %3786 = vmatmul.mubr.f32.gmra.mrb[0].mxu0 %v3046
    %v3787 = vpop.f32.mrb[0].mxu0
    %v3788 = vadd.f32 0.0, %v3787
    %v3789 = vpop.f32.mrb[0].mxu0
    %v3790 = vadd.f32 0.0, %v3789
    %3791 = vmatprep.mubr.f32.mxu0 0.0
    %3792 = vmatmul.mubr.f32.gmra.mrb[0].mxu0 %v3049
    %v3793 = vpop.f32.mrb[0].mxu0
    %v3794 = vadd.f32 0.0, %v3793
    %v3795 = vpop.f32.mrb[0].mxu0
    %v3796 = vadd.f32 0.0, %v3795
    %3797 = vmatprep.mubr.f32.mxu0 0.0
    %3798 = vmatmul.mubr.f32.gmra.mrb[0].mxu0 %v3052
    %v3799 = vpop.f32.mrb[0].mxu0
    %v3800 = vadd.f32 0.0, %v3799
    %v3801 = vpop.f32.mrb[0].mxu0
    %v3802 = vadd.f32 0.0, %v3801
    %3803 = vmatprep.mubr.f32.mxu0 0.0
    %3804 = vmatmul.mubr.f32.gmra.mrb[0].mxu0 %v3055
    %v3805 = vpop.f32.mrb[0].mxu0
    %v3806 = vadd.f32 0.0, %v3805
    %v3807 = vpop.f32.mrb[0].mxu0
    %v3808 = vadd.f32 0.0, %v3807
    %3809 = vmatprep.mubr.f32.mxu0 0.0
    %3810 = vmatmul.mubr.f32.gmra.mrb[0].mxu0 %v3058
    %v3811 = vpop.f32.mrb[0].mxu0
    %v3812 = vadd.f32 0.0, %v3811
    %v3813 = vpop.f32.mrb[0].mxu0
    %v3814 = vadd.f32 0.0, %v3813
    %3815 = vmatprep.mubr.f32.mxu0 0.0
    %3816 = vmatmul.mubr.f32.gmra.mrb[0].mxu0 %v3061
    %v3817 = vpop.f32.mrb[0].mxu0
    %v3818 = vadd.f32 0.0, %v3817
    %v3819 = vpop.f32.mrb[0].mxu0
    %v3820 = vadd.f32 0.0, %v3819
    %3821 = vmatprep.mubr.f32.mxu0 0.0
    %3822 = vmatmul.mubr.f32.gmra.mrb[0].mxu0 %v3353
    %v3823 = vpop.f32.mrb[0].mxu0
    %v3824 = vadd.f32 0.0, %v3823
    %v3825 = vpop.f32.mrb[0].mxu0
    %v3826 = vadd.f32 0.0, %v3825
    %3827 = vmatprep.mubr.f32.mxu0 0.0
    %3828 = vmatmul.mubr.f32.gmra.mrb[0].mxu0 %v3530
    %v3829 = vpop.f32.mrb[0].mxu0
    %v3830 = vadd.f32 0.0, %v3829
    %v3831 = vpop.f32.mrb[0].mxu0
    %v3832 = vadd.f32 0.0, %v3831
    %3833 = vmatprep.mubr.f32.mxu0 0.0
    %3834 = vmatmul.mubr.f32.gmra.mrb[0].mxu0 %v3707
    %v3835 = vpop.f32.mrb[0].mxu0
    %v3836 = vadd.f32 0.0, %v3835
    %v3837 = vpop.f32.mrb[0].mxu0
    %v3838 = vadd.f32 0.0, %v3837
    %3839 = vdwg.mxu0
    %v3840 = vadd.f32 %v3663, %v3782
    %v3841 = vadd.f32 %v3664, %v3784
    %v3842 = vadd.f32 %v3665, %v3788
    %v3843 = vadd.f32 %v3666, %v3790
    %v3844 = vadd.f32 %v3667, %v3794
    %v3845 = vadd.f32 %v3668, %v3796
    %v3846 = vadd.f32 %v3669, %v3800
    %v3847 = vadd.f32 %v3670, %v3802
    %v3848 = vadd.f32 %v3671, %v3806
    %v3849 = vadd.f32 %v3672, %v3808
    %v3850 = vadd.f32 %v3673, %v3812
    %v3851 = vadd.f32 %v3674, %v3814
    %v3852 = vadd.f32 %v3675, %v3818
    %v3853 = vadd.f32 %v3676, %v3820
    %v3854 = vadd.f32 %v3677, %v3824
    %v3855 = vadd.f32 %v3678, %v3826
    %v3856 = vadd.f32 %v3679, %v3830
    %v3857 = vadd.f32 %v3680, %v3832
    %v3858 = vadd.f32 %v3681, %v3836
    %v3859 = vadd.f32 %v3682, %v3838
    %v3860 = vld [vmem:[#allocation4] sm:$0x3]
    %v3862 = vlaneseq
    %v3863 = vshrl.u32 %v3862, 7
    %v3864 = vsub.s32 0, %v3863
    %v3865 = vrot.slane %v3860, %v3864
    %v3866 = vlaneseq
    %v3867 = vshrl.u32 %v3866, 7
    %v3868 = vsub.s32 1, %v3867
    %v3869 = vrot.slane %v3860, %v3868
    %v3872 = vadd.f32 %v3840, %v3865
    %v3873 = vadd.f32 %v3841, %v3869
    %v3874 = vadd.f32 %v3842, %v3865
    %v3875 = vadd.f32 %v3843, %v3869
    %v3876 = vadd.f32 %v3844, %v3865
    %v3877 = vadd.f32 %v3845, %v3869
    %v3878 = vadd.f32 %v3846, %v3865
    %v3879 = vadd.f32 %v3847, %v3869
    %v3880 = vadd.f32 %v3848, %v3865
    %v3881 = vadd.f32 %v3849, %v3869
    %v3882 = vadd.f32 %v3850, %v3865
    %v3883 = vadd.f32 %v3851, %v3869
    %v3884 = vadd.f32 %v3852, %v3865
    %v3885 = vadd.f32 %v3853, %v3869
    %v3886 = vadd.f32 %v3854, %v3865
    %v3887 = vadd.f32 %v3855, %v3869
    %v3888 = vadd.f32 %v3856, %v3865
    %v3889 = vadd.f32 %v3857, %v3869
    %v3890 = vadd.f32 %v3858, %v3865
    %v3891 = vadd.f32 %v3859, %v3869
    %v3892 = vmax.f32 %v3872, 0.0
    %v3893 = vmax.f32 %v3873, 0.0
    %v3894 = vmax.f32 %v3874, 0.0
    %v3895 = vmax.f32 %v3875, 0.0
    %v3896 = vmax.f32 %v3876, 0.0
    %v3897 = vmax.f32 %v3877, 0.0
    %v3898 = vmax.f32 %v3878, 0.0
    %v3899 = vmax.f32 %v3879, 0.0
    %v3900 = vmax.f32 %v3880, 0.0
    %v3901 = vmax.f32 %v3881, 0.0
    %v3902 = vmax.f32 %v3882, 0.0
    %v3903 = vmax.f32 %v3883, 0.0
    %v3904 = vmax.f32 %v3884, 0.0
    %v3905 = vmax.f32 %v3885, 0.0
    %v3906 = vmax.f32 %v3886, 0.0
    %v3907 = vmax.f32 %v3887, 0.0
    %v3908 = vmax.f32 %v3888, 0.0
    %v3909 = vmax.f32 %v3889, 0.0
    %v3910 = vmax.f32 %v3890, 0.0
    %v3911 = vmax.f32 %v3891, 0.0
    %v3912 = vld [vmem:[#allocation6] sm:$0xff]
    %v3913 = vld [vmem:[#allocation6 + $0x8] sm:$0xff]
    %v3914 = vld [vmem:[#allocation6 + $0x10] sm:$0xff]
    %v3915 = vld [vmem:[#allocation6 + $0x18] sm:$0xff]
    %v3916 = vld [vmem:[#allocation6 + $0x20] sm:$0xff]
    %v3917 = vld [vmem:[#allocation6 + $0x28] sm:$0xff]
    %v3918 = vld [vmem:[#allocation6 + $0x30] sm:$0xff]
    %v3919 = vld [vmem:[#allocation6 + $0x38] sm:$0xff]
    %v3920 = vld [vmem:[#allocation6 + $0x40] sm:$0xff]
    %v3921 = vld [vmem:[#allocation6 + $0x48] sm:$0xff]
    %v3922 = vld [vmem:[#allocation6 + $0x50] sm:$0xff]
    %v3923 = vld [vmem:[#allocation6 + $0x58] sm:$0xff]
    %v3924 = vld [vmem:[#allocation6 + $0x60] sm:$0xff]
    %v3925 = vld [vmem:[#allocation6 + $0x68] sm:$0xff]
    %v3926 = vld [vmem:[#allocation6 + $0x70] sm:$0xff]
    %v3927 = vld [vmem:[#allocation6 + $0x78] sm:$0xff]
    %v3928 = vld [vmem:[#allocation6 + $0x80] sm:$0xff]
    %v3929 = vld [vmem:[#allocation6 + $0x88] sm:$0xff]
    %v3930 = vld [vmem:[#allocation6 + $0x90] sm:$0xff]
    %v3931 = vld [vmem:[#allocation6 + $0x98] sm:$0xff]
    %v3932 = vld [vmem:[#allocation6 + $0xa0] sm:$0xff]
    %v3933 = vld [vmem:[#allocation6 + $0xa8] sm:$0xff]
    %v3934 = vld [vmem:[#allocation6 + $0xb0] sm:$0xff]
    %v3935 = vld [vmem:[#allocation6 + $0xb8] sm:$0xff]
    %v3936 = vld [vmem:[#allocation6 + $0xc0] sm:$0xff]
    %v3937 = vld [vmem:[#allocation6 + $0xc8] sm:$0xff]
    %v3938 = vld [vmem:[#allocation6 + $0xd0] sm:$0xff]
    %v3939 = vld [vmem:[#allocation6 + $0xd8] sm:$0xff]
    %v3940 = vld [vmem:[#allocation6 + $0xe0] sm:$0xff]
    %v3941 = vld [vmem:[#allocation6 + $0xe8] sm:$0xff]
    %v3942 = vld [vmem:[#allocation6 + $0xf0] sm:$0xff]
    %v3943 = vld [vmem:[#allocation6 + $0xf8] sm:$0xff]
    %v3944 = vld [vmem:[#allocation6 + $0x100] sm:$0xff]
    %v3945 = vld [vmem:[#allocation6 + $0x108] sm:$0xff]
    %v3946 = vld [vmem:[#allocation6 + $0x110] sm:$0xff]
    %v3947 = vld [vmem:[#allocation6 + $0x118] sm:$0xff]
    %v3948 = vld [vmem:[#allocation6 + $0x120] sm:$0xff]
    %v3949 = vld [vmem:[#allocation6 + $0x128] sm:$0xff]
    %v3950 = vld [vmem:[#allocation6 + $0x130] sm:$0xff]
    %v3951 = vld [vmem:[#allocation6 + $0x138] sm:$0xff]
    %v3952 = vld [vmem:[#allocation6 + $0x140] sm:$0xff]
    %v3953 = vld [vmem:[#allocation6 + $0x148] sm:$0xff]
    %v3954 = vld [vmem:[#allocation6 + $0x150] sm:$0xff]
    %v3955 = vld [vmem:[#allocation6 + $0x158] sm:$0xff]
    %v3956 = vld [vmem:[#allocation6 + $0x160] sm:$0xff]
    %v3957 = vld [vmem:[#allocation6 + $0x168] sm:$0xff]
    %v3958 = vld [vmem:[#allocation6 + $0x170] sm:$0xff]
    %v3959 = vld [vmem:[#allocation6 + $0x178] sm:$0xff]
    %v3960 = vld [vmem:[#allocation6 + $0x180] sm:$0xff]
    %v3961 = vld [vmem:[#allocation6 + $0x188] sm:$0xff]
    %v3962 = vld [vmem:[#allocation6 + $0x190] sm:$0xff]
    %v3963 = vld [vmem:[#allocation6 + $0x198] sm:$0xff]
    %v3964 = vld [vmem:[#allocation6 + $0x1a0] sm:$0xff]
    %v3965 = vld [vmem:[#allocation6 + $0x1a8] sm:$0xff]
    %v3966 = vld [vmem:[#allocation6 + $0x1b0] sm:$0xff]
    %v3967 = vld [vmem:[#allocation6 + $0x1b8] sm:$0xff]
    %v3968 = vld [vmem:[#allocation6 + $0x1c0] sm:$0xff]
    %v3969 = vld [vmem:[#allocation6 + $0x1c8] sm:$0xff]
    %v3970 = vld [vmem:[#allocation6 + $0x1d0] sm:$0xff]
    %v3971 = vld [vmem:[#allocation6 + $0x1d8] sm:$0xff]
    %v3972 = vld [vmem:[#allocation6 + $0x1e0] sm:$0xff]
    %v3973 = vld [vmem:[#allocation6 + $0x1e8] sm:$0xff]
    %v3974 = vld [vmem:[#allocation6 + $0x1f0] sm:$0xff]
    %v3975 = vld [vmem:[#allocation6 + $0x1f8] sm:$0xff]
    %v3976 = vld [vmem:[#allocation6 + $0x200] sm:$0xff]
    %v3977 = vld [vmem:[#allocation6 + $0x208] sm:$0xff]
    %v3978 = vld [vmem:[#allocation6 + $0x210] sm:$0xff]
    %v3979 = vld [vmem:[#allocation6 + $0x218] sm:$0xff]
    %v3980 = vld [vmem:[#allocation6 + $0x220] sm:$0xff]
    %v3981 = vld [vmem:[#allocation6 + $0x228] sm:$0xff]
    %v3982 = vld [vmem:[#allocation6 + $0x230] sm:$0xff]
    %v3983 = vld [vmem:[#allocation6 + $0x238] sm:$0xff]
    %v3984 = vld [vmem:[#allocation6 + $0x240] sm:$0xff]
    %v3985 = vld [vmem:[#allocation6 + $0x248] sm:$0xff]
    %v3986 = vld [vmem:[#allocation6 + $0x250] sm:$0xff]
    %v3987 = vld [vmem:[#allocation6 + $0x258] sm:$0xff]
    %v3988 = vld [vmem:[#allocation6 + $0x260] sm:$0xff]
    %v3989 = vld [vmem:[#allocation6 + $0x268] sm:$0xff]
    %v3990 = vld [vmem:[#allocation6 + $0x270] sm:$0xff]
    %v3991 = vld [vmem:[#allocation6 + $0x278] sm:$0xff]
    %s3992 = scalar_lea.vmem [#allocation6], 640
    %v3993 = vld [vmem:[%s3992] sm:$0xff]
    %v3994 = vld [vmem:[%s3992 + $0x8] sm:$0xff]
    %v3995 = vld [vmem:[%s3992 + $0x10] sm:$0xff]
    %v3996 = vld [vmem:[%s3992 + $0x18] sm:$0xff]
    %v3997 = vld [vmem:[%s3992 + $0x20] sm:$0xff]
    %v3998 = vld [vmem:[%s3992 + $0x28] sm:$0xff]
    %v3999 = vld [vmem:[%s3992 + $0x30] sm:$0xff]
    %v4000 = vld [vmem:[%s3992 + $0x38] sm:$0xff]
    %v4001 = vld [vmem:[%s3992 + $0x40] sm:$0xff]
    %v4002 = vld [vmem:[%s3992 + $0x48] sm:$0xff]
    %v4003 = vld [vmem:[%s3992 + $0x50] sm:$0xff]
    %v4004 = vld [vmem:[%s3992 + $0x58] sm:$0xff]
    %v4005 = vld [vmem:[%s3992 + $0x60] sm:$0xff]
    %v4006 = vld [vmem:[%s3992 + $0x68] sm:$0xff]
    %v4007 = vld [vmem:[%s3992 + $0x70] sm:$0xff]
    %v4008 = vld [vmem:[%s3992 + $0x78] sm:$0xff]
    %v4009 = vld [vmem:[%s3992 + $0x80] sm:$0xff]
    %v4010 = vld [vmem:[%s3992 + $0x88] sm:$0xff]
    %v4011 = vld [vmem:[%s3992 + $0x90] sm:$0xff]
    %v4012 = vld [vmem:[%s3992 + $0x98] sm:$0xff]
    %v4013 = vld [vmem:[%s3992 + $0xa0] sm:$0xff]
    %v4014 = vld [vmem:[%s3992 + $0xa8] sm:$0xff]
    %v4015 = vld [vmem:[%s3992 + $0xb0] sm:$0xff]
    %v4016 = vld [vmem:[%s3992 + $0xb8] sm:$0xff]
    %v4017 = vld [vmem:[%s3992 + $0xc0] sm:$0xff]
    %v4018 = vld [vmem:[%s3992 + $0xc8] sm:$0xff]
    %v4019 = vld [vmem:[%s3992 + $0xd0] sm:$0xff]
    %v4020 = vld [vmem:[%s3992 + $0xd8] sm:$0xff]
    %v4021 = vld [vmem:[%s3992 + $0xe0] sm:$0xff]
    %v4022 = vld [vmem:[%s3992 + $0xe8] sm:$0xff]
    %v4023 = vld [vmem:[%s3992 + $0xf0] sm:$0xff]
    %v4024 = vld [vmem:[%s3992 + $0xf8] sm:$0xff]
    %v4025 = vld [vmem:[%s3992 + $0x100] sm:$0xff]
    %v4026 = vld [vmem:[%s3992 + $0x108] sm:$0xff]
    %v4027 = vld [vmem:[%s3992 + $0x110] sm:$0xff]
    %v4028 = vld [vmem:[%s3992 + $0x118] sm:$0xff]
    %v4029 = vld [vmem:[%s3992 + $0x120] sm:$0xff]
    %v4030 = vld [vmem:[%s3992 + $0x128] sm:$0xff]
    %v4031 = vld [vmem:[%s3992 + $0x130] sm:$0xff]
    %v4032 = vld [vmem:[%s3992 + $0x138] sm:$0xff]
    %v4033 = vld [vmem:[%s3992 + $0x140] sm:$0xff]
    %v4034 = vld [vmem:[%s3992 + $0x148] sm:$0xff]
    %v4035 = vld [vmem:[%s3992 + $0x150] sm:$0xff]
    %v4036 = vld [vmem:[%s3992 + $0x158] sm:$0xff]
    %v4037 = vld [vmem:[%s3992 + $0x160] sm:$0xff]
    %v4038 = vld [vmem:[%s3992 + $0x168] sm:$0xff]
    %v4039 = vld [vmem:[%s3992 + $0x170] sm:$0xff]
    %v4040 = vld [vmem:[%s3992 + $0x178] sm:$0xff]
    %v4041 = vld [vmem:[%s3992 + $0x180] sm:$0xff]
    %v4042 = vld [vmem:[%s3992 + $0x188] sm:$0xff]
    %v4043 = vld [vmem:[%s3992 + $0x190] sm:$0xff]
    %v4044 = vld [vmem:[%s3992 + $0x198] sm:$0xff]
    %v4045 = vld [vmem:[%s3992 + $0x1a0] sm:$0xff]
    %v4046 = vld [vmem:[%s3992 + $0x1a8] sm:$0xff]
    %v4047 = vld [vmem:[%s3992 + $0x1b0] sm:$0xff]
    %v4048 = vld [vmem:[%s3992 + $0x1b8] sm:$0xff]
    %v4049 = vld [vmem:[%s3992 + $0x1c0] sm:$0xff]
    %v4050 = vld [vmem:[%s3992 + $0x1c8] sm:$0xff]
    %v4051 = vld [vmem:[%s3992 + $0x1d0] sm:$0xff]
    %v4052 = vld [vmem:[%s3992 + $0x1d8] sm:$0xff]
    %v4053 = vld [vmem:[%s3992 + $0x1e0] sm:$0xff]
    %v4054 = vld [vmem:[%s3992 + $0x1e8] sm:$0xff]
    %v4055 = vld [vmem:[%s3992 + $0x1f0] sm:$0xff]
    %v4056 = vld [vmem:[%s3992 + $0x1f8] sm:$0xff]
    %v4057 = vld [vmem:[%s3992 + $0x200] sm:$0xff]
    %v4058 = vld [vmem:[%s3992 + $0x208] sm:$0xff]
    %v4059 = vld [vmem:[%s3992 + $0x210] sm:$0xff]
    %v4060 = vld [vmem:[%s3992 + $0x218] sm:$0xff]
    %v4061 = vld [vmem:[%s3992 + $0x220] sm:$0xff]
    %v4062 = vld [vmem:[%s3992 + $0x228] sm:$0xff]
    %v4063 = vld [vmem:[%s3992 + $0x230] sm:$0xff]
    %v4064 = vld [vmem:[%s3992 + $0x238] sm:$0xff]
    %v4065 = vld [vmem:[%s3992 + $0x240] sm:$0xff]
    %v4066 = vld [vmem:[%s3992 + $0x248] sm:$0xff]
    %v4067 = vld [vmem:[%s3992 + $0x250] sm:$0xff]
    %v4068 = vld [vmem:[%s3992 + $0x258] sm:$0xff]
    %v4069 = vld [vmem:[%s3992 + $0x260] sm:$0xff]
    %v4070 = vld [vmem:[%s3992 + $0x268] sm:$0xff]
    %v4071 = vld [vmem:[%s3992 + $0x270] sm:$0xff]
    %v4072 = vld [vmem:[%s3992 + $0x278] sm:$0xff]
    %vm4073 = vcmask 261120
    %v4075 = vsel %vm4073, %v3895, 0
    %4077 = vmatprep.subr.mxu0 %v3994
    %4078 = vmatpush1.msra.mxu0 %v3993
    %4079 = vmatprep.subr.mxu0 %v3998
    %4080 = vmatpush1.msra.mxu0 %v3997
    %4081 = vmatprep.subr.mxu0 %v4002
    %4082 = vmatpush1.msra.mxu0 %v4001
    %4083 = vmatprep.subr.mxu0 %v4006
    %4084 = vmatpush1.msra.mxu0 %v4005
    %4085 = vmatprep.subr.mxu0 %v4010
    %4086 = vmatpush1.msra.mxu0 %v4009
    %4087 = vmatprep.subr.mxu0 %v4014
    %4088 = vmatpush1.msra.mxu0 %v4013
    %4089 = vmatprep.subr.mxu0 %v4018
    %4090 = vmatpush1.msra.mxu0 %v4017
    %4091 = vmatprep.subr.mxu0 %v4022
    %4092 = vmatpush1.msra.mxu0 %v4021
    %4093 = vmatprep.subr.mxu0 %v4026
    %4094 = vmatpush1.msra.mxu0 %v4025
    %4095 = vmatprep.subr.mxu0 %v4030
    %4096 = vmatpush1.msra.mxu0 %v4029
    %4097 = vmatprep.subr.mxu0 %v4034
    %4098 = vmatpush1.msra.mxu0 %v4033
    %4099 = vmatprep.subr.mxu0 %v4038
    %4100 = vmatpush1.msra.mxu0 %v4037
    %4101 = vmatprep.subr.mxu0 %v4042
    %4102 = vmatpush1.msra.mxu0 %v4041
    %4103 = vmatprep.subr.mxu0 %v4046
    %4104 = vmatpush1.msra.mxu0 %v4045
    %4105 = vmatprep.subr.mxu0 %v4050
    %4106 = vmatpush1.msra.mxu0 %v4049
    %4107 = vmatprep.subr.mxu0 %v4054
    %4108 = vmatpush1.msra.mxu0 %v4053
    %4109 = vmatprep.subr.mxu0 %v4058
    %4110 = vmatpush1.msra.mxu0 %v4057
    %4111 = vmatprep.subr.mxu0 %v4062
    %4112 = vmatpush1.msra.mxu0 %v4061
    %4113 = vmatprep.subr.mxu0 %v4066
    %4114 = vmatpush1.msra.mxu0 %v4065
    %4115 = vmatprep.subr.mxu0 %v4070
    %4116 = vmatpush1.msra.mxu0 %v4069
    %4117 = vmatprep.subr.mxu0 0.0
    %4118 = vmatpush1.msra.mxu0 0.0
    %4119 = vmatprep.subr.mxu0 0.0
    %4120 = vmatpush1.msra.mxu0 0.0
    %4121 = vmatprep.subr.mxu0 0.0
    %4122 = vmatpush1.msra.mxu0 0.0
    %4123 = vmatprep.subr.mxu0 0.0
    %4124 = vmatpush1.msra.mxu0 0.0
    %4125 = vmatprep.subr.mxu0 0.0
    %4126 = vmatpush1.msra.mxu0 0.0
    %4127 = vmatprep.subr.mxu0 0.0
    %4128 = vmatpush1.msra.mxu0 0.0
    %4129 = vmatprep.subr.mxu0 0.0
    %4130 = vmatpush1.msra.mxu0 0.0
    %4131 = vmatprep.subr.mxu0 0.0
    %4132 = vmatpush1.msra.mxu0 0.0
    %4133 = vmatprep.subr.mxu0 0.0
    %4134 = vmatpush1.msra.mxu0 0.0
    %4135 = vmatprep.subr.mxu0 0.0
    %4136 = vmatpush1.msra.mxu0 0.0
    %4137 = vmatprep.subr.mxu0 0.0
    %4138 = vmatpush1.msra.mxu0 0.0
    %4139 = vmatprep.subr.mxu0 0.0
    %4140 = vmatpush1.msra.mxu0 0.0
    %4141 = vmatprep.mubr.f32.mxu0 %v4075
    %4142 = vmatmul.mubr.f32.gmra.mrb[0].mxu0 %v3894
    %v4143 = vpop.f32.mrb[0].mxu0
    %v4144 = vadd.f32 0.0, %v4143
    %v4145 = vpop.f32.mrb[0].mxu0
    %v4146 = vadd.f32 0.0, %v4145
    %4147 = vdwg.mxu0
    %4148 = vmatprep.subr.mxu0 %v3996
    %4149 = vmatpush1.msra.mxu0 %v3995
    %4150 = vmatprep.subr.mxu0 %v4000
    %4151 = vmatpush1.msra.mxu0 %v3999
    %4152 = vmatprep.subr.mxu0 %v4004
    %4153 = vmatpush1.msra.mxu0 %v4003
    %4154 = vmatprep.subr.mxu0 %v4008
    %4155 = vmatpush1.msra.mxu0 %v4007
    %4156 = vmatprep.subr.mxu0 %v4012
    %4157 = vmatpush1.msra.mxu0 %v4011
    %4158 = vmatprep.subr.mxu0 %v4016
    %4159 = vmatpush1.msra.mxu0 %v4015
    %4160 = vmatprep.subr.mxu0 %v4020
    %4161 = vmatpush1.msra.mxu0 %v4019
    %4162 = vmatprep.subr.mxu0 %v4024
    %4163 = vmatpush1.msra.mxu0 %v4023
    %4164 = vmatprep.subr.mxu0 %v4028
    %4165 = vmatpush1.msra.mxu0 %v4027
    %4166 = vmatprep.subr.mxu0 %v4032
    %4167 = vmatpush1.msra.mxu0 %v4031
    %4168 = vmatprep.subr.mxu0 %v4036
    %4169 = vmatpush1.msra.mxu0 %v4035
    %4170 = vmatprep.subr.mxu0 %v4040
    %4171 = vmatpush1.msra.mxu0 %v4039
    %4172 = vmatprep.subr.mxu0 %v4044
    %4173 = vmatpush1.msra.mxu0 %v4043
    %4174 = vmatprep.subr.mxu0 %v4048
    %4175 = vmatpush1.msra.mxu0 %v4047
    %4176 = vmatprep.subr.mxu0 %v4052
    %4177 = vmatpush1.msra.mxu0 %v4051
    %4178 = vmatprep.subr.mxu0 %v4056
    %4179 = vmatpush1.msra.mxu0 %v4055
    %4180 = vmatprep.subr.mxu0 %v4060
    %4181 = vmatpush1.msra.mxu0 %v4059
    %4182 = vmatprep.subr.mxu0 %v4064
    %4183 = vmatpush1.msra.mxu0 %v4063
    %4184 = vmatprep.subr.mxu0 %v4068
    %4185 = vmatpush1.msra.mxu0 %v4067
    %4186 = vmatprep.subr.mxu0 %v4072
    %4187 = vmatpush1.msra.mxu0 %v4071
    %4188 = vmatprep.subr.mxu0 0.0
    %4189 = vmatpush1.msra.mxu0 0.0
    %4190 = vmatprep.subr.mxu0 0.0
    %4191 = vmatpush1.msra.mxu0 0.0
    %4192 = vmatprep.subr.mxu0 0.0
    %4193 = vmatpush1.msra.mxu0 0.0
    %4194 = vmatprep.subr.mxu0 0.0
    %4195 = vmatpush1.msra.mxu0 0.0
    %4196 = vmatprep.subr.mxu0 0.0
    %4197 = vmatpush1.msra.mxu0 0.0
    %4198 = vmatprep.subr.mxu0 0.0
    %4199 = vmatpush1.msra.mxu0 0.0
    %4200 = vmatprep.subr.mxu0 0.0
    %4201 = vmatpush1.msra.mxu0 0.0
    %4202 = vmatprep.subr.mxu0 0.0
    %4203 = vmatpush1.msra.mxu0 0.0
    %4204 = vmatprep.subr.mxu0 0.0
    %4205 = vmatpush1.msra.mxu0 0.0
    %4206 = vmatprep.subr.mxu0 0.0
    %4207 = vmatpush1.msra.mxu0 0.0
    %4208 = vmatprep.subr.mxu0 0.0
    %4209 = vmatpush1.msra.mxu0 0.0
    %4210 = vmatprep.subr.mxu0 0.0
    %4211 = vmatpush1.msra.mxu0 0.0
    %4212 = vmatprep.mubr.f32.mxu0 %v4075
    %4213 = vmatmul.mubr.f32.gmra.mrb[0].mxu0 %v3894
    %v4214 = vpop.f32.mrb[0].mxu0
    %v4215 = vadd.f32 0.0, %v4214
    %v4216 = vpop.f32.mrb[0].mxu0
    %v4217 = vadd.f32 0.0, %v4216
    %4218 = vdwg.mxu0
    %v4220 = vsel %vm4073, %v3893, 0
    %4222 = vmatprep.subr.mxu0 %v3913
    %4223 = vmatpush1.msra.mxu0 %v3912
    %4224 = vmatprep.subr.mxu0 %v3917
    %4225 = vmatpush1.msra.mxu0 %v3916
    %4226 = vmatprep.subr.mxu0 %v3921
    %4227 = vmatpush1.msra.mxu0 %v3920
    %4228 = vmatprep.subr.mxu0 %v3925
    %4229 = vmatpush1.msra.mxu0 %v3924
    %4230 = vmatprep.subr.mxu0 %v3929
    %4231 = vmatpush1.msra.mxu0 %v3928
    %4232 = vmatprep.subr.mxu0 %v3933
    %4233 = vmatpush1.msra.mxu0 %v3932
    %4234 = vmatprep.subr.mxu0 %v3937
    %4235 = vmatpush1.msra.mxu0 %v3936
    %4236 = vmatprep.subr.mxu0 %v3941
    %4237 = vmatpush1.msra.mxu0 %v3940
    %4238 = vmatprep.subr.mxu0 %v3945
    %4239 = vmatpush1.msra.mxu0 %v3944
    %4240 = vmatprep.subr.mxu0 %v3949
    %4241 = vmatpush1.msra.mxu0 %v3948
    %4242 = vmatprep.subr.mxu0 %v3953
    %4243 = vmatpush1.msra.mxu0 %v3952
    %4244 = vmatprep.subr.mxu0 %v3957
    %4245 = vmatpush1.msra.mxu0 %v3956
    %4246 = vmatprep.subr.mxu0 %v3961
    %4247 = vmatpush1.msra.mxu0 %v3960
    %4248 = vmatprep.subr.mxu0 %v3965
    %4249 = vmatpush1.msra.mxu0 %v3964
    %4250 = vmatprep.subr.mxu0 %v3969
    %4251 = vmatpush1.msra.mxu0 %v3968
    %4252 = vmatprep.subr.mxu0 %v3973
    %4253 = vmatpush1.msra.mxu0 %v3972
    %4254 = vmatprep.subr.mxu0 %v3977
    %4255 = vmatpush1.msra.mxu0 %v3976
    %4256 = vmatprep.subr.mxu0 %v3981
    %4257 = vmatpush1.msra.mxu0 %v3980
    %4258 = vmatprep.subr.mxu0 %v3985
    %4259 = vmatpush1.msra.mxu0 %v3984
    %4260 = vmatprep.subr.mxu0 %v3989
    %4261 = vmatpush1.msra.mxu0 %v3988
    %4262 = vmatprep.subr.mxu0 0.0
    %4263 = vmatpush1.msra.mxu0 0.0
    %4264 = vmatprep.subr.mxu0 0.0
    %4265 = vmatpush1.msra.mxu0 0.0
    %4266 = vmatprep.subr.mxu0 0.0
    %4267 = vmatpush1.msra.mxu0 0.0
    %4268 = vmatprep.subr.mxu0 0.0
    %4269 = vmatpush1.msra.mxu0 0.0
    %4270 = vmatprep.subr.mxu0 0.0
    %4271 = vmatpush1.msra.mxu0 0.0
    %4272 = vmatprep.subr.mxu0 0.0
    %4273 = vmatpush1.msra.mxu0 0.0
    %4274 = vmatprep.subr.mxu0 0.0
    %4275 = vmatpush1.msra.mxu0 0.0
    %4276 = vmatprep.subr.mxu0 0.0
    %4277 = vmatpush1.msra.mxu0 0.0
    %4278 = vmatprep.subr.mxu0 0.0
    %4279 = vmatpush1.msra.mxu0 0.0
    %4280 = vmatprep.subr.mxu0 0.0
    %4281 = vmatpush1.msra.mxu0 0.0
    %4282 = vmatprep.subr.mxu0 0.0
    %4283 = vmatpush1.msra.mxu0 0.0
    %4284 = vmatprep.subr.mxu0 0.0
    %4285 = vmatpush1.msra.mxu0 0.0
    %4286 = vmatprep.mubr.f32.mxu0 %v4220
    %4287 = vmatmul.mubr.f32.gmra.mrb[0].mxu0 %v3892
    %v4288 = vpop.f32.mrb[0].mxu0
    %v4289 = vadd.f32 %v4144, %v4288
    %v4290 = vpop.f32.mrb[0].mxu0
    %v4291 = vadd.f32 %v4146, %v4290
    %4292 = vdwg.mxu0
    %4293 = vmatprep.subr.mxu0 %v3915
    %4294 = vmatpush1.msra.mxu0 %v3914
    %4295 = vmatprep.subr.mxu0 %v3919
    %4296 = vmatpush1.msra.mxu0 %v3918
    %4297 = vmatprep.subr.mxu0 %v3923
    %4298 = vmatpush1.msra.mxu0 %v3922
    %4299 = vmatprep.subr.mxu0 %v3927
    %4300 = vmatpush1.msra.mxu0 %v3926
    %4301 = vmatprep.subr.mxu0 %v3931
    %4302 = vmatpush1.msra.mxu0 %v3930
    %4303 = vmatprep.subr.mxu0 %v3935
    %4304 = vmatpush1.msra.mxu0 %v3934
    %4305 = vmatprep.subr.mxu0 %v3939
    %4306 = vmatpush1.msra.mxu0 %v3938
    %4307 = vmatprep.subr.mxu0 %v3943
    %4308 = vmatpush1.msra.mxu0 %v3942
    %4309 = vmatprep.subr.mxu0 %v3947
    %4310 = vmatpush1.msra.mxu0 %v3946
    %4311 = vmatprep.subr.mxu0 %v3951
    %4312 = vmatpush1.msra.mxu0 %v3950
    %4313 = vmatprep.subr.mxu0 %v3955
    %4314 = vmatpush1.msra.mxu0 %v3954
    %4315 = vmatprep.subr.mxu0 %v3959
    %4316 = vmatpush1.msra.mxu0 %v3958
    %4317 = vmatprep.subr.mxu0 %v3963
    %4318 = vmatpush1.msra.mxu0 %v3962
    %4319 = vmatprep.subr.mxu0 %v3967
    %4320 = vmatpush1.msra.mxu0 %v3966
    %4321 = vmatprep.subr.mxu0 %v3971
    %4322 = vmatpush1.msra.mxu0 %v3970
    %4323 = vmatprep.subr.mxu0 %v3975
    %4324 = vmatpush1.msra.mxu0 %v3974
    %4325 = vmatprep.subr.mxu0 %v3979
    %4326 = vmatpush1.msra.mxu0 %v3978
    %4327 = vmatprep.subr.mxu0 %v3983
    %4328 = vmatpush1.msra.mxu0 %v3982
    %4329 = vmatprep.subr.mxu0 %v3987
    %4330 = vmatpush1.msra.mxu0 %v3986
    %4331 = vmatprep.subr.mxu0 %v3991
    %4332 = vmatpush1.msra.mxu0 %v3990
    %4333 = vmatprep.subr.mxu0 0.0
    %4334 = vmatpush1.msra.mxu0 0.0
    %4335 = vmatprep.subr.mxu0 0.0
    %4336 = vmatpush1.msra.mxu0 0.0
    %4337 = vmatprep.subr.mxu0 0.0
    %4338 = vmatpush1.msra.mxu0 0.0
    %4339 = vmatprep.subr.mxu0 0.0
    %4340 = vmatpush1.msra.mxu0 0.0
    %4341 = vmatprep.subr.mxu0 0.0
    %4342 = vmatpush1.msra.mxu0 0.0
    %4343 = vmatprep.subr.mxu0 0.0
    %4344 = vmatpush1.msra.mxu0 0.0
    %4345 = vmatprep.subr.mxu0 0.0
    %4346 = vmatpush1.msra.mxu0 0.0
    %4347 = vmatprep.subr.mxu0 0.0
    %4348 = vmatpush1.msra.mxu0 0.0
    %4349 = vmatprep.subr.mxu0 0.0
    %4350 = vmatpush1.msra.mxu0 0.0
    %4351 = vmatprep.subr.mxu0 0.0
    %4352 = vmatpush1.msra.mxu0 0.0
    %4353 = vmatprep.subr.mxu0 0.0
    %4354 = vmatpush1.msra.mxu0 0.0
    %4355 = vmatprep.subr.mxu0 0.0
    %4356 = vmatpush1.msra.mxu0 0.0
    %4357 = vmatprep.mubr.f32.mxu0 %v4220
    %4358 = vmatmul.mubr.f32.gmra.mrb[0].mxu0 %v3892
    %v4359 = vpop.f32.mrb[0].mxu0
    %v4360 = vadd.f32 %v4215, %v4359
    %v4361 = vpop.f32.mrb[0].mxu0
    %v4362 = vadd.f32 %v4217, %v4361
    %4363 = vdwg.mxu0
    %s4364 = scalar_lea.vmem [#allocation6], 1280
    %v4365 = vld [vmem:[%s4364] sm:$0xff]
    %v4366 = vld [vmem:[%s4364 + $0x8] sm:$0xff]
    %v4367 = vld [vmem:[%s4364 + $0x10] sm:$0xff]
    %v4368 = vld [vmem:[%s4364 + $0x18] sm:$0xff]
    %v4369 = vld [vmem:[%s4364 + $0x20] sm:$0xff]
    %v4370 = vld [vmem:[%s4364 + $0x28] sm:$0xff]
    %v4371 = vld [vmem:[%s4364 + $0x30] sm:$0xff]
    %v4372 = vld [vmem:[%s4364 + $0x38] sm:$0xff]
    %v4373 = vld [vmem:[%s4364 + $0x40] sm:$0xff]
    %v4374 = vld [vmem:[%s4364 + $0x48] sm:$0xff]
    %v4375 = vld [vmem:[%s4364 + $0x50] sm:$0xff]
    %v4376 = vld [vmem:[%s4364 + $0x58] sm:$0xff]
    %v4377 = vld [vmem:[%s4364 + $0x60] sm:$0xff]
    %v4378 = vld [vmem:[%s4364 + $0x68] sm:$0xff]
    %v4379 = vld [vmem:[%s4364 + $0x70] sm:$0xff]
    %v4380 = vld [vmem:[%s4364 + $0x78] sm:$0xff]
    %v4381 = vld [vmem:[%s4364 + $0x80] sm:$0xff]
    %v4382 = vld [vmem:[%s4364 + $0x88] sm:$0xff]
    %v4383 = vld [vmem:[%s4364 + $0x90] sm:$0xff]
    %v4384 = vld [vmem:[%s4364 + $0x98] sm:$0xff]
    %v4385 = vld [vmem:[%s4364 + $0xa0] sm:$0xff]
    %v4386 = vld [vmem:[%s4364 + $0xa8] sm:$0xff]
    %v4387 = vld [vmem:[%s4364 + $0xb0] sm:$0xff]
    %v4388 = vld [vmem:[%s4364 + $0xb8] sm:$0xff]
    %v4389 = vld [vmem:[%s4364 + $0xc0] sm:$0xff]
    %v4390 = vld [vmem:[%s4364 + $0xc8] sm:$0xff]
    %v4391 = vld [vmem:[%s4364 + $0xd0] sm:$0xff]
    %v4392 = vld [vmem:[%s4364 + $0xd8] sm:$0xff]
    %v4393 = vld [vmem:[%s4364 + $0xe0] sm:$0xff]
    %v4394 = vld [vmem:[%s4364 + $0xe8] sm:$0xff]
    %v4395 = vld [vmem:[%s4364 + $0xf0] sm:$0xff]
    %v4396 = vld [vmem:[%s4364 + $0xf8] sm:$0xff]
    %v4397 = vld [vmem:[%s4364 + $0x100] sm:$0xff]
    %v4398 = vld [vmem:[%s4364 + $0x108] sm:$0xff]
    %v4399 = vld [vmem:[%s4364 + $0x110] sm:$0xff]
    %v4400 = vld [vmem:[%s4364 + $0x118] sm:$0xff]
    %v4401 = vld [vmem:[%s4364 + $0x120] sm:$0xff]
    %v4402 = vld [vmem:[%s4364 + $0x128] sm:$0xff]
    %v4403 = vld [vmem:[%s4364 + $0x130] sm:$0xff]
    %v4404 = vld [vmem:[%s4364 + $0x138] sm:$0xff]
    %v4405 = vld [vmem:[%s4364 + $0x140] sm:$0xff]
    %v4406 = vld [vmem:[%s4364 + $0x148] sm:$0xff]
    %v4407 = vld [vmem:[%s4364 + $0x150] sm:$0xff]
    %v4408 = vld [vmem:[%s4364 + $0x158] sm:$0xff]
    %v4409 = vld [vmem:[%s4364 + $0x160] sm:$0xff]
    %v4410 = vld [vmem:[%s4364 + $0x168] sm:$0xff]
    %v4411 = vld [vmem:[%s4364 + $0x170] sm:$0xff]
    %v4412 = vld [vmem:[%s4364 + $0x178] sm:$0xff]
    %v4413 = vld [vmem:[%s4364 + $0x180] sm:$0xff]
    %v4414 = vld [vmem:[%s4364 + $0x188] sm:$0xff]
    %v4415 = vld [vmem:[%s4364 + $0x190] sm:$0xff]
    %v4416 = vld [vmem:[%s4364 + $0x198] sm:$0xff]
    %v4417 = vld [vmem:[%s4364 + $0x1a0] sm:$0xff]
    %v4418 = vld [vmem:[%s4364 + $0x1a8] sm:$0xff]
    %v4419 = vld [vmem:[%s4364 + $0x1b0] sm:$0xff]
    %v4420 = vld [vmem:[%s4364 + $0x1b8] sm:$0xff]
    %v4421 = vld [vmem:[%s4364 + $0x1c0] sm:$0xff]
    %v4422 = vld [vmem:[%s4364 + $0x1c8] sm:$0xff]
    %v4423 = vld [vmem:[%s4364 + $0x1d0] sm:$0xff]
    %v4424 = vld [vmem:[%s4364 + $0x1d8] sm:$0xff]
    %v4425 = vld [vmem:[%s4364 + $0x1e0] sm:$0xff]
    %v4426 = vld [vmem:[%s4364 + $0x1e8] sm:$0xff]
    %v4427 = vld [vmem:[%s4364 + $0x1f0] sm:$0xff]
    %v4428 = vld [vmem:[%s4364 + $0x1f8] sm:$0xff]
    %v4429 = vld [vmem:[%s4364 + $0x200] sm:$0xff]
    %v4430 = vld [vmem:[%s4364 + $0x208] sm:$0xff]
    %v4431 = vld [vmem:[%s4364 + $0x210] sm:$0xff]
    %v4432 = vld [vmem:[%s4364 + $0x218] sm:$0xff]
    %v4433 = vld [vmem:[%s4364 + $0x220] sm:$0xff]
    %v4434 = vld [vmem:[%s4364 + $0x228] sm:$0xff]
    %v4435 = vld [vmem:[%s4364 + $0x230] sm:$0xff]
    %v4436 = vld [vmem:[%s4364 + $0x238] sm:$0xff]
    %v4437 = vld [vmem:[%s4364 + $0x240] sm:$0xff]
    %v4438 = vld [vmem:[%s4364 + $0x248] sm:$0xff]
    %v4439 = vld [vmem:[%s4364 + $0x250] sm:$0xff]
    %v4440 = vld [vmem:[%s4364 + $0x258] sm:$0xff]
    %v4441 = vld [vmem:[%s4364 + $0x260] sm:$0xff]
    %v4442 = vld [vmem:[%s4364 + $0x268] sm:$0xff]
    %v4443 = vld [vmem:[%s4364 + $0x270] sm:$0xff]
    %v4444 = vld [vmem:[%s4364 + $0x278] sm:$0xff]
    %v4446 = vsel %vm4073, %v3897, 0
    %4448 = vmatprep.subr.mxu0 %v4366
    %4449 = vmatpush1.msra.mxu0 %v4365
    %4450 = vmatprep.subr.mxu0 %v4370
    %4451 = vmatpush1.msra.mxu0 %v4369
    %4452 = vmatprep.subr.mxu0 %v4374
    %4453 = vmatpush1.msra.mxu0 %v4373
    %4454 = vmatprep.subr.mxu0 %v4378
    %4455 = vmatpush1.msra.mxu0 %v4377
    %4456 = vmatprep.subr.mxu0 %v4382
    %4457 = vmatpush1.msra.mxu0 %v4381
    %4458 = vmatprep.subr.mxu0 %v4386
    %4459 = vmatpush1.msra.mxu0 %v4385
    %4460 = vmatprep.subr.mxu0 %v4390
    %4461 = vmatpush1.msra.mxu0 %v4389
    %4462 = vmatprep.subr.mxu0 %v4394
    %4463 = vmatpush1.msra.mxu0 %v4393
    %4464 = vmatprep.subr.mxu0 %v4398
    %4465 = vmatpush1.msra.mxu0 %v4397
    %4466 = vmatprep.subr.mxu0 %v4402
    %4467 = vmatpush1.msra.mxu0 %v4401
    %4468 = vmatprep.subr.mxu0 %v4406
    %4469 = vmatpush1.msra.mxu0 %v4405
    %4470 = vmatprep.subr.mxu0 %v4410
    %4471 = vmatpush1.msra.mxu0 %v4409
    %4472 = vmatprep.subr.mxu0 %v4414
    %4473 = vmatpush1.msra.mxu0 %v4413
    %4474 = vmatprep.subr.mxu0 %v4418
    %4475 = vmatpush1.msra.mxu0 %v4417
    %4476 = vmatprep.subr.mxu0 %v4422
    %4477 = vmatpush1.msra.mxu0 %v4421
    %4478 = vmatprep.subr.mxu0 %v4426
    %4479 = vmatpush1.msra.mxu0 %v4425
    %4480 = vmatprep.subr.mxu0 %v4430
    %4481 = vmatpush1.msra.mxu0 %v4429
    %4482 = vmatprep.subr.mxu0 %v4434
    %4483 = vmatpush1.msra.mxu0 %v4433
    %4484 = vmatprep.subr.mxu0 %v4438
    %4485 = vmatpush1.msra.mxu0 %v4437
    %4486 = vmatprep.subr.mxu0 %v4442
    %4487 = vmatpush1.msra.mxu0 %v4441
    %4488 = vmatprep.subr.mxu0 0.0
    %4489 = vmatpush1.msra.mxu0 0.0
    %4490 = vmatprep.subr.mxu0 0.0
    %4491 = vmatpush1.msra.mxu0 0.0
    %4492 = vmatprep.subr.mxu0 0.0
    %4493 = vmatpush1.msra.mxu0 0.0
    %4494 = vmatprep.subr.mxu0 0.0
    %4495 = vmatpush1.msra.mxu0 0.0
    %4496 = vmatprep.subr.mxu0 0.0
    %4497 = vmatpush1.msra.mxu0 0.0
    %4498 = vmatprep.subr.mxu0 0.0
    %4499 = vmatpush1.msra.mxu0 0.0
    %4500 = vmatprep.subr.mxu0 0.0
    %4501 = vmatpush1.msra.mxu0 0.0
    %4502 = vmatprep.subr.mxu0 0.0
    %4503 = vmatpush1.msra.mxu0 0.0
    %4504 = vmatprep.subr.mxu0 0.0
    %4505 = vmatpush1.msra.mxu0 0.0
    %4506 = vmatprep.subr.mxu0 0.0
    %4507 = vmatpush1.msra.mxu0 0.0
    %4508 = vmatprep.subr.mxu0 0.0
    %4509 = vmatpush1.msra.mxu0 0.0
    %4510 = vmatprep.subr.mxu0 0.0
    %4511 = vmatpush1.msra.mxu0 0.0
    %4512 = vmatprep.mubr.f32.mxu0 %v4446
    %4513 = vmatmul.mubr.f32.gmra.mrb[0].mxu0 %v3896
    %v4514 = vpop.f32.mrb[0].mxu0
    %v4515 = vadd.f32 0.0, %v4514
    %v4516 = vpop.f32.mrb[0].mxu0
    %v4517 = vadd.f32 0.0, %v4516
    %4518 = vdwg.mxu0
    %4519 = vmatprep.subr.mxu0 %v4368
    %4520 = vmatpush1.msra.mxu0 %v4367
    %4521 = vmatprep.subr.mxu0 %v4372
    %4522 = vmatpush1.msra.mxu0 %v4371
    %4523 = vmatprep.subr.mxu0 %v4376
    %4524 = vmatpush1.msra.mxu0 %v4375
    %4525 = vmatprep.subr.mxu0 %v4380
    %4526 = vmatpush1.msra.mxu0 %v4379
    %4527 = vmatprep.subr.mxu0 %v4384
    %4528 = vmatpush1.msra.mxu0 %v4383
    %4529 = vmatprep.subr.mxu0 %v4388
    %4530 = vmatpush1.msra.mxu0 %v4387
    %4531 = vmatprep.subr.mxu0 %v4392
    %4532 = vmatpush1.msra.mxu0 %v4391
    %4533 = vmatprep.subr.mxu0 %v4396
    %4534 = vmatpush1.msra.mxu0 %v4395
    %4535 = vmatprep.subr.mxu0 %v4400
    %4536 = vmatpush1.msra.mxu0 %v4399
    %4537 = vmatprep.subr.mxu0 %v4404
    %4538 = vmatpush1.msra.mxu0 %v4403
    %4539 = vmatprep.subr.mxu0 %v4408
    %4540 = vmatpush1.msra.mxu0 %v4407
    %4541 = vmatprep.subr.mxu0 %v4412
    %4542 = vmatpush1.msra.mxu0 %v4411
    %4543 = vmatprep.subr.mxu0 %v4416
    %4544 = vmatpush1.msra.mxu0 %v4415
    %4545 = vmatprep.subr.mxu0 %v4420
    %4546 = vmatpush1.msra.mxu0 %v4419
    %4547 = vmatprep.subr.mxu0 %v4424
    %4548 = vmatpush1.msra.mxu0 %v4423
    %4549 = vmatprep.subr.mxu0 %v4428
    %4550 = vmatpush1.msra.mxu0 %v4427
    %4551 = vmatprep.subr.mxu0 %v4432
    %4552 = vmatpush1.msra.mxu0 %v4431
    %4553 = vmatprep.subr.mxu0 %v4436
    %4554 = vmatpush1.msra.mxu0 %v4435
    %4555 = vmatprep.subr.mxu0 %v4440
    %4556 = vmatpush1.msra.mxu0 %v4439
    %4557 = vmatprep.subr.mxu0 %v4444
    %4558 = vmatpush1.msra.mxu0 %v4443
    %4559 = vmatprep.subr.mxu0 0.0
    %4560 = vmatpush1.msra.mxu0 0.0
    %4561 = vmatprep.subr.mxu0 0.0
    %4562 = vmatpush1.msra.mxu0 0.0
    %4563 = vmatprep.subr.mxu0 0.0
    %4564 = vmatpush1.msra.mxu0 0.0
    %4565 = vmatprep.subr.mxu0 0.0
    %4566 = vmatpush1.msra.mxu0 0.0
    %4567 = vmatprep.subr.mxu0 0.0
    %4568 = vmatpush1.msra.mxu0 0.0
    %4569 = vmatprep.subr.mxu0 0.0
    %4570 = vmatpush1.msra.mxu0 0.0
    %4571 = vmatprep.subr.mxu0 0.0
    %4572 = vmatpush1.msra.mxu0 0.0
    %4573 = vmatprep.subr.mxu0 0.0
    %4574 = vmatpush1.msra.mxu0 0.0
    %4575 = vmatprep.subr.mxu0 0.0
    %4576 = vmatpush1.msra.mxu0 0.0
    %4577 = vmatprep.subr.mxu0 0.0
    %4578 = vmatpush1.msra.mxu0 0.0
    %4579 = vmatprep.subr.mxu0 0.0
    %4580 = vmatpush1.msra.mxu0 0.0
    %4581 = vmatprep.subr.mxu0 0.0
    %4582 = vmatpush1.msra.mxu0 0.0
    %4583 = vmatprep.mubr.f32.mxu0 %v4446
    %4584 = vmatmul.mubr.f32.gmra.mrb[0].mxu0 %v3896
    %v4585 = vpop.f32.mrb[0].mxu0
    %v4586 = vadd.f32 0.0, %v4585
    %v4587 = vpop.f32.mrb[0].mxu0
    %v4588 = vadd.f32 0.0, %v4587
    %4589 = vdwg.mxu0
    %v4590 = vadd.f32 %v4289, %v4515
    %v4591 = vadd.f32 %v4291, %v4517
    %v4592 = vadd.f32 %v4360, %v4586
    %v4593 = vadd.f32 %v4362, %v4588
    %s4594 = scalar_lea.vmem [#allocation6], 1920
    %v4595 = vld [vmem:[%s4594] sm:$0xff]
    %v4596 = vld [vmem:[%s4594 + $0x8] sm:$0xff]
    %v4597 = vld [vmem:[%s4594 + $0x10] sm:$0xff]
    %v4598 = vld [vmem:[%s4594 + $0x18] sm:$0xff]
    %v4599 = vld [vmem:[%s4594 + $0x20] sm:$0xff]
    %v4600 = vld [vmem:[%s4594 + $0x28] sm:$0xff]
    %v4601 = vld [vmem:[%s4594 + $0x30] sm:$0xff]
    %v4602 = vld [vmem:[%s4594 + $0x38] sm:$0xff]
    %v4603 = vld [vmem:[%s4594 + $0x40] sm:$0xff]
    %v4604 = vld [vmem:[%s4594 + $0x48] sm:$0xff]
    %v4605 = vld [vmem:[%s4594 + $0x50] sm:$0xff]
    %v4606 = vld [vmem:[%s4594 + $0x58] sm:$0xff]
    %v4607 = vld [vmem:[%s4594 + $0x60] sm:$0xff]
    %v4608 = vld [vmem:[%s4594 + $0x68] sm:$0xff]
    %v4609 = vld [vmem:[%s4594 + $0x70] sm:$0xff]
    %v4610 = vld [vmem:[%s4594 + $0x78] sm:$0xff]
    %v4611 = vld [vmem:[%s4594 + $0x80] sm:$0xff]
    %v4612 = vld [vmem:[%s4594 + $0x88] sm:$0xff]
    %v4613 = vld [vmem:[%s4594 + $0x90] sm:$0xff]
    %v4614 = vld [vmem:[%s4594 + $0x98] sm:$0xff]
    %v4615 = vld [vmem:[%s4594 + $0xa0] sm:$0xff]
    %v4616 = vld [vmem:[%s4594 + $0xa8] sm:$0xff]
    %v4617 = vld [vmem:[%s4594 + $0xb0] sm:$0xff]
    %v4618 = vld [vmem:[%s4594 + $0xb8] sm:$0xff]
    %v4619 = vld [vmem:[%s4594 + $0xc0] sm:$0xff]
    %v4620 = vld [vmem:[%s4594 + $0xc8] sm:$0xff]
    %v4621 = vld [vmem:[%s4594 + $0xd0] sm:$0xff]
    %v4622 = vld [vmem:[%s4594 + $0xd8] sm:$0xff]
    %v4623 = vld [vmem:[%s4594 + $0xe0] sm:$0xff]
    %v4624 = vld [vmem:[%s4594 + $0xe8] sm:$0xff]
    %v4625 = vld [vmem:[%s4594 + $0xf0] sm:$0xff]
    %v4626 = vld [vmem:[%s4594 + $0xf8] sm:$0xff]
    %v4627 = vld [vmem:[%s4594 + $0x100] sm:$0xff]
    %v4628 = vld [vmem:[%s4594 + $0x108] sm:$0xff]
    %v4629 = vld [vmem:[%s4594 + $0x110] sm:$0xff]
    %v4630 = vld [vmem:[%s4594 + $0x118] sm:$0xff]
    %v4631 = vld [vmem:[%s4594 + $0x120] sm:$0xff]
    %v4632 = vld [vmem:[%s4594 + $0x128] sm:$0xff]
    %v4633 = vld [vmem:[%s4594 + $0x130] sm:$0xff]
    %v4634 = vld [vmem:[%s4594 + $0x138] sm:$0xff]
    %v4635 = vld [vmem:[%s4594 + $0x140] sm:$0xff]
    %v4636 = vld [vmem:[%s4594 + $0x148] sm:$0xff]
    %v4637 = vld [vmem:[%s4594 + $0x150] sm:$0xff]
    %v4638 = vld [vmem:[%s4594 + $0x158] sm:$0xff]
    %v4639 = vld [vmem:[%s4594 + $0x160] sm:$0xff]
    %v4640 = vld [vmem:[%s4594 + $0x168] sm:$0xff]
    %v4641 = vld [vmem:[%s4594 + $0x170] sm:$0xff]
    %v4642 = vld [vmem:[%s4594 + $0x178] sm:$0xff]
    %v4643 = vld [vmem:[%s4594 + $0x180] sm:$0xff]
    %v4644 = vld [vmem:[%s4594 + $0x188] sm:$0xff]
    %v4645 = vld [vmem:[%s4594 + $0x190] sm:$0xff]
    %v4646 = vld [vmem:[%s4594 + $0x198] sm:$0xff]
    %v4647 = vld [vmem:[%s4594 + $0x1a0] sm:$0xff]
    %v4648 = vld [vmem:[%s4594 + $0x1a8] sm:$0xff]
    %v4649 = vld [vmem:[%s4594 + $0x1b0] sm:$0xff]
    %v4650 = vld [vmem:[%s4594 + $0x1b8] sm:$0xff]
    %v4651 = vld [vmem:[%s4594 + $0x1c0] sm:$0xff]
    %v4652 = vld [vmem:[%s4594 + $0x1c8] sm:$0xff]
    %v4653 = vld [vmem:[%s4594 + $0x1d0] sm:$0xff]
    %v4654 = vld [vmem:[%s4594 + $0x1d8] sm:$0xff]
    %v4655 = vld [vmem:[%s4594 + $0x1e0] sm:$0xff]
    %v4656 = vld [vmem:[%s4594 + $0x1e8] sm:$0xff]
    %v4657 = vld [vmem:[%s4594 + $0x1f0] sm:$0xff]
    %v4658 = vld [vmem:[%s4594 + $0x1f8] sm:$0xff]
    %v4659 = vld [vmem:[%s4594 + $0x200] sm:$0xff]
    %v4660 = vld [vmem:[%s4594 + $0x208] sm:$0xff]
    %v4661 = vld [vmem:[%s4594 + $0x210] sm:$0xff]
    %v4662 = vld [vmem:[%s4594 + $0x218] sm:$0xff]
    %v4663 = vld [vmem:[%s4594 + $0x220] sm:$0xff]
    %v4664 = vld [vmem:[%s4594 + $0x228] sm:$0xff]
    %v4665 = vld [vmem:[%s4594 + $0x230] sm:$0xff]
    %v4666 = vld [vmem:[%s4594 + $0x238] sm:$0xff]
    %v4667 = vld [vmem:[%s4594 + $0x240] sm:$0xff]
    %v4668 = vld [vmem:[%s4594 + $0x248] sm:$0xff]
    %v4669 = vld [vmem:[%s4594 + $0x250] sm:$0xff]
    %v4670 = vld [vmem:[%s4594 + $0x258] sm:$0xff]
    %v4671 = vld [vmem:[%s4594 + $0x260] sm:$0xff]
    %v4672 = vld [vmem:[%s4594 + $0x268] sm:$0xff]
    %v4673 = vld [vmem:[%s4594 + $0x270] sm:$0xff]
    %v4674 = vld [vmem:[%s4594 + $0x278] sm:$0xff]
    %v4676 = vsel %vm4073, %v3899, 0
    %4678 = vmatprep.subr.mxu0 %v4596
    %4679 = vmatpush1.msra.mxu0 %v4595
    %4680 = vmatprep.subr.mxu0 %v4600
    %4681 = vmatpush1.msra.mxu0 %v4599
    %4682 = vmatprep.subr.mxu0 %v4604
    %4683 = vmatpush1.msra.mxu0 %v4603
    %4684 = vmatprep.subr.mxu0 %v4608
    %4685 = vmatpush1.msra.mxu0 %v4607
    %4686 = vmatprep.subr.mxu0 %v4612
    %4687 = vmatpush1.msra.mxu0 %v4611
    %4688 = vmatprep.subr.mxu0 %v4616
    %4689 = vmatpush1.msra.mxu0 %v4615
    %4690 = vmatprep.subr.mxu0 %v4620
    %4691 = vmatpush1.msra.mxu0 %v4619
    %4692 = vmatprep.subr.mxu0 %v4624
    %4693 = vmatpush1.msra.mxu0 %v4623
    %4694 = vmatprep.subr.mxu0 %v4628
    %4695 = vmatpush1.msra.mxu0 %v4627
    %4696 = vmatprep.subr.mxu0 %v4632
    %4697 = vmatpush1.msra.mxu0 %v4631
    %4698 = vmatprep.subr.mxu0 %v4636
    %4699 = vmatpush1.msra.mxu0 %v4635
    %4700 = vmatprep.subr.mxu0 %v4640
    %4701 = vmatpush1.msra.mxu0 %v4639
    %4702 = vmatprep.subr.mxu0 %v4644
    %4703 = vmatpush1.msra.mxu0 %v4643
    %4704 = vmatprep.subr.mxu0 %v4648
    %4705 = vmatpush1.msra.mxu0 %v4647
    %4706 = vmatprep.subr.mxu0 %v4652
    %4707 = vmatpush1.msra.mxu0 %v4651
    %4708 = vmatprep.subr.mxu0 %v4656
    %4709 = vmatpush1.msra.mxu0 %v4655
    %4710 = vmatprep.subr.mxu0 %v4660
    %4711 = vmatpush1.msra.mxu0 %v4659
    %4712 = vmatprep.subr.mxu0 %v4664
    %4713 = vmatpush1.msra.mxu0 %v4663
    %4714 = vmatprep.subr.mxu0 %v4668
    %4715 = vmatpush1.msra.mxu0 %v4667
    %4716 = vmatprep.subr.mxu0 %v4672
    %4717 = vmatpush1.msra.mxu0 %v4671
    %4718 = vmatprep.subr.mxu0 0.0
    %4719 = vmatpush1.msra.mxu0 0.0
    %4720 = vmatprep.subr.mxu0 0.0
    %4721 = vmatpush1.msra.mxu0 0.0
    %4722 = vmatprep.subr.mxu0 0.0
    %4723 = vmatpush1.msra.mxu0 0.0
    %4724 = vmatprep.subr.mxu0 0.0
    %4725 = vmatpush1.msra.mxu0 0.0
    %4726 = vmatprep.subr.mxu0 0.0
    %4727 = vmatpush1.msra.mxu0 0.0
    %4728 = vmatprep.subr.mxu0 0.0
    %4729 = vmatpush1.msra.mxu0 0.0
    %4730 = vmatprep.subr.mxu0 0.0
    %4731 = vmatpush1.msra.mxu0 0.0
    %4732 = vmatprep.subr.mxu0 0.0
    %4733 = vmatpush1.msra.mxu0 0.0
    %4734 = vmatprep.subr.mxu0 0.0
    %4735 = vmatpush1.msra.mxu0 0.0
    %4736 = vmatprep.subr.mxu0 0.0
    %4737 = vmatpush1.msra.mxu0 0.0
    %4738 = vmatprep.subr.mxu0 0.0
    %4739 = vmatpush1.msra.mxu0 0.0
    %4740 = vmatprep.subr.mxu0 0.0
    %4741 = vmatpush1.msra.mxu0 0.0
    %4742 = vmatprep.mubr.f32.mxu0 %v4676
    %4743 = vmatmul.mubr.f32.gmra.mrb[0].mxu0 %v3898
    %v4744 = vpop.f32.mrb[0].mxu0
    %v4745 = vadd.f32 0.0, %v4744
    %v4746 = vpop.f32.mrb[0].mxu0
    %v4747 = vadd.f32 0.0, %v4746
    %4748 = vdwg.mxu0
    %4749 = vmatprep.subr.mxu0 %v4598
    %4750 = vmatpush1.msra.mxu0 %v4597
    %4751 = vmatprep.subr.mxu0 %v4602
    %4752 = vmatpush1.msra.mxu0 %v4601
    %4753 = vmatprep.subr.mxu0 %v4606
    %4754 = vmatpush1.msra.mxu0 %v4605
    %4755 = vmatprep.subr.mxu0 %v4610
    %4756 = vmatpush1.msra.mxu0 %v4609
    %4757 = vmatprep.subr.mxu0 %v4614
    %4758 = vmatpush1.msra.mxu0 %v4613
    %4759 = vmatprep.subr.mxu0 %v4618
    %4760 = vmatpush1.msra.mxu0 %v4617
    %4761 = vmatprep.subr.mxu0 %v4622
    %4762 = vmatpush1.msra.mxu0 %v4621
    %4763 = vmatprep.subr.mxu0 %v4626
    %4764 = vmatpush1.msra.mxu0 %v4625
    %4765 = vmatprep.subr.mxu0 %v4630
    %4766 = vmatpush1.msra.mxu0 %v4629
    %4767 = vmatprep.subr.mxu0 %v4634
    %4768 = vmatpush1.msra.mxu0 %v4633
    %4769 = vmatprep.subr.mxu0 %v4638
    %4770 = vmatpush1.msra.mxu0 %v4637
    %4771 = vmatprep.subr.mxu0 %v4642
    %4772 = vmatpush1.msra.mxu0 %v4641
    %4773 = vmatprep.subr.mxu0 %v4646
    %4774 = vmatpush1.msra.mxu0 %v4645
    %4775 = vmatprep.subr.mxu0 %v4650
    %4776 = vmatpush1.msra.mxu0 %v4649
    %4777 = vmatprep.subr.mxu0 %v4654
    %4778 = vmatpush1.msra.mxu0 %v4653
    %4779 = vmatprep.subr.mxu0 %v4658
    %4780 = vmatpush1.msra.mxu0 %v4657
    %4781 = vmatprep.subr.mxu0 %v4662
    %4782 = vmatpush1.msra.mxu0 %v4661
    %4783 = vmatprep.subr.mxu0 %v4666
    %4784 = vmatpush1.msra.mxu0 %v4665
    %4785 = vmatprep.subr.mxu0 %v4670
    %4786 = vmatpush1.msra.mxu0 %v4669
    %4787 = vmatprep.subr.mxu0 %v4674
    %4788 = vmatpush1.msra.mxu0 %v4673
    %4789 = vmatprep.subr.mxu0 0.0
    %4790 = vmatpush1.msra.mxu0 0.0
    %4791 = vmatprep.subr.mxu0 0.0
    %4792 = vmatpush1.msra.mxu0 0.0
    %4793 = vmatprep.subr.mxu0 0.0
    %4794 = vmatpush1.msra.mxu0 0.0
    %4795 = vmatprep.subr.mxu0 0.0
    %4796 = vmatpush1.msra.mxu0 0.0
    %4797 = vmatprep.subr.mxu0 0.0
    %4798 = vmatpush1.msra.mxu0 0.0
    %4799 = vmatprep.subr.mxu0 0.0
    %4800 = vmatpush1.msra.mxu0 0.0
    %4801 = vmatprep.subr.mxu0 0.0
    %4802 = vmatpush1.msra.mxu0 0.0
    %4803 = vmatprep.subr.mxu0 0.0
    %4804 = vmatpush1.msra.mxu0 0.0
    %4805 = vmatprep.subr.mxu0 0.0
    %4806 = vmatpush1.msra.mxu0 0.0
    %4807 = vmatprep.subr.mxu0 0.0
    %4808 = vmatpush1.msra.mxu0 0.0
    %4809 = vmatprep.subr.mxu0 0.0
    %4810 = vmatpush1.msra.mxu0 0.0
    %4811 = vmatprep.subr.mxu0 0.0
    %4812 = vmatpush1.msra.mxu0 0.0
    %4813 = vmatprep.mubr.f32.mxu0 %v4676
    %4814 = vmatmul.mubr.f32.gmra.mrb[0].mxu0 %v3898
    %v4815 = vpop.f32.mrb[0].mxu0
    %v4816 = vadd.f32 0.0, %v4815
    %v4817 = vpop.f32.mrb[0].mxu0
    %v4818 = vadd.f32 0.0, %v4817
    %4819 = vdwg.mxu0
    %v4820 = vadd.f32 %v4590, %v4745
    %v4821 = vadd.f32 %v4591, %v4747
    %v4822 = vadd.f32 %v4592, %v4816
    %v4823 = vadd.f32 %v4593, %v4818
    %s4824 = scalar_lea.vmem [#allocation6], 2560
    %v4825 = vld [vmem:[%s4824] sm:$0xff]
    %v4826 = vld [vmem:[%s4824 + $0x8] sm:$0xff]
    %v4827 = vld [vmem:[%s4824 + $0x10] sm:$0xff]
    %v4828 = vld [vmem:[%s4824 + $0x18] sm:$0xff]
    %v4829 = vld [vmem:[%s4824 + $0x20] sm:$0xff]
    %v4830 = vld [vmem:[%s4824 + $0x28] sm:$0xff]
    %v4831 = vld [vmem:[%s4824 + $0x30] sm:$0xff]
    %v4832 = vld [vmem:[%s4824 + $0x38] sm:$0xff]
    %v4833 = vld [vmem:[%s4824 + $0x40] sm:$0xff]
    %v4834 = vld [vmem:[%s4824 + $0x48] sm:$0xff]
    %v4835 = vld [vmem:[%s4824 + $0x50] sm:$0xff]
    %v4836 = vld [vmem:[%s4824 + $0x58] sm:$0xff]
    %v4837 = vld [vmem:[%s4824 + $0x60] sm:$0xff]
    %v4838 = vld [vmem:[%s4824 + $0x68] sm:$0xff]
    %v4839 = vld [vmem:[%s4824 + $0x70] sm:$0xff]
    %v4840 = vld [vmem:[%s4824 + $0x78] sm:$0xff]
    %v4841 = vld [vmem:[%s4824 + $0x80] sm:$0xff]
    %v4842 = vld [vmem:[%s4824 + $0x88] sm:$0xff]
    %v4843 = vld [vmem:[%s4824 + $0x90] sm:$0xff]
    %v4844 = vld [vmem:[%s4824 + $0x98] sm:$0xff]
    %v4845 = vld [vmem:[%s4824 + $0xa0] sm:$0xff]
    %v4846 = vld [vmem:[%s4824 + $0xa8] sm:$0xff]
    %v4847 = vld [vmem:[%s4824 + $0xb0] sm:$0xff]
    %v4848 = vld [vmem:[%s4824 + $0xb8] sm:$0xff]
    %v4849 = vld [vmem:[%s4824 + $0xc0] sm:$0xff]
    %v4850 = vld [vmem:[%s4824 + $0xc8] sm:$0xff]
    %v4851 = vld [vmem:[%s4824 + $0xd0] sm:$0xff]
    %v4852 = vld [vmem:[%s4824 + $0xd8] sm:$0xff]
    %v4853 = vld [vmem:[%s4824 + $0xe0] sm:$0xff]
    %v4854 = vld [vmem:[%s4824 + $0xe8] sm:$0xff]
    %v4855 = vld [vmem:[%s4824 + $0xf0] sm:$0xff]
    %v4856 = vld [vmem:[%s4824 + $0xf8] sm:$0xff]
    %v4857 = vld [vmem:[%s4824 + $0x100] sm:$0xff]
    %v4858 = vld [vmem:[%s4824 + $0x108] sm:$0xff]
    %v4859 = vld [vmem:[%s4824 + $0x110] sm:$0xff]
    %v4860 = vld [vmem:[%s4824 + $0x118] sm:$0xff]
    %v4861 = vld [vmem:[%s4824 + $0x120] sm:$0xff]
    %v4862 = vld [vmem:[%s4824 + $0x128] sm:$0xff]
    %v4863 = vld [vmem:[%s4824 + $0x130] sm:$0xff]
    %v4864 = vld [vmem:[%s4824 + $0x138] sm:$0xff]
    %v4865 = vld [vmem:[%s4824 + $0x140] sm:$0xff]
    %v4866 = vld [vmem:[%s4824 + $0x148] sm:$0xff]
    %v4867 = vld [vmem:[%s4824 + $0x150] sm:$0xff]
    %v4868 = vld [vmem:[%s4824 + $0x158] sm:$0xff]
    %v4869 = vld [vmem:[%s4824 + $0x160] sm:$0xff]
    %v4870 = vld [vmem:[%s4824 + $0x168] sm:$0xff]
    %v4871 = vld [vmem:[%s4824 + $0x170] sm:$0xff]
    %v4872 = vld [vmem:[%s4824 + $0x178] sm:$0xff]
    %v4873 = vld [vmem:[%s4824 + $0x180] sm:$0xff]
    %v4874 = vld [vmem:[%s4824 + $0x188] sm:$0xff]
    %v4875 = vld [vmem:[%s4824 + $0x190] sm:$0xff]
    %v4876 = vld [vmem:[%s4824 + $0x198] sm:$0xff]
    %v4877 = vld [vmem:[%s4824 + $0x1a0] sm:$0xff]
    %v4878 = vld [vmem:[%s4824 + $0x1a8] sm:$0xff]
    %v4879 = vld [vmem:[%s4824 + $0x1b0] sm:$0xff]
    %v4880 = vld [vmem:[%s4824 + $0x1b8] sm:$0xff]
    %v4881 = vld [vmem:[%s4824 + $0x1c0] sm:$0xff]
    %v4882 = vld [vmem:[%s4824 + $0x1c8] sm:$0xff]
    %v4883 = vld [vmem:[%s4824 + $0x1d0] sm:$0xff]
    %v4884 = vld [vmem:[%s4824 + $0x1d8] sm:$0xff]
    %v4885 = vld [vmem:[%s4824 + $0x1e0] sm:$0xff]
    %v4886 = vld [vmem:[%s4824 + $0x1e8] sm:$0xff]
    %v4887 = vld [vmem:[%s4824 + $0x1f0] sm:$0xff]
    %v4888 = vld [vmem:[%s4824 + $0x1f8] sm:$0xff]
    %v4889 = vld [vmem:[%s4824 + $0x200] sm:$0xff]
    %v4890 = vld [vmem:[%s4824 + $0x208] sm:$0xff]
    %v4891 = vld [vmem:[%s4824 + $0x210] sm:$0xff]
    %v4892 = vld [vmem:[%s4824 + $0x218] sm:$0xff]
    %v4893 = vld [vmem:[%s4824 + $0x220] sm:$0xff]
    %v4894 = vld [vmem:[%s4824 + $0x228] sm:$0xff]
    %v4895 = vld [vmem:[%s4824 + $0x230] sm:$0xff]
    %v4896 = vld [vmem:[%s4824 + $0x238] sm:$0xff]
    %v4897 = vld [vmem:[%s4824 + $0x240] sm:$0xff]
    %v4898 = vld [vmem:[%s4824 + $0x248] sm:$0xff]
    %v4899 = vld [vmem:[%s4824 + $0x250] sm:$0xff]
    %v4900 = vld [vmem:[%s4824 + $0x258] sm:$0xff]
    %v4901 = vld [vmem:[%s4824 + $0x260] sm:$0xff]
    %v4902 = vld [vmem:[%s4824 + $0x268] sm:$0xff]
    %v4903 = vld [vmem:[%s4824 + $0x270] sm:$0xff]
    %v4904 = vld [vmem:[%s4824 + $0x278] sm:$0xff]
    %v4906 = vsel %vm4073, %v3901, 0
    %4908 = vmatprep.subr.mxu0 %v4826
    %4909 = vmatpush1.msra.mxu0 %v4825
    %4910 = vmatprep.subr.mxu0 %v4830
    %4911 = vmatpush1.msra.mxu0 %v4829
    %4912 = vmatprep.subr.mxu0 %v4834
    %4913 = vmatpush1.msra.mxu0 %v4833
    %4914 = vmatprep.subr.mxu0 %v4838
    %4915 = vmatpush1.msra.mxu0 %v4837
    %4916 = vmatprep.subr.mxu0 %v4842
    %4917 = vmatpush1.msra.mxu0 %v4841
    %4918 = vmatprep.subr.mxu0 %v4846
    %4919 = vmatpush1.msra.mxu0 %v4845
    %4920 = vmatprep.subr.mxu0 %v4850
    %4921 = vmatpush1.msra.mxu0 %v4849
    %4922 = vmatprep.subr.mxu0 %v4854
    %4923 = vmatpush1.msra.mxu0 %v4853
    %4924 = vmatprep.subr.mxu0 %v4858
    %4925 = vmatpush1.msra.mxu0 %v4857
    %4926 = vmatprep.subr.mxu0 %v4862
    %4927 = vmatpush1.msra.mxu0 %v4861
    %4928 = vmatprep.subr.mxu0 %v4866
    %4929 = vmatpush1.msra.mxu0 %v4865
    %4930 = vmatprep.subr.mxu0 %v4870
    %4931 = vmatpush1.msra.mxu0 %v4869
    %4932 = vmatprep.subr.mxu0 %v4874
    %4933 = vmatpush1.msra.mxu0 %v4873
    %4934 = vmatprep.subr.mxu0 %v4878
    %4935 = vmatpush1.msra.mxu0 %v4877
    %4936 = vmatprep.subr.mxu0 %v4882
    %4937 = vmatpush1.msra.mxu0 %v4881
    %4938 = vmatprep.subr.mxu0 %v4886
    %4939 = vmatpush1.msra.mxu0 %v4885
    %4940 = vmatprep.subr.mxu0 %v4890
    %4941 = vmatpush1.msra.mxu0 %v4889
    %4942 = vmatprep.subr.mxu0 %v4894
    %4943 = vmatpush1.msra.mxu0 %v4893
    %4944 = vmatprep.subr.mxu0 %v4898
    %4945 = vmatpush1.msra.mxu0 %v4897
    %4946 = vmatprep.subr.mxu0 %v4902
    %4947 = vmatpush1.msra.mxu0 %v4901
    %4948 = vmatprep.subr.mxu0 0.0
    %4949 = vmatpush1.msra.mxu0 0.0
    %4950 = vmatprep.subr.mxu0 0.0
    %4951 = vmatpush1.msra.mxu0 0.0
    %4952 = vmatprep.subr.mxu0 0.0
    %4953 = vmatpush1.msra.mxu0 0.0
    %4954 = vmatprep.subr.mxu0 0.0
    %4955 = vmatpush1.msra.mxu0 0.0
    %4956 = vmatprep.subr.mxu0 0.0
    %4957 = vmatpush1.msra.mxu0 0.0
    %4958 = vmatprep.subr.mxu0 0.0
    %4959 = vmatpush1.msra.mxu0 0.0
    %4960 = vmatprep.subr.mxu0 0.0
    %4961 = vmatpush1.msra.mxu0 0.0
    %4962 = vmatprep.subr.mxu0 0.0
    %4963 = vmatpush1.msra.mxu0 0.0
    %4964 = vmatprep.subr.mxu0 0.0
    %4965 = vmatpush1.msra.mxu0 0.0
    %4966 = vmatprep.subr.mxu0 0.0
    %4967 = vmatpush1.msra.mxu0 0.0
    %4968 = vmatprep.subr.mxu0 0.0
    %4969 = vmatpush1.msra.mxu0 0.0
    %4970 = vmatprep.subr.mxu0 0.0
    %4971 = vmatpush1.msra.mxu0 0.0
    %4972 = vmatprep.mubr.f32.mxu0 %v4906
    %4973 = vmatmul.mubr.f32.gmra.mrb[0].mxu0 %v3900
    %v4974 = vpop.f32.mrb[0].mxu0
    %v4975 = vadd.f32 0.0, %v4974
    %v4976 = vpop.f32.mrb[0].mxu0
    %v4977 = vadd.f32 0.0, %v4976
    %4978 = vdwg.mxu0
    %4979 = vmatprep.subr.mxu0 %v4828
    %4980 = vmatpush1.msra.mxu0 %v4827
    %4981 = vmatprep.subr.mxu0 %v4832
    %4982 = vmatpush1.msra.mxu0 %v4831
    %4983 = vmatprep.subr.mxu0 %v4836
    %4984 = vmatpush1.msra.mxu0 %v4835
    %4985 = vmatprep.subr.mxu0 %v4840
    %4986 = vmatpush1.msra.mxu0 %v4839
    %4987 = vmatprep.subr.mxu0 %v4844
    %4988 = vmatpush1.msra.mxu0 %v4843
    %4989 = vmatprep.subr.mxu0 %v4848
    %4990 = vmatpush1.msra.mxu0 %v4847
    %4991 = vmatprep.subr.mxu0 %v4852
    %4992 = vmatpush1.msra.mxu0 %v4851
    %4993 = vmatprep.subr.mxu0 %v4856
    %4994 = vmatpush1.msra.mxu0 %v4855
    %4995 = vmatprep.subr.mxu0 %v4860
    %4996 = vmatpush1.msra.mxu0 %v4859
    %4997 = vmatprep.subr.mxu0 %v4864
    %4998 = vmatpush1.msra.mxu0 %v4863
    %4999 = vmatprep.subr.mxu0 %v4868
    %5000 = vmatpush1.msra.mxu0 %v4867
    %5001 = vmatprep.subr.mxu0 %v4872
    %5002 = vmatpush1.msra.mxu0 %v4871
    %5003 = vmatprep.subr.mxu0 %v4876
    %5004 = vmatpush1.msra.mxu0 %v4875
    %5005 = vmatprep.subr.mxu0 %v4880
    %5006 = vmatpush1.msra.mxu0 %v4879
    %5007 = vmatprep.subr.mxu0 %v4884
    %5008 = vmatpush1.msra.mxu0 %v4883
    %5009 = vmatprep.subr.mxu0 %v4888
    %5010 = vmatpush1.msra.mxu0 %v4887
    %5011 = vmatprep.subr.mxu0 %v4892
    %5012 = vmatpush1.msra.mxu0 %v4891
    %5013 = vmatprep.subr.mxu0 %v4896
    %5014 = vmatpush1.msra.mxu0 %v4895
    %5015 = vmatprep.subr.mxu0 %v4900
    %5016 = vmatpush1.msra.mxu0 %v4899
    %5017 = vmatprep.subr.mxu0 %v4904
    %5018 = vmatpush1.msra.mxu0 %v4903
    %5019 = vmatprep.subr.mxu0 0.0
    %5020 = vmatpush1.msra.mxu0 0.0
    %5021 = vmatprep.subr.mxu0 0.0
    %5022 = vmatpush1.msra.mxu0 0.0
    %5023 = vmatprep.subr.mxu0 0.0
    %5024 = vmatpush1.msra.mxu0 0.0
    %5025 = vmatprep.subr.mxu0 0.0
    %5026 = vmatpush1.msra.mxu0 0.0
    %5027 = vmatprep.subr.mxu0 0.0
    %5028 = vmatpush1.msra.mxu0 0.0
    %5029 = vmatprep.subr.mxu0 0.0
    %5030 = vmatpush1.msra.mxu0 0.0
    %5031 = vmatprep.subr.mxu0 0.0
    %5032 = vmatpush1.msra.mxu0 0.0
    %5033 = vmatprep.subr.mxu0 0.0
    %5034 = vmatpush1.msra.mxu0 0.0
    %5035 = vmatprep.subr.mxu0 0.0
    %5036 = vmatpush1.msra.mxu0 0.0
    %5037 = vmatprep.subr.mxu0 0.0
    %5038 = vmatpush1.msra.mxu0 0.0
    %5039 = vmatprep.subr.mxu0 0.0
    %5040 = vmatpush1.msra.mxu0 0.0
    %5041 = vmatprep.subr.mxu0 0.0
    %5042 = vmatpush1.msra.mxu0 0.0
    %5043 = vmatprep.mubr.f32.mxu0 %v4906
    %5044 = vmatmul.mubr.f32.gmra.mrb[0].mxu0 %v3900
    %v5045 = vpop.f32.mrb[0].mxu0
    %v5046 = vadd.f32 0.0, %v5045
    %v5047 = vpop.f32.mrb[0].mxu0
    %v5048 = vadd.f32 0.0, %v5047
    %5049 = vdwg.mxu0
    %v5050 = vadd.f32 %v4820, %v4975
    %v5051 = vadd.f32 %v4821, %v4977
    %v5052 = vadd.f32 %v4822, %v5046
    %v5053 = vadd.f32 %v4823, %v5048
    %s5054 = scalar_lea.vmem [#allocation6], 3200
    %v5055 = vld [vmem:[%s5054] sm:$0xff]
    %v5056 = vld [vmem:[%s5054 + $0x8] sm:$0xff]
    %v5057 = vld [vmem:[%s5054 + $0x10] sm:$0xff]
    %v5058 = vld [vmem:[%s5054 + $0x18] sm:$0xff]
    %v5059 = vld [vmem:[%s5054 + $0x20] sm:$0xff]
    %v5060 = vld [vmem:[%s5054 + $0x28] sm:$0xff]
    %v5061 = vld [vmem:[%s5054 + $0x30] sm:$0xff]
    %v5062 = vld [vmem:[%s5054 + $0x38] sm:$0xff]
    %v5063 = vld [vmem:[%s5054 + $0x40] sm:$0xff]
    %v5064 = vld [vmem:[%s5054 + $0x48] sm:$0xff]
    %v5065 = vld [vmem:[%s5054 + $0x50] sm:$0xff]
    %v5066 = vld [vmem:[%s5054 + $0x58] sm:$0xff]
    %v5067 = vld [vmem:[%s5054 + $0x60] sm:$0xff]
    %v5068 = vld [vmem:[%s5054 + $0x68] sm:$0xff]
    %v5069 = vld [vmem:[%s5054 + $0x70] sm:$0xff]
    %v5070 = vld [vmem:[%s5054 + $0x78] sm:$0xff]
    %v5071 = vld [vmem:[%s5054 + $0x80] sm:$0xff]
    %v5072 = vld [vmem:[%s5054 + $0x88] sm:$0xff]
    %v5073 = vld [vmem:[%s5054 + $0x90] sm:$0xff]
    %v5074 = vld [vmem:[%s5054 + $0x98] sm:$0xff]
    %v5075 = vld [vmem:[%s5054 + $0xa0] sm:$0xff]
    %v5076 = vld [vmem:[%s5054 + $0xa8] sm:$0xff]
    %v5077 = vld [vmem:[%s5054 + $0xb0] sm:$0xff]
    %v5078 = vld [vmem:[%s5054 + $0xb8] sm:$0xff]
    %v5079 = vld [vmem:[%s5054 + $0xc0] sm:$0xff]
    %v5080 = vld [vmem:[%s5054 + $0xc8] sm:$0xff]
    %v5081 = vld [vmem:[%s5054 + $0xd0] sm:$0xff]
    %v5082 = vld [vmem:[%s5054 + $0xd8] sm:$0xff]
    %v5083 = vld [vmem:[%s5054 + $0xe0] sm:$0xff]
    %v5084 = vld [vmem:[%s5054 + $0xe8] sm:$0xff]
    %v5085 = vld [vmem:[%s5054 + $0xf0] sm:$0xff]
    %v5086 = vld [vmem:[%s5054 + $0xf8] sm:$0xff]
    %v5087 = vld [vmem:[%s5054 + $0x100] sm:$0xff]
    %v5088 = vld [vmem:[%s5054 + $0x108] sm:$0xff]
    %v5089 = vld [vmem:[%s5054 + $0x110] sm:$0xff]
    %v5090 = vld [vmem:[%s5054 + $0x118] sm:$0xff]
    %v5091 = vld [vmem:[%s5054 + $0x120] sm:$0xff]
    %v5092 = vld [vmem:[%s5054 + $0x128] sm:$0xff]
    %v5093 = vld [vmem:[%s5054 + $0x130] sm:$0xff]
    %v5094 = vld [vmem:[%s5054 + $0x138] sm:$0xff]
    %v5095 = vld [vmem:[%s5054 + $0x140] sm:$0xff]
    %v5096 = vld [vmem:[%s5054 + $0x148] sm:$0xff]
    %v5097 = vld [vmem:[%s5054 + $0x150] sm:$0xff]
    %v5098 = vld [vmem:[%s5054 + $0x158] sm:$0xff]
    %v5099 = vld [vmem:[%s5054 + $0x160] sm:$0xff]
    %v5100 = vld [vmem:[%s5054 + $0x168] sm:$0xff]
    %v5101 = vld [vmem:[%s5054 + $0x170] sm:$0xff]
    %v5102 = vld [vmem:[%s5054 + $0x178] sm:$0xff]
    %v5103 = vld [vmem:[%s5054 + $0x180] sm:$0xff]
    %v5104 = vld [vmem:[%s5054 + $0x188] sm:$0xff]
    %v5105 = vld [vmem:[%s5054 + $0x190] sm:$0xff]
    %v5106 = vld [vmem:[%s5054 + $0x198] sm:$0xff]
    %v5107 = vld [vmem:[%s5054 + $0x1a0] sm:$0xff]
    %v5108 = vld [vmem:[%s5054 + $0x1a8] sm:$0xff]
    %v5109 = vld [vmem:[%s5054 + $0x1b0] sm:$0xff]
    %v5110 = vld [vmem:[%s5054 + $0x1b8] sm:$0xff]
    %v5111 = vld [vmem:[%s5054 + $0x1c0] sm:$0xff]
    %v5112 = vld [vmem:[%s5054 + $0x1c8] sm:$0xff]
    %v5113 = vld [vmem:[%s5054 + $0x1d0] sm:$0xff]
    %v5114 = vld [vmem:[%s5054 + $0x1d8] sm:$0xff]
    %v5115 = vld [vmem:[%s5054 + $0x1e0] sm:$0xff]
    %v5116 = vld [vmem:[%s5054 + $0x1e8] sm:$0xff]
    %v5117 = vld [vmem:[%s5054 + $0x1f0] sm:$0xff]
    %v5118 = vld [vmem:[%s5054 + $0x1f8] sm:$0xff]
    %v5119 = vld [vmem:[%s5054 + $0x200] sm:$0xff]
    %v5120 = vld [vmem:[%s5054 + $0x208] sm:$0xff]
    %v5121 = vld [vmem:[%s5054 + $0x210] sm:$0xff]
    %v5122 = vld [vmem:[%s5054 + $0x218] sm:$0xff]
    %v5123 = vld [vmem:[%s5054 + $0x220] sm:$0xff]
    %v5124 = vld [vmem:[%s5054 + $0x228] sm:$0xff]
    %v5125 = vld [vmem:[%s5054 + $0x230] sm:$0xff]
    %v5126 = vld [vmem:[%s5054 + $0x238] sm:$0xff]
    %v5127 = vld [vmem:[%s5054 + $0x240] sm:$0xff]
    %v5128 = vld [vmem:[%s5054 + $0x248] sm:$0xff]
    %v5129 = vld [vmem:[%s5054 + $0x250] sm:$0xff]
    %v5130 = vld [vmem:[%s5054 + $0x258] sm:$0xff]
    %v5131 = vld [vmem:[%s5054 + $0x260] sm:$0xff]
    %v5132 = vld [vmem:[%s5054 + $0x268] sm:$0xff]
    %v5133 = vld [vmem:[%s5054 + $0x270] sm:$0xff]
    %v5134 = vld [vmem:[%s5054 + $0x278] sm:$0xff]
    %v5136 = vsel %vm4073, %v3903, 0
    %5138 = vmatprep.subr.mxu0 %v5056
    %5139 = vmatpush1.msra.mxu0 %v5055
    %5140 = vmatprep.subr.mxu0 %v5060
    %5141 = vmatpush1.msra.mxu0 %v5059
    %5142 = vmatprep.subr.mxu0 %v5064
    %5143 = vmatpush1.msra.mxu0 %v5063
    %5144 = vmatprep.subr.mxu0 %v5068
    %5145 = vmatpush1.msra.mxu0 %v5067
    %5146 = vmatprep.subr.mxu0 %v5072
    %5147 = vmatpush1.msra.mxu0 %v5071
    %5148 = vmatprep.subr.mxu0 %v5076
    %5149 = vmatpush1.msra.mxu0 %v5075
    %5150 = vmatprep.subr.mxu0 %v5080
    %5151 = vmatpush1.msra.mxu0 %v5079
    %5152 = vmatprep.subr.mxu0 %v5084
    %5153 = vmatpush1.msra.mxu0 %v5083
    %5154 = vmatprep.subr.mxu0 %v5088
    %5155 = vmatpush1.msra.mxu0 %v5087
    %5156 = vmatprep.subr.mxu0 %v5092
    %5157 = vmatpush1.msra.mxu0 %v5091
    %5158 = vmatprep.subr.mxu0 %v5096
    %5159 = vmatpush1.msra.mxu0 %v5095
    %5160 = vmatprep.subr.mxu0 %v5100
    %5161 = vmatpush1.msra.mxu0 %v5099
    %5162 = vmatprep.subr.mxu0 %v5104
    %5163 = vmatpush1.msra.mxu0 %v5103
    %5164 = vmatprep.subr.mxu0 %v5108
    %5165 = vmatpush1.msra.mxu0 %v5107
    %5166 = vmatprep.subr.mxu0 %v5112
    %5167 = vmatpush1.msra.mxu0 %v5111
    %5168 = vmatprep.subr.mxu0 %v5116
    %5169 = vmatpush1.msra.mxu0 %v5115
    %5170 = vmatprep.subr.mxu0 %v5120
    %5171 = vmatpush1.msra.mxu0 %v5119
    %5172 = vmatprep.subr.mxu0 %v5124
    %5173 = vmatpush1.msra.mxu0 %v5123
    %5174 = vmatprep.subr.mxu0 %v5128
    %5175 = vmatpush1.msra.mxu0 %v5127
    %5176 = vmatprep.subr.mxu0 %v5132
    %5177 = vmatpush1.msra.mxu0 %v5131
    %5178 = vmatprep.subr.mxu0 0.0
    %5179 = vmatpush1.msra.mxu0 0.0
    %5180 = vmatprep.subr.mxu0 0.0
    %5181 = vmatpush1.msra.mxu0 0.0
    %5182 = vmatprep.subr.mxu0 0.0
    %5183 = vmatpush1.msra.mxu0 0.0
    %5184 = vmatprep.subr.mxu0 0.0
    %5185 = vmatpush1.msra.mxu0 0.0
    %5186 = vmatprep.subr.mxu0 0.0
    %5187 = vmatpush1.msra.mxu0 0.0
    %5188 = vmatprep.subr.mxu0 0.0
    %5189 = vmatpush1.msra.mxu0 0.0
    %5190 = vmatprep.subr.mxu0 0.0
    %5191 = vmatpush1.msra.mxu0 0.0
    %5192 = vmatprep.subr.mxu0 0.0
    %5193 = vmatpush1.msra.mxu0 0.0
    %5194 = vmatprep.subr.mxu0 0.0
    %5195 = vmatpush1.msra.mxu0 0.0
    %5196 = vmatprep.subr.mxu0 0.0
    %5197 = vmatpush1.msra.mxu0 0.0
    %5198 = vmatprep.subr.mxu0 0.0
    %5199 = vmatpush1.msra.mxu0 0.0
    %5200 = vmatprep.subr.mxu0 0.0
    %5201 = vmatpush1.msra.mxu0 0.0
    %5202 = vmatprep.mubr.f32.mxu0 %v5136
    %5203 = vmatmul.mubr.f32.gmra.mrb[0].mxu0 %v3902
    %v5204 = vpop.f32.mrb[0].mxu0
    %v5205 = vadd.f32 0.0, %v5204
    %v5206 = vpop.f32.mrb[0].mxu0
    %v5207 = vadd.f32 0.0, %v5206
    %5208 = vdwg.mxu0
    %5209 = vmatprep.subr.mxu0 %v5058
    %5210 = vmatpush1.msra.mxu0 %v5057
    %5211 = vmatprep.subr.mxu0 %v5062
    %5212 = vmatpush1.msra.mxu0 %v5061
    %5213 = vmatprep.subr.mxu0 %v5066
    %5214 = vmatpush1.msra.mxu0 %v5065
    %5215 = vmatprep.subr.mxu0 %v5070
    %5216 = vmatpush1.msra.mxu0 %v5069
    %5217 = vmatprep.subr.mxu0 %v5074
    %5218 = vmatpush1.msra.mxu0 %v5073
    %5219 = vmatprep.subr.mxu0 %v5078
    %5220 = vmatpush1.msra.mxu0 %v5077
    %5221 = vmatprep.subr.mxu0 %v5082
    %5222 = vmatpush1.msra.mxu0 %v5081
    %5223 = vmatprep.subr.mxu0 %v5086
    %5224 = vmatpush1.msra.mxu0 %v5085
    %5225 = vmatprep.subr.mxu0 %v5090
    %5226 = vmatpush1.msra.mxu0 %v5089
    %5227 = vmatprep.subr.mxu0 %v5094
    %5228 = vmatpush1.msra.mxu0 %v5093
    %5229 = vmatprep.subr.mxu0 %v5098
    %5230 = vmatpush1.msra.mxu0 %v5097
    %5231 = vmatprep.subr.mxu0 %v5102
    %5232 = vmatpush1.msra.mxu0 %v5101
    %5233 = vmatprep.subr.mxu0 %v5106
    %5234 = vmatpush1.msra.mxu0 %v5105
    %5235 = vmatprep.subr.mxu0 %v5110
    %5236 = vmatpush1.msra.mxu0 %v5109
    %5237 = vmatprep.subr.mxu0 %v5114
    %5238 = vmatpush1.msra.mxu0 %v5113
    %5239 = vmatprep.subr.mxu0 %v5118
    %5240 = vmatpush1.msra.mxu0 %v5117
    %5241 = vmatprep.subr.mxu0 %v5122
    %5242 = vmatpush1.msra.mxu0 %v5121
    %5243 = vmatprep.subr.mxu0 %v5126
    %5244 = vmatpush1.msra.mxu0 %v5125
    %5245 = vmatprep.subr.mxu0 %v5130
    %5246 = vmatpush1.msra.mxu0 %v5129
    %5247 = vmatprep.subr.mxu0 %v5134
    %5248 = vmatpush1.msra.mxu0 %v5133
    %5249 = vmatprep.subr.mxu0 0.0
    %5250 = vmatpush1.msra.mxu0 0.0
    %5251 = vmatprep.subr.mxu0 0.0
    %5252 = vmatpush1.msra.mxu0 0.0
    %5253 = vmatprep.subr.mxu0 0.0
    %5254 = vmatpush1.msra.mxu0 0.0
    %5255 = vmatprep.subr.mxu0 0.0
    %5256 = vmatpush1.msra.mxu0 0.0
    %5257 = vmatprep.subr.mxu0 0.0
    %5258 = vmatpush1.msra.mxu0 0.0
    %5259 = vmatprep.subr.mxu0 0.0
    %5260 = vmatpush1.msra.mxu0 0.0
    %5261 = vmatprep.subr.mxu0 0.0
    %5262 = vmatpush1.msra.mxu0 0.0
    %5263 = vmatprep.subr.mxu0 0.0
    %5264 = vmatpush1.msra.mxu0 0.0
    %5265 = vmatprep.subr.mxu0 0.0
    %5266 = vmatpush1.msra.mxu0 0.0
    %5267 = vmatprep.subr.mxu0 0.0
    %5268 = vmatpush1.msra.mxu0 0.0
    %5269 = vmatprep.subr.mxu0 0.0
    %5270 = vmatpush1.msra.mxu0 0.0
    %5271 = vmatprep.subr.mxu0 0.0
    %5272 = vmatpush1.msra.mxu0 0.0
    %5273 = vmatprep.mubr.f32.mxu0 %v5136
    %5274 = vmatmul.mubr.f32.gmra.mrb[0].mxu0 %v3902
    %v5275 = vpop.f32.mrb[0].mxu0
    %v5276 = vadd.f32 0.0, %v5275
    %v5277 = vpop.f32.mrb[0].mxu0
    %v5278 = vadd.f32 0.0, %v5277
    %5279 = vdwg.mxu0
    %v5280 = vadd.f32 %v5050, %v5205
    %v5281 = vadd.f32 %v5051, %v5207
    %v5282 = vadd.f32 %v5052, %v5276
    %v5283 = vadd.f32 %v5053, %v5278
    %s5284 = scalar_lea.vmem [#allocation6], 3840
    %v5285 = vld [vmem:[%s5284] sm:$0xff]
    %v5286 = vld [vmem:[%s5284 + $0x8] sm:$0xff]
    %v5287 = vld [vmem:[%s5284 + $0x10] sm:$0xff]
    %v5288 = vld [vmem:[%s5284 + $0x18] sm:$0xff]
    %v5289 = vld [vmem:[%s5284 + $0x20] sm:$0xff]
    %v5290 = vld [vmem:[%s5284 + $0x28] sm:$0xff]
    %v5291 = vld [vmem:[%s5284 + $0x30] sm:$0xff]
    %v5292 = vld [vmem:[%s5284 + $0x38] sm:$0xff]
    %v5293 = vld [vmem:[%s5284 + $0x40] sm:$0xff]
    %v5294 = vld [vmem:[%s5284 + $0x48] sm:$0xff]
    %v5295 = vld [vmem:[%s5284 + $0x50] sm:$0xff]
    %v5296 = vld [vmem:[%s5284 + $0x58] sm:$0xff]
    %v5297 = vld [vmem:[%s5284 + $0x60] sm:$0xff]
    %v5298 = vld [vmem:[%s5284 + $0x68] sm:$0xff]
    %v5299 = vld [vmem:[%s5284 + $0x70] sm:$0xff]
    %v5300 = vld [vmem:[%s5284 + $0x78] sm:$0xff]
    %v5301 = vld [vmem:[%s5284 + $0x80] sm:$0xff]
    %v5302 = vld [vmem:[%s5284 + $0x88] sm:$0xff]
    %v5303 = vld [vmem:[%s5284 + $0x90] sm:$0xff]
    %v5304 = vld [vmem:[%s5284 + $0x98] sm:$0xff]
    %v5305 = vld [vmem:[%s5284 + $0xa0] sm:$0xff]
    %v5306 = vld [vmem:[%s5284 + $0xa8] sm:$0xff]
    %v5307 = vld [vmem:[%s5284 + $0xb0] sm:$0xff]
    %v5308 = vld [vmem:[%s5284 + $0xb8] sm:$0xff]
    %v5309 = vld [vmem:[%s5284 + $0xc0] sm:$0xff]
    %v5310 = vld [vmem:[%s5284 + $0xc8] sm:$0xff]
    %v5311 = vld [vmem:[%s5284 + $0xd0] sm:$0xff]
    %v5312 = vld [vmem:[%s5284 + $0xd8] sm:$0xff]
    %v5313 = vld [vmem:[%s5284 + $0xe0] sm:$0xff]
    %v5314 = vld [vmem:[%s5284 + $0xe8] sm:$0xff]
    %v5315 = vld [vmem:[%s5284 + $0xf0] sm:$0xff]
    %v5316 = vld [vmem:[%s5284 + $0xf8] sm:$0xff]
    %v5317 = vld [vmem:[%s5284 + $0x100] sm:$0xff]
    %v5318 = vld [vmem:[%s5284 + $0x108] sm:$0xff]
    %v5319 = vld [vmem:[%s5284 + $0x110] sm:$0xff]
    %v5320 = vld [vmem:[%s5284 + $0x118] sm:$0xff]
    %v5321 = vld [vmem:[%s5284 + $0x120] sm:$0xff]
    %v5322 = vld [vmem:[%s5284 + $0x128] sm:$0xff]
    %v5323 = vld [vmem:[%s5284 + $0x130] sm:$0xff]
    %v5324 = vld [vmem:[%s5284 + $0x138] sm:$0xff]
    %v5325 = vld [vmem:[%s5284 + $0x140] sm:$0xff]
    %v5326 = vld [vmem:[%s5284 + $0x148] sm:$0xff]
    %v5327 = vld [vmem:[%s5284 + $0x150] sm:$0xff]
    %v5328 = vld [vmem:[%s5284 + $0x158] sm:$0xff]
    %v5329 = vld [vmem:[%s5284 + $0x160] sm:$0xff]
    %v5330 = vld [vmem:[%s5284 + $0x168] sm:$0xff]
    %v5331 = vld [vmem:[%s5284 + $0x170] sm:$0xff]
    %v5332 = vld [vmem:[%s5284 + $0x178] sm:$0xff]
    %v5333 = vld [vmem:[%s5284 + $0x180] sm:$0xff]
    %v5334 = vld [vmem:[%s5284 + $0x188] sm:$0xff]
    %v5335 = vld [vmem:[%s5284 + $0x190] sm:$0xff]
    %v5336 = vld [vmem:[%s5284 + $0x198] sm:$0xff]
    %v5337 = vld [vmem:[%s5284 + $0x1a0] sm:$0xff]
    %v5338 = vld [vmem:[%s5284 + $0x1a8] sm:$0xff]
    %v5339 = vld [vmem:[%s5284 + $0x1b0] sm:$0xff]
    %v5340 = vld [vmem:[%s5284 + $0x1b8] sm:$0xff]
    %v5341 = vld [vmem:[%s5284 + $0x1c0] sm:$0xff]
    %v5342 = vld [vmem:[%s5284 + $0x1c8] sm:$0xff]
    %v5343 = vld [vmem:[%s5284 + $0x1d0] sm:$0xff]
    %v5344 = vld [vmem:[%s5284 + $0x1d8] sm:$0xff]
    %v5345 = vld [vmem:[%s5284 + $0x1e0] sm:$0xff]
    %v5346 = vld [vmem:[%s5284 + $0x1e8] sm:$0xff]
    %v5347 = vld [vmem:[%s5284 + $0x1f0] sm:$0xff]
    %v5348 = vld [vmem:[%s5284 + $0x1f8] sm:$0xff]
    %v5349 = vld [vmem:[%s5284 + $0x200] sm:$0xff]
    %v5350 = vld [vmem:[%s5284 + $0x208] sm:$0xff]
    %v5351 = vld [vmem:[%s5284 + $0x210] sm:$0xff]
    %v5352 = vld [vmem:[%s5284 + $0x218] sm:$0xff]
    %v5353 = vld [vmem:[%s5284 + $0x220] sm:$0xff]
    %v5354 = vld [vmem:[%s5284 + $0x228] sm:$0xff]
    %v5355 = vld [vmem:[%s5284 + $0x230] sm:$0xff]
    %v5356 = vld [vmem:[%s5284 + $0x238] sm:$0xff]
    %v5357 = vld [vmem:[%s5284 + $0x240] sm:$0xff]
    %v5358 = vld [vmem:[%s5284 + $0x248] sm:$0xff]
    %v5359 = vld [vmem:[%s5284 + $0x250] sm:$0xff]
    %v5360 = vld [vmem:[%s5284 + $0x258] sm:$0xff]
    %v5361 = vld [vmem:[%s5284 + $0x260] sm:$0xff]
    %v5362 = vld [vmem:[%s5284 + $0x268] sm:$0xff]
    %v5363 = vld [vmem:[%s5284 + $0x270] sm:$0xff]
    %v5364 = vld [vmem:[%s5284 + $0x278] sm:$0xff]
    %v5366 = vsel %vm4073, %v3905, 0
    %5368 = vmatprep.subr.mxu0 %v5286
    %5369 = vmatpush1.msra.mxu0 %v5285
    %5370 = vmatprep.subr.mxu0 %v5290
    %5371 = vmatpush1.msra.mxu0 %v5289
    %5372 = vmatprep.subr.mxu0 %v5294
    %5373 = vmatpush1.msra.mxu0 %v5293
    %5374 = vmatprep.subr.mxu0 %v5298
    %5375 = vmatpush1.msra.mxu0 %v5297
    %5376 = vmatprep.subr.mxu0 %v5302
    %5377 = vmatpush1.msra.mxu0 %v5301
    %5378 = vmatprep.subr.mxu0 %v5306
    %5379 = vmatpush1.msra.mxu0 %v5305
    %5380 = vmatprep.subr.mxu0 %v5310
    %5381 = vmatpush1.msra.mxu0 %v5309
    %5382 = vmatprep.subr.mxu0 %v5314
    %5383 = vmatpush1.msra.mxu0 %v5313
    %5384 = vmatprep.subr.mxu0 %v5318
    %5385 = vmatpush1.msra.mxu0 %v5317
    %5386 = vmatprep.subr.mxu0 %v5322
    %5387 = vmatpush1.msra.mxu0 %v5321
    %5388 = vmatprep.subr.mxu0 %v5326
    %5389 = vmatpush1.msra.mxu0 %v5325
    %5390 = vmatprep.subr.mxu0 %v5330
    %5391 = vmatpush1.msra.mxu0 %v5329
    %5392 = vmatprep.subr.mxu0 %v5334
    %5393 = vmatpush1.msra.mxu0 %v5333
    %5394 = vmatprep.subr.mxu0 %v5338
    %5395 = vmatpush1.msra.mxu0 %v5337
    %5396 = vmatprep.subr.mxu0 %v5342
    %5397 = vmatpush1.msra.mxu0 %v5341
    %5398 = vmatprep.subr.mxu0 %v5346
    %5399 = vmatpush1.msra.mxu0 %v5345
    %5400 = vmatprep.subr.mxu0 %v5350
    %5401 = vmatpush1.msra.mxu0 %v5349
    %5402 = vmatprep.subr.mxu0 %v5354
    %5403 = vmatpush1.msra.mxu0 %v5353
    %5404 = vmatprep.subr.mxu0 %v5358
    %5405 = vmatpush1.msra.mxu0 %v5357
    %5406 = vmatprep.subr.mxu0 %v5362
    %5407 = vmatpush1.msra.mxu0 %v5361
    %5408 = vmatprep.subr.mxu0 0.0
    %5409 = vmatpush1.msra.mxu0 0.0
    %5410 = vmatprep.subr.mxu0 0.0
    %5411 = vmatpush1.msra.mxu0 0.0
    %5412 = vmatprep.subr.mxu0 0.0
    %5413 = vmatpush1.msra.mxu0 0.0
    %5414 = vmatprep.subr.mxu0 0.0
    %5415 = vmatpush1.msra.mxu0 0.0
    %5416 = vmatprep.subr.mxu0 0.0
    %5417 = vmatpush1.msra.mxu0 0.0
    %5418 = vmatprep.subr.mxu0 0.0
    %5419 = vmatpush1.msra.mxu0 0.0
    %5420 = vmatprep.subr.mxu0 0.0
    %5421 = vmatpush1.msra.mxu0 0.0
    %5422 = vmatprep.subr.mxu0 0.0
    %5423 = vmatpush1.msra.mxu0 0.0
    %5424 = vmatprep.subr.mxu0 0.0
    %5425 = vmatpush1.msra.mxu0 0.0
    %5426 = vmatprep.subr.mxu0 0.0
    %5427 = vmatpush1.msra.mxu0 0.0
    %5428 = vmatprep.subr.mxu0 0.0
    %5429 = vmatpush1.msra.mxu0 0.0
    %5430 = vmatprep.subr.mxu0 0.0
    %5431 = vmatpush1.msra.mxu0 0.0
    %5432 = vmatprep.mubr.f32.mxu0 %v5366
    %5433 = vmatmul.mubr.f32.gmra.mrb[0].mxu0 %v3904
    %v5434 = vpop.f32.mrb[0].mxu0
    %v5435 = vadd.f32 0.0, %v5434
    %v5436 = vpop.f32.mrb[0].mxu0
    %v5437 = vadd.f32 0.0, %v5436
    %5438 = vdwg.mxu0
    %5439 = vmatprep.subr.mxu0 %v5288
    %5440 = vmatpush1.msra.mxu0 %v5287
    %5441 = vmatprep.subr.mxu0 %v5292
    %5442 = vmatpush1.msra.mxu0 %v5291
    %5443 = vmatprep.subr.mxu0 %v5296
    %5444 = vmatpush1.msra.mxu0 %v5295
    %5445 = vmatprep.subr.mxu0 %v5300
    %5446 = vmatpush1.msra.mxu0 %v5299
    %5447 = vmatprep.subr.mxu0 %v5304
    %5448 = vmatpush1.msra.mxu0 %v5303
    %5449 = vmatprep.subr.mxu0 %v5308
    %5450 = vmatpush1.msra.mxu0 %v5307
    %5451 = vmatprep.subr.mxu0 %v5312
    %5452 = vmatpush1.msra.mxu0 %v5311
    %5453 = vmatprep.subr.mxu0 %v5316
    %5454 = vmatpush1.msra.mxu0 %v5315
    %5455 = vmatprep.subr.mxu0 %v5320
    %5456 = vmatpush1.msra.mxu0 %v5319
    %5457 = vmatprep.subr.mxu0 %v5324
    %5458 = vmatpush1.msra.mxu0 %v5323
    %5459 = vmatprep.subr.mxu0 %v5328
    %5460 = vmatpush1.msra.mxu0 %v5327
    %5461 = vmatprep.subr.mxu0 %v5332
    %5462 = vmatpush1.msra.mxu0 %v5331
    %5463 = vmatprep.subr.mxu0 %v5336
    %5464 = vmatpush1.msra.mxu0 %v5335
    %5465 = vmatprep.subr.mxu0 %v5340
    %5466 = vmatpush1.msra.mxu0 %v5339
    %5467 = vmatprep.subr.mxu0 %v5344
    %5468 = vmatpush1.msra.mxu0 %v5343
    %5469 = vmatprep.subr.mxu0 %v5348
    %5470 = vmatpush1.msra.mxu0 %v5347
    %5471 = vmatprep.subr.mxu0 %v5352
    %5472 = vmatpush1.msra.mxu0 %v5351
    %5473 = vmatprep.subr.mxu0 %v5356
    %5474 = vmatpush1.msra.mxu0 %v5355
    %5475 = vmatprep.subr.mxu0 %v5360
    %5476 = vmatpush1.msra.mxu0 %v5359
    %5477 = vmatprep.subr.mxu0 %v5364
    %5478 = vmatpush1.msra.mxu0 %v5363
    %5479 = vmatprep.subr.mxu0 0.0
    %5480 = vmatpush1.msra.mxu0 0.0
    %5481 = vmatprep.subr.mxu0 0.0
    %5482 = vmatpush1.msra.mxu0 0.0
    %5483 = vmatprep.subr.mxu0 0.0
    %5484 = vmatpush1.msra.mxu0 0.0
    %5485 = vmatprep.subr.mxu0 0.0
    %5486 = vmatpush1.msra.mxu0 0.0
    %5487 = vmatprep.subr.mxu0 0.0
    %5488 = vmatpush1.msra.mxu0 0.0
    %5489 = vmatprep.subr.mxu0 0.0
    %5490 = vmatpush1.msra.mxu0 0.0
    %5491 = vmatprep.subr.mxu0 0.0
    %5492 = vmatpush1.msra.mxu0 0.0
    %5493 = vmatprep.subr.mxu0 0.0
    %5494 = vmatpush1.msra.mxu0 0.0
    %5495 = vmatprep.subr.mxu0 0.0
    %5496 = vmatpush1.msra.mxu0 0.0
    %5497 = vmatprep.subr.mxu0 0.0
    %5498 = vmatpush1.msra.mxu0 0.0
    %5499 = vmatprep.subr.mxu0 0.0
    %5500 = vmatpush1.msra.mxu0 0.0
    %5501 = vmatprep.subr.mxu0 0.0
    %5502 = vmatpush1.msra.mxu0 0.0
    %5503 = vmatprep.mubr.f32.mxu0 %v5366
    %5504 = vmatmul.mubr.f32.gmra.mrb[0].mxu0 %v3904
    %v5505 = vpop.f32.mrb[0].mxu0
    %v5506 = vadd.f32 0.0, %v5505
    %v5507 = vpop.f32.mrb[0].mxu0
    %v5508 = vadd.f32 0.0, %v5507
    %5509 = vdwg.mxu0
    %v5510 = vadd.f32 %v5280, %v5435
    %v5511 = vadd.f32 %v5281, %v5437
    %v5512 = vadd.f32 %v5282, %v5506
    %v5513 = vadd.f32 %v5283, %v5508
    %s5514 = scalar_lea.vmem [#allocation6], 4480
    %v5515 = vld [vmem:[%s5514] sm:$0xff]
    %v5516 = vld [vmem:[%s5514 + $0x8] sm:$0xff]
    %v5517 = vld [vmem:[%s5514 + $0x10] sm:$0xff]
    %v5518 = vld [vmem:[%s5514 + $0x18] sm:$0xff]
    %v5519 = vld [vmem:[%s5514 + $0x20] sm:$0xff]
    %v5520 = vld [vmem:[%s5514 + $0x28] sm:$0xff]
    %v5521 = vld [vmem:[%s5514 + $0x30] sm:$0xff]
    %v5522 = vld [vmem:[%s5514 + $0x38] sm:$0xff]
    %v5523 = vld [vmem:[%s5514 + $0x40] sm:$0xff]
    %v5524 = vld [vmem:[%s5514 + $0x48] sm:$0xff]
    %v5525 = vld [vmem:[%s5514 + $0x50] sm:$0xff]
    %v5526 = vld [vmem:[%s5514 + $0x58] sm:$0xff]
    %v5527 = vld [vmem:[%s5514 + $0x60] sm:$0xff]
    %v5528 = vld [vmem:[%s5514 + $0x68] sm:$0xff]
    %v5529 = vld [vmem:[%s5514 + $0x70] sm:$0xff]
    %v5530 = vld [vmem:[%s5514 + $0x78] sm:$0xff]
    %v5531 = vld [vmem:[%s5514 + $0x80] sm:$0xff]
    %v5532 = vld [vmem:[%s5514 + $0x88] sm:$0xff]
    %v5533 = vld [vmem:[%s5514 + $0x90] sm:$0xff]
    %v5534 = vld [vmem:[%s5514 + $0x98] sm:$0xff]
    %v5535 = vld [vmem:[%s5514 + $0xa0] sm:$0xff]
    %v5536 = vld [vmem:[%s5514 + $0xa8] sm:$0xff]
    %v5537 = vld [vmem:[%s5514 + $0xb0] sm:$0xff]
    %v5538 = vld [vmem:[%s5514 + $0xb8] sm:$0xff]
    %v5539 = vld [vmem:[%s5514 + $0xc0] sm:$0xff]
    %v5540 = vld [vmem:[%s5514 + $0xc8] sm:$0xff]
    %v5541 = vld [vmem:[%s5514 + $0xd0] sm:$0xff]
    %v5542 = vld [vmem:[%s5514 + $0xd8] sm:$0xff]
    %v5543 = vld [vmem:[%s5514 + $0xe0] sm:$0xff]
    %v5544 = vld [vmem:[%s5514 + $0xe8] sm:$0xff]
    %v5545 = vld [vmem:[%s5514 + $0xf0] sm:$0xff]
    %v5546 = vld [vmem:[%s5514 + $0xf8] sm:$0xff]
    %v5547 = vld [vmem:[%s5514 + $0x100] sm:$0xff]
    %v5548 = vld [vmem:[%s5514 + $0x108] sm:$0xff]
    %v5549 = vld [vmem:[%s5514 + $0x110] sm:$0xff]
    %v5550 = vld [vmem:[%s5514 + $0x118] sm:$0xff]
    %v5551 = vld [vmem:[%s5514 + $0x120] sm:$0xff]
    %v5552 = vld [vmem:[%s5514 + $0x128] sm:$0xff]
    %v5553 = vld [vmem:[%s5514 + $0x130] sm:$0xff]
    %v5554 = vld [vmem:[%s5514 + $0x138] sm:$0xff]
    %v5555 = vld [vmem:[%s5514 + $0x140] sm:$0xff]
    %v5556 = vld [vmem:[%s5514 + $0x148] sm:$0xff]
    %v5557 = vld [vmem:[%s5514 + $0x150] sm:$0xff]
    %v5558 = vld [vmem:[%s5514 + $0x158] sm:$0xff]
    %v5559 = vld [vmem:[%s5514 + $0x160] sm:$0xff]
    %v5560 = vld [vmem:[%s5514 + $0x168] sm:$0xff]
    %v5561 = vld [vmem:[%s5514 + $0x170] sm:$0xff]
    %v5562 = vld [vmem:[%s5514 + $0x178] sm:$0xff]
    %v5563 = vld [vmem:[%s5514 + $0x180] sm:$0xff]
    %v5564 = vld [vmem:[%s5514 + $0x188] sm:$0xff]
    %v5565 = vld [vmem:[%s5514 + $0x190] sm:$0xff]
    %v5566 = vld [vmem:[%s5514 + $0x198] sm:$0xff]
    %v5567 = vld [vmem:[%s5514 + $0x1a0] sm:$0xff]
    %v5568 = vld [vmem:[%s5514 + $0x1a8] sm:$0xff]
    %v5569 = vld [vmem:[%s5514 + $0x1b0] sm:$0xff]
    %v5570 = vld [vmem:[%s5514 + $0x1b8] sm:$0xff]
    %v5571 = vld [vmem:[%s5514 + $0x1c0] sm:$0xff]
    %v5572 = vld [vmem:[%s5514 + $0x1c8] sm:$0xff]
    %v5573 = vld [vmem:[%s5514 + $0x1d0] sm:$0xff]
    %v5574 = vld [vmem:[%s5514 + $0x1d8] sm:$0xff]
    %v5575 = vld [vmem:[%s5514 + $0x1e0] sm:$0xff]
    %v5576 = vld [vmem:[%s5514 + $0x1e8] sm:$0xff]
    %v5577 = vld [vmem:[%s5514 + $0x1f0] sm:$0xff]
    %v5578 = vld [vmem:[%s5514 + $0x1f8] sm:$0xff]
    %v5579 = vld [vmem:[%s5514 + $0x200] sm:$0xff]
    %v5580 = vld [vmem:[%s5514 + $0x208] sm:$0xff]
    %v5581 = vld [vmem:[%s5514 + $0x210] sm:$0xff]
    %v5582 = vld [vmem:[%s5514 + $0x218] sm:$0xff]
    %v5583 = vld [vmem:[%s5514 + $0x220] sm:$0xff]
    %v5584 = vld [vmem:[%s5514 + $0x228] sm:$0xff]
    %v5585 = vld [vmem:[%s5514 + $0x230] sm:$0xff]
    %v5586 = vld [vmem:[%s5514 + $0x238] sm:$0xff]
    %v5587 = vld [vmem:[%s5514 + $0x240] sm:$0xff]
    %v5588 = vld [vmem:[%s5514 + $0x248] sm:$0xff]
    %v5589 = vld [vmem:[%s5514 + $0x250] sm:$0xff]
    %v5590 = vld [vmem:[%s5514 + $0x258] sm:$0xff]
    %v5591 = vld [vmem:[%s5514 + $0x260] sm:$0xff]
    %v5592 = vld [vmem:[%s5514 + $0x268] sm:$0xff]
    %v5593 = vld [vmem:[%s5514 + $0x270] sm:$0xff]
    %v5594 = vld [vmem:[%s5514 + $0x278] sm:$0xff]
    %v5596 = vsel %vm4073, %v3907, 0
    %5598 = vmatprep.subr.mxu0 %v5516
    %5599 = vmatpush1.msra.mxu0 %v5515
    %5600 = vmatprep.subr.mxu0 %v5520
    %5601 = vmatpush1.msra.mxu0 %v5519
    %5602 = vmatprep.subr.mxu0 %v5524
    %5603 = vmatpush1.msra.mxu0 %v5523
    %5604 = vmatprep.subr.mxu0 %v5528
    %5605 = vmatpush1.msra.mxu0 %v5527
    %5606 = vmatprep.subr.mxu0 %v5532
    %5607 = vmatpush1.msra.mxu0 %v5531
    %5608 = vmatprep.subr.mxu0 %v5536
    %5609 = vmatpush1.msra.mxu0 %v5535
    %5610 = vmatprep.subr.mxu0 %v5540
    %5611 = vmatpush1.msra.mxu0 %v5539
    %5612 = vmatprep.subr.mxu0 %v5544
    %5613 = vmatpush1.msra.mxu0 %v5543
    %5614 = vmatprep.subr.mxu0 %v5548
    %5615 = vmatpush1.msra.mxu0 %v5547
    %5616 = vmatprep.subr.mxu0 %v5552
    %5617 = vmatpush1.msra.mxu0 %v5551
    %5618 = vmatprep.subr.mxu0 %v5556
    %5619 = vmatpush1.msra.mxu0 %v5555
    %5620 = vmatprep.subr.mxu0 %v5560
    %5621 = vmatpush1.msra.mxu0 %v5559
    %5622 = vmatprep.subr.mxu0 %v5564
    %5623 = vmatpush1.msra.mxu0 %v5563
    %5624 = vmatprep.subr.mxu0 %v5568
    %5625 = vmatpush1.msra.mxu0 %v5567
    %5626 = vmatprep.subr.mxu0 %v5572
    %5627 = vmatpush1.msra.mxu0 %v5571
    %5628 = vmatprep.subr.mxu0 %v5576
    %5629 = vmatpush1.msra.mxu0 %v5575
    %5630 = vmatprep.subr.mxu0 %v5580
    %5631 = vmatpush1.msra.mxu0 %v5579
    %5632 = vmatprep.subr.mxu0 %v5584
    %5633 = vmatpush1.msra.mxu0 %v5583
    %5634 = vmatprep.subr.mxu0 %v5588
    %5635 = vmatpush1.msra.mxu0 %v5587
    %5636 = vmatprep.subr.mxu0 %v5592
    %5637 = vmatpush1.msra.mxu0 %v5591
    %5638 = vmatprep.subr.mxu0 0.0
    %5639 = vmatpush1.msra.mxu0 0.0
    %5640 = vmatprep.subr.mxu0 0.0
    %5641 = vmatpush1.msra.mxu0 0.0
    %5642 = vmatprep.subr.mxu0 0.0
    %5643 = vmatpush1.msra.mxu0 0.0
    %5644 = vmatprep.subr.mxu0 0.0
    %5645 = vmatpush1.msra.mxu0 0.0
    %5646 = vmatprep.subr.mxu0 0.0
    %5647 = vmatpush1.msra.mxu0 0.0
    %5648 = vmatprep.subr.mxu0 0.0
    %5649 = vmatpush1.msra.mxu0 0.0
    %5650 = vmatprep.subr.mxu0 0.0
    %5651 = vmatpush1.msra.mxu0 0.0
    %5652 = vmatprep.subr.mxu0 0.0
    %5653 = vmatpush1.msra.mxu0 0.0
    %5654 = vmatprep.subr.mxu0 0.0
    %5655 = vmatpush1.msra.mxu0 0.0
    %5656 = vmatprep.subr.mxu0 0.0
    %5657 = vmatpush1.msra.mxu0 0.0
    %5658 = vmatprep.subr.mxu0 0.0
    %5659 = vmatpush1.msra.mxu0 0.0
    %5660 = vmatprep.subr.mxu0 0.0
    %5661 = vmatpush1.msra.mxu0 0.0
    %5662 = vmatprep.mubr.f32.mxu0 %v5596
    %5663 = vmatmul.mubr.f32.gmra.mrb[0].mxu0 %v3906
    %v5664 = vpop.f32.mrb[0].mxu0
    %v5665 = vadd.f32 0.0, %v5664
    %v5666 = vpop.f32.mrb[0].mxu0
    %v5667 = vadd.f32 0.0, %v5666
    %5668 = vdwg.mxu0
    %5669 = vmatprep.subr.mxu0 %v5518
    %5670 = vmatpush1.msra.mxu0 %v5517
    %5671 = vmatprep.subr.mxu0 %v5522
    %5672 = vmatpush1.msra.mxu0 %v5521
    %5673 = vmatprep.subr.mxu0 %v5526
    %5674 = vmatpush1.msra.mxu0 %v5525
    %5675 = vmatprep.subr.mxu0 %v5530
    %5676 = vmatpush1.msra.mxu0 %v5529
    %5677 = vmatprep.subr.mxu0 %v5534
    %5678 = vmatpush1.msra.mxu0 %v5533
    %5679 = vmatprep.subr.mxu0 %v5538
    %5680 = vmatpush1.msra.mxu0 %v5537
    %5681 = vmatprep.subr.mxu0 %v5542
    %5682 = vmatpush1.msra.mxu0 %v5541
    %5683 = vmatprep.subr.mxu0 %v5546
    %5684 = vmatpush1.msra.mxu0 %v5545
    %5685 = vmatprep.subr.mxu0 %v5550
    %5686 = vmatpush1.msra.mxu0 %v5549
    %5687 = vmatprep.subr.mxu0 %v5554
    %5688 = vmatpush1.msra.mxu0 %v5553
    %5689 = vmatprep.subr.mxu0 %v5558
    %5690 = vmatpush1.msra.mxu0 %v5557
    %5691 = vmatprep.subr.mxu0 %v5562
    %5692 = vmatpush1.msra.mxu0 %v5561
    %5693 = vmatprep.subr.mxu0 %v5566
    %5694 = vmatpush1.msra.mxu0 %v5565
    %5695 = vmatprep.subr.mxu0 %v5570
    %5696 = vmatpush1.msra.mxu0 %v5569
    %5697 = vmatprep.subr.mxu0 %v5574
    %5698 = vmatpush1.msra.mxu0 %v5573
    %5699 = vmatprep.subr.mxu0 %v5578
    %5700 = vmatpush1.msra.mxu0 %v5577
    %5701 = vmatprep.subr.mxu0 %v5582
    %5702 = vmatpush1.msra.mxu0 %v5581
    %5703 = vmatprep.subr.mxu0 %v5586
    %5704 = vmatpush1.msra.mxu0 %v5585
    %5705 = vmatprep.subr.mxu0 %v5590
    %5706 = vmatpush1.msra.mxu0 %v5589
    %5707 = vmatprep.subr.mxu0 %v5594
    %5708 = vmatpush1.msra.mxu0 %v5593
    %5709 = vmatprep.subr.mxu0 0.0
    %5710 = vmatpush1.msra.mxu0 0.0
    %5711 = vmatprep.subr.mxu0 0.0
    %5712 = vmatpush1.msra.mxu0 0.0
    %5713 = vmatprep.subr.mxu0 0.0
    %5714 = vmatpush1.msra.mxu0 0.0
    %5715 = vmatprep.subr.mxu0 0.0
    %5716 = vmatpush1.msra.mxu0 0.0
    %5717 = vmatprep.subr.mxu0 0.0
    %5718 = vmatpush1.msra.mxu0 0.0
    %5719 = vmatprep.subr.mxu0 0.0
    %5720 = vmatpush1.msra.mxu0 0.0
    %5721 = vmatprep.subr.mxu0 0.0
    %5722 = vmatpush1.msra.mxu0 0.0
    %5723 = vmatprep.subr.mxu0 0.0
    %5724 = vmatpush1.msra.mxu0 0.0
    %5725 = vmatprep.subr.mxu0 0.0
    %5726 = vmatpush1.msra.mxu0 0.0
    %5727 = vmatprep.subr.mxu0 0.0
    %5728 = vmatpush1.msra.mxu0 0.0
    %5729 = vmatprep.subr.mxu0 0.0
    %5730 = vmatpush1.msra.mxu0 0.0
    %5731 = vmatprep.subr.mxu0 0.0
    %5732 = vmatpush1.msra.mxu0 0.0
    %5733 = vmatprep.mubr.f32.mxu0 %v5596
    %5734 = vmatmul.mubr.f32.gmra.mrb[0].mxu0 %v3906
    %v5735 = vpop.f32.mrb[0].mxu0
    %v5736 = vadd.f32 0.0, %v5735
    %v5737 = vpop.f32.mrb[0].mxu0
    %v5738 = vadd.f32 0.0, %v5737
    %5739 = vdwg.mxu0
    %v5740 = vadd.f32 %v5510, %v5665
    %v5741 = vadd.f32 %v5511, %v5667
    %v5742 = vadd.f32 %v5512, %v5736
    %v5743 = vadd.f32 %v5513, %v5738
    %s5744 = scalar_lea.vmem [#allocation6], 5120
    %v5745 = vld [vmem:[%s5744] sm:$0xff]
    %v5746 = vld [vmem:[%s5744 + $0x8] sm:$0xff]
    %v5747 = vld [vmem:[%s5744 + $0x10] sm:$0xff]
    %v5748 = vld [vmem:[%s5744 + $0x18] sm:$0xff]
    %v5749 = vld [vmem:[%s5744 + $0x20] sm:$0xff]
    %v5750 = vld [vmem:[%s5744 + $0x28] sm:$0xff]
    %v5751 = vld [vmem:[%s5744 + $0x30] sm:$0xff]
    %v5752 = vld [vmem:[%s5744 + $0x38] sm:$0xff]
    %v5753 = vld [vmem:[%s5744 + $0x40] sm:$0xff]
    %v5754 = vld [vmem:[%s5744 + $0x48] sm:$0xff]
    %v5755 = vld [vmem:[%s5744 + $0x50] sm:$0xff]
    %v5756 = vld [vmem:[%s5744 + $0x58] sm:$0xff]
    %v5757 = vld [vmem:[%s5744 + $0x60] sm:$0xff]
    %v5758 = vld [vmem:[%s5744 + $0x68] sm:$0xff]
    %v5759 = vld [vmem:[%s5744 + $0x70] sm:$0xff]
    %v5760 = vld [vmem:[%s5744 + $0x78] sm:$0xff]
    %v5761 = vld [vmem:[%s5744 + $0x80] sm:$0xff]
    %v5762 = vld [vmem:[%s5744 + $0x88] sm:$0xff]
    %v5763 = vld [vmem:[%s5744 + $0x90] sm:$0xff]
    %v5764 = vld [vmem:[%s5744 + $0x98] sm:$0xff]
    %v5765 = vld [vmem:[%s5744 + $0xa0] sm:$0xff]
    %v5766 = vld [vmem:[%s5744 + $0xa8] sm:$0xff]
    %v5767 = vld [vmem:[%s5744 + $0xb0] sm:$0xff]
    %v5768 = vld [vmem:[%s5744 + $0xb8] sm:$0xff]
    %v5769 = vld [vmem:[%s5744 + $0xc0] sm:$0xff]
    %v5770 = vld [vmem:[%s5744 + $0xc8] sm:$0xff]
    %v5771 = vld [vmem:[%s5744 + $0xd0] sm:$0xff]
    %v5772 = vld [vmem:[%s5744 + $0xd8] sm:$0xff]
    %v5773 = vld [vmem:[%s5744 + $0xe0] sm:$0xff]
    %v5774 = vld [vmem:[%s5744 + $0xe8] sm:$0xff]
    %v5775 = vld [vmem:[%s5744 + $0xf0] sm:$0xff]
    %v5776 = vld [vmem:[%s5744 + $0xf8] sm:$0xff]
    %v5777 = vld [vmem:[%s5744 + $0x100] sm:$0xff]
    %v5778 = vld [vmem:[%s5744 + $0x108] sm:$0xff]
    %v5779 = vld [vmem:[%s5744 + $0x110] sm:$0xff]
    %v5780 = vld [vmem:[%s5744 + $0x118] sm:$0xff]
    %v5781 = vld [vmem:[%s5744 + $0x120] sm:$0xff]
    %v5782 = vld [vmem:[%s5744 + $0x128] sm:$0xff]
    %v5783 = vld [vmem:[%s5744 + $0x130] sm:$0xff]
    %v5784 = vld [vmem:[%s5744 + $0x138] sm:$0xff]
    %v5785 = vld [vmem:[%s5744 + $0x140] sm:$0xff]
    %v5786 = vld [vmem:[%s5744 + $0x148] sm:$0xff]
    %v5787 = vld [vmem:[%s5744 + $0x150] sm:$0xff]
    %v5788 = vld [vmem:[%s5744 + $0x158] sm:$0xff]
    %v5789 = vld [vmem:[%s5744 + $0x160] sm:$0xff]
    %v5790 = vld [vmem:[%s5744 + $0x168] sm:$0xff]
    %v5791 = vld [vmem:[%s5744 + $0x170] sm:$0xff]
    %v5792 = vld [vmem:[%s5744 + $0x178] sm:$0xff]
    %v5793 = vld [vmem:[%s5744 + $0x180] sm:$0xff]
    %v5794 = vld [vmem:[%s5744 + $0x188] sm:$0xff]
    %v5795 = vld [vmem:[%s5744 + $0x190] sm:$0xff]
    %v5796 = vld [vmem:[%s5744 + $0x198] sm:$0xff]
    %v5797 = vld [vmem:[%s5744 + $0x1a0] sm:$0xff]
    %v5798 = vld [vmem:[%s5744 + $0x1a8] sm:$0xff]
    %v5799 = vld [vmem:[%s5744 + $0x1b0] sm:$0xff]
    %v5800 = vld [vmem:[%s5744 + $0x1b8] sm:$0xff]
    %v5801 = vld [vmem:[%s5744 + $0x1c0] sm:$0xff]
    %v5802 = vld [vmem:[%s5744 + $0x1c8] sm:$0xff]
    %v5803 = vld [vmem:[%s5744 + $0x1d0] sm:$0xff]
    %v5804 = vld [vmem:[%s5744 + $0x1d8] sm:$0xff]
    %v5805 = vld [vmem:[%s5744 + $0x1e0] sm:$0xff]
    %v5806 = vld [vmem:[%s5744 + $0x1e8] sm:$0xff]
    %v5807 = vld [vmem:[%s5744 + $0x1f0] sm:$0xff]
    %v5808 = vld [vmem:[%s5744 + $0x1f8] sm:$0xff]
    %v5809 = vld [vmem:[%s5744 + $0x200] sm:$0xff]
    %v5810 = vld [vmem:[%s5744 + $0x208] sm:$0xff]
    %v5811 = vld [vmem:[%s5744 + $0x210] sm:$0xff]
    %v5812 = vld [vmem:[%s5744 + $0x218] sm:$0xff]
    %v5813 = vld [vmem:[%s5744 + $0x220] sm:$0xff]
    %v5814 = vld [vmem:[%s5744 + $0x228] sm:$0xff]
    %v5815 = vld [vmem:[%s5744 + $0x230] sm:$0xff]
    %v5816 = vld [vmem:[%s5744 + $0x238] sm:$0xff]
    %v5817 = vld [vmem:[%s5744 + $0x240] sm:$0xff]
    %v5818 = vld [vmem:[%s5744 + $0x248] sm:$0xff]
    %v5819 = vld [vmem:[%s5744 + $0x250] sm:$0xff]
    %v5820 = vld [vmem:[%s5744 + $0x258] sm:$0xff]
    %v5821 = vld [vmem:[%s5744 + $0x260] sm:$0xff]
    %v5822 = vld [vmem:[%s5744 + $0x268] sm:$0xff]
    %v5823 = vld [vmem:[%s5744 + $0x270] sm:$0xff]
    %v5824 = vld [vmem:[%s5744 + $0x278] sm:$0xff]
    %v5826 = vsel %vm4073, %v3909, 0
    %5828 = vmatprep.subr.mxu0 %v5746
    %5829 = vmatpush1.msra.mxu0 %v5745
    %5830 = vmatprep.subr.mxu0 %v5750
    %5831 = vmatpush1.msra.mxu0 %v5749
    %5832 = vmatprep.subr.mxu0 %v5754
    %5833 = vmatpush1.msra.mxu0 %v5753
    %5834 = vmatprep.subr.mxu0 %v5758
    %5835 = vmatpush1.msra.mxu0 %v5757
    %5836 = vmatprep.subr.mxu0 %v5762
    %5837 = vmatpush1.msra.mxu0 %v5761
    %5838 = vmatprep.subr.mxu0 %v5766
    %5839 = vmatpush1.msra.mxu0 %v5765
    %5840 = vmatprep.subr.mxu0 %v5770
    %5841 = vmatpush1.msra.mxu0 %v5769
    %5842 = vmatprep.subr.mxu0 %v5774
    %5843 = vmatpush1.msra.mxu0 %v5773
    %5844 = vmatprep.subr.mxu0 %v5778
    %5845 = vmatpush1.msra.mxu0 %v5777
    %5846 = vmatprep.subr.mxu0 %v5782
    %5847 = vmatpush1.msra.mxu0 %v5781
    %5848 = vmatprep.subr.mxu0 %v5786
    %5849 = vmatpush1.msra.mxu0 %v5785
    %5850 = vmatprep.subr.mxu0 %v5790
    %5851 = vmatpush1.msra.mxu0 %v5789
    %5852 = vmatprep.subr.mxu0 %v5794
    %5853 = vmatpush1.msra.mxu0 %v5793
    %5854 = vmatprep.subr.mxu0 %v5798
    %5855 = vmatpush1.msra.mxu0 %v5797
    %5856 = vmatprep.subr.mxu0 %v5802
    %5857 = vmatpush1.msra.mxu0 %v5801
    %5858 = vmatprep.subr.mxu0 %v5806
    %5859 = vmatpush1.msra.mxu0 %v5805
    %5860 = vmatprep.subr.mxu0 %v5810
    %5861 = vmatpush1.msra.mxu0 %v5809
    %5862 = vmatprep.subr.mxu0 %v5814
    %5863 = vmatpush1.msra.mxu0 %v5813
    %5864 = vmatprep.subr.mxu0 %v5818
    %5865 = vmatpush1.msra.mxu0 %v5817
    %5866 = vmatprep.subr.mxu0 %v5822
    %5867 = vmatpush1.msra.mxu0 %v5821
    %5868 = vmatprep.subr.mxu0 0.0
    %5869 = vmatpush1.msra.mxu0 0.0
    %5870 = vmatprep.subr.mxu0 0.0
    %5871 = vmatpush1.msra.mxu0 0.0
    %5872 = vmatprep.subr.mxu0 0.0
    %5873 = vmatpush1.msra.mxu0 0.0
    %5874 = vmatprep.subr.mxu0 0.0
    %5875 = vmatpush1.msra.mxu0 0.0
    %5876 = vmatprep.subr.mxu0 0.0
    %5877 = vmatpush1.msra.mxu0 0.0
    %5878 = vmatprep.subr.mxu0 0.0
    %5879 = vmatpush1.msra.mxu0 0.0
    %5880 = vmatprep.subr.mxu0 0.0
    %5881 = vmatpush1.msra.mxu0 0.0
    %5882 = vmatprep.subr.mxu0 0.0
    %5883 = vmatpush1.msra.mxu0 0.0
    %5884 = vmatprep.subr.mxu0 0.0
    %5885 = vmatpush1.msra.mxu0 0.0
    %5886 = vmatprep.subr.mxu0 0.0
    %5887 = vmatpush1.msra.mxu0 0.0
    %5888 = vmatprep.subr.mxu0 0.0
    %5889 = vmatpush1.msra.mxu0 0.0
    %5890 = vmatprep.subr.mxu0 0.0
    %5891 = vmatpush1.msra.mxu0 0.0
    %5892 = vmatprep.mubr.f32.mxu0 %v5826
    %5893 = vmatmul.mubr.f32.gmra.mrb[0].mxu0 %v3908
    %v5894 = vpop.f32.mrb[0].mxu0
    %v5895 = vadd.f32 0.0, %v5894
    %v5896 = vpop.f32.mrb[0].mxu0
    %v5897 = vadd.f32 0.0, %v5896
    %5898 = vdwg.mxu0
    %5899 = vmatprep.subr.mxu0 %v5748
    %5900 = vmatpush1.msra.mxu0 %v5747
    %5901 = vmatprep.subr.mxu0 %v5752
    %5902 = vmatpush1.msra.mxu0 %v5751
    %5903 = vmatprep.subr.mxu0 %v5756
    %5904 = vmatpush1.msra.mxu0 %v5755
    %5905 = vmatprep.subr.mxu0 %v5760
    %5906 = vmatpush1.msra.mxu0 %v5759
    %5907 = vmatprep.subr.mxu0 %v5764
    %5908 = vmatpush1.msra.mxu0 %v5763
    %5909 = vmatprep.subr.mxu0 %v5768
    %5910 = vmatpush1.msra.mxu0 %v5767
    %5911 = vmatprep.subr.mxu0 %v5772
    %5912 = vmatpush1.msra.mxu0 %v5771
    %5913 = vmatprep.subr.mxu0 %v5776
    %5914 = vmatpush1.msra.mxu0 %v5775
    %5915 = vmatprep.subr.mxu0 %v5780
    %5916 = vmatpush1.msra.mxu0 %v5779
    %5917 = vmatprep.subr.mxu0 %v5784
    %5918 = vmatpush1.msra.mxu0 %v5783
    %5919 = vmatprep.subr.mxu0 %v5788
    %5920 = vmatpush1.msra.mxu0 %v5787
    %5921 = vmatprep.subr.mxu0 %v5792
    %5922 = vmatpush1.msra.mxu0 %v5791
    %5923 = vmatprep.subr.mxu0 %v5796
    %5924 = vmatpush1.msra.mxu0 %v5795
    %5925 = vmatprep.subr.mxu0 %v5800
    %5926 = vmatpush1.msra.mxu0 %v5799
    %5927 = vmatprep.subr.mxu0 %v5804
    %5928 = vmatpush1.msra.mxu0 %v5803
    %5929 = vmatprep.subr.mxu0 %v5808
    %5930 = vmatpush1.msra.mxu0 %v5807
    %5931 = vmatprep.subr.mxu0 %v5812
    %5932 = vmatpush1.msra.mxu0 %v5811
    %5933 = vmatprep.subr.mxu0 %v5816
    %5934 = vmatpush1.msra.mxu0 %v5815
    %5935 = vmatprep.subr.mxu0 %v5820
    %5936 = vmatpush1.msra.mxu0 %v5819
    %5937 = vmatprep.subr.mxu0 %v5824
    %5938 = vmatpush1.msra.mxu0 %v5823
    %5939 = vmatprep.subr.mxu0 0.0
    %5940 = vmatpush1.msra.mxu0 0.0
    %5941 = vmatprep.subr.mxu0 0.0
    %5942 = vmatpush1.msra.mxu0 0.0
    %5943 = vmatprep.subr.mxu0 0.0
    %5944 = vmatpush1.msra.mxu0 0.0
    %5945 = vmatprep.subr.mxu0 0.0
    %5946 = vmatpush1.msra.mxu0 0.0
    %5947 = vmatprep.subr.mxu0 0.0
    %5948 = vmatpush1.msra.mxu0 0.0
    %5949 = vmatprep.subr.mxu0 0.0
    %5950 = vmatpush1.msra.mxu0 0.0
    %5951 = vmatprep.subr.mxu0 0.0
    %5952 = vmatpush1.msra.mxu0 0.0
    %5953 = vmatprep.subr.mxu0 0.0
    %5954 = vmatpush1.msra.mxu0 0.0
    %5955 = vmatprep.subr.mxu0 0.0
    %5956 = vmatpush1.msra.mxu0 0.0
    %5957 = vmatprep.subr.mxu0 0.0
    %5958 = vmatpush1.msra.mxu0 0.0
    %5959 = vmatprep.subr.mxu0 0.0
    %5960 = vmatpush1.msra.mxu0 0.0
    %5961 = vmatprep.subr.mxu0 0.0
    %5962 = vmatpush1.msra.mxu0 0.0
    %5963 = vmatprep.mubr.f32.mxu0 %v5826
    %5964 = vmatmul.mubr.f32.gmra.mrb[0].mxu0 %v3908
    %v5965 = vpop.f32.mrb[0].mxu0
    %v5966 = vadd.f32 0.0, %v5965
    %v5967 = vpop.f32.mrb[0].mxu0
    %v5968 = vadd.f32 0.0, %v5967
    %5969 = vdwg.mxu0
    %v5970 = vadd.f32 %v5740, %v5895
    %v5971 = vadd.f32 %v5741, %v5897
    %v5972 = vadd.f32 %v5742, %v5966
    %v5973 = vadd.f32 %v5743, %v5968
    %s5974 = scalar_lea.vmem [#allocation6], 5760
    %v5975 = vld [vmem:[%s5974] sm:$0xff]
    %v5976 = vld [vmem:[%s5974 + $0x8] sm:$0xff]
    %v5977 = vld [vmem:[%s5974 + $0x10] sm:$0xff]
    %v5978 = vld [vmem:[%s5974 + $0x18] sm:$0xff]
    %v5979 = vld [vmem:[%s5974 + $0x20] sm:$0xff]
    %v5980 = vld [vmem:[%s5974 + $0x28] sm:$0xff]
    %v5981 = vld [vmem:[%s5974 + $0x30] sm:$0xff]
    %v5982 = vld [vmem:[%s5974 + $0x38] sm:$0xff]
    %v5983 = vld [vmem:[%s5974 + $0x40] sm:$0xff]
    %v5984 = vld [vmem:[%s5974 + $0x48] sm:$0xff]
    %v5985 = vld [vmem:[%s5974 + $0x50] sm:$0xff]
    %v5986 = vld [vmem:[%s5974 + $0x58] sm:$0xff]
    %v5987 = vld [vmem:[%s5974 + $0x60] sm:$0xff]
    %v5988 = vld [vmem:[%s5974 + $0x68] sm:$0xff]
    %v5989 = vld [vmem:[%s5974 + $0x70] sm:$0xff]
    %v5990 = vld [vmem:[%s5974 + $0x78] sm:$0xff]
    %v5991 = vld [vmem:[%s5974 + $0x80] sm:$0xff]
    %v5992 = vld [vmem:[%s5974 + $0x88] sm:$0xff]
    %v5993 = vld [vmem:[%s5974 + $0x90] sm:$0xff]
    %v5994 = vld [vmem:[%s5974 + $0x98] sm:$0xff]
    %v5995 = vld [vmem:[%s5974 + $0xa0] sm:$0xff]
    %v5996 = vld [vmem:[%s5974 + $0xa8] sm:$0xff]
    %v5997 = vld [vmem:[%s5974 + $0xb0] sm:$0xff]
    %v5998 = vld [vmem:[%s5974 + $0xb8] sm:$0xff]
    %v5999 = vld [vmem:[%s5974 + $0xc0] sm:$0xff]
    %v6000 = vld [vmem:[%s5974 + $0xc8] sm:$0xff]
    %v6001 = vld [vmem:[%s5974 + $0xd0] sm:$0xff]
    %v6002 = vld [vmem:[%s5974 + $0xd8] sm:$0xff]
    %v6003 = vld [vmem:[%s5974 + $0xe0] sm:$0xff]
    %v6004 = vld [vmem:[%s5974 + $0xe8] sm:$0xff]
    %v6005 = vld [vmem:[%s5974 + $0xf0] sm:$0xff]
    %v6006 = vld [vmem:[%s5974 + $0xf8] sm:$0xff]
    %v6007 = vld [vmem:[%s5974 + $0x100] sm:$0xff]
    %v6008 = vld [vmem:[%s5974 + $0x108] sm:$0xff]
    %v6009 = vld [vmem:[%s5974 + $0x110] sm:$0xff]
    %v6010 = vld [vmem:[%s5974 + $0x118] sm:$0xff]
    %v6011 = vld [vmem:[%s5974 + $0x120] sm:$0xff]
    %v6012 = vld [vmem:[%s5974 + $0x128] sm:$0xff]
    %v6013 = vld [vmem:[%s5974 + $0x130] sm:$0xff]
    %v6014 = vld [vmem:[%s5974 + $0x138] sm:$0xff]
    %v6015 = vld [vmem:[%s5974 + $0x140] sm:$0xff]
    %v6016 = vld [vmem:[%s5974 + $0x148] sm:$0xff]
    %v6017 = vld [vmem:[%s5974 + $0x150] sm:$0xff]
    %v6018 = vld [vmem:[%s5974 + $0x158] sm:$0xff]
    %v6019 = vld [vmem:[%s5974 + $0x160] sm:$0xff]
    %v6020 = vld [vmem:[%s5974 + $0x168] sm:$0xff]
    %v6021 = vld [vmem:[%s5974 + $0x170] sm:$0xff]
    %v6022 = vld [vmem:[%s5974 + $0x178] sm:$0xff]
    %v6023 = vld [vmem:[%s5974 + $0x180] sm:$0xff]
    %v6024 = vld [vmem:[%s5974 + $0x188] sm:$0xff]
    %v6025 = vld [vmem:[%s5974 + $0x190] sm:$0xff]
    %v6026 = vld [vmem:[%s5974 + $0x198] sm:$0xff]
    %v6027 = vld [vmem:[%s5974 + $0x1a0] sm:$0xff]
    %v6028 = vld [vmem:[%s5974 + $0x1a8] sm:$0xff]
    %v6029 = vld [vmem:[%s5974 + $0x1b0] sm:$0xff]
    %v6030 = vld [vmem:[%s5974 + $0x1b8] sm:$0xff]
    %v6031 = vld [vmem:[%s5974 + $0x1c0] sm:$0xff]
    %v6032 = vld [vmem:[%s5974 + $0x1c8] sm:$0xff]
    %v6033 = vld [vmem:[%s5974 + $0x1d0] sm:$0xff]
    %v6034 = vld [vmem:[%s5974 + $0x1d8] sm:$0xff]
    %v6035 = vld [vmem:[%s5974 + $0x1e0] sm:$0xff]
    %v6036 = vld [vmem:[%s5974 + $0x1e8] sm:$0xff]
    %v6037 = vld [vmem:[%s5974 + $0x1f0] sm:$0xff]
    %v6038 = vld [vmem:[%s5974 + $0x1f8] sm:$0xff]
    %v6039 = vld [vmem:[%s5974 + $0x200] sm:$0xff]
    %v6040 = vld [vmem:[%s5974 + $0x208] sm:$0xff]
    %v6041 = vld [vmem:[%s5974 + $0x210] sm:$0xff]
    %v6042 = vld [vmem:[%s5974 + $0x218] sm:$0xff]
    %v6043 = vld [vmem:[%s5974 + $0x220] sm:$0xff]
    %v6044 = vld [vmem:[%s5974 + $0x228] sm:$0xff]
    %v6045 = vld [vmem:[%s5974 + $0x230] sm:$0xff]
    %v6046 = vld [vmem:[%s5974 + $0x238] sm:$0xff]
    %v6047 = vld [vmem:[%s5974 + $0x240] sm:$0xff]
    %v6048 = vld [vmem:[%s5974 + $0x248] sm:$0xff]
    %v6049 = vld [vmem:[%s5974 + $0x250] sm:$0xff]
    %v6050 = vld [vmem:[%s5974 + $0x258] sm:$0xff]
    %v6051 = vld [vmem:[%s5974 + $0x260] sm:$0xff]
    %v6052 = vld [vmem:[%s5974 + $0x268] sm:$0xff]
    %v6053 = vld [vmem:[%s5974 + $0x270] sm:$0xff]
    %v6054 = vld [vmem:[%s5974 + $0x278] sm:$0xff]
    %v6056 = vsel %vm4073, %v3911, 0
    %6058 = vmatprep.subr.mxu0 %v5976
    %6059 = vmatpush1.msra.mxu0 %v5975
    %6060 = vmatprep.subr.mxu0 %v5980
    %6061 = vmatpush1.msra.mxu0 %v5979
    %6062 = vmatprep.subr.mxu0 %v5984
    %6063 = vmatpush1.msra.mxu0 %v5983
    %6064 = vmatprep.subr.mxu0 %v5988
    %6065 = vmatpush1.msra.mxu0 %v5987
    %6066 = vmatprep.subr.mxu0 %v5992
    %6067 = vmatpush1.msra.mxu0 %v5991
    %6068 = vmatprep.subr.mxu0 %v5996
    %6069 = vmatpush1.msra.mxu0 %v5995
    %6070 = vmatprep.subr.mxu0 %v6000
    %6071 = vmatpush1.msra.mxu0 %v5999
    %6072 = vmatprep.subr.mxu0 %v6004
    %6073 = vmatpush1.msra.mxu0 %v6003
    %6074 = vmatprep.subr.mxu0 %v6008
    %6075 = vmatpush1.msra.mxu0 %v6007
    %6076 = vmatprep.subr.mxu0 %v6012
    %6077 = vmatpush1.msra.mxu0 %v6011
    %6078 = vmatprep.subr.mxu0 %v6016
    %6079 = vmatpush1.msra.mxu0 %v6015
    %6080 = vmatprep.subr.mxu0 %v6020
    %6081 = vmatpush1.msra.mxu0 %v6019
    %6082 = vmatprep.subr.mxu0 %v6024
    %6083 = vmatpush1.msra.mxu0 %v6023
    %6084 = vmatprep.subr.mxu0 %v6028
    %6085 = vmatpush1.msra.mxu0 %v6027
    %6086 = vmatprep.subr.mxu0 %v6032
    %6087 = vmatpush1.msra.mxu0 %v6031
    %6088 = vmatprep.subr.mxu0 %v6036
    %6089 = vmatpush1.msra.mxu0 %v6035
    %6090 = vmatprep.subr.mxu0 %v6040
    %6091 = vmatpush1.msra.mxu0 %v6039
    %6092 = vmatprep.subr.mxu0 %v6044
    %6093 = vmatpush1.msra.mxu0 %v6043
    %6094 = vmatprep.subr.mxu0 %v6048
    %6095 = vmatpush1.msra.mxu0 %v6047
    %6096 = vmatprep.subr.mxu0 %v6052
    %6097 = vmatpush1.msra.mxu0 %v6051
    %6098 = vmatprep.subr.mxu0 0.0
    %6099 = vmatpush1.msra.mxu0 0.0
    %6100 = vmatprep.subr.mxu0 0.0
    %6101 = vmatpush1.msra.mxu0 0.0
    %6102 = vmatprep.subr.mxu0 0.0
    %6103 = vmatpush1.msra.mxu0 0.0
    %6104 = vmatprep.subr.mxu0 0.0
    %6105 = vmatpush1.msra.mxu0 0.0
    %6106 = vmatprep.subr.mxu0 0.0
    %6107 = vmatpush1.msra.mxu0 0.0
    %6108 = vmatprep.subr.mxu0 0.0
    %6109 = vmatpush1.msra.mxu0 0.0
    %6110 = vmatprep.subr.mxu0 0.0
    %6111 = vmatpush1.msra.mxu0 0.0
    %6112 = vmatprep.subr.mxu0 0.0
    %6113 = vmatpush1.msra.mxu0 0.0
    %6114 = vmatprep.subr.mxu0 0.0
    %6115 = vmatpush1.msra.mxu0 0.0
    %6116 = vmatprep.subr.mxu0 0.0
    %6117 = vmatpush1.msra.mxu0 0.0
    %6118 = vmatprep.subr.mxu0 0.0
    %6119 = vmatpush1.msra.mxu0 0.0
    %6120 = vmatprep.subr.mxu0 0.0
    %6121 = vmatpush1.msra.mxu0 0.0
    %6122 = vmatprep.mubr.f32.mxu0 %v6056
    %6123 = vmatmul.mubr.f32.gmra.mrb[0].mxu0 %v3910
    %v6124 = vpop.f32.mrb[0].mxu0
    %v6125 = vadd.f32 0.0, %v6124
    %v6126 = vpop.f32.mrb[0].mxu0
    %v6127 = vadd.f32 0.0, %v6126
    %6128 = vdwg.mxu0
    %6129 = vmatprep.subr.mxu0 %v5978
    %6130 = vmatpush1.msra.mxu0 %v5977
    %6131 = vmatprep.subr.mxu0 %v5982
    %6132 = vmatpush1.msra.mxu0 %v5981
    %6133 = vmatprep.subr.mxu0 %v5986
    %6134 = vmatpush1.msra.mxu0 %v5985
    %6135 = vmatprep.subr.mxu0 %v5990
    %6136 = vmatpush1.msra.mxu0 %v5989
    %6137 = vmatprep.subr.mxu0 %v5994
    %6138 = vmatpush1.msra.mxu0 %v5993
    %6139 = vmatprep.subr.mxu0 %v5998
    %6140 = vmatpush1.msra.mxu0 %v5997
    %6141 = vmatprep.subr.mxu0 %v6002
    %6142 = vmatpush1.msra.mxu0 %v6001
    %6143 = vmatprep.subr.mxu0 %v6006
    %6144 = vmatpush1.msra.mxu0 %v6005
    %6145 = vmatprep.subr.mxu0 %v6010
    %6146 = vmatpush1.msra.mxu0 %v6009
    %6147 = vmatprep.subr.mxu0 %v6014
    %6148 = vmatpush1.msra.mxu0 %v6013
    %6149 = vmatprep.subr.mxu0 %v6018
    %6150 = vmatpush1.msra.mxu0 %v6017
    %6151 = vmatprep.subr.mxu0 %v6022
    %6152 = vmatpush1.msra.mxu0 %v6021
    %6153 = vmatprep.subr.mxu0 %v6026
    %6154 = vmatpush1.msra.mxu0 %v6025
    %6155 = vmatprep.subr.mxu0 %v6030
    %6156 = vmatpush1.msra.mxu0 %v6029
    %6157 = vmatprep.subr.mxu0 %v6034
    %6158 = vmatpush1.msra.mxu0 %v6033
    %6159 = vmatprep.subr.mxu0 %v6038
    %6160 = vmatpush1.msra.mxu0 %v6037
    %6161 = vmatprep.subr.mxu0 %v6042
    %6162 = vmatpush1.msra.mxu0 %v6041
    %6163 = vmatprep.subr.mxu0 %v6046
    %6164 = vmatpush1.msra.mxu0 %v6045
    %6165 = vmatprep.subr.mxu0 %v6050
    %6166 = vmatpush1.msra.mxu0 %v6049
    %6167 = vmatprep.subr.mxu0 %v6054
    %6168 = vmatpush1.msra.mxu0 %v6053
    %6169 = vmatprep.subr.mxu0 0.0
    %6170 = vmatpush1.msra.mxu0 0.0
    %6171 = vmatprep.subr.mxu0 0.0
    %6172 = vmatpush1.msra.mxu0 0.0
    %6173 = vmatprep.subr.mxu0 0.0
    %6174 = vmatpush1.msra.mxu0 0.0
    %6175 = vmatprep.subr.mxu0 0.0
    %6176 = vmatpush1.msra.mxu0 0.0
    %6177 = vmatprep.subr.mxu0 0.0
    %6178 = vmatpush1.msra.mxu0 0.0
    %6179 = vmatprep.subr.mxu0 0.0
    %6180 = vmatpush1.msra.mxu0 0.0
    %6181 = vmatprep.subr.mxu0 0.0
    %6182 = vmatpush1.msra.mxu0 0.0
    %6183 = vmatprep.subr.mxu0 0.0
    %6184 = vmatpush1.msra.mxu0 0.0
    %6185 = vmatprep.subr.mxu0 0.0
    %6186 = vmatpush1.msra.mxu0 0.0
    %6187 = vmatprep.subr.mxu0 0.0
    %6188 = vmatpush1.msra.mxu0 0.0
    %6189 = vmatprep.subr.mxu0 0.0
    %6190 = vmatpush1.msra.mxu0 0.0
    %6191 = vmatprep.subr.mxu0 0.0
    %6192 = vmatpush1.msra.mxu0 0.0
    %6193 = vmatprep.mubr.f32.mxu0 %v6056
    %6194 = vmatmul.mubr.f32.gmra.mrb[0].mxu0 %v3910
    %v6195 = vpop.f32.mrb[0].mxu0
    %v6196 = vadd.f32 0.0, %v6195
    %v6197 = vpop.f32.mrb[0].mxu0
    %v6198 = vadd.f32 0.0, %v6197
    %6199 = vdwg.mxu0
    %v6200 = vadd.f32 %v5970, %v6125
    %v6201 = vadd.f32 %v5971, %v6127
    %v6202 = vadd.f32 %v5972, %v6196
    %v6203 = vadd.f32 %v5973, %v6198
    %v6204 = vld [vmem:[#allocation7] sm:$0xf]
    %v6206 = vlaneseq
    %v6207 = vshrl.u32 %v6206, 7
    %v6208 = vsub.s32 0, %v6207
    %v6209 = vrot.slane %v6204, %v6208
    %v6210 = vlaneseq
    %v6211 = vshrl.u32 %v6210, 7
    %v6212 = vsub.s32 1, %v6211
    %v6213 = vrot.slane %v6204, %v6212
    %v6214 = vlaneseq
    %v6215 = vshrl.u32 %v6214, 7
    %v6216 = vsub.s32 2, %v6215
    %v6217 = vrot.slane %v6204, %v6216
    %v6218 = vlaneseq
    %v6219 = vshrl.u32 %v6218, 7
    %v6220 = vsub.s32 3, %v6219
    %v6221 = vrot.slane %v6204, %v6220
    %v6226 = vadd.f32 %v6200, %v6209
    %v6227 = vadd.f32 %v6201, %v6213
    %v6228 = vadd.f32 %v6202, %v6217
    %v6229 = vadd.f32 %v6203, %v6221
    %v6230 = vmax.f32 %v6226, 0.0
    %v6231 = vmax.f32 %v6227, 0.0
    %v6232 = vmax.f32 %v6228, 0.0
    %v6233 = vmax.f32 %v6229, 0.0
    %v6234 = vld [vmem:[%s9] sm:$0xff]
    %v6235 = vld [vmem:[%s9 + $0x8] sm:$0xff]
    %v6236 = vld [vmem:[%s9 + $0x10] sm:$0xff]
    %v6237 = vld [vmem:[%s9 + $0x18] sm:$0xff]
    %v6238 = vld [vmem:[%s9 + $0x20] sm:$0xff]
    %v6239 = vld [vmem:[%s9 + $0x28] sm:$0xff]
    %v6240 = vld [vmem:[%s9 + $0x30] sm:$0xff]
    %v6241 = vld [vmem:[%s9 + $0x38] sm:$0xff]
    %v6242 = vld [vmem:[%s9 + $0x40] sm:$0xff]
    %v6243 = vld [vmem:[%s9 + $0x48] sm:$0xff]
    %v6244 = vld [vmem:[%s9 + $0x50] sm:$0xff]
    %v6245 = vld [vmem:[%s9 + $0x58] sm:$0xff]
    %v6246 = vld [vmem:[%s9 + $0x60] sm:$0xff]
    %v6247 = vld [vmem:[%s9 + $0x68] sm:$0xff]
    %v6248 = vld [vmem:[%s9 + $0x70] sm:$0xff]
    %v6249 = vld [vmem:[%s9 + $0x78] sm:$0xff]
    %v6250 = vld [vmem:[%s9 + $0x80] sm:$0xff]
    %v6251 = vld [vmem:[%s9 + $0x88] sm:$0xff]
    %v6252 = vld [vmem:[%s9 + $0x90] sm:$0xff]
    %v6253 = vld [vmem:[%s9 + $0x98] sm:$0xff]
    %v6254 = vld [vmem:[%s9 + $0xa0] sm:$0xff]
    %v6255 = vld [vmem:[%s9 + $0xa8] sm:$0xff]
    %v6256 = vld [vmem:[%s9 + $0xb0] sm:$0xff]
    %v6257 = vld [vmem:[%s9 + $0xb8] sm:$0xff]
    %v6258 = vld [vmem:[%s9 + $0xc0] sm:$0xff]
    %v6259 = vld [vmem:[%s9 + $0xc8] sm:$0xff]
    %v6260 = vld [vmem:[%s9 + $0xd0] sm:$0xff]
    %v6261 = vld [vmem:[%s9 + $0xd8] sm:$0xff]
    %v6262 = vld [vmem:[%s9 + $0xe0] sm:$0xff]
    %v6263 = vld [vmem:[%s9 + $0xe8] sm:$0xff]
    %v6264 = vld [vmem:[%s9 + $0xf0] sm:$0xff]
    %v6265 = vld [vmem:[%s9 + $0xf8] sm:$0xff]
    %v6266 = vld [vmem:[%s9 + $0x100] sm:$0xff]
    %v6267 = vld [vmem:[%s9 + $0x108] sm:$0xff]
    %v6268 = vld [vmem:[%s9 + $0x110] sm:$0xff]
    %v6269 = vld [vmem:[%s9 + $0x118] sm:$0xff]
    %v6270 = vld [vmem:[%s9 + $0x120] sm:$0xff]
    %v6271 = vld [vmem:[%s9 + $0x128] sm:$0xff]
    %v6272 = vld [vmem:[%s9 + $0x130] sm:$0xff]
    %v6273 = vld [vmem:[%s9 + $0x138] sm:$0xff]
    %v6274 = vld [vmem:[%s9 + $0x140] sm:$0xff]
    %v6275 = vld [vmem:[%s9 + $0x148] sm:$0xff]
    %v6276 = vld [vmem:[%s9 + $0x150] sm:$0xff]
    %v6277 = vld [vmem:[%s9 + $0x158] sm:$0xff]
    %v6278 = vld [vmem:[%s9 + $0x160] sm:$0xff]
    %v6279 = vld [vmem:[%s9 + $0x168] sm:$0xff]
    %v6280 = vld [vmem:[%s9 + $0x170] sm:$0xff]
    %v6281 = vld [vmem:[%s9 + $0x178] sm:$0xff]
    %v6282 = vld [vmem:[%s9 + $0x180] sm:$0xff]
    %v6283 = vld [vmem:[%s9 + $0x188] sm:$0xff]
    %v6284 = vld [vmem:[%s9 + $0x190] sm:$0xff]
    %v6285 = vld [vmem:[%s9 + $0x198] sm:$0xff]
    %v6286 = vld [vmem:[%s9 + $0x1a0] sm:$0xff]
    %v6287 = vld [vmem:[%s9 + $0x1a8] sm:$0xff]
    %v6288 = vld [vmem:[%s9 + $0x1b0] sm:$0xff]
    %v6289 = vld [vmem:[%s9 + $0x1b8] sm:$0xff]
    %v6290 = vld [vmem:[%s9 + $0x1c0] sm:$0xff]
    %v6291 = vld [vmem:[%s9 + $0x1c8] sm:$0xff]
    %v6292 = vld [vmem:[%s9 + $0x1d0] sm:$0xff]
    %v6293 = vld [vmem:[%s9 + $0x1d8] sm:$0xff]
    %v6294 = vld [vmem:[%s9 + $0x1e0] sm:$0xff]
    %v6295 = vld [vmem:[%s9 + $0x1e8] sm:$0xff]
    %v6296 = vld [vmem:[%s9 + $0x1f0] sm:$0xff]
    %v6297 = vld [vmem:[%s9 + $0x1f8] sm:$0xff]
    %v6298 = vld [vmem:[%s9 + $0x200] sm:$0xff]
    %v6299 = vld [vmem:[%s9 + $0x208] sm:$0xff]
    %v6300 = vld [vmem:[%s9 + $0x210] sm:$0xff]
    %v6301 = vld [vmem:[%s9 + $0x218] sm:$0xff]
    %v6302 = vld [vmem:[%s9 + $0x220] sm:$0xff]
    %v6303 = vld [vmem:[%s9 + $0x228] sm:$0xff]
    %v6304 = vld [vmem:[%s9 + $0x230] sm:$0xff]
    %v6305 = vld [vmem:[%s9 + $0x238] sm:$0xff]
    %v6306 = vld [vmem:[%s9 + $0x240] sm:$0xff]
    %v6307 = vld [vmem:[%s9 + $0x248] sm:$0xff]
    %v6308 = vld [vmem:[%s9 + $0x250] sm:$0xff]
    %v6309 = vld [vmem:[%s9 + $0x258] sm:$0xff]
    %v6310 = vld [vmem:[%s9 + $0x260] sm:$0xff]
    %v6311 = vld [vmem:[%s9 + $0x268] sm:$0xff]
    %v6312 = vld [vmem:[%s9 + $0x270] sm:$0xff]
    %v6313 = vld [vmem:[%s9 + $0x278] sm:$0xff]
    %v6314 = vld [vmem:[%s9 + $0x280] sm:$0xff]
    %v6315 = vld [vmem:[%s9 + $0x288] sm:$0xff]
    %v6316 = vld [vmem:[%s9 + $0x290] sm:$0xff]
    %v6317 = vld [vmem:[%s9 + $0x298] sm:$0xff]
    %v6318 = vld [vmem:[%s9 + $0x2a0] sm:$0xff]
    %v6319 = vld [vmem:[%s9 + $0x2a8] sm:$0xff]
    %v6320 = vld [vmem:[%s9 + $0x2b0] sm:$0xff]
    %v6321 = vld [vmem:[%s9 + $0x2b8] sm:$0xff]
    %v6322 = vld [vmem:[%s9 + $0x2c0] sm:$0xff]
    %v6323 = vld [vmem:[%s9 + $0x2c8] sm:$0xff]
    %v6324 = vld [vmem:[%s9 + $0x2d0] sm:$0xff]
    %v6325 = vld [vmem:[%s9 + $0x2d8] sm:$0xff]
    %v6326 = vld [vmem:[%s9 + $0x2e0] sm:$0xff]
    %v6327 = vld [vmem:[%s9 + $0x2e8] sm:$0xff]
    %v6328 = vld [vmem:[%s9 + $0x2f0] sm:$0xff]
    %v6329 = vld [vmem:[%s9 + $0x2f8] sm:$0xff]
    %v6330 = vld [vmem:[%s9 + $0x300] sm:$0xff]
    %v6331 = vld [vmem:[%s9 + $0x308] sm:$0xff]
    %v6332 = vld [vmem:[%s9 + $0x310] sm:$0xff]
    %v6333 = vld [vmem:[%s9 + $0x318] sm:$0xff]
    %v6334 = vld [vmem:[%s9 + $0x320] sm:$0xff]
    %v6335 = vld [vmem:[%s9 + $0x328] sm:$0xff]
    %v6336 = vld [vmem:[%s9 + $0x330] sm:$0xff]
    %v6337 = vld [vmem:[%s9 + $0x338] sm:$0xff]
    %v6338 = vld [vmem:[%s9 + $0x340] sm:$0xff]
    %v6339 = vld [vmem:[%s9 + $0x348] sm:$0xff]
    %v6340 = vld [vmem:[%s9 + $0x350] sm:$0xff]
    %v6341 = vld [vmem:[%s9 + $0x358] sm:$0xff]
    %v6342 = vld [vmem:[%s9 + $0x360] sm:$0xff]
    %v6343 = vld [vmem:[%s9 + $0x368] sm:$0xff]
    %v6344 = vld [vmem:[%s9 + $0x370] sm:$0xff]
    %v6345 = vld [vmem:[%s9 + $0x378] sm:$0xff]
    %v6346 = vld [vmem:[%s9 + $0x380] sm:$0xff]
    %v6347 = vld [vmem:[%s9 + $0x388] sm:$0xff]
    %v6348 = vld [vmem:[%s9 + $0x390] sm:$0xff]
    %v6349 = vld [vmem:[%s9 + $0x398] sm:$0xff]
    %v6350 = vld [vmem:[%s9 + $0x3a0] sm:$0xff]
    %v6351 = vld [vmem:[%s9 + $0x3a8] sm:$0xff]
    %v6352 = vld [vmem:[%s9 + $0x3b0] sm:$0xff]
    %v6353 = vld [vmem:[%s9 + $0x3b8] sm:$0xff]
    %v6354 = vld [vmem:[%s9 + $0x3c0] sm:$0xff]
    %v6355 = vld [vmem:[%s9 + $0x3c8] sm:$0xff]
    %v6356 = vld [vmem:[%s9 + $0x3d0] sm:$0xff]
    %v6357 = vld [vmem:[%s9 + $0x3d8] sm:$0xff]
    %v6358 = vld [vmem:[%s9 + $0x3e0] sm:$0xff]
    %v6359 = vld [vmem:[%s9 + $0x3e8] sm:$0xff]
    %v6360 = vld [vmem:[%s9 + $0x3f0] sm:$0xff]
    %v6361 = vld [vmem:[%s9 + $0x3f8] sm:$0xff]
    %v6362 = vld [vmem:[#allocation9] sm:$0x3]
    %v6364 = vlaneseq
    %v6365 = vshrl.u32 %v6364, 7
    %v6366 = vsub.s32 0, %v6365
    %v6367 = vrot.slane %v6362, %v6366
    %v6368 = vlaneseq
    %v6369 = vshrl.u32 %v6368, 7
    %v6370 = vsub.s32 1, %v6369
    %v6371 = vrot.slane %v6362, %v6370
    %6374 = vmatprep.subr.mxu0 %v6235
    %6375 = vmatpush1.msra.mxu0 %v6234
    %6376 = vmatprep.subr.mxu0 %v6237
    %6377 = vmatpush1.msra.mxu0 %v6236
    %6378 = vmatprep.subr.mxu0 %v6239
    %6379 = vmatpush1.msra.mxu0 %v6238
    %6380 = vmatprep.subr.mxu0 %v6241
    %6381 = vmatpush1.msra.mxu0 %v6240
    %6382 = vmatprep.subr.mxu0 %v6243
    %6383 = vmatpush1.msra.mxu0 %v6242
    %6384 = vmatprep.subr.mxu0 %v6245
    %6385 = vmatpush1.msra.mxu0 %v6244
    %6386 = vmatprep.subr.mxu0 %v6247
    %6387 = vmatpush1.msra.mxu0 %v6246
    %6388 = vmatprep.subr.mxu0 %v6249
    %6389 = vmatpush1.msra.mxu0 %v6248
    %6390 = vmatprep.subr.mxu0 %v6251
    %6391 = vmatpush1.msra.mxu0 %v6250
    %6392 = vmatprep.subr.mxu0 %v6253
    %6393 = vmatpush1.msra.mxu0 %v6252
    %6394 = vmatprep.subr.mxu0 %v6255
    %6395 = vmatpush1.msra.mxu0 %v6254
    %6396 = vmatprep.subr.mxu0 %v6257
    %6397 = vmatpush1.msra.mxu0 %v6256
    %6398 = vmatprep.subr.mxu0 %v6259
    %6399 = vmatpush1.msra.mxu0 %v6258
    %6400 = vmatprep.subr.mxu0 %v6261
    %6401 = vmatpush1.msra.mxu0 %v6260
    %6402 = vmatprep.subr.mxu0 %v6263
    %6403 = vmatpush1.msra.mxu0 %v6262
    %6404 = vmatprep.subr.mxu0 %v6265
    %6405 = vmatpush1.msra.mxu0 %v6264
    %6406 = vmatprep.subr.mxu0 %v6267
    %6407 = vmatpush1.msra.mxu0 %v6266
    %6408 = vmatprep.subr.mxu0 %v6269
    %6409 = vmatpush1.msra.mxu0 %v6268
    %6410 = vmatprep.subr.mxu0 %v6271
    %6411 = vmatpush1.msra.mxu0 %v6270
    %6412 = vmatprep.subr.mxu0 %v6273
    %6413 = vmatpush1.msra.mxu0 %v6272
    %6414 = vmatprep.subr.mxu0 %v6275
    %6415 = vmatpush1.msra.mxu0 %v6274
    %6416 = vmatprep.subr.mxu0 %v6277
    %6417 = vmatpush1.msra.mxu0 %v6276
    %6418 = vmatprep.subr.mxu0 %v6279
    %6419 = vmatpush1.msra.mxu0 %v6278
    %6420 = vmatprep.subr.mxu0 %v6281
    %6421 = vmatpush1.msra.mxu0 %v6280
    %6422 = vmatprep.subr.mxu0 %v6283
    %6423 = vmatpush1.msra.mxu0 %v6282
    %6424 = vmatprep.subr.mxu0 %v6285
    %6425 = vmatpush1.msra.mxu0 %v6284
    %6426 = vmatprep.subr.mxu0 %v6287
    %6427 = vmatpush1.msra.mxu0 %v6286
    %6428 = vmatprep.subr.mxu0 %v6289
    %6429 = vmatpush1.msra.mxu0 %v6288
    %6430 = vmatprep.subr.mxu0 %v6291
    %6431 = vmatpush1.msra.mxu0 %v6290
    %6432 = vmatprep.subr.mxu0 %v6293
    %6433 = vmatpush1.msra.mxu0 %v6292
    %6434 = vmatprep.subr.mxu0 %v6295
    %6435 = vmatpush1.msra.mxu0 %v6294
    %6436 = vmatprep.subr.mxu0 %v6297
    %6437 = vmatpush1.msra.mxu0 %v6296
    %6438 = vmatprep.mubr.f32.mxu0 %v6231
    %6439 = vmatmul.mubr.f32.gmra.mrb[0].mxu0 %v6230
    %v6440 = vpop.f32.mrb[0].mxu0
    %v6441 = vadd.f32 %v6367, %v6440
    %v6442 = vpop.f32.mrb[0].mxu0
    %v6443 = vadd.f32 %v6371, %v6442
    %6444 = vdwg.mxu0
    %6445 = vmatprep.subr.mxu0 %v6299
    %6446 = vmatpush1.msra.mxu0 %v6298
    %6447 = vmatprep.subr.mxu0 %v6301
    %6448 = vmatpush1.msra.mxu0 %v6300
    %6449 = vmatprep.subr.mxu0 %v6303
    %6450 = vmatpush1.msra.mxu0 %v6302
    %6451 = vmatprep.subr.mxu0 %v6305
    %6452 = vmatpush1.msra.mxu0 %v6304
    %6453 = vmatprep.subr.mxu0 %v6307
    %6454 = vmatpush1.msra.mxu0 %v6306
    %6455 = vmatprep.subr.mxu0 %v6309
    %6456 = vmatpush1.msra.mxu0 %v6308
    %6457 = vmatprep.subr.mxu0 %v6311
    %6458 = vmatpush1.msra.mxu0 %v6310
    %6459 = vmatprep.subr.mxu0 %v6313
    %6460 = vmatpush1.msra.mxu0 %v6312
    %6461 = vmatprep.subr.mxu0 %v6315
    %6462 = vmatpush1.msra.mxu0 %v6314
    %6463 = vmatprep.subr.mxu0 %v6317
    %6464 = vmatpush1.msra.mxu0 %v6316
    %6465 = vmatprep.subr.mxu0 %v6319
    %6466 = vmatpush1.msra.mxu0 %v6318
    %6467 = vmatprep.subr.mxu0 %v6321
    %6468 = vmatpush1.msra.mxu0 %v6320
    %6469 = vmatprep.subr.mxu0 %v6323
    %6470 = vmatpush1.msra.mxu0 %v6322
    %6471 = vmatprep.subr.mxu0 %v6325
    %6472 = vmatpush1.msra.mxu0 %v6324
    %6473 = vmatprep.subr.mxu0 %v6327
    %6474 = vmatpush1.msra.mxu0 %v6326
    %6475 = vmatprep.subr.mxu0 %v6329
    %6476 = vmatpush1.msra.mxu0 %v6328
    %6477 = vmatprep.subr.mxu0 %v6331
    %6478 = vmatpush1.msra.mxu0 %v6330
    %6479 = vmatprep.subr.mxu0 %v6333
    %6480 = vmatpush1.msra.mxu0 %v6332
    %6481 = vmatprep.subr.mxu0 %v6335
    %6482 = vmatpush1.msra.mxu0 %v6334
    %6483 = vmatprep.subr.mxu0 %v6337
    %6484 = vmatpush1.msra.mxu0 %v6336
    %6485 = vmatprep.subr.mxu0 %v6339
    %6486 = vmatpush1.msra.mxu0 %v6338
    %6487 = vmatprep.subr.mxu0 %v6341
    %6488 = vmatpush1.msra.mxu0 %v6340
    %6489 = vmatprep.subr.mxu0 %v6343
    %6490 = vmatpush1.msra.mxu0 %v6342
    %6491 = vmatprep.subr.mxu0 %v6345
    %6492 = vmatpush1.msra.mxu0 %v6344
    %6493 = vmatprep.subr.mxu0 %v6347
    %6494 = vmatpush1.msra.mxu0 %v6346
    %6495 = vmatprep.subr.mxu0 %v6349
    %6496 = vmatpush1.msra.mxu0 %v6348
    %6497 = vmatprep.subr.mxu0 %v6351
    %6498 = vmatpush1.msra.mxu0 %v6350
    %6499 = vmatprep.subr.mxu0 %v6353
    %6500 = vmatpush1.msra.mxu0 %v6352
    %6501 = vmatprep.subr.mxu0 %v6355
    %6502 = vmatpush1.msra.mxu0 %v6354
    %6503 = vmatprep.subr.mxu0 %v6357
    %6504 = vmatpush1.msra.mxu0 %v6356
    %6505 = vmatprep.subr.mxu0 %v6359
    %6506 = vmatpush1.msra.mxu0 %v6358
    %6507 = vmatprep.subr.mxu0 %v6361
    %6508 = vmatpush1.msra.mxu0 %v6360
    %6509 = vmatprep.mubr.f32.mxu0 %v6233
    %6510 = vmatmul.mubr.f32.gmra.mrb[0].mxu0 %v6232
    %v6511 = vpop.f32.mrb[0].mxu0
    %v6512 = vadd.f32 %v6441, %v6511
    %v6513 = vpop.f32.mrb[0].mxu0
    %v6514 = vadd.f32 %v6443, %v6513
    %6515 = vdwg.mxu0
    %v6516 = vmax.f32 %v6512, 0.0
    %v6517 = vmax.f32 %v6514, 0.0
    %v6518 = vld [vmem:[%s11] sm:$0xff]
    %v6519 = vld [vmem:[%s11 + $0x8] sm:$0xff]
    %v6520 = vld [vmem:[%s11 + $0x10] sm:$0xff]
    %v6521 = vld [vmem:[%s11 + $0x18] sm:$0xff]
    %v6522 = vld [vmem:[%s11 + $0x20] sm:$0xff]
    %v6523 = vld [vmem:[%s11 + $0x28] sm:$0xff]
    %v6524 = vld [vmem:[%s11 + $0x30] sm:$0xff]
    %v6525 = vld [vmem:[%s11 + $0x38] sm:$0xff]
    %v6526 = vld [vmem:[%s11 + $0x40] sm:$0xff]
    %v6527 = vld [vmem:[%s11 + $0x48] sm:$0xff]
    %v6528 = vld [vmem:[%s11 + $0x50] sm:$0xff]
    %v6529 = vld [vmem:[%s11 + $0x58] sm:$0xff]
    %v6530 = vld [vmem:[%s11 + $0x60] sm:$0xff]
    %v6531 = vld [vmem:[%s11 + $0x68] sm:$0xff]
    %v6532 = vld [vmem:[%s11 + $0x70] sm:$0xff]
    %v6533 = vld [vmem:[%s11 + $0x78] sm:$0xff]
    %v6534 = vld [vmem:[%s11 + $0x80] sm:$0xff]
    %v6535 = vld [vmem:[%s11 + $0x88] sm:$0xff]
    %v6536 = vld [vmem:[%s11 + $0x90] sm:$0xff]
    %v6537 = vld [vmem:[%s11 + $0x98] sm:$0xff]
    %v6538 = vld [vmem:[%s11 + $0xa0] sm:$0xff]
    %v6539 = vld [vmem:[%s11 + $0xa8] sm:$0xff]
    %v6540 = vld [vmem:[%s11 + $0xb0] sm:$0xff]
    %v6541 = vld [vmem:[%s11 + $0xb8] sm:$0xff]
    %v6542 = vld [vmem:[%s11 + $0xc0] sm:$0xff]
    %v6543 = vld [vmem:[%s11 + $0xc8] sm:$0xff]
    %v6544 = vld [vmem:[%s11 + $0xd0] sm:$0xff]
    %v6545 = vld [vmem:[%s11 + $0xd8] sm:$0xff]
    %v6546 = vld [vmem:[%s11 + $0xe0] sm:$0xff]
    %v6547 = vld [vmem:[%s11 + $0xe8] sm:$0xff]
    %v6548 = vld [vmem:[%s11 + $0xf0] sm:$0xff]
    %v6549 = vld [vmem:[%s11 + $0xf8] sm:$0xff]
    %v6550 = vld [vmem:[#allocation10] sm:$0x1]
    %v6552 = vlaneseq
    %v6553 = vshrl.u32 %v6552, 7
    %v6554 = vsub.s32 0, %v6553
    %v6555 = vrot.slane %v6550, %v6554
    %6557 = vmatprep.subr.mxu0 0.0
    %6558 = vmatpush1.msra.mxu0 %v6518
    %6559 = vmatprep.subr.mxu0 0.0
    %6560 = vmatpush1.msra.mxu0 %v6519
    %6561 = vmatprep.subr.mxu0 0.0
    %6562 = vmatpush1.msra.mxu0 %v6520
    %6563 = vmatprep.subr.mxu0 0.0
    %6564 = vmatpush1.msra.mxu0 %v6521
    %6565 = vmatprep.subr.mxu0 0.0
    %6566 = vmatpush1.msra.mxu0 %v6522
    %6567 = vmatprep.subr.mxu0 0.0
    %6568 = vmatpush1.msra.mxu0 %v6523
    %6569 = vmatprep.subr.mxu0 0.0
    %6570 = vmatpush1.msra.mxu0 %v6524
    %6571 = vmatprep.subr.mxu0 0.0
    %6572 = vmatpush1.msra.mxu0 %v6525
    %6573 = vmatprep.subr.mxu0 0.0
    %6574 = vmatpush1.msra.mxu0 %v6526
    %6575 = vmatprep.subr.mxu0 0.0
    %6576 = vmatpush1.msra.mxu0 %v6527
    %6577 = vmatprep.subr.mxu0 0.0
    %6578 = vmatpush1.msra.mxu0 %v6528
    %6579 = vmatprep.subr.mxu0 0.0
    %6580 = vmatpush1.msra.mxu0 %v6529
    %6581 = vmatprep.subr.mxu0 0.0
    %6582 = vmatpush1.msra.mxu0 %v6530
    %6583 = vmatprep.subr.mxu0 0.0
    %6584 = vmatpush1.msra.mxu0 %v6531
    %6585 = vmatprep.subr.mxu0 0.0
    %6586 = vmatpush1.msra.mxu0 %v6532
    %6587 = vmatprep.subr.mxu0 0.0
    %6588 = vmatpush1.msra.mxu0 %v6533
    %6589 = vmatprep.subr.mxu0 0.0
    %6590 = vmatpush1.msra.mxu0 %v6534
    %6591 = vmatprep.subr.mxu0 0.0
    %6592 = vmatpush1.msra.mxu0 %v6535
    %6593 = vmatprep.subr.mxu0 0.0
    %6594 = vmatpush1.msra.mxu0 %v6536
    %6595 = vmatprep.subr.mxu0 0.0
    %6596 = vmatpush1.msra.mxu0 %v6537
    %6597 = vmatprep.subr.mxu0 0.0
    %6598 = vmatpush1.msra.mxu0 %v6538
    %6599 = vmatprep.subr.mxu0 0.0
    %6600 = vmatpush1.msra.mxu0 %v6539
    %6601 = vmatprep.subr.mxu0 0.0
    %6602 = vmatpush1.msra.mxu0 %v6540
    %6603 = vmatprep.subr.mxu0 0.0
    %6604 = vmatpush1.msra.mxu0 %v6541
    %6605 = vmatprep.subr.mxu0 0.0
    %6606 = vmatpush1.msra.mxu0 %v6542
    %6607 = vmatprep.subr.mxu0 0.0
    %6608 = vmatpush1.msra.mxu0 %v6543
    %6609 = vmatprep.subr.mxu0 0.0
    %6610 = vmatpush1.msra.mxu0 %v6544
    %6611 = vmatprep.subr.mxu0 0.0
    %6612 = vmatpush1.msra.mxu0 %v6545
    %6613 = vmatprep.subr.mxu0 0.0
    %6614 = vmatpush1.msra.mxu0 %v6546
    %6615 = vmatprep.subr.mxu0 0.0
    %6616 = vmatpush1.msra.mxu0 %v6547
    %6617 = vmatprep.subr.mxu0 0.0
    %6618 = vmatpush1.msra.mxu0 %v6548
    %6619 = vmatprep.subr.mxu0 0.0
    %6620 = vmatpush1.msra.mxu0 %v6549
    %6621 = vmatprep.mubr.f32.mxu0 %v6517
    %6622 = vmatmul.mubr.f32.gmra.mrb[0].mxu0 %v6516
    %v6623 = vpop.f32.mrb[0].mxu0
    %v6624 = vadd.f32 %v6555, %v6623
    %v6625 = vpop.f32.mrb[0].mxu0
    %6626 = vdwg.mxu0
    %6627 = vst.msk [vmem:[%s13] sm:$0xff] %vm2638, %v6624
    // Predicated region
    $region78: #{cifarcnn_forward.1} parent=1 // pred_check
      _
    $region79: #{cifarcnn_forward.1} parent=1 // pred_check_branch
      %6629 = sbr.rel (0) target = $region81
    $region80: #{cifarcnn_forward.1} parent=1 // pred_region
      _
    $region81: #{cifarcnn_forward.1} parent=1 // pred_fallthru
      _
    // Predicated region
    $region82: #{cifarcnn_forward.1} parent=1 // pred_check
      _
    $region83: #{cifarcnn_forward.1} parent=1 // pred_check_branch
      %6631 = sbr.rel (0) target = $region85
    $region84: #{cifarcnn_forward.1} parent=1 // pred_region
      _
    $region85: #{cifarcnn_forward.1} parent=1 // pred_fallthru
      _
    %6632 = vsyncpa [#allocation3], 1
    %6633 = vsyncpa [#allocation5], 1
    %6634 = vsyncpa [#allocation8], 1
    %6635 = vsyncpa [#allocation11], 1

</llo_original>
